<compile_context>
chip_gen: v5e
topology: v5e:2x2
jax: 0.10.0
libtpu: 0.0.40
codegen_flags: <defaults>
</compile_context>

<pallas_src>
import functools

import numpy as np
import jax
import jax.numpy as jnp
from jax.experimental import pallas as pl
from jax.experimental.pallas import tpu as pltpu


_PARALLEL1 = pltpu.CompilerParams(dimension_semantics=("parallel",))


# --------------------------------------------------------------------------
# Small trace-time helpers
# --------------------------------------------------------------------------
def _const_spec(a):
    nd = a.ndim
    return pl.BlockSpec(tuple(a.shape), lambda b, _n=nd: (0,) * _n)


def _col_masks(Ho, Wo):
    """(No,1) f32 masks: m_l = 1 where column > 0, m_r = 1 where column < Wo-1."""
    col = np.arange(Ho * Wo, dtype=np.int64) % Wo
    m_l = (col > 0).astype(np.float32)[:, None]
    m_r = (col < Wo - 1).astype(np.float32)[:, None]
    return jnp.asarray(m_l), jnp.asarray(m_r)


# --------------------------------------------------------------------------
# In-kernel compute helpers (operate on values, weights come from refs)
# --------------------------------------------------------------------------
def _flat_shift(x, s):
    """y[n] = x[n + s] on the flattened-spatial (sublane) axis, zeros outside."""
    if s == 0:
        return x
    n, c = x.shape
    z = jnp.zeros((abs(s), c), x.dtype)
    if s > 0:
        return jnp.concatenate([x[s:, :], z], axis=0)
    return jnp.concatenate([z, x[: n + s, :]], axis=0)


def _pw(x, w_ref, b_ref, relu=True):
    """1x1 conv (folded BN) as an MXU matmul with bf16 operands, f32 epilogue."""
    y = jnp.dot(x.astype(jnp.bfloat16), w_ref[...],
                preferred_element_type=jnp.float32) + b_ref[...]
    if relu:
        y = jnp.maximum(y, 0.0)
    return y


def _dw_s1(x, w9, b, W, m_l, m_r):
    """Depthwise 3x3 / stride 1 / pad 1 on flattened (N, C); pure VPU FMAs."""
    acc = jnp.zeros_like(x) + b
    for dy in (-1, 0, 1):
        for dx in (-1, 0, 1):
            tap = _flat_shift(x, dy * W + dx)
            if dx == -1:
                tap = tap * m_l
            elif dx == 1:
                tap = tap * m_r
            acc = acc + tap * w9[(dy + 1) * 3 + (dx + 1)]
    return acc


def _s2_tap(phases, dy, dx, Wo, m_l):
    """Tap (dy,dx) of a 3x3 / stride 2 / pad 1 window, from even/odd phases."""
    t = phases[(0 if dy == 0 else 2) + (0 if dx == 0 else 1)]
    if dy == -1:
        t = _flat_shift(t, -Wo)
    if dx == -1:
        t = _flat_shift(t, -1) * m_l
    return t


def _dw_s2(phases, w9, b, Wo, m_l):
    """Depthwise 3x3 / stride 2 directly at output resolution (VPU FMAs)."""
    acc = jnp.zeros_like(phases[0]) + b
    for dy in (-1, 0, 1):
        for dx in (-1, 0, 1):
            acc = acc + _s2_tap(phases, dy, dx, Wo, m_l) * w9[(dy + 1) * 3 + (dx + 1)]
    return acc


def _ir_block_s2(phases, Wo, m_l, r):
    """Stride-2 InvertedResidual; shuffle folded into zero-interleaved weights."""
    b1dw_w, b1dw_b, b1pw_w, b1pw_b, pw1_w, pw1_b, dw_w, dw_b, pw2_w, pw2_b = r
    # branch1: dw/2 + BN -> 1x1 + BN + ReLU (output lands on even channels)
    d1 = _dw_s2(phases, b1dw_w[...], b1dw_b[...], Wo, m_l)
    a = _pw(d1, b1pw_w, b1pw_b)
    # branch2: 1x1 + BN + ReLU (per phase) -> dw/2 + BN -> 1x1 + BN + ReLU (odd ch)
    t = [_pw(p, pw1_w, pw1_b) for p in phases]
    d2 = _dw_s2(t, dw_w[...], dw_b[...], Wo, m_l)
    b2 = _pw(d2, pw2_w, pw2_b)
    return a + b2                       # interleaved concat+shuffle, exact


def _ir_block_s1(x, Wo, m_l, m_r, r):
    """Stride-1 InvertedResidual; split/shuffle folded, pass-through is a mask-mul."""
    pw1_w, pw1_b, dw_w, dw_b, pw2_w, pw2_b, pmask = r
    t = _pw(x, pw1_w, pw1_b)                               # split folded into zero rows
    d = _dw_s1(t, dw_w[...], dw_b[...], Wo, m_l, m_r)
    b2 = _pw(d, pw2_w, pw2_b)                              # scattered to branch channels
    return x * pmask[...] + b2                             # pass-through stays in place


# --------------------------------------------------------------------------
# Kernel bodies
# --------------------------------------------------------------------------
def _conv1_pool_body(Wp, p_ref, w_ref, b_ref, ml_ref, o_ref):
    """conv1 3x3/2 (im2col matmul, phase-ordered) + BN + ReLU + 3x3/2 maxpool."""
    m_l = ml_ref[...]
    phases = [_pw(p_ref[0, i], w_ref, b_ref) for i in range(4)]   # post-ReLU >= 0
    acc = phases[0]                                               # centre tap, always valid
    for dy in (-1, 0, 1):
        for dx in (-1, 0, 1):
            if dy == 0 and dx == 0:
                continue
            acc = jnp.maximum(acc, _s2_tap(phases, dy, dx, Wp, m_l))
    o_ref[0] = acc.astype(o_ref.dtype)


def _stage_body(nb, Wo, with_head, x_ref, ml_ref, mr_ref, *refs):
    nw = 10 + 7 * (nb - 1) + (4 if with_head else 0)
    w = refs[:nw]
    outs = refs[nw:]
    m_l = ml_ref[...]
    m_r = mr_ref[...]
    phases = [x_ref[0, p].astype(jnp.float32) for p in range(4)]
    x = _ir_block_s2(phases, Wo, m_l, w[0:10])
    off = 10
    for _ in range(nb - 1):
        x = _ir_block_s1(x, Wo, m_l, m_r, w[off:off + 7])
        off += 7
    if with_head:
        c5w, c5b, fcw, fcb = w[off:off + 4]
        f = _pw(x, c5w, c5b)                                   # conv5 + BN + ReLU
        v = jnp.sum(f, axis=0, keepdims=True) * (1.0 / f.shape[0])   # global avg pool
        y = _pw(v, fcw, fcb, relu=False)                       # Linear classifier
        outs[0][0] = v.astype(outs[0].dtype)
        outs[1][0] = y.astype(outs[1].dtype)
    else:
        outs[0][0] = x.astype(outs[0].dtype)


# --------------------------------------------------------------------------
# XLA glue (tiny strided-slice / reshape helpers feeding the kernels)
# --------------------------------------------------------------------------
def _conv1_patches(x_nchw):
    """im2col patches for conv1, grouped by maxpool phase: (B, 4, Hp*Wp, 27) bf16."""
    B, Cin, H, W = x_nchw.shape
    Hp, Wp = H // 4, W // 4
    xp = jnp.pad(x_nchw, ((0, 0), (0, 0), (1, 1), (1, 1)))
    phases = []
    for ry in (0, 1):
        for rx in (0, 1):
            taps = []
            for ky in range(3):
                for kx in range(3):
                    a = 2 * ry + ky
                    b = 2 * rx + kx
                    taps.append(xp[:, :, a:a + 4 * Hp - 3:4, b:b + 4 * Wp - 3:4])
            t = jnp.stack(taps, axis=1)                         # (B, 9, Cin, Hp, Wp)
            t = t.transpose(0, 3, 4, 1, 2).reshape(B, Hp * Wp, 9 * Cin)
            phases.append(t)
    return jnp.stack(phases, axis=1).astype(jnp.bfloat16)


def _phase_split(x, H, W):
    """(B, H*W, C) channels-last -> (B, 4, (H/2)*(W/2), C) even/odd phases."""
    B, N, C = x.shape
    xr = x.reshape(B, H, W, C)
    ph = [xr[:, ry::2, rx::2, :].reshape(B, (H // 2) * (W // 2), C)
          for ry in (0, 1) for rx in (0, 1)]
    return jnp.stack(ph, axis=1)


# --------------------------------------------------------------------------
# pallas_call wrappers
# --------------------------------------------------------------------------
def _conv1_pool_call(patches, w1, b1, Hp, Wp):
    B = patches.shape[0]
    Np = Hp * Wp
    c0 = w1.shape[1]
    K = patches.shape[3]
    m_l, _ = _col_masks(Hp, Wp)
    return pl.pallas_call(
        functools.partial(_conv1_pool_body, Wp),
        out_shape=jax.ShapeDtypeStruct((B, Np, c0), jnp.bfloat16),
        grid=(B,),
        in_specs=[pl.BlockSpec((1, 4, Np, K), lambda b: (b, 0, 0, 0)),
                  _const_spec(w1), _const_spec(b1), _const_spec(m_l)],
        out_specs=pl.BlockSpec((1, Np, c0), lambda b: (b, 0, 0)),
        compiler_params=_PARALLEL1,
    )(patches, w1, b1, m_l)


def _stage_call(x, H, W, blocks, head=None):
    B, N, Cin = x.shape
    Ho, Wo = H // 2, W // 2
    No = Ho * Wo
    ph = _phase_split(x, H, W)                                  # (B, 4, No, Cin)
    m_l, m_r = _col_masks(Ho, Wo)
    wlist = [w for blk in blocks for w in blk]
    if head is not None:
        wlist = wlist + list(head)
    nb = len(blocks)
    kern = functools.partial(_stage_body, nb, Wo, head is not None)
    in_specs = [pl.BlockSpec((1, 4, No, Cin), lambda b: (b, 0, 0, 0)),
                _const_spec(m_l), _const_spec(m_r)]
    in_specs += [_const_spec(w) for w in wlist]
    if head is None:
        out_ch = blocks[0][8].shape[1]
        out_shape = jax.ShapeDtypeStruct((B, No, out_ch), jnp.bfloat16)
        out_specs = pl.BlockSpec((1, No, out_ch), lambda b: (b, 0, 0))
    else:
        c5 = head[0].shape[1]
        nc = head[2].shape[1]
        out_shape = (jax.ShapeDtypeStruct((B, 1, c5), jnp.float32),
                     jax.ShapeDtypeStruct((B, 1, nc), jnp.float32))
        out_specs = (pl.BlockSpec((1, 1, c5), lambda b: (b, 0, 0)),
                     pl.BlockSpec((1, 1, nc), lambda b: (b, 0, 0)))
    out = pl.pallas_call(
        kern, out_shape=out_shape, grid=(B,),
        in_specs=in_specs, out_specs=out_specs,
        compiler_params=_PARALLEL1,
    )(ph, m_l, m_r, *wlist)
    return out, (Ho, Wo)


# --------------------------------------------------------------------------
# Forward pass (matches ShuffleNetV2.forward semantics, eval-mode BN)
# --------------------------------------------------------------------------
def shufflenet_v2_forward(x_nchw, params, training=False, loss='softmax'):
    B, _, H, W = x_nchw.shape
    assert H % 32 == 0 and W % 32 == 0, "spatial dims must keep all stride-2 inputs even"
    Hp, Wp = H // 4, W // 4
    w1, b1 = params['conv1']
    x = _conv1_pool_call(_conv1_patches(x_nchw), w1, b1, Hp, Wp)
    Hc, Wc = Hp, Wp
    for name in ('stage2', 'stage3'):
        x, (Hc, Wc) = _stage_call(x, Hc, Wc, params[name])
    (v3, y3), _ = _stage_call(x, Hc, Wc, params['stage4'], head=params['head'])
    v = v3[:, 0, :]
    y = y3[:, 0, :]
    if not training:
        return v
    if loss == 'softmax':
        return y
    if loss == 'triplet':
        return y, v
    raise KeyError('Unsupported loss: {}'.format(loss))


# --------------------------------------------------------------------------
# Deterministic synthetic parameters (shapes follow the PyTorch __init__),
# eval-mode BN folded; split/concat/channel_shuffle folded by tracking the
# physical->logical channel permutation L across blocks.
# --------------------------------------------------------------------------
def _bn_fold(key, C):
    k1, k2, k3, k4 = jax.random.split(key, 4)
    gamma = 1.0 + 0.1 * jax.random.normal(k1, (C,), jnp.float32)
    beta = 0.1 * jax.random.normal(k2, (C,), jnp.float32)
    mean = 0.1 * jax.random.normal(k3, (C,), jnp.float32)
    var = jax.random.uniform(k4, (C,), jnp.float32, 0.5, 1.5)
    scale = gamma / jnp.sqrt(var + 1e-5)
    return scale, beta - mean * scale


def _pw_folded(kw, kbn, cout, cin):
    w = 0.1 * jax.random.normal(kw, (cout, cin), jnp.float32)
    s, b = _bn_fold(kbn, cout)
    return (w * s[:, None]).T, b[None, :]          # (cin, cout), (1, cout)


def _dw_folded(kw, kbn, c):
    w = 0.1 * jax.random.normal(kw, (c, 3, 3), jnp.float32)
    s, b = _bn_fold(kbn, c)
    wf = (w * s[:, None, None]).transpose(1, 2, 0).reshape(9, 1, c)   # tap = ky*3+kx
    return wf, b[None, :]


def _make_conv1(key, c0):
    k1, k2 = jax.random.split(key)
    w = 0.1 * jax.random.normal(k1, (c0, 3, 3, 3), jnp.float32)       # (co, cin, ky, kx)
    s, b = _bn_fold(k2, c0)
    wt = (w * s[:, None, None, None]).transpose(2, 3, 1, 0).reshape(27, c0)
    return wt.astype(jnp.bfloat16), b[None, :]


def _make_block_s2(key, inp, oup, L_in):
    cb = oup // 2
    ks = jax.random.split(key, 10)
    b1dw_w, b1dw_b = _dw_folded(ks[0], ks[1], inp)
    b1dw_w = b1dw_w[:, :, L_in]                      # fold incoming channel perm
    b1dw_b = b1dw_b[:, L_in]
    wa, ba = _pw_folded(ks[2], ks[3], cb, inp)
    wa = wa[L_in, :]
    b1pw_w = jnp.zeros((inp, oup), jnp.float32).at[:, 0::2].set(wa)   # shuffle -> even
    b1pw_b = jnp.zeros((1, oup), jnp.float32).at[:, 0::2].set(ba)
    pw1_w, pw1_b = _pw_folded(ks[4], ks[5], cb, inp)
    pw1_w = pw1_w[L_in, :]
    dw_w, dw_b = _dw_folded(ks[6], ks[7], cb)
    wb, bb = _pw_folded(ks[8], ks[9], cb, cb)
    pw2_w = jnp.zeros((cb, oup), jnp.float32).at[:, 1::2].set(wb)     # shuffle -> odd
    pw2_b = jnp.zeros((1, oup), jnp.float32).at[:, 1::2].set(bb)
    weights = [b1dw_w, b1dw_b, b1pw_w.astype(jnp.bfloat16), b1pw_b,
               pw1_w.astype(jnp.bfloat16), pw1_b, dw_w, dw_b,
               pw2_w.astype(jnp.bfloat16), pw2_b]
    return weights, np.arange(oup)                   # output is in logical order


def _make_block_s1(key, oup, L_in):
    cb = oup // 2
    ks = jax.random.split(key, 6)
    L_in = np.asarray(L_in)
    rows = np.nonzero(L_in >= cb)[0]                 # physical positions holding x2
    w1, b1 = _pw_folded(ks[0], ks[1], cb, cb)
    pw1_w = jnp.zeros((oup, cb), jnp.float32).at[rows, :].set(w1[L_in[rows] - cb, :])
    dw_w, dw_b = _dw_folded(ks[2], ks[3], cb)
    w2, b2 = _pw_folded(ks[4], ks[5], cb, cb)
    pw2_w = jnp.zeros((cb, oup), jnp.float32).at[:, rows].set(w2[:, L_in[rows] - cb])
    pw2_b = jnp.zeros((1, oup), jnp.float32).at[:, rows].set(b2[:, L_in[rows] - cb])
    pmask = jnp.asarray((L_in < cb).astype(np.float32))[None, :]
    weights = [pw1_w.astype(jnp.bfloat16), b1, dw_w, dw_b,
               pw2_w.astype(jnp.bfloat16), pw2_b, pmask]
    L_out = np.where(L_in < cb, 2 * L_in, 2 * (L_in - cb) + 1)        # virtual shuffle
    return weights, L_out


def _make_head(key, cin, c5, nc, L_in):
    ks = jax.random.split(key, 4)
    w5, b5 = _pw_folded(ks[0], ks[1], c5, cin)
    w5 = w5[np.asarray(L_in), :]                     # fold final channel perm into conv5
    fc_w = (0.1 * jax.random.normal(ks[2], (nc, c5), jnp.float32)).T
    fc_b = 0.1 * jax.random.normal(ks[3], (nc,), jnp.float32)[None, :]
    return [w5.astype(jnp.bfloat16), b5, fc_w.astype(jnp.bfloat16), fc_b]


def make_params(key, stages_repeats, stages_out_channels, num_classes):
    keys = iter(jax.random.split(key, 64))
    params = {}
    c0 = stages_out_channels[0]
    params['conv1'] = _make_conv1(next(keys), c0)
    L = np.arange(c0)
    inp = c0
    for name, reps, oup in zip(('stage2', 'stage3', 'stage4'),
                               stages_repeats, stages_out_channels[1:4]):
        wts, L = _make_block_s2(next(keys), inp, oup, L)
        blocks = [wts]
        for _ in range(reps - 1):
            w, L = _make_block_s1(next(keys), oup, L)
            blocks.append(w)
        params[name] = blocks
        inp = oup
    params['head'] = _make_head(next(keys), inp, stages_out_channels[-1],
                                num_classes, L)
    return params


if __name__ == "__main__":
    key = jax.random.PRNGKey(0)
    k_x, k_p = jax.random.split(key)

    stages_repeats = [2, 2, 2]
    stages_out_channels = [8, 16, 32, 64, 128]
    num_classes = 10

    x = jax.random.normal(k_x, (2, 3, 64, 64), jnp.float32)     # NCHW input
    params = make_params(k_p, stages_repeats, stages_out_channels, num_classes)

    # Eval-mode forward (PyTorch: `if not self.training: return v`).
    fwd_eval = jax.jit(lambda inp: shufflenet_v2_forward(inp, params, training=False))
    v = fwd_eval(x)
    jax.block_until_ready(v)
    assert v.shape == (2, stages_out_channels[-1])
    assert bool(jnp.all(jnp.isfinite(v)))

    # Training-mode ('softmax') path exercises the classifier output too.
    fwd_train = jax.jit(
        lambda inp: shufflenet_v2_forward(inp, params, training=True, loss='softmax'))
    y = fwd_train(x)
    jax.block_until_ready(y)
    assert y.shape == (2, num_classes)
    assert bool(jnp.all(jnp.isfinite(y)))

    print("KERNEL_OK")
</pallas_src>

<mosaic_0001>
module attributes {stable_mosaic.version = 11 : i64} {
  func.func @_conv1_pool_body(%arg0: i32, %arg1: memref<1x4x256x27xbf16, #tpu.memory_space<vmem>>, %arg2: memref<27x8xbf16, #tpu.memory_space<vmem>>, %arg3: memref<1x8xf32, #tpu.memory_space<vmem>>, %arg4: memref<256x1xf32, #tpu.memory_space<vmem>>, %arg5: memref<1x256x8xbf16, #tpu.memory_space<vmem>>) attributes {dimension_semantics = [#tpu.dimension_semantics<parallel>], iteration_bounds = array<i64: 2>, scalar_prefetch = 0 : i64, scratch_operands = 0 : i64, tpu.core_type = #tpu.core_type<tc>, window_params = [{transform_indices = @transform_0, window_bounds = array<i64: 1, 4, 256, 27>}, {pipeline_mode = #tpu.pipeline_mode<synchronous>, transform_indices = @transform_1, window_bounds = array<i64: 27, 8>}, {pipeline_mode = #tpu.pipeline_mode<synchronous>, transform_indices = @transform_2, window_bounds = array<i64: 1, 8>}, {pipeline_mode = #tpu.pipeline_mode<synchronous>, transform_indices = @transform_3, window_bounds = array<i64: 256, 1>}, {transform_indices = @transform_4, window_bounds = array<i64: 1, 256, 8>}]} {
    %c0 = arith.constant 0 : index
    %c0_0 = arith.constant 0 : index
    %0 = vector.load %arg4[%c0, %c0_0] : memref<256x1xf32, #tpu.memory_space<vmem>>, vector<256x1xf32>
    %c0_1 = arith.constant 0 : index
    %c0_2 = arith.constant 0 : index
    %c0_3 = arith.constant 0 : index
    %c0_4 = arith.constant 0 : index
    %1 = vector.load %arg1[%c0_1, %c0_2, %c0_3, %c0_4] : memref<1x4x256x27xbf16, #tpu.memory_space<vmem>>, vector<1x1x256x27xbf16>
    %2 = vector.shape_cast %1 : vector<1x1x256x27xbf16> to vector<256x27xbf16>
    %c0_5 = arith.constant 0 : index
    %c0_6 = arith.constant 0 : index
    %3 = vector.load %arg2[%c0_5, %c0_6] : memref<27x8xbf16, #tpu.memory_space<vmem>>, vector<27x8xbf16>
    %cst = arith.constant dense<0.000000e+00> : vector<256x8xf32>
    %4 = tpu.matmul %2, %3, %cst {dimension_numbers = #tpu.dot_dimension_numbers<[1], [0], [0], [1], [0, 0, 1, 1], [], []>} : vector<256x27xbf16>, vector<27x8xbf16>, vector<256x8xf32> -> vector<256x8xf32>
    %c0_7 = arith.constant 0 : index
    %c0_8 = arith.constant 0 : index
    %5 = vector.load %arg3[%c0_7, %c0_8] : memref<1x8xf32, #tpu.memory_space<vmem>>, vector<1x8xf32>
    %6 = vector.broadcast %5 : vector<1x8xf32> to vector<256x8xf32>
    %7 = arith.addf %4, %6 : vector<256x8xf32>
    %cst_9 = arith.constant 0.000000e+00 : f32
    %8 = vector.broadcast %cst_9 : f32 to vector<256x8xf32>
    %9 = arith.maximumf %7, %8 : vector<256x8xf32>
    %c0_10 = arith.constant 0 : index
    %c1 = arith.constant 1 : index
    %c0_11 = arith.constant 0 : index
    %c0_12 = arith.constant 0 : index
    %10 = vector.load %arg1[%c0_10, %c1, %c0_11, %c0_12] : memref<1x4x256x27xbf16, #tpu.memory_space<vmem>>, vector<1x1x256x27xbf16>
    %11 = vector.shape_cast %10 : vector<1x1x256x27xbf16> to vector<256x27xbf16>
    %c0_13 = arith.constant 0 : index
    %c0_14 = arith.constant 0 : index
    %12 = vector.load %arg2[%c0_13, %c0_14] : memref<27x8xbf16, #tpu.memory_space<vmem>>, vector<27x8xbf16>
    %cst_15 = arith.constant dense<0.000000e+00> : vector<256x8xf32>
    %13 = tpu.matmul %11, %12, %cst_15 {dimension_numbers = #tpu.dot_dimension_numbers<[1], [0], [0], [1], [0, 0, 1, 1], [], []>} : vector<256x27xbf16>, vector<27x8xbf16>, vector<256x8xf32> -> vector<256x8xf32>
    %c0_16 = arith.constant 0 : index
    %c0_17 = arith.constant 0 : index
    %14 = vector.load %arg3[%c0_16, %c0_17] : memref<1x8xf32, #tpu.memory_space<vmem>>, vector<1x8xf32>
    %15 = vector.broadcast %14 : vector<1x8xf32> to vector<256x8xf32>
    %16 = arith.addf %13, %15 : vector<256x8xf32>
    %cst_18 = arith.constant 0.000000e+00 : f32
    %17 = vector.broadcast %cst_18 : f32 to vector<256x8xf32>
    %18 = arith.maximumf %16, %17 : vector<256x8xf32>
    %c0_19 = arith.constant 0 : index
    %c2 = arith.constant 2 : index
    %c0_20 = arith.constant 0 : index
    %c0_21 = arith.constant 0 : index
    %19 = vector.load %arg1[%c0_19, %c2, %c0_20, %c0_21] : memref<1x4x256x27xbf16, #tpu.memory_space<vmem>>, vector<1x1x256x27xbf16>
    %20 = vector.shape_cast %19 : vector<1x1x256x27xbf16> to vector<256x27xbf16>
    %c0_22 = arith.constant 0 : index
    %c0_23 = arith.constant 0 : index
    %21 = vector.load %arg2[%c0_22, %c0_23] : memref<27x8xbf16, #tpu.memory_space<vmem>>, vector<27x8xbf16>
    %cst_24 = arith.constant dense<0.000000e+00> : vector<256x8xf32>
    %22 = tpu.matmul %20, %21, %cst_24 {dimension_numbers = #tpu.dot_dimension_numbers<[1], [0], [0], [1], [0, 0, 1, 1], [], []>} : vector<256x27xbf16>, vector<27x8xbf16>, vector<256x8xf32> -> vector<256x8xf32>
    %c0_25 = arith.constant 0 : index
    %c0_26 = arith.constant 0 : index
    %23 = vector.load %arg3[%c0_25, %c0_26] : memref<1x8xf32, #tpu.memory_space<vmem>>, vector<1x8xf32>
    %24 = vector.broadcast %23 : vector<1x8xf32> to vector<256x8xf32>
    %25 = arith.addf %22, %24 : vector<256x8xf32>
    %cst_27 = arith.constant 0.000000e+00 : f32
    %26 = vector.broadcast %cst_27 : f32 to vector<256x8xf32>
    %27 = arith.maximumf %25, %26 : vector<256x8xf32>
    %c0_28 = arith.constant 0 : index
    %c3 = arith.constant 3 : index
    %c0_29 = arith.constant 0 : index
    %c0_30 = arith.constant 0 : index
    %28 = vector.load %arg1[%c0_28, %c3, %c0_29, %c0_30] : memref<1x4x256x27xbf16, #tpu.memory_space<vmem>>, vector<1x1x256x27xbf16>
    %29 = vector.shape_cast %28 : vector<1x1x256x27xbf16> to vector<256x27xbf16>
    %c0_31 = arith.constant 0 : index
    %c0_32 = arith.constant 0 : index
    %30 = vector.load %arg2[%c0_31, %c0_32] : memref<27x8xbf16, #tpu.memory_space<vmem>>, vector<27x8xbf16>
    %cst_33 = arith.constant dense<0.000000e+00> : vector<256x8xf32>
    %31 = tpu.matmul %29, %30, %cst_33 {dimension_numbers = #tpu.dot_dimension_numbers<[1], [0], [0], [1], [0, 0, 1, 1], [], []>} : vector<256x27xbf16>, vector<27x8xbf16>, vector<256x8xf32> -> vector<256x8xf32>
    %c0_34 = arith.constant 0 : index
    %c0_35 = arith.constant 0 : index
    %32 = vector.load %arg3[%c0_34, %c0_35] : memref<1x8xf32, #tpu.memory_space<vmem>>, vector<1x8xf32>
    %33 = vector.broadcast %32 : vector<1x8xf32> to vector<256x8xf32>
    %34 = arith.addf %31, %33 : vector<256x8xf32>
    %cst_36 = arith.constant 0.000000e+00 : f32
    %35 = vector.broadcast %cst_36 : f32 to vector<256x8xf32>
    %36 = arith.maximumf %34, %35 : vector<256x8xf32>
    %cst_37 = arith.constant 0.000000e+00 : f32
    %37 = vector.broadcast %cst_37 : f32 to vector<16x8xf32>
    %38 = vector.extract_strided_slice %36 {offsets = [0, 0], sizes = [240, 8], strides = [1, 1]} : vector<256x8xf32> to vector<240x8xf32>
    %39 = tpu.concatenate %37, %38 in 0 : vector<16x8xf32>, vector<240x8xf32> -> vector<256x8xf32>
    %cst_38 = arith.constant 0.000000e+00 : f32
    %40 = vector.broadcast %cst_38 : f32 to vector<1x8xf32>
    %41 = vector.extract_strided_slice %39 {offsets = [0, 0], sizes = [255, 8], strides = [1, 1]} : vector<256x8xf32> to vector<255x8xf32>
    %42 = tpu.concatenate %40, %41 in 0 : vector<1x8xf32>, vector<255x8xf32> -> vector<256x8xf32>
    %43 = vector.broadcast %0 : vector<256x1xf32> to vector<256x8xf32>
    %44 = arith.mulf %42, %43 : vector<256x8xf32>
    %45 = arith.maximumf %9, %44 : vector<256x8xf32>
    %cst_39 = arith.constant 0.000000e+00 : f32
    %46 = vector.broadcast %cst_39 : f32 to vector<16x8xf32>
    %47 = vector.extract_strided_slice %27 {offsets = [0, 0], sizes = [240, 8], strides = [1, 1]} : vector<256x8xf32> to vector<240x8xf32>
    %48 = tpu.concatenate %46, %47 in 0 : vector<16x8xf32>, vector<240x8xf32> -> vector<256x8xf32>
    %49 = arith.maximumf %45, %48 : vector<256x8xf32>
    %cst_40 = arith.constant 0.000000e+00 : f32
    %50 = vector.broadcast %cst_40 : f32 to vector<16x8xf32>
    %51 = vector.extract_strided_slice %36 {offsets = [0, 0], sizes = [240, 8], strides = [1, 1]} : vector<256x8xf32> to vector<240x8xf32>
    %52 = tpu.concatenate %50, %51 in 0 : vector<16x8xf32>, vector<240x8xf32> -> vector<256x8xf32>
    %53 = arith.maximumf %49, %52 : vector<256x8xf32>
    %cst_41 = arith.constant 0.000000e+00 : f32
    %54 = vector.broadcast %cst_41 : f32 to vector<1x8xf32>
    %55 = vector.extract_strided_slice %18 {offsets = [0, 0], sizes = [255, 8], strides = [1, 1]} : vector<256x8xf32> to vector<255x8xf32>
    %56 = tpu.concatenate %54, %55 in 0 : vector<1x8xf32>, vector<255x8xf32> -> vector<256x8xf32>
    %57 = vector.broadcast %0 : vector<256x1xf32> to vector<256x8xf32>
    %58 = arith.mulf %56, %57 : vector<256x8xf32>
    %59 = arith.maximumf %53, %58 : vector<256x8xf32>
    %60 = arith.maximumf %59, %18 : vector<256x8xf32>
    %cst_42 = arith.constant 0.000000e+00 : f32
    %61 = vector.broadcast %cst_42 : f32 to vector<1x8xf32>
    %62 = vector.extract_strided_slice %36 {offsets = [0, 0], sizes = [255, 8], strides = [1, 1]} : vector<256x8xf32> to vector<255x8xf32>
    %63 = tpu.concatenate %61, %62 in 0 : vector<1x8xf32>, vector<255x8xf32> -> vector<256x8xf32>
    %64 = vector.broadcast %0 : vector<256x1xf32> to vector<256x8xf32>
    %65 = arith.mulf %63, %64 : vector<256x8xf32>
    %66 = arith.maximumf %60, %65 : vector<256x8xf32>
    %67 = arith.maximumf %66, %27 : vector<256x8xf32>
    %68 = arith.maximumf %67, %36 : vector<256x8xf32>
    %69 = arith.truncf %68 : vector<256x8xf32> to vector<256x8xbf16>
    %c0_43 = arith.constant 0 : index
    %c0_44 = arith.constant 0 : index
    %c0_45 = arith.constant 0 : index
    %70 = vector.load %arg5[%c0_43, %c0_44, %c0_45] : memref<1x256x8xbf16, #tpu.memory_space<vmem>>, vector<1x256x8xbf16>
    %71 = vector.shape_cast %70 : vector<1x256x8xbf16> to vector<256x8xbf16>
    %72 = vector.shape_cast %69 : vector<256x8xbf16> to vector<1x256x8xbf16>
    tpu.vector_store %arg5[%c0_43, %c0_44, %c0_45], %72 {strides = array<i32>} : memref<1x256x8xbf16, #tpu.memory_space<vmem>>, vector<1x256x8xbf16>,
    return
  }
  func.func @transform_0(%arg0: i32) -> (i32, i32, i32, i32) {
    %c0_i32 = arith.constant 0 : i32
    %c0_i32_0 = arith.constant 0 : i32
    %c0_i32_1 = arith.constant 0 : i32
    %c0_i32_2 = arith.constant 0 : i32
    return %arg0, %c0_i32, %c0_i32_0, %c0_i32_1 : i32, i32, i32, i32
  }
  func.func @transform_1(%arg0: i32) -> (i32, i32) {
    %c0_i32 = arith.constant 0 : i32
    %c0_i32_0 = arith.constant 0 : i32
    %c0_i32_1 = arith.constant 0 : i32
    return %c0_i32, %c0_i32_0 : i32, i32
  }
  func.func @transform_2(%arg0: i32) -> (i32, i32) {
    %c0_i32 = arith.constant 0 : i32
    %c0_i32_0 = arith.constant 0 : i32
    %c0_i32_1 = arith.constant 0 : i32
    return %c0_i32, %c0_i32_0 : i32, i32
  }
  func.func @transform_3(%arg0: i32) -> (i32, i32) {
    %c0_i32 = arith.constant 0 : i32
    %c0_i32_0 = arith.constant 0 : i32
    %c0_i32_1 = arith.constant 0 : i32
    return %c0_i32, %c0_i32_0 : i32, i32
  }
  func.func @transform_4(%arg0: i32) -> (i32, i32, i32) {
    %c0_i32 = arith.constant 0 : i32
    %c0_i32_0 = arith.constant 0 : i32
    %c0_i32_1 = arith.constant 0 : i32
    return %arg0, %c0_i32, %c0_i32_0 : i32, i32, i32
  }
}

module attributes {stable_mosaic.version = 11 : i64} {
  func.func @_stage_body(%arg0: i32, %arg1: memref<1x4x64x8xbf16, #tpu.memory_space<vmem>>, %arg2: memref<64x1xf32, #tpu.memory_space<vmem>>, %arg3: memref<64x1xf32, #tpu.memory_space<vmem>>, %arg4: memref<9x1x8xf32, #tpu.memory_space<vmem>>, %arg5: memref<1x8xf32, #tpu.memory_space<vmem>>, %arg6: memref<8x16xbf16, #tpu.memory_space<vmem>>, %arg7: memref<1x16xf32, #tpu.memory_space<vmem>>, %arg8: memref<8x8xbf16, #tpu.memory_space<vmem>>, %arg9: memref<1x8xf32, #tpu.memory_space<vmem>>, %arg10: memref<9x1x8xf32, #tpu.memory_space<vmem>>, %arg11: memref<1x8xf32, #tpu.memory_space<vmem>>, %arg12: memref<8x16xbf16, #tpu.memory_space<vmem>>, %arg13: memref<1x16xf32, #tpu.memory_space<vmem>>, %arg14: memref<16x8xbf16, #tpu.memory_space<vmem>>, %arg15: memref<1x8xf32, #tpu.memory_space<vmem>>, %arg16: memref<9x1x8xf32, #tpu.memory_space<vmem>>, %arg17: memref<1x8xf32, #tpu.memory_space<vmem>>, %arg18: memref<8x16xbf16, #tpu.memory_space<vmem>>, %arg19: memref<1x16xf32, #tpu.memory_space<vmem>>, %arg20: memref<1x16xf32, #tpu.memory_space<vmem>>, %arg21: memref<1x64x16xbf16, #tpu.memory_space<vmem>>) attributes {dimension_semantics = [#tpu.dimension_semantics<parallel>], iteration_bounds = array<i64: 2>, scalar_prefetch = 0 : i64, scratch_operands = 0 : i64, tpu.core_type = #tpu.core_type<tc>, window_params = [{transform_indices = @transform_0, window_bounds = array<i64: 1, 4, 64, 8>}, {pipeline_mode = #tpu.pipeline_mode<synchronous>, transform_indices = @transform_1, window_bounds = array<i64: 64, 1>}, {pipeline_mode = #tpu.pipeline_mode<synchronous>, transform_indices = @transform_2, window_bounds = array<i64: 64, 1>}, {pipeline_mode = #tpu.pipeline_mode<synchronous>, transform_indices = @transform_3, window_bounds = array<i64: 9, 1, 8>}, {pipeline_mode = #tpu.pipeline_mode<synchronous>, transform_indices = @transform_4, window_bounds = array<i64: 1, 8>}, {pipeline_mode = #tpu.pipeline_mode<synchronous>, transform_indices = @transform_5, window_bounds = array<i64: 8, 16>}, {pipeline_mode = #tpu.pipeline_mode<synchronous>, transform_indices = @transform_6, window_bounds = array<i64: 1, 16>}, {pipeline_mode = #tpu.pipeline_mode<synchronous>, transform_indices = @transform_7, window_bounds = array<i64: 8, 8>}, {pipeline_mode = #tpu.pipeline_mode<synchronous>, transform_indices = @transform_8, window_bounds = array<i64: 1, 8>}, {pipeline_mode = #tpu.pipeline_mode<synchronous>, transform_indices = @transform_9, window_bounds = array<i64: 9, 1, 8>}, {pipeline_mode = #tpu.pipeline_mode<synchronous>, transform_indices = @transform_10, window_bounds = array<i64: 1, 8>}, {pipeline_mode = #tpu.pipeline_mode<synchronous>, transform_indices = @transform_11, window_bounds = array<i64: 8, 16>}, {pipeline_mode = #tpu.pipeline_mode<synchronous>, transform_indices = @transform_12, window_bounds = array<i64: 1, 16>}, {pipeline_mode = #tpu.pipeline_mode<synchronous>, transform_indices = @transform_13, window_bounds = array<i64: 16, 8>}, {pipeline_mode = #tpu.pipeline_mode<synchronous>, transform_indices = @transform_14, window_bounds = array<i64: 1, 8>}, {pipeline_mode = #tpu.pipeline_mode<synchronous>, transform_indices = @transform_15, window_bounds = array<i64: 9, 1, 8>}, {pipeline_mode = #tpu.pipeline_mode<synchronous>, transform_indices = @transform_16, window_bounds = array<i64: 1, 8>}, {pipeline_mode = #tpu.pipeline_mode<synchronous>, transform_indices = @transform_17, window_bounds = array<i64: 8, 16>}, {pipeline_mode = #tpu.pipeline_mode<synchronous>, transform_indices = @transform_18, window_bounds = array<i64: 1, 16>}, {pipeline_mode = #tpu.pipeline_mode<synchronous>, transform_indices = @transform_19, window_bounds = array<i64: 1, 16>}, {transform_indices = @transform_20, window_bounds = array<i64: 1, 64, 16>}]} {
    %c0 = arith.constant 0 : index
    %c0_0 = arith.constant 0 : index
    %0 = vector.load %arg2[%c0, %c0_0] : memref<64x1xf32, #tpu.memory_space<vmem>>, vector<64x1xf32>
    %c0_1 = arith.constant 0 : index
    %c0_2 = arith.constant 0 : index
    %1 = vector.load %arg3[%c0_1, %c0_2] : memref<64x1xf32, #tpu.memory_space<vmem>>, vector<64x1xf32>
    %c0_3 = arith.constant 0 : index
    %c0_4 = arith.constant 0 : index
    %c0_5 = arith.constant 0 : index
    %c0_6 = arith.constant 0 : index
    %2 = vector.load %arg1[%c0_3, %c0_4, %c0_5, %c0_6] : memref<1x4x64x8xbf16, #tpu.memory_space<vmem>>, vector<1x1x64x8xbf16>
    %3 = vector.shape_cast %2 : vector<1x1x64x8xbf16> to vector<64x8xbf16>
    %4 = arith.extf %3 : vector<64x8xbf16> to vector<64x8xf32>
    %c0_7 = arith.constant 0 : index
    %c1 = arith.constant 1 : index
    %c0_8 = arith.constant 0 : index
    %c0_9 = arith.constant 0 : index
    %5 = vector.load %arg1[%c0_7, %c1, %c0_8, %c0_9] : memref<1x4x64x8xbf16, #tpu.memory_space<vmem>>, vector<1x1x64x8xbf16>
    %6 = vector.shape_cast %5 : vector<1x1x64x8xbf16> to vector<64x8xbf16>
    %7 = arith.extf %6 : vector<64x8xbf16> to vector<64x8xf32>
    %c0_10 = arith.constant 0 : index
    %c2 = arith.constant 2 : index
    %c0_11 = arith.constant 0 : index
    %c0_12 = arith.constant 0 : index
    %8 = vector.load %arg1[%c0_10, %c2, %c0_11, %c0_12] : memref<1x4x64x8xbf16, #tpu.memory_space<vmem>>, vector<1x1x64x8xbf16>
    %9 = vector.shape_cast %8 : vector<1x1x64x8xbf16> to vector<64x8xbf16>
    %10 = arith.extf %9 : vector<64x8xbf16> to vector<64x8xf32>
    %c0_13 = arith.constant 0 : index
    %c3 = arith.constant 3 : index
    %c0_14 = arith.constant 0 : index
    %c0_15 = arith.constant 0 : index
    %11 = vector.load %arg1[%c0_13, %c3, %c0_14, %c0_15] : memref<1x4x64x8xbf16, #tpu.memory_space<vmem>>, vector<1x1x64x8xbf16>
    %12 = vector.shape_cast %11 : vector<1x1x64x8xbf16> to vector<64x8xbf16>
    %13 = arith.extf %12 : vector<64x8xbf16> to vector<64x8xf32>
    %c0_16 = arith.constant 0 : index
    %c0_17 = arith.constant 0 : index
    %c0_18 = arith.constant 0 : index
    %14 = vector.load %arg4[%c0_16, %c0_17, %c0_18] : memref<9x1x8xf32, #tpu.memory_space<vmem>>, vector<9x1x8xf32>
    %c0_19 = arith.constant 0 : index
    %c0_20 = arith.constant 0 : index
    %15 = vector.load %arg5[%c0_19, %c0_20] : memref<1x8xf32, #tpu.memory_space<vmem>>, vector<1x8xf32>
    %cst = arith.constant 0.000000e+00 : f32
    %16 = vector.broadcast %cst : f32 to vector<64x8xf32>
    %17 = vector.broadcast %15 : vector<1x8xf32> to vector<64x8xf32>
    %18 = arith.addf %16, %17 : vector<64x8xf32>
    %cst_21 = arith.constant 0.000000e+00 : f32
    %19 = vector.broadcast %cst_21 : f32 to vector<8x8xf32>
    %20 = vector.extract_strided_slice %13 {offsets = [0, 0], sizes = [56, 8], strides = [1, 1]} : vector<64x8xf32> to vector<56x8xf32>
    %21 = tpu.concatenate %19, %20 in 0 : vector<8x8xf32>, vector<56x8xf32> -> vector<64x8xf32>
    %cst_22 = arith.constant 0.000000e+00 : f32
    %22 = vector.broadcast %cst_22 : f32 to vector<1x8xf32>
    %23 = vector.extract_strided_slice %21 {offsets = [0, 0], sizes = [63, 8], strides = [1, 1]} : vector<64x8xf32> to vector<63x8xf32>
    %24 = tpu.concatenate %22, %23 in 0 : vector<1x8xf32>, vector<63x8xf32> -> vector<64x8xf32>
    %25 = vector.broadcast %0 : vector<64x1xf32> to vector<64x8xf32>
    %26 = arith.mulf %24, %25 : vector<64x8xf32>
    %27 = vector.extract_strided_slice %14 {offsets = [0, 0, 0], sizes = [1, 1, 8], strides = [1, 1, 1]} : vector<9x1x8xf32> to vector<1x1x8xf32>
    %28 = vector.shape_cast %27 : vector<1x1x8xf32> to vector<1x8xf32>
    %29 = vector.broadcast %28 : vector<1x8xf32> to vector<64x8xf32>
    %30 = arith.mulf %26, %29 : vector<64x8xf32>
    %31 = arith.addf %18, %30 : vector<64x8xf32>
    %cst_23 = arith.constant 0.000000e+00 : f32
    %32 = vector.broadcast %cst_23 : f32 to vector<8x8xf32>
    %33 = vector.extract_strided_slice %10 {offsets = [0, 0], sizes = [56, 8], strides = [1, 1]} : vector<64x8xf32> to vector<56x8xf32>
    %34 = tpu.concatenate %32, %33 in 0 : vector<8x8xf32>, vector<56x8xf32> -> vector<64x8xf32>
    %35 = vector.extract_strided_slice %14 {offsets = [1, 0, 0], sizes = [1, 1, 8], strides = [1, 1, 1]} : vector<9x1x8xf32> to vector<1x1x8xf32>
    %36 = vector.shape_cast %35 : vector<1x1x8xf32> to vector<1x8xf32>
    %37 = vector.broadcast %36 : vector<1x8xf32> to vector<64x8xf32>
    %38 = arith.mulf %34, %37 : vector<64x8xf32>
    %39 = arith.addf %31, %38 : vector<64x8xf32>
    %cst_24 = arith.constant 0.000000e+00 : f32
    %40 = vector.broadcast %cst_24 : f32 to vector<8x8xf32>
    %41 = vector.extract_strided_slice %13 {offsets = [0, 0], sizes = [56, 8], strides = [1, 1]} : vector<64x8xf32> to vector<56x8xf32>
    %42 = tpu.concatenate %40, %41 in 0 : vector<8x8xf32>, vector<56x8xf32> -> vector<64x8xf32>
    %43 = vector.extract_strided_slice %14 {offsets = [2, 0, 0], sizes = [1, 1, 8], strides = [1, 1, 1]} : vector<9x1x8xf32> to vector<1x1x8xf32>
    %44 = vector.shape_cast %43 : vector<1x1x8xf32> to vector<1x8xf32>
    %45 = vector.broadcast %44 : vector<1x8xf32> to vector<64x8xf32>
    %46 = arith.mulf %42, %45 : vector<64x8xf32>
    %47 = arith.addf %39, %46 : vector<64x8xf32>
    %cst_25 = arith.constant 0.000000e+00 : f32
    %48 = vector.broadcast %cst_25 : f32 to vector<1x8xf32>
    %49 = vector.extract_strided_slice %7 {offsets = [0, 0], sizes = [63, 8], strides = [1, 1]} : vector<64x8xf32> to vector<63x8xf32>
    %50 = tpu.concatenate %48, %49 in 0 : vector<1x8xf32>, vector<63x8xf32> -> vector<64x8xf32>
    %51 = vector.broadcast %0 : vector<64x1xf32> to vector<64x8xf32>
    %52 = arith.mulf %50, %51 : vector<64x8xf32>
    %53 = vector.extract_strided_slice %14 {offsets = [3, 0, 0], sizes = [1, 1, 8], strides = [1, 1, 1]} : vector<9x1x8xf32> to vector<1x1x8xf32>
    %54 = vector.shape_cast %53 : vector<1x1x8xf32> to vector<1x8xf32>
    %55 = vector.broadcast %54 : vector<1x8xf32> to vector<64x8xf32>
    %56 = arith.mulf %52, %55 : vector<64x8xf32>
    %57 = arith.addf %47, %56 : vector<64x8xf32>
    %58 = vector.extract_strided_slice %14 {offsets = [4, 0, 0], sizes = [1, 1, 8], strides = [1, 1, 1]} : vector<9x1x8xf32> to vector<1x1x8xf32>
    %59 = vector.shape_cast %58 : vector<1x1x8xf32> to vector<1x8xf32>
    %60 = vector.broadcast %59 : vector<1x8xf32> to vector<64x8xf32>
    %61 = arith.mulf %4, %60 : vector<64x8xf32>
    %62 = arith.addf %57, %61 : vector<64x8xf32>
    %63 = vector.extract_strided_slice %14 {offsets = [5, 0, 0], sizes = [1, 1, 8], strides = [1, 1, 1]} : vector<9x1x8xf32> to vector<1x1x8xf32>
    %64 = vector.shape_cast %63 : vector<1x1x8xf32> to vector<1x8xf32>
    %65 = vector.broadcast %64 : vector<1x8xf32> to vector<64x8xf32>
    %66 = arith.mulf %7, %65 : vector<64x8xf32>
    %67 = arith.addf %62, %66 : vector<64x8xf32>
    %cst_26 = arith.constant 0.000000e+00 : f32
    %68 = vector.broadcast %cst_26 : f32 to vector<1x8xf32>
    %69 = vector.extract_strided_slice %13 {offsets = [0, 0], sizes = [63, 8], strides = [1, 1]} : vector<64x8xf32> to vector<63x8xf32>
    %70 = tpu.concatenate %68, %69 in 0 : vector<1x8xf32>, vector<63x8xf32> -> vector<64x8xf32>
    %71 = vector.broadcast %0 : vector<64x1xf32> to vector<64x8xf32>
    %72 = arith.mulf %70, %71 : vector<64x8xf32>
    %73 = vector.extract_strided_slice %14 {offsets = [6, 0, 0], sizes = [1, 1, 8], strides = [1, 1, 1]} : vector<9x1x8xf32> to vector<1x1x8xf32>
    %74 = vector.shape_cast %73 : vector<1x1x8xf32> to vector<1x8xf32>
    %75 = vector.broadcast %74 : vector<1x8xf32> to vector<64x8xf32>
    %76 = arith.mulf %72, %75 : vector<64x8xf32>
    %77 = arith.addf %67, %76 : vector<64x8xf32>
    %78 = vector.extract_strided_slice %14 {offsets = [7, 0, 0], sizes = [1, 1, 8], strides = [1, 1, 1]} : vector<9x1x8xf32> to vector<1x1x8xf32>
    %79 = vector.shape_cast %78 : vector<1x1x8xf32> to vector<1x8xf32>
    %80 = vector.broadcast %79 : vector<1x8xf32> to vector<64x8xf32>
    %81 = arith.mulf %10, %80 : vector<64x8xf32>
    %82 = arith.addf %77, %81 : vector<64x8xf32>
    %83 = vector.extract_strided_slice %14 {offsets = [8, 0, 0], sizes = [1, 1, 8], strides = [1, 1, 1]} : vector<9x1x8xf32> to vector<1x1x8xf32>
    %84 = vector.shape_cast %83 : vector<1x1x8xf32> to vector<1x8xf32>
    %85 = vector.broadcast %84 : vector<1x8xf32> to vector<64x8xf32>
    %86 = arith.mulf %13, %85 : vector<64x8xf32>
    %87 = arith.addf %82, %86 : vector<64x8xf32>
    %88 = arith.truncf %87 : vector<64x8xf32> to vector<64x8xbf16>
    %c0_27 = arith.constant 0 : index
    %c0_28 = arith.constant 0 : index
    %89 = vector.load %arg6[%c0_27, %c0_28] : memref<8x16xbf16, #tpu.memory_space<vmem>>, vector<8x16xbf16>
    %cst_29 = arith.constant dense<0.000000e+00> : vector<64x16xf32>
    %90 = tpu.matmul %88, %89, %cst_29 {dimension_numbers = #tpu.dot_dimension_numbers<[1], [0], [0], [1], [0, 0, 1, 1], [], []>} : vector<64x8xbf16>, vector<8x16xbf16>, vector<64x16xf32> -> vector<64x16xf32>
    %c0_30 = arith.constant 0 : index
    %c0_31 = arith.constant 0 : index
    %91 = vector.load %arg7[%c0_30, %c0_31] : memref<1x16xf32, #tpu.memory_space<vmem>>, vector<1x16xf32>
    %92 = vector.broadcast %91 : vector<1x16xf32> to vector<64x16xf32>
    %93 = arith.addf %90, %92 : vector<64x16xf32>
    %cst_32 = arith.constant 0.000000e+00 : f32
    %94 = vector.broadcast %cst_32 : f32 to vector<64x16xf32>
    %95 = arith.maximumf %93, %94 : vector<64x16xf32>
    %96 = arith.truncf %4 : vector<64x8xf32> to vector<64x8xbf16>
    %c0_33 = arith.constant 0 : index
    %c0_34 = arith.constant 0 : index
    %97 = vector.load %arg8[%c0_33, %c0_34] : memref<8x8xbf16, #tpu.memory_space<vmem>>, vector<8x8xbf16>
    %cst_35 = arith.constant dense<0.000000e+00> : vector<64x8xf32>
    %98 = tpu.matmul %96, %97, %cst_35 {dimension_numbers = #tpu.dot_dimension_numbers<[1], [0], [0], [1], [0, 0, 1, 1], [], []>} : vector<64x8xbf16>, vector<8x8xbf16>, vector<64x8xf32> -> vector<64x8xf32>
    %c0_36 = arith.constant 0 : index
    %c0_37 = arith.constant 0 : index
    %99 = vector.load %arg9[%c0_36, %c0_37] : memref<1x8xf32, #tpu.memory_space<vmem>>, vector<1x8xf32>
    %100 = vector.broadcast %99 : vector<1x8xf32> to vector<64x8xf32>
    %101 = arith.addf %98, %100 : vector<64x8xf32>
    %cst_38 = arith.constant 0.000000e+00 : f32
    %102 = vector.broadcast %cst_38 : f32 to vector<64x8xf32>
    %103 = arith.maximumf %101, %102 : vector<64x8xf32>
    %104 = arith.truncf %7 : vector<64x8xf32> to vector<64x8xbf16>
    %c0_39 = arith.constant 0 : index
    %c0_40 = arith.constant 0 : index
    %105 = vector.load %arg8[%c0_39, %c0_40] : memref<8x8xbf16, #tpu.memory_space<vmem>>, vector<8x8xbf16>
    %cst_41 = arith.constant dense<0.000000e+00> : vector<64x8xf32>
    %106 = tpu.matmul %104, %105, %cst_41 {dimension_numbers = #tpu.dot_dimension_numbers<[1], [0], [0], [1], [0, 0, 1, 1], [], []>} : vector<64x8xbf16>, vector<8x8xbf16>, vector<64x8xf32> -> vector<64x8xf32>
    %c0_42 = arith.constant 0 : index
    %c0_43 = arith.constant 0 : index
    %107 = vector.load %arg9[%c0_42, %c0_43] : memref<1x8xf32, #tpu.memory_space<vmem>>, vector<1x8xf32>
    %108 = vector.broadcast %107 : vector<1x8xf32> to vector<64x8xf32>
    %109 = arith.addf %106, %108 : vector<64x8xf32>
    %cst_44 = arith.constant 0.000000e+00 : f32
    %110 = vector.broadcast %cst_44 : f32 to vector<64x8xf32>
    %111 = arith.maximumf %109, %110 : vector<64x8xf32>
    %112 = arith.truncf %10 : vector<64x8xf32> to vector<64x8xbf16>
    %c0_45 = arith.constant 0 : index
    %c0_46 = arith.constant 0 : index
    %113 = vector.load %arg8[%c0_45, %c0_46] : memref<8x8xbf16, #tpu.memory_space<vmem>>, vector<8x8xbf16>
    %cst_47 = arith.constant dense<0.000000e+00> : vector<64x8xf32>
    %114 = tpu.matmul %112, %113, %cst_47 {dimension_numbers = #tpu.dot_dimension_numbers<[1], [0], [0], [1], [0, 0, 1, 1], [], []>} : vector<64x8xbf16>, vector<8x8xbf16>, vector<64x8xf32> -> vector<64x8xf32>
    %c0_48 = arith.constant 0 : index
    %c0_49 = arith.constant 0 : index
    %115 = vector.load %arg9[%c0_48, %c0_49] : memref<1x8xf32, #tpu.memory_space<vmem>>, vector<1x8xf32>
    %116 = vector.broadcast %115 : vector<1x8xf32> to vector<64x8xf32>
    %117 = arith.addf %114, %116 : vector<64x8xf32>
    %cst_50 = arith.constant 0.000000e+00 : f32
    %118 = vector.broadcast %cst_50 : f32 to vector<64x8xf32>
    %119 = arith.maximumf %117, %118 : vector<64x8xf32>
    %120 = arith.truncf %13 : vector<64x8xf32> to vector<64x8xbf16>
    %c0_51 = arith.constant 0 : index
    %c0_52 = arith.constant 0 : index
    %121 = vector.load %arg8[%c0_51, %c0_52] : memref<8x8xbf16, #tpu.memory_space<vmem>>, vector<8x8xbf16>
    %cst_53 = arith.constant dense<0.000000e+00> : vector<64x8xf32>
    %122 = tpu.matmul %120, %121, %cst_53 {dimension_numbers = #tpu.dot_dimension_numbers<[1], [0], [0], [1], [0, 0, 1, 1], [], []>} : vector<64x8xbf16>, vector<8x8xbf16>, vector<64x8xf32> -> vector<64x8xf32>
    %c0_54 = arith.constant 0 : index
    %c0_55 = arith.constant 0 : index
    %123 = vector.load %arg9[%c0_54, %c0_55] : memref<1x8xf32, #tpu.memory_space<vmem>>, vector<1x8xf32>
    %124 = vector.broadcast %123 : vector<1x8xf32> to vector<64x8xf32>
    %125 = arith.addf %122, %124 : vector<64x8xf32>
    %cst_56 = arith.constant 0.000000e+00 : f32
    %126 = vector.broadcast %cst_56 : f32 to vector<64x8xf32>
    %127 = arith.maximumf %125, %126 : vector<64x8xf32>
    %c0_57 = arith.constant 0 : index
    %c0_58 = arith.constant 0 : index
    %c0_59 = arith.constant 0 : index
    %128 = vector.load %arg10[%c0_57, %c0_58, %c0_59] : memref<9x1x8xf32, #tpu.memory_space<vmem>>, vector<9x1x8xf32>
    %c0_60 = arith.constant 0 : index
    %c0_61 = arith.constant 0 : index
    %129 = vector.load %arg11[%c0_60, %c0_61] : memref<1x8xf32, #tpu.memory_space<vmem>>, vector<1x8xf32>
    %cst_62 = arith.constant 0.000000e+00 : f32
    %130 = vector.broadcast %cst_62 : f32 to vector<64x8xf32>
    %131 = vector.broadcast %129 : vector<1x8xf32> to vector<64x8xf32>
    %132 = arith.addf %130, %131 : vector<64x8xf32>
    %cst_63 = arith.constant 0.000000e+00 : f32
    %133 = vector.broadcast %cst_63 : f32 to vector<8x8xf32>
    %134 = vector.extract_strided_slice %127 {offsets = [0, 0], sizes = [56, 8], strides = [1, 1]} : vector<64x8xf32> to vector<56x8xf32>
    %135 = tpu.concatenate %133, %134 in 0 : vector<8x8xf32>, vector<56x8xf32> -> vector<64x8xf32>
    %cst_64 = arith.constant 0.000000e+00 : f32
    %136 = vector.broadcast %cst_64 : f32 to vector<1x8xf32>
    %137 = vector.extract_strided_slice %135 {offsets = [0, 0], sizes = [63, 8], strides = [1, 1]} : vector<64x8xf32> to vector<63x8xf32>
    %138 = tpu.concatenate %136, %137 in 0 : vector<1x8xf32>, vector<63x8xf32> -> vector<64x8xf32>
    %139 = vector.broadcast %0 : vector<64x1xf32> to vector<64x8xf32>
    %140 = arith.mulf %138, %139 : vector<64x8xf32>
    %141 = vector.extract_strided_slice %128 {offsets = [0, 0, 0], sizes = [1, 1, 8], strides = [1, 1, 1]} : vector<9x1x8xf32> to vector<1x1x8xf32>
    %142 = vector.shape_cast %141 : vector<1x1x8xf32> to vector<1x8xf32>
    %143 = vector.broadcast %142 : vector<1x8xf32> to vector<64x8xf32>
    %144 = arith.mulf %140, %143 : vector<64x8xf32>
    %145 = arith.addf %132, %144 : vector<64x8xf32>
    %cst_65 = arith.constant 0.000000e+00 : f32
    %146 = vector.broadcast %cst_65 : f32 to vector<8x8xf32>
    %147 = vector.extract_strided_slice %119 {offsets = [0, 0], sizes = [56, 8], strides = [1, 1]} : vector<64x8xf32> to vector<56x8xf32>
    %148 = tpu.concatenate %146, %147 in 0 : vector<8x8xf32>, vector<56x8xf32> -> vector<64x8xf32>
    %149 = vector.extract_strided_slice %128 {offsets = [1, 0, 0], sizes = [1, 1, 8], strides = [1, 1, 1]} : vector<9x1x8xf32> to vector<1x1x8xf32>
    %150 = vector.shape_cast %149 : vector<1x1x8xf32> to vector<1x8xf32>
    %151 = vector.broadcast %150 : vector<1x8xf32> to vector<64x8xf32>
    %152 = arith.mulf %148, %151 : vector<64x8xf32>
    %153 = arith.addf %145, %152 : vector<64x8xf32>
    %cst_66 = arith.constant 0.000000e+00 : f32
    %154 = vector.broadcast %cst_66 : f32 to vector<8x8xf32>
    %155 = vector.extract_strided_slice %127 {offsets = [0, 0], sizes = [56, 8], strides = [1, 1]} : vector<64x8xf32> to vector<56x8xf32>
    %156 = tpu.concatenate %154, %155 in 0 : vector<8x8xf32>, vector<56x8xf32> -> vector<64x8xf32>
    %157 = vector.extract_strided_slice %128 {offsets = [2, 0, 0], sizes = [1, 1, 8], strides = [1, 1, 1]} : vector<9x1x8xf32> to vector<1x1x8xf32>
    %158 = vector.shape_cast %157 : vector<1x1x8xf32> to vector<1x8xf32>
    %159 = vector.broadcast %158 : vector<1x8xf32> to vector<64x8xf32>
    %160 = arith.mulf %156, %159 : vector<64x8xf32>
    %161 = arith.addf %153, %160 : vector<64x8xf32>
    %cst_67 = arith.constant 0.000000e+00 : f32
    %162 = vector.broadcast %cst_67 : f32 to vector<1x8xf32>
    %163 = vector.extract_strided_slice %111 {offsets = [0, 0], sizes = [63, 8], strides = [1, 1]} : vector<64x8xf32> to vector<63x8xf32>
    %164 = tpu.concatenate %162, %163 in 0 : vector<1x8xf32>, vector<63x8xf32> -> vector<64x8xf32>
    %165 = vector.broadcast %0 : vector<64x1xf32> to vector<64x8xf32>
    %166 = arith.mulf %164, %165 : vector<64x8xf32>
    %167 = vector.extract_strided_slice %128 {offsets = [3, 0, 0], sizes = [1, 1, 8], strides = [1, 1, 1]} : vector<9x1x8xf32> to vector<1x1x8xf32>
    %168 = vector.shape_cast %167 : vector<1x1x8xf32> to vector<1x8xf32>
    %169 = vector.broadcast %168 : vector<1x8xf32> to vector<64x8xf32>
    %170 = arith.mulf %166, %169 : vector<64x8xf32>
    %171 = arith.addf %161, %170 : vector<64x8xf32>
    %172 = vector.extract_strided_slice %128 {offsets = [4, 0, 0], sizes = [1, 1, 8], strides = [1, 1, 1]} : vector<9x1x8xf32> to vector<1x1x8xf32>
    %173 = vector.shape_cast %172 : vector<1x1x8xf32> to vector<1x8xf32>
    %174 = vector.broadcast %173 : vector<1x8xf32> to vector<64x8xf32>
    %175 = arith.mulf %103, %174 : vector<64x8xf32>
    %176 = arith.addf %171, %175 : vector<64x8xf32>
    %177 = vector.extract_strided_slice %128 {offsets = [5, 0, 0], sizes = [1, 1, 8], strides = [1, 1, 1]} : vector<9x1x8xf32> to vector<1x1x8xf32>
    %178 = vector.shape_cast %177 : vector<1x1x8xf32> to vector<1x8xf32>
    %179 = vector.broadcast %178 : vector<1x8xf32> to vector<64x8xf32>
    %180 = arith.mulf %111, %179 : vector<64x8xf32>
    %181 = arith.addf %176, %180 : vector<64x8xf32>
    %cst_68 = arith.constant 0.000000e+00 : f32
    %182 = vector.broadcast %cst_68 : f32 to vector<1x8xf32>
    %183 = vector.extract_strided_slice %127 {offsets = [0, 0], sizes = [63, 8], strides = [1, 1]} : vector<64x8xf32> to vector<63x8xf32>
    %184 = tpu.concatenate %182, %183 in 0 : vector<1x8xf32>, vector<63x8xf32> -> vector<64x8xf32>
    %185 = vector.broadcast %0 : vector<64x1xf32> to vector<64x8xf32>
    %186 = arith.mulf %184, %185 : vector<64x8xf32>
    %187 = vector.extract_strided_slice %128 {offsets = [6, 0, 0], sizes = [1, 1, 8], strides = [1, 1, 1]} : vector<9x1x8xf32> to vector<1x1x8xf32>
    %188 = vector.shape_cast %187 : vector<1x1x8xf32> to vector<1x8xf32>
    %189 = vector.broadcast %188 : vector<1x8xf32> to vector<64x8xf32>
    %190 = arith.mulf %186, %189 : vector<64x8xf32>
    %191 = arith.addf %181, %190 : vector<64x8xf32>
    %192 = vector.extract_strided_slice %128 {offsets = [7, 0, 0], sizes = [1, 1, 8], strides = [1, 1, 1]} : vector<9x1x8xf32> to vector<1x1x8xf32>
    %193 = vector.shape_cast %192 : vector<1x1x8xf32> to vector<1x8xf32>
    %194 = vector.broadcast %193 : vector<1x8xf32> to vector<64x8xf32>
    %195 = arith.mulf %119, %194 : vector<64x8xf32>
    %196 = arith.addf %191, %195 : vector<64x8xf32>
    %197 = vector.extract_strided_slice %128 {offsets = [8, 0, 0], sizes = [1, 1, 8], strides = [1, 1, 1]} : vector<9x1x8xf32> to vector<1x1x8xf32>
    %198 = vector.shape_cast %197 : vector<1x1x8xf32> to vector<1x8xf32>
    %199 = vector.broadcast %198 : vector<1x8xf32> to vector<64x8xf32>
    %200 = arith.mulf %127, %199 : vector<64x8xf32>
    %201 = arith.addf %196, %200 : vector<64x8xf32>
    %202 = arith.truncf %201 : vector<64x8xf32> to vector<64x8xbf16>
    %c0_69 = arith.constant 0 : index
    %c0_70 = arith.constant 0 : index
    %203 = vector.load %arg12[%c0_69, %c0_70] : memref<8x16xbf16, #tpu.memory_space<vmem>>, vector<8x16xbf16>
    %cst_71 = arith.constant dense<0.000000e+00> : vector<64x16xf32>
    %204 = tpu.matmul %202, %203, %cst_71 {dimension_numbers = #tpu.dot_dimension_numbers<[1], [0], [0], [1], [0, 0, 1, 1], [], []>} : vector<64x8xbf16>, vector<8x16xbf16>, vector<64x16xf32> -> vector<64x16xf32>
    %c0_72 = arith.constant 0 : index
    %c0_73 = arith.constant 0 : index
    %205 = vector.load %arg13[%c0_72, %c0_73] : memref<1x16xf32, #tpu.memory_space<vmem>>, vector<1x16xf32>
    %206 = vector.broadcast %205 : vector<1x16xf32> to vector<64x16xf32>
    %207 = arith.addf %204, %206 : vector<64x16xf32>
    %cst_74 = arith.constant 0.000000e+00 : f32
    %208 = vector.broadcast %cst_74 : f32 to vector<64x16xf32>
    %209 = arith.maximumf %207, %208 : vector<64x16xf32>
    %210 = arith.addf %95, %209 : vector<64x16xf32>
    %211 = arith.truncf %210 : vector<64x16xf32> to vector<64x16xbf16>
    %c0_75 = arith.constant 0 : index
    %c0_76 = arith.constant 0 : index
    %212 = vector.load %arg14[%c0_75, %c0_76] : memref<16x8xbf16, #tpu.memory_space<vmem>>, vector<16x8xbf16>
    %cst_77 = arith.constant dense<0.000000e+00> : vector<64x8xf32>
    %213 = tpu.matmul %211, %212, %cst_77 {dimension_numbers = #tpu.dot_dimension_numbers<[1], [0], [0], [1], [0, 0, 1, 1], [], []>} : vector<64x16xbf16>, vector<16x8xbf16>, vector<64x8xf32> -> vector<64x8xf32>
    %c0_78 = arith.constant 0 : index
    %c0_79 = arith.constant 0 : index
    %214 = vector.load %arg15[%c0_78, %c0_79] : memref<1x8xf32, #tpu.memory_space<vmem>>, vector<1x8xf32>
    %215 = vector.broadcast %214 : vector<1x8xf32> to vector<64x8xf32>
    %216 = arith.addf %213, %215 : vector<64x8xf32>
    %cst_80 = arith.constant 0.000000e+00 : f32
    %217 = vector.broadcast %cst_80 : f32 to vector<64x8xf32>
    %218 = arith.maximumf %216, %217 : vector<64x8xf32>
    %c0_81 = arith.constant 0 : index
    %c0_82 = arith.constant 0 : index
    %c0_83 = arith.constant 0 : index
    %219 = vector.load %arg16[%c0_81, %c0_82, %c0_83] : memref<9x1x8xf32, #tpu.memory_space<vmem>>, vector<9x1x8xf32>
    %c0_84 = arith.constant 0 : index
    %c0_85 = arith.constant 0 : index
    %220 = vector.load %arg17[%c0_84, %c0_85] : memref<1x8xf32, #tpu.memory_space<vmem>>, vector<1x8xf32>
    %cst_86 = arith.constant 0.000000e+00 : f32
    %221 = vector.broadcast %cst_86 : f32 to vector<64x8xf32>
    %222 = vector.broadcast %220 : vector<1x8xf32> to vector<64x8xf32>
    %223 = arith.addf %221, %222 : vector<64x8xf32>
    %cst_87 = arith.constant 0.000000e+00 : f32
    %224 = vector.broadcast %cst_87 : f32 to vector<9x8xf32>
    %225 = vector.extract_strided_slice %218 {offsets = [0, 0], sizes = [55, 8], strides = [1, 1]} : vector<64x8xf32> to vector<55x8xf32>
    %226 = tpu.concatenate %224, %225 in 0 : vector<9x8xf32>, vector<55x8xf32> -> vector<64x8xf32>
    %227 = vector.broadcast %0 : vector<64x1xf32> to vector<64x8xf32>
    %228 = arith.mulf %226, %227 : vector<64x8xf32>
    %229 = vector.extract_strided_slice %219 {offsets = [0, 0, 0], sizes = [1, 1, 8], strides = [1, 1, 1]} : vector<9x1x8xf32> to vector<1x1x8xf32>
    %230 = vector.shape_cast %229 : vector<1x1x8xf32> to vector<1x8xf32>
    %231 = vector.broadcast %230 : vector<1x8xf32> to vector<64x8xf32>
    %232 = arith.mulf %228, %231 : vector<64x8xf32>
    %233 = arith.addf %223, %232 : vector<64x8xf32>
    %cst_88 = arith.constant 0.000000e+00 : f32
    %234 = vector.broadcast %cst_88 : f32 to vector<8x8xf32>
    %235 = vector.extract_strided_slice %218 {offsets = [0, 0], sizes = [56, 8], strides = [1, 1]} : vector<64x8xf32> to vector<56x8xf32>
    %236 = tpu.concatenate %234, %235 in 0 : vector<8x8xf32>, vector<56x8xf32> -> vector<64x8xf32>
    %237 = vector.extract_strided_slice %219 {offsets = [1, 0, 0], sizes = [1, 1, 8], strides = [1, 1, 1]} : vector<9x1x8xf32> to vector<1x1x8xf32>
    %238 = vector.shape_cast %237 : vector<1x1x8xf32> to vector<1x8xf32>
    %239 = vector.broadcast %238 : vector<1x8xf32> to vector<64x8xf32>
    %240 = arith.mulf %236, %239 : vector<64x8xf32>
    %241 = arith.addf %233, %240 : vector<64x8xf32>
    %cst_89 = arith.constant 0.000000e+00 : f32
    %242 = vector.broadcast %cst_89 : f32 to vector<7x8xf32>
    %243 = vector.extract_strided_slice %218 {offsets = [0, 0], sizes = [57, 8], strides = [1, 1]} : vector<64x8xf32> to vector<57x8xf32>
    %244 = tpu.concatenate %242, %243 in 0 : vector<7x8xf32>, vector<57x8xf32> -> vector<64x8xf32>
    %245 = vector.broadcast %1 : vector<64x1xf32> to vector<64x8xf32>
    %246 = arith.mulf %244, %245 : vector<64x8xf32>
    %247 = vector.extract_strided_slice %219 {offsets = [2, 0, 0], sizes = [1, 1, 8], strides = [1, 1, 1]} : vector<9x1x8xf32> to vector<1x1x8xf32>
    %248 = vector.shape_cast %247 : vector<1x1x8xf32> to vector<1x8xf32>
    %249 = vector.broadcast %248 : vector<1x8xf32> to vector<64x8xf32>
    %250 = arith.mulf %246, %249 : vector<64x8xf32>
    %251 = arith.addf %241, %250 : vector<64x8xf32>
    %cst_90 = arith.constant 0.000000e+00 : f32
    %252 = vector.broadcast %cst_90 : f32 to vector<1x8xf32>
    %253 = vector.extract_strided_slice %218 {offsets = [0, 0], sizes = [63, 8], strides = [1, 1]} : vector<64x8xf32> to vector<63x8xf32>
    %254 = tpu.concatenate %252, %253 in 0 : vector<1x8xf32>, vector<63x8xf32> -> vector<64x8xf32>
    %255 = vector.broadcast %0 : vector<64x1xf32> to vector<64x8xf32>
    %256 = arith.mulf %254, %255 : vector<64x8xf32>
    %257 = vector.extract_strided_slice %219 {offsets = [3, 0, 0], sizes = [1, 1, 8], strides = [1, 1, 1]} : vector<9x1x8xf32> to vector<1x1x8xf32>
    %258 = vector.shape_cast %257 : vector<1x1x8xf32> to vector<1x8xf32>
    %259 = vector.broadcast %258 : vector<1x8xf32> to vector<64x8xf32>
    %260 = arith.mulf %256, %259 : vector<64x8xf32>
    %261 = arith.addf %251, %260 : vector<64x8xf32>
    %262 = vector.extract_strided_slice %219 {offsets = [4, 0, 0], sizes = [1, 1, 8], strides = [1, 1, 1]} : vector<9x1x8xf32> to vector<1x1x8xf32>
    %263 = vector.shape_cast %262 : vector<1x1x8xf32> to vector<1x8xf32>
    %264 = vector.broadcast %263 : vector<1x8xf32> to vector<64x8xf32>
    %265 = arith.mulf %218, %264 : vector<64x8xf32>
    %266 = arith.addf %261, %265 : vector<64x8xf32>
    %cst_91 = arith.constant 0.000000e+00 : f32
    %267 = vector.broadcast %cst_91 : f32 to vector<1x8xf32>
    %268 = vector.extract_strided_slice %218 {offsets = [1, 0], sizes = [63, 8], strides = [1, 1]} : vector<64x8xf32> to vector<63x8xf32>
    %269 = tpu.concatenate %268, %267 in 0 : vector<63x8xf32>, vector<1x8xf32> -> vector<64x8xf32>
    %270 = vector.broadcast %1 : vector<64x1xf32> to vector<64x8xf32>
    %271 = arith.mulf %269, %270 : vector<64x8xf32>
    %272 = vector.extract_strided_slice %219 {offsets = [5, 0, 0], sizes = [1, 1, 8], strides = [1, 1, 1]} : vector<9x1x8xf32> to vector<1x1x8xf32>
    %273 = vector.shape_cast %272 : vector<1x1x8xf32> to vector<1x8xf32>
    %274 = vector.broadcast %273 : vector<1x8xf32> to vector<64x8xf32>
    %275 = arith.mulf %271, %274 : vector<64x8xf32>
    %276 = arith.addf %266, %275 : vector<64x8xf32>
    %cst_92 = arith.constant 0.000000e+00 : f32
    %277 = vector.broadcast %cst_92 : f32 to vector<7x8xf32>
    %278 = vector.extract_strided_slice %218 {offsets = [7, 0], sizes = [57, 8], strides = [1, 1]} : vector<64x8xf32> to vector<57x8xf32>
    %279 = tpu.concatenate %278, %277 in 0 : vector<57x8xf32>, vector<7x8xf32> -> vector<64x8xf32>
    %280 = vector.broadcast %0 : vector<64x1xf32> to vector<64x8xf32>
    %281 = arith.mulf %279, %280 : vector<64x8xf32>
    %282 = vector.extract_strided_slice %219 {offsets = [6, 0, 0], sizes = [1, 1, 8], strides = [1, 1, 1]} : vector<9x1x8xf32> to vector<1x1x8xf32>
    %283 = vector.shape_cast %282 : vector<1x1x8xf32> to vector<1x8xf32>
    %284 = vector.broadcast %283 : vector<1x8xf32> to vector<64x8xf32>
    %285 = arith.mulf %281, %284 : vector<64x8xf32>
    %286 = arith.addf %276, %285 : vector<64x8xf32>
    %cst_93 = arith.constant 0.000000e+00 : f32
    %287 = vector.broadcast %cst_93 : f32 to vector<8x8xf32>
    %288 = vector.extract_strided_slice %218 {offsets = [8, 0], sizes = [56, 8], strides = [1, 1]} : vector<64x8xf32> to vector<56x8xf32>
    %289 = tpu.concatenate %288, %287 in 0 : vector<56x8xf32>, vector<8x8xf32> -> vector<64x8xf32>
    %290 = vector.extract_strided_slice %219 {offsets = [7, 0, 0], sizes = [1, 1, 8], strides = [1, 1, 1]} : vector<9x1x8xf32> to vector<1x1x8xf32>
    %291 = vector.shape_cast %290 : vector<1x1x8xf32> to vector<1x8xf32>
    %292 = vector.broadcast %291 : vector<1x8xf32> to vector<64x8xf32>
    %293 = arith.mulf %289, %292 : vector<64x8xf32>
    %294 = arith.addf %286, %293 : vector<64x8xf32>
    %cst_94 = arith.constant 0.000000e+00 : f32
    %295 = vector.broadcast %cst_94 : f32 to vector<9x8xf32>
    %296 = vector.extract_strided_slice %218 {offsets = [9, 0], sizes = [55, 8], strides = [1, 1]} : vector<64x8xf32> to vector<55x8xf32>
    %297 = tpu.concatenate %296, %295 in 0 : vector<55x8xf32>, vector<9x8xf32> -> vector<64x8xf32>
    %298 = vector.broadcast %1 : vector<64x1xf32> to vector<64x8xf32>
    %299 = arith.mulf %297, %298 : vector<64x8xf32>
    %300 = vector.extract_strided_slice %219 {offsets = [8, 0, 0], sizes = [1, 1, 8], strides = [1, 1, 1]} : vector<9x1x8xf32> to vector<1x1x8xf32>
    %301 = vector.shape_cast %300 : vector<1x1x8xf32> to vector<1x8xf32>
    %302 = vector.broadcast %301 : vector<1x8xf32> to vector<64x8xf32>
    %303 = arith.mulf %299, %302 : vector<64x8xf32>
    %304 = arith.addf %294, %303 : vector<64x8xf32>
    %305 = arith.truncf %304 : vector<64x8xf32> to vector<64x8xbf16>
    %c0_95 = arith.constant 0 : index
    %c0_96 = arith.constant 0 : index
    %306 = vector.load %arg18[%c0_95, %c0_96] : memref<8x16xbf16, #tpu.memory_space<vmem>>, vector<8x16xbf16>
    %cst_97 = arith.constant dense<0.000000e+00> : vector<64x16xf32>
    %307 = tpu.matmul %305, %306, %cst_97 {dimension_numbers = #tpu.dot_dimension_numbers<[1], [0], [0], [1], [0, 0, 1, 1], [], []>} : vector<64x8xbf16>, vector<8x16xbf16>, vector<64x16xf32> -> vector<64x16xf32>
    %c0_98 = arith.constant 0 : index
    %c0_99 = arith.constant 0 : index
    %308 = vector.load %arg19[%c0_98, %c0_99] : memref<1x16xf32, #tpu.memory_space<vmem>>, vector<1x16xf32>
    %309 = vector.broadcast %308 : vector<1x16xf32> to vector<64x16xf32>
    %310 = arith.addf %307, %309 : vector<64x16xf32>
    %cst_100 = arith.constant 0.000000e+00 : f32
    %311 = vector.broadcast %cst_100 : f32 to vector<64x16xf32>
    %312 = arith.maximumf %310, %311 : vector<64x16xf32>
    %c0_101 = arith.constant 0 : index
    %c0_102 = arith.constant 0 : index
    %313 = vector.load %arg20[%c0_101, %c0_102] : memref<1x16xf32, #tpu.memory_space<vmem>>, vector<1x16xf32>
    %314 = vector.broadcast %313 : vector<1x16xf32> to vector<64x16xf32>
    %315 = arith.mulf %210, %314 : vector<64x16xf32>
    %316 = arith.addf %315, %312 : vector<64x16xf32>
    %317 = arith.truncf %316 : vector<64x16xf32> to vector<64x16xbf16>
    %c0_103 = arith.constant 0 : index
    %c0_104 = arith.constant 0 : index
    %c0_105 = arith.constant 0 : index
    %318 = vector.load %arg21[%c0_103, %c0_104, %c0_105] : memref<1x64x16xbf16, #tpu.memory_space<vmem>>, vector<1x64x16xbf16>
    %319 = vector.shape_cast %318 : vector<1x64x16xbf16> to vector<64x16xbf16>
    %320 = vector.shape_cast %317 : vector<64x16xbf16> to vector<1x64x16xbf16>
    tpu.vector_store %arg21[%c0_103, %c0_104, %c0_105], %320 {strides = array<i32>} : memref<1x64x16xbf16, #tpu.memory_space<vmem>>, vector<1x64x16xbf16>,
    return
  }
  func.func @transform_0(%arg0: i32) -> (i32, i32, i32, i32) {
    %c0_i32 = arith.constant 0 : i32
    %c0_i32_0 = arith.constant 0 : i32
    %c0_i32_1 = arith.constant 0 : i32
    %c0_i32_2 = arith.constant 0 : i32
    return %arg0, %c0_i32, %c0_i32_0, %c0_i32_1 : i32, i32, i32, i32
  }
  func.func @transform_1(%arg0: i32) -> (i32, i32) {
    %c0_i32 = arith.constant 0 : i32
    %c0_i32_0 = arith.constant 0 : i32
    %c0_i32_1 = arith.constant 0 : i32
    return %c0_i32, %c0_i32_0 : i32, i32
  }
  func.func @transform_2(%arg0: i32) -> (i32, i32) {
    %c0_i32 = arith.constant 0 : i32
    %c0_i32_0 = arith.constant 0 : i32
    %c0_i32_1 = arith.constant 0 : i32
    return %c0_i32, %c0_i32_0 : i32, i32
  }
  func.func @transform_3(%arg0: i32) -> (i32, i32, i32) {
    %c0_i32 = arith.constant 0 : i32
    %c0_i32_0 = arith.constant 0 : i32
    %c0_i32_1 = arith.constant 0 : i32
    %c0_i32_2 = arith.constant 0 : i32
    return %c0_i32, %c0_i32_0, %c0_i32_1 : i32, i32, i32
  }
  func.func @transform_4(%arg0: i32) -> (i32, i32) {
    %c0_i32 = arith.constant 0 : i32
    %c0_i32_0 = arith.constant 0 : i32
    %c0_i32_1 = arith.constant 0 : i32
    return %c0_i32, %c0_i32_0 : i32, i32
  }
  func.func @transform_5(%arg0: i32) -> (i32, i32) {
    %c0_i32 = arith.constant 0 : i32
    %c0_i32_0 = arith.constant 0 : i32
    %c0_i32_1 = arith.constant 0 : i32
    return %c0_i32, %c0_i32_0 : i32, i32
  }
  func.func @transform_6(%arg0: i32) -> (i32, i32) {
    %c0_i32 = arith.constant 0 : i32
    %c0_i32_0 = arith.constant 0 : i32
    %c0_i32_1 = arith.constant 0 : i32
    return %c0_i32, %c0_i32_0 : i32, i32
  }
  func.func @transform_7(%arg0: i32) -> (i32, i32) {
    %c0_i32 = arith.constant 0 : i32
    %c0_i32_0 = arith.constant 0 : i32
    %c0_i32_1 = arith.constant 0 : i32
    return %c0_i32, %c0_i32_0 : i32, i32
  }
  func.func @transform_8(%arg0: i32) -> (i32, i32) {
    %c0_i32 = arith.constant 0 : i32
    %c0_i32_0 = arith.constant 0 : i32
    %c0_i32_1 = arith.constant 0 : i32
    return %c0_i32, %c0_i32_0 : i32, i32
  }
  func.func @transform_9(%arg0: i32) -> (i32, i32, i32) {
    %c0_i32 = arith.constant 0 : i32
    %c0_i32_0 = arith.constant 0 : i32
    %c0_i32_1 = arith.constant 0 : i32
    %c0_i32_2 = arith.constant 0 : i32
    return %c0_i32, %c0_i32_0, %c0_i32_1 : i32, i32, i32
  }
  func.func @transform_10(%arg0: i32) -> (i32, i32) {
    %c0_i32 = arith.constant 0 : i32
    %c0_i32_0 = arith.constant 0 : i32
    %c0_i32_1 = arith.constant 0 : i32
    return %c0_i32, %c0_i32_0 : i32, i32
  }
  func.func @transform_11(%arg0: i32) -> (i32, i32) {
    %c0_i32 = arith.constant 0 : i32
    %c0_i32_0 = arith.constant 0 : i32
    %c0_i32_1 = arith.constant 0 : i32
    return %c0_i32, %c0_i32_0 : i32, i32
  }
  func.func @transform_12(%arg0: i32) -> (i32, i32) {
    %c0_i32 = arith.constant 0 : i32
    %c0_i32_0 = arith.constant 0 : i32
    %c0_i32_1 = arith.constant 0 : i32
    return %c0_i32, %c0_i32_0 : i32, i32
  }
  func.func @transform_13(%arg0: i32) -> (i32, i32) {
    %c0_i32 = arith.constant 0 : i32
    %c0_i32_0 = arith.constant 0 : i32
    %c0_i32_1 = arith.constant 0 : i32
    return %c0_i32, %c0_i32_0 : i32, i32
  }
  func.func @transform_14(%arg0: i32) -> (i32, i32) {
    %c0_i32 = arith.constant 0 : i32
    %c0_i32_0 = arith.constant 0 : i32
    %c0_i32_1 = arith.constant 0 : i32
    return %c0_i32, %c0_i32_0 : i32, i32
  }
  func.func @transform_15(%arg0: i32) -> (i32, i32, i32) {
    %c0_i32 = arith.constant 0 : i32
    %c0_i32_0 = arith.constant 0 : i32
    %c0_i32_1 = arith.constant 0 : i32
    %c0_i32_2 = arith.constant 0 : i32
    return %c0_i32, %c0_i32_0, %c0_i32_1 : i32, i32, i32
  }
  func.func @transform_16(%arg0: i32) -> (i32, i32) {
    %c0_i32 = arith.constant 0 : i32
    %c0_i32_0 = arith.constant 0 : i32
    %c0_i32_1 = arith.constant 0 : i32
    return %c0_i32, %c0_i32_0 : i32, i32
  }
  func.func @transform_17(%arg0: i32) -> (i32, i32) {
    %c0_i32 = arith.constant 0 : i32
    %c0_i32_0 = arith.constant 0 : i32
    %c0_i32_1 = arith.constant 0 : i32
    return %c0_i32, %c0_i32_0 : i32, i32
  }
  func.func @transform_18(%arg0: i32) -> (i32, i32) {
    %c0_i32 = arith.constant 0 : i32
    %c0_i32_0 = arith.constant 0 : i32
    %c0_i32_1 = arith.constant 0 : i32
    return %c0_i32, %c0_i32_0 : i32, i32
  }
  func.func @transform_19(%arg0: i32) -> (i32, i32) {
    %c0_i32 = arith.constant 0 : i32
    %c0_i32_0 = arith.constant 0 : i32
    %c0_i32_1 = arith.constant 0 : i32
    return %c0_i32, %c0_i32_0 : i32, i32
  }
  func.func @transform_20(%arg0: i32) -> (i32, i32, i32) {
    %c0_i32 = arith.constant 0 : i32
    %c0_i32_0 = arith.constant 0 : i32
    %c0_i32_1 = arith.constant 0 : i32
    return %arg0, %c0_i32, %c0_i32_0 : i32, i32, i32
  }
}

module attributes {stable_mosaic.version = 11 : i64} {
  func.func @_stage_body(%arg0: i32, %arg1: memref<1x4x16x16xbf16, #tpu.memory_space<vmem>>, %arg2: memref<16x1xf32, #tpu.memory_space<vmem>>, %arg3: memref<16x1xf32, #tpu.memory_space<vmem>>, %arg4: memref<9x1x16xf32, #tpu.memory_space<vmem>>, %arg5: memref<1x16xf32, #tpu.memory_space<vmem>>, %arg6: memref<16x32xbf16, #tpu.memory_space<vmem>>, %arg7: memref<1x32xf32, #tpu.memory_space<vmem>>, %arg8: memref<16x16xbf16, #tpu.memory_space<vmem>>, %arg9: memref<1x16xf32, #tpu.memory_space<vmem>>, %arg10: memref<9x1x16xf32, #tpu.memory_space<vmem>>, %arg11: memref<1x16xf32, #tpu.memory_space<vmem>>, %arg12: memref<16x32xbf16, #tpu.memory_space<vmem>>, %arg13: memref<1x32xf32, #tpu.memory_space<vmem>>, %arg14: memref<32x16xbf16, #tpu.memory_space<vmem>>, %arg15: memref<1x16xf32, #tpu.memory_space<vmem>>, %arg16: memref<9x1x16xf32, #tpu.memory_space<vmem>>, %arg17: memref<1x16xf32, #tpu.memory_space<vmem>>, %arg18: memref<16x32xbf16, #tpu.memory_space<vmem>>, %arg19: memref<1x32xf32, #tpu.memory_space<vmem>>, %arg20: memref<1x32xf32, #tpu.memory_space<vmem>>, %arg21: memref<1x16x32xbf16, #tpu.memory_space<vmem>>) attributes {dimension_semantics = [#tpu.dimension_semantics<parallel>], iteration_bounds = array<i64: 2>, scalar_prefetch = 0 : i64, scratch_operands = 0 : i64, tpu.core_type = #tpu.core_type<tc>, window_params = [{transform_indices = @transform_0, window_bounds = array<i64: 1, 4, 16, 16>}, {pipeline_mode = #tpu.pipeline_mode<synchronous>, transform_indices = @transform_1, window_bounds = array<i64: 16, 1>}, {pipeline_mode = #tpu.pipeline_mode<synchronous>, transform_indices = @transform_2, window_bounds = array<i64: 16, 1>}, {pipeline_mode = #tpu.pipeline_mode<synchronous>, transform_indices = @transform_3, window_bounds = array<i64: 9, 1, 16>}, {pipeline_mode = #tpu.pipeline_mode<synchronous>, transform_indices = @transform_4, window_bounds = array<i64: 1, 16>}, {pipeline_mode = #tpu.pipeline_mode<synchronous>, transform_indices = @transform_5, window_bounds = array<i64: 16, 32>}, {pipeline_mode = #tpu.pipeline_mode<synchronous>, transform_indices = @transform_6, window_bounds = array<i64: 1, 32>}, {pipeline_mode = #tpu.pipeline_mode<synchronous>, transform_indices = @transform_7, window_bounds = array<i64: 16, 16>}, {pipeline_mode = #tpu.pipeline_mode<synchronous>, transform_indices = @transform_8, window_bounds = array<i64: 1, 16>}, {pipeline_mode = #tpu.pipeline_mode<synchronous>, transform_indices = @transform_9, window_bounds = array<i64: 9, 1, 16>}, {pipeline_mode = #tpu.pipeline_mode<synchronous>, transform_indices = @transform_10, window_bounds = array<i64: 1, 16>}, {pipeline_mode = #tpu.pipeline_mode<synchronous>, transform_indices = @transform_11, window_bounds = array<i64: 16, 32>}, {pipeline_mode = #tpu.pipeline_mode<synchronous>, transform_indices = @transform_12, window_bounds = array<i64: 1, 32>}, {pipeline_mode = #tpu.pipeline_mode<synchronous>, transform_indices = @transform_13, window_bounds = array<i64: 32, 16>}, {pipeline_mode = #tpu.pipeline_mode<synchronous>, transform_indices = @transform_14, window_bounds = array<i64: 1, 16>}, {pipeline_mode = #tpu.pipeline_mode<synchronous>, transform_indices = @transform_15, window_bounds = array<i64: 9, 1, 16>}, {pipeline_mode = #tpu.pipeline_mode<synchronous>, transform_indices = @transform_16, window_bounds = array<i64: 1, 16>}, {pipeline_mode = #tpu.pipeline_mode<synchronous>, transform_indices = @transform_17, window_bounds = array<i64: 16, 32>}, {pipeline_mode = #tpu.pipeline_mode<synchronous>, transform_indices = @transform_18, window_bounds = array<i64: 1, 32>}, {pipeline_mode = #tpu.pipeline_mode<synchronous>, transform_indices = @transform_19, window_bounds = array<i64: 1, 32>}, {transform_indices = @transform_20, window_bounds = array<i64: 1, 16, 32>}]} {
    %c0 = arith.constant 0 : index
    %c0_0 = arith.constant 0 : index
    %0 = vector.load %arg2[%c0, %c0_0] : memref<16x1xf32, #tpu.memory_space<vmem>>, vector<16x1xf32>
    %c0_1 = arith.constant 0 : index
    %c0_2 = arith.constant 0 : index
    %1 = vector.load %arg3[%c0_1, %c0_2] : memref<16x1xf32, #tpu.memory_space<vmem>>, vector<16x1xf32>
    %c0_3 = arith.constant 0 : index
    %c0_4 = arith.constant 0 : index
    %c0_5 = arith.constant 0 : index
    %c0_6 = arith.constant 0 : index
    %2 = vector.load %arg1[%c0_3, %c0_4, %c0_5, %c0_6] : memref<1x4x16x16xbf16, #tpu.memory_space<vmem>>, vector<1x1x16x16xbf16>
    %3 = vector.shape_cast %2 : vector<1x1x16x16xbf16> to vector<16x16xbf16>
    %4 = arith.extf %3 : vector<16x16xbf16> to vector<16x16xf32>
    %c0_7 = arith.constant 0 : index
    %c1 = arith.constant 1 : index
    %c0_8 = arith.constant 0 : index
    %c0_9 = arith.constant 0 : index
    %5 = vector.load %arg1[%c0_7, %c1, %c0_8, %c0_9] : memref<1x4x16x16xbf16, #tpu.memory_space<vmem>>, vector<1x1x16x16xbf16>
    %6 = vector.shape_cast %5 : vector<1x1x16x16xbf16> to vector<16x16xbf16>
    %7 = arith.extf %6 : vector<16x16xbf16> to vector<16x16xf32>
    %c0_10 = arith.constant 0 : index
    %c2 = arith.constant 2 : index
    %c0_11 = arith.constant 0 : index
    %c0_12 = arith.constant 0 : index
    %8 = vector.load %arg1[%c0_10, %c2, %c0_11, %c0_12] : memref<1x4x16x16xbf16, #tpu.memory_space<vmem>>, vector<1x1x16x16xbf16>
    %9 = vector.shape_cast %8 : vector<1x1x16x16xbf16> to vector<16x16xbf16>
    %10 = arith.extf %9 : vector<16x16xbf16> to vector<16x16xf32>
    %c0_13 = arith.constant 0 : index
    %c3 = arith.constant 3 : index
    %c0_14 = arith.constant 0 : index
    %c0_15 = arith.constant 0 : index
    %11 = vector.load %arg1[%c0_13, %c3, %c0_14, %c0_15] : memref<1x4x16x16xbf16, #tpu.memory_space<vmem>>, vector<1x1x16x16xbf16>
    %12 = vector.shape_cast %11 : vector<1x1x16x16xbf16> to vector<16x16xbf16>
    %13 = arith.extf %12 : vector<16x16xbf16> to vector<16x16xf32>
    %c0_16 = arith.constant 0 : index
    %c0_17 = arith.constant 0 : index
    %c0_18 = arith.constant 0 : index
    %14 = vector.load %arg4[%c0_16, %c0_17, %c0_18] : memref<9x1x16xf32, #tpu.memory_space<vmem>>, vector<9x1x16xf32>
    %c0_19 = arith.constant 0 : index
    %c0_20 = arith.constant 0 : index
    %15 = vector.load %arg5[%c0_19, %c0_20] : memref<1x16xf32, #tpu.memory_space<vmem>>, vector<1x16xf32>
    %cst = arith.constant 0.000000e+00 : f32
    %16 = vector.broadcast %cst : f32 to vector<16x16xf32>
    %17 = vector.broadcast %15 : vector<1x16xf32> to vector<16x16xf32>
    %18 = arith.addf %16, %17 : vector<16x16xf32>
    %cst_21 = arith.constant 0.000000e+00 : f32
    %19 = vector.broadcast %cst_21 : f32 to vector<4x16xf32>
    %20 = vector.extract_strided_slice %13 {offsets = [0, 0], sizes = [12, 16], strides = [1, 1]} : vector<16x16xf32> to vector<12x16xf32>
    %21 = tpu.concatenate %19, %20 in 0 : vector<4x16xf32>, vector<12x16xf32> -> vector<16x16xf32>
    %cst_22 = arith.constant 0.000000e+00 : f32
    %22 = vector.broadcast %cst_22 : f32 to vector<1x16xf32>
    %23 = vector.extract_strided_slice %21 {offsets = [0, 0], sizes = [15, 16], strides = [1, 1]} : vector<16x16xf32> to vector<15x16xf32>
    %24 = tpu.concatenate %22, %23 in 0 : vector<1x16xf32>, vector<15x16xf32> -> vector<16x16xf32>
    %25 = vector.broadcast %0 : vector<16x1xf32> to vector<16x16xf32>
    %26 = arith.mulf %24, %25 : vector<16x16xf32>
    %27 = vector.extract_strided_slice %14 {offsets = [0, 0, 0], sizes = [1, 1, 16], strides = [1, 1, 1]} : vector<9x1x16xf32> to vector<1x1x16xf32>
    %28 = vector.shape_cast %27 : vector<1x1x16xf32> to vector<1x16xf32>
    %29 = vector.broadcast %28 : vector<1x16xf32> to vector<16x16xf32>
    %30 = arith.mulf %26, %29 : vector<16x16xf32>
    %31 = arith.addf %18, %30 : vector<16x16xf32>
    %cst_23 = arith.constant 0.000000e+00 : f32
    %32 = vector.broadcast %cst_23 : f32 to vector<4x16xf32>
    %33 = vector.extract_strided_slice %10 {offsets = [0, 0], sizes = [12, 16], strides = [1, 1]} : vector<16x16xf32> to vector<12x16xf32>
    %34 = tpu.concatenate %32, %33 in 0 : vector<4x16xf32>, vector<12x16xf32> -> vector<16x16xf32>
    %35 = vector.extract_strided_slice %14 {offsets = [1, 0, 0], sizes = [1, 1, 16], strides = [1, 1, 1]} : vector<9x1x16xf32> to vector<1x1x16xf32>
    %36 = vector.shape_cast %35 : vector<1x1x16xf32> to vector<1x16xf32>
    %37 = vector.broadcast %36 : vector<1x16xf32> to vector<16x16xf32>
    %38 = arith.mulf %34, %37 : vector<16x16xf32>
    %39 = arith.addf %31, %38 : vector<16x16xf32>
    %cst_24 = arith.constant 0.000000e+00 : f32
    %40 = vector.broadcast %cst_24 : f32 to vector<4x16xf32>
    %41 = vector.extract_strided_slice %13 {offsets = [0, 0], sizes = [12, 16], strides = [1, 1]} : vector<16x16xf32> to vector<12x16xf32>
    %42 = tpu.concatenate %40, %41 in 0 : vector<4x16xf32>, vector<12x16xf32> -> vector<16x16xf32>
    %43 = vector.extract_strided_slice %14 {offsets = [2, 0, 0], sizes = [1, 1, 16], strides = [1, 1, 1]} : vector<9x1x16xf32> to vector<1x1x16xf32>
    %44 = vector.shape_cast %43 : vector<1x1x16xf32> to vector<1x16xf32>
    %45 = vector.broadcast %44 : vector<1x16xf32> to vector<16x16xf32>
    %46 = arith.mulf %42, %45 : vector<16x16xf32>
    %47 = arith.addf %39, %46 : vector<16x16xf32>
    %cst_25 = arith.constant 0.000000e+00 : f32
    %48 = vector.broadcast %cst_25 : f32 to vector<1x16xf32>
    %49 = vector.extract_strided_slice %7 {offsets = [0, 0], sizes = [15, 16], strides = [1, 1]} : vector<16x16xf32> to vector<15x16xf32>
    %50 = tpu.concatenate %48, %49 in 0 : vector<1x16xf32>, vector<15x16xf32> -> vector<16x16xf32>
    %51 = vector.broadcast %0 : vector<16x1xf32> to vector<16x16xf32>
    %52 = arith.mulf %50, %51 : vector<16x16xf32>
    %53 = vector.extract_strided_slice %14 {offsets = [3, 0, 0], sizes = [1, 1, 16], strides = [1, 1, 1]} : vector<9x1x16xf32> to vector<1x1x16xf32>
    %54 = vector.shape_cast %53 : vector<1x1x16xf32> to vector<1x16xf32>
    %55 = vector.broadcast %54 : vector<1x16xf32> to vector<16x16xf32>
    %56 = arith.mulf %52, %55 : vector<16x16xf32>
    %57 = arith.addf %47, %56 : vector<16x16xf32>
    %58 = vector.extract_strided_slice %14 {offsets = [4, 0, 0], sizes = [1, 1, 16], strides = [1, 1, 1]} : vector<9x1x16xf32> to vector<1x1x16xf32>
    %59 = vector.shape_cast %58 : vector<1x1x16xf32> to vector<1x16xf32>
    %60 = vector.broadcast %59 : vector<1x16xf32> to vector<16x16xf32>
    %61 = arith.mulf %4, %60 : vector<16x16xf32>
    %62 = arith.addf %57, %61 : vector<16x16xf32>
    %63 = vector.extract_strided_slice %14 {offsets = [5, 0, 0], sizes = [1, 1, 16], strides = [1, 1, 1]} : vector<9x1x16xf32> to vector<1x1x16xf32>
    %64 = vector.shape_cast %63 : vector<1x1x16xf32> to vector<1x16xf32>
    %65 = vector.broadcast %64 : vector<1x16xf32> to vector<16x16xf32>
    %66 = arith.mulf %7, %65 : vector<16x16xf32>
    %67 = arith.addf %62, %66 : vector<16x16xf32>
    %cst_26 = arith.constant 0.000000e+00 : f32
    %68 = vector.broadcast %cst_26 : f32 to vector<1x16xf32>
    %69 = vector.extract_strided_slice %13 {offsets = [0, 0], sizes = [15, 16], strides = [1, 1]} : vector<16x16xf32> to vector<15x16xf32>
    %70 = tpu.concatenate %68, %69 in 0 : vector<1x16xf32>, vector<15x16xf32> -> vector<16x16xf32>
    %71 = vector.broadcast %0 : vector<16x1xf32> to vector<16x16xf32>
    %72 = arith.mulf %70, %71 : vector<16x16xf32>
    %73 = vector.extract_strided_slice %14 {offsets = [6, 0, 0], sizes = [1, 1, 16], strides = [1, 1, 1]} : vector<9x1x16xf32> to vector<1x1x16xf32>
    %74 = vector.shape_cast %73 : vector<1x1x16xf32> to vector<1x16xf32>
    %75 = vector.broadcast %74 : vector<1x16xf32> to vector<16x16xf32>
    %76 = arith.mulf %72, %75 : vector<16x16xf32>
    %77 = arith.addf %67, %76 : vector<16x16xf32>
    %78 = vector.extract_strided_slice %14 {offsets = [7, 0, 0], sizes = [1, 1, 16], strides = [1, 1, 1]} : vector<9x1x16xf32> to vector<1x1x16xf32>
    %79 = vector.shape_cast %78 : vector<1x1x16xf32> to vector<1x16xf32>
    %80 = vector.broadcast %79 : vector<1x16xf32> to vector<16x16xf32>
    %81 = arith.mulf %10, %80 : vector<16x16xf32>
    %82 = arith.addf %77, %81 : vector<16x16xf32>
    %83 = vector.extract_strided_slice %14 {offsets = [8, 0, 0], sizes = [1, 1, 16], strides = [1, 1, 1]} : vector<9x1x16xf32> to vector<1x1x16xf32>
    %84 = vector.shape_cast %83 : vector<1x1x16xf32> to vector<1x16xf32>
    %85 = vector.broadcast %84 : vector<1x16xf32> to vector<16x16xf32>
    %86 = arith.mulf %13, %85 : vector<16x16xf32>
    %87 = arith.addf %82, %86 : vector<16x16xf32>
    %88 = arith.truncf %87 : vector<16x16xf32> to vector<16x16xbf16>
    %c0_27 = arith.constant 0 : index
    %c0_28 = arith.constant 0 : index
    %89 = vector.load %arg6[%c0_27, %c0_28] : memref<16x32xbf16, #tpu.memory_space<vmem>>, vector<16x32xbf16>
    %cst_29 = arith.constant dense<0.000000e+00> : vector<16x32xf32>
    %90 = tpu.matmul %88, %89, %cst_29 {dimension_numbers = #tpu.dot_dimension_numbers<[1], [0], [0], [1], [0, 0, 1, 1], [], []>} : vector<16x16xbf16>, vector<16x32xbf16>, vector<16x32xf32> -> vector<16x32xf32>
    %c0_30 = arith.constant 0 : index
    %c0_31 = arith.constant 0 : index
    %91 = vector.load %arg7[%c0_30, %c0_31] : memref<1x32xf32, #tpu.memory_space<vmem>>, vector<1x32xf32>
    %92 = vector.broadcast %91 : vector<1x32xf32> to vector<16x32xf32>
    %93 = arith.addf %90, %92 : vector<16x32xf32>
    %cst_32 = arith.constant 0.000000e+00 : f32
    %94 = vector.broadcast %cst_32 : f32 to vector<16x32xf32>
    %95 = arith.maximumf %93, %94 : vector<16x32xf32>
    %96 = arith.truncf %4 : vector<16x16xf32> to vector<16x16xbf16>
    %c0_33 = arith.constant 0 : index
    %c0_34 = arith.constant 0 : index
    %97 = vector.load %arg8[%c0_33, %c0_34] : memref<16x16xbf16, #tpu.memory_space<vmem>>, vector<16x16xbf16>
    %cst_35 = arith.constant dense<0.000000e+00> : vector<16x16xf32>
    %98 = tpu.matmul %96, %97, %cst_35 {dimension_numbers = #tpu.dot_dimension_numbers<[1], [0], [0], [1], [0, 0, 1, 1], [], []>} : vector<16x16xbf16>, vector<16x16xbf16>, vector<16x16xf32> -> vector<16x16xf32>
    %c0_36 = arith.constant 0 : index
    %c0_37 = arith.constant 0 : index
    %99 = vector.load %arg9[%c0_36, %c0_37] : memref<1x16xf32, #tpu.memory_space<vmem>>, vector<1x16xf32>
    %100 = vector.broadcast %99 : vector<1x16xf32> to vector<16x16xf32>
    %101 = arith.addf %98, %100 : vector<16x16xf32>
    %cst_38 = arith.constant 0.000000e+00 : f32
    %102 = vector.broadcast %cst_38 : f32 to vector<16x16xf32>
    %103 = arith.maximumf %101, %102 : vector<16x16xf32>
    %104 = arith.truncf %7 : vector<16x16xf32> to vector<16x16xbf16>
    %c0_39 = arith.constant 0 : index
    %c0_40 = arith.constant 0 : index
    %105 = vector.load %arg8[%c0_39, %c0_40] : memref<16x16xbf16, #tpu.memory_space<vmem>>, vector<16x16xbf16>
    %cst_41 = arith.constant dense<0.000000e+00> : vector<16x16xf32>
    %106 = tpu.matmul %104, %105, %cst_41 {dimension_numbers = #tpu.dot_dimension_numbers<[1], [0], [0], [1], [0, 0, 1, 1], [], []>} : vector<16x16xbf16>, vector<16x16xbf16>, vector<16x16xf32> -> vector<16x16xf32>
    %c0_42 = arith.constant 0 : index
    %c0_43 = arith.constant 0 : index
    %107 = vector.load %arg9[%c0_42, %c0_43] : memref<1x16xf32, #tpu.memory_space<vmem>>, vector<1x16xf32>
    %108 = vector.broadcast %107 : vector<1x16xf32> to vector<16x16xf32>
    %109 = arith.addf %106, %108 : vector<16x16xf32>
    %cst_44 = arith.constant 0.000000e+00 : f32
    %110 = vector.broadcast %cst_44 : f32 to vector<16x16xf32>
    %111 = arith.maximumf %109, %110 : vector<16x16xf32>
    %112 = arith.truncf %10 : vector<16x16xf32> to vector<16x16xbf16>
    %c0_45 = arith.constant 0 : index
    %c0_46 = arith.constant 0 : index
    %113 = vector.load %arg8[%c0_45, %c0_46] : memref<16x16xbf16, #tpu.memory_space<vmem>>, vector<16x16xbf16>
    %cst_47 = arith.constant dense<0.000000e+00> : vector<16x16xf32>
    %114 = tpu.matmul %112, %113, %cst_47 {dimension_numbers = #tpu.dot_dimension_numbers<[1], [0], [0], [1], [0, 0, 1, 1], [], []>} : vector<16x16xbf16>, vector<16x16xbf16>, vector<16x16xf32> -> vector<16x16xf32>
    %c0_48 = arith.constant 0 : index
    %c0_49 = arith.constant 0 : index
    %115 = vector.load %arg9[%c0_48, %c0_49] : memref<1x16xf32, #tpu.memory_space<vmem>>, vector<1x16xf32>
    %116 = vector.broadcast %115 : vector<1x16xf32> to vector<16x16xf32>
    %117 = arith.addf %114, %116 : vector<16x16xf32>
    %cst_50 = arith.constant 0.000000e+00 : f32
    %118 = vector.broadcast %cst_50 : f32 to vector<16x16xf32>
    %119 = arith.maximumf %117, %118 : vector<16x16xf32>
    %120 = arith.truncf %13 : vector<16x16xf32> to vector<16x16xbf16>
    %c0_51 = arith.constant 0 : index
    %c0_52 = arith.constant 0 : index
    %121 = vector.load %arg8[%c0_51, %c0_52] : memref<16x16xbf16, #tpu.memory_space<vmem>>, vector<16x16xbf16>
    %cst_53 = arith.constant dense<0.000000e+00> : vector<16x16xf32>
    %122 = tpu.matmul %120, %121, %cst_53 {dimension_numbers = #tpu.dot_dimension_numbers<[1], [0], [0], [1], [0, 0, 1, 1], [], []>} : vector<16x16xbf16>, vector<16x16xbf16>, vector<16x16xf32> -> vector<16x16xf32>
    %c0_54 = arith.constant 0 : index
    %c0_55 = arith.constant 0 : index
    %123 = vector.load %arg9[%c0_54, %c0_55] : memref<1x16xf32, #tpu.memory_space<vmem>>, vector<1x16xf32>
    %124 = vector.broadcast %123 : vector<1x16xf32> to vector<16x16xf32>
    %125 = arith.addf %122, %124 : vector<16x16xf32>
    %cst_56 = arith.constant 0.000000e+00 : f32
    %126 = vector.broadcast %cst_56 : f32 to vector<16x16xf32>
    %127 = arith.maximumf %125, %126 : vector<16x16xf32>
    %c0_57 = arith.constant 0 : index
    %c0_58 = arith.constant 0 : index
    %c0_59 = arith.constant 0 : index
    %128 = vector.load %arg10[%c0_57, %c0_58, %c0_59] : memref<9x1x16xf32, #tpu.memory_space<vmem>>, vector<9x1x16xf32>
    %c0_60 = arith.constant 0 : index
    %c0_61 = arith.constant 0 : index
    %129 = vector.load %arg11[%c0_60, %c0_61] : memref<1x16xf32, #tpu.memory_space<vmem>>, vector<1x16xf32>
    %cst_62 = arith.constant 0.000000e+00 : f32
    %130 = vector.broadcast %cst_62 : f32 to vector<16x16xf32>
    %131 = vector.broadcast %129 : vector<1x16xf32> to vector<16x16xf32>
    %132 = arith.addf %130, %131 : vector<16x16xf32>
    %cst_63 = arith.constant 0.000000e+00 : f32
    %133 = vector.broadcast %cst_63 : f32 to vector<4x16xf32>
    %134 = vector.extract_strided_slice %127 {offsets = [0, 0], sizes = [12, 16], strides = [1, 1]} : vector<16x16xf32> to vector<12x16xf32>
    %135 = tpu.concatenate %133, %134 in 0 : vector<4x16xf32>, vector<12x16xf32> -> vector<16x16xf32>
    %cst_64 = arith.constant 0.000000e+00 : f32
    %136 = vector.broadcast %cst_64 : f32 to vector<1x16xf32>
    %137 = vector.extract_strided_slice %135 {offsets = [0, 0], sizes = [15, 16], strides = [1, 1]} : vector<16x16xf32> to vector<15x16xf32>
    %138 = tpu.concatenate %136, %137 in 0 : vector<1x16xf32>, vector<15x16xf32> -> vector<16x16xf32>
    %139 = vector.broadcast %0 : vector<16x1xf32> to vector<16x16xf32>
    %140 = arith.mulf %138, %139 : vector<16x16xf32>
    %141 = vector.extract_strided_slice %128 {offsets = [0, 0, 0], sizes = [1, 1, 16], strides = [1, 1, 1]} : vector<9x1x16xf32> to vector<1x1x16xf32>
    %142 = vector.shape_cast %141 : vector<1x1x16xf32> to vector<1x16xf32>
    %143 = vector.broadcast %142 : vector<1x16xf32> to vector<16x16xf32>
    %144 = arith.mulf %140, %143 : vector<16x16xf32>
    %145 = arith.addf %132, %144 : vector<16x16xf32>
    %cst_65 = arith.constant 0.000000e+00 : f32
    %146 = vector.broadcast %cst_65 : f32 to vector<4x16xf32>
    %147 = vector.extract_strided_slice %119 {offsets = [0, 0], sizes = [12, 16], strides = [1, 1]} : vector<16x16xf32> to vector<12x16xf32>
    %148 = tpu.concatenate %146, %147 in 0 : vector<4x16xf32>, vector<12x16xf32> -> vector<16x16xf32>
    %149 = vector.extract_strided_slice %128 {offsets = [1, 0, 0], sizes = [1, 1, 16], strides = [1, 1, 1]} : vector<9x1x16xf32> to vector<1x1x16xf32>
    %150 = vector.shape_cast %149 : vector<1x1x16xf32> to vector<1x16xf32>
    %151 = vector.broadcast %150 : vector<1x16xf32> to vector<16x16xf32>
    %152 = arith.mulf %148, %151 : vector<16x16xf32>
    %153 = arith.addf %145, %152 : vector<16x16xf32>
    %cst_66 = arith.constant 0.000000e+00 : f32
    %154 = vector.broadcast %cst_66 : f32 to vector<4x16xf32>
    %155 = vector.extract_strided_slice %127 {offsets = [0, 0], sizes = [12, 16], strides = [1, 1]} : vector<16x16xf32> to vector<12x16xf32>
    %156 = tpu.concatenate %154, %155 in 0 : vector<4x16xf32>, vector<12x16xf32> -> vector<16x16xf32>
    %157 = vector.extract_strided_slice %128 {offsets = [2, 0, 0], sizes = [1, 1, 16], strides = [1, 1, 1]} : vector<9x1x16xf32> to vector<1x1x16xf32>
    %158 = vector.shape_cast %157 : vector<1x1x16xf32> to vector<1x16xf32>
    %159 = vector.broadcast %158 : vector<1x16xf32> to vector<16x16xf32>
    %160 = arith.mulf %156, %159 : vector<16x16xf32>
    %161 = arith.addf %153, %160 : vector<16x16xf32>
    %cst_67 = arith.constant 0.000000e+00 : f32
    %162 = vector.broadcast %cst_67 : f32 to vector<1x16xf32>
    %163 = vector.extract_strided_slice %111 {offsets = [0, 0], sizes = [15, 16], strides = [1, 1]} : vector<16x16xf32> to vector<15x16xf32>
    %164 = tpu.concatenate %162, %163 in 0 : vector<1x16xf32>, vector<15x16xf32> -> vector<16x16xf32>
    %165 = vector.broadcast %0 : vector<16x1xf32> to vector<16x16xf32>
    %166 = arith.mulf %164, %165 : vector<16x16xf32>
    %167 = vector.extract_strided_slice %128 {offsets = [3, 0, 0], sizes = [1, 1, 16], strides = [1, 1, 1]} : vector<9x1x16xf32> to vector<1x1x16xf32>
    %168 = vector.shape_cast %167 : vector<1x1x16xf32> to vector<1x16xf32>
    %169 = vector.broadcast %168 : vector<1x16xf32> to vector<16x16xf32>
    %170 = arith.mulf %166, %169 : vector<16x16xf32>
    %171 = arith.addf %161, %170 : vector<16x16xf32>
    %172 = vector.extract_strided_slice %128 {offsets = [4, 0, 0], sizes = [1, 1, 16], strides = [1, 1, 1]} : vector<9x1x16xf32> to vector<1x1x16xf32>
    %173 = vector.shape_cast %172 : vector<1x1x16xf32> to vector<1x16xf32>
    %174 = vector.broadcast %173 : vector<1x16xf32> to vector<16x16xf32>
    %175 = arith.mulf %103, %174 : vector<16x16xf32>
    %176 = arith.addf %171, %175 : vector<16x16xf32>
    %177 = vector.extract_strided_slice %128 {offsets = [5, 0, 0], sizes = [1, 1, 16], strides = [1, 1, 1]} : vector<9x1x16xf32> to vector<1x1x16xf32>
    %178 = vector.shape_cast %177 : vector<1x1x16xf32> to vector<1x16xf32>
    %179 = vector.broadcast %178 : vector<1x16xf32> to vector<16x16xf32>
    %180 = arith.mulf %111, %179 : vector<16x16xf32>
    %181 = arith.addf %176, %180 : vector<16x16xf32>
    %cst_68 = arith.constant 0.000000e+00 : f32
    %182 = vector.broadcast %cst_68 : f32 to vector<1x16xf32>
    %183 = vector.extract_strided_slice %127 {offsets = [0, 0], sizes = [15, 16], strides = [1, 1]} : vector<16x16xf32> to vector<15x16xf32>
    %184 = tpu.concatenate %182, %183 in 0 : vector<1x16xf32>, vector<15x16xf32> -> vector<16x16xf32>
    %185 = vector.broadcast %0 : vector<16x1xf32> to vector<16x16xf32>
    %186 = arith.mulf %184, %185 : vector<16x16xf32>
    %187 = vector.extract_strided_slice %128 {offsets = [6, 0, 0], sizes = [1, 1, 16], strides = [1, 1, 1]} : vector<9x1x16xf32> to vector<1x1x16xf32>
    %188 = vector.shape_cast %187 : vector<1x1x16xf32> to vector<1x16xf32>
    %189 = vector.broadcast %188 : vector<1x16xf32> to vector<16x16xf32>
    %190 = arith.mulf %186, %189 : vector<16x16xf32>
    %191 = arith.addf %181, %190 : vector<16x16xf32>
    %192 = vector.extract_strided_slice %128 {offsets = [7, 0, 0], sizes = [1, 1, 16], strides = [1, 1, 1]} : vector<9x1x16xf32> to vector<1x1x16xf32>
    %193 = vector.shape_cast %192 : vector<1x1x16xf32> to vector<1x16xf32>
    %194 = vector.broadcast %193 : vector<1x16xf32> to vector<16x16xf32>
    %195 = arith.mulf %119, %194 : vector<16x16xf32>
    %196 = arith.addf %191, %195 : vector<16x16xf32>
    %197 = vector.extract_strided_slice %128 {offsets = [8, 0, 0], sizes = [1, 1, 16], strides = [1, 1, 1]} : vector<9x1x16xf32> to vector<1x1x16xf32>
    %198 = vector.shape_cast %197 : vector<1x1x16xf32> to vector<1x16xf32>
    %199 = vector.broadcast %198 : vector<1x16xf32> to vector<16x16xf32>
    %200 = arith.mulf %127, %199 : vector<16x16xf32>
    %201 = arith.addf %196, %200 : vector<16x16xf32>
    %202 = arith.truncf %201 : vector<16x16xf32> to vector<16x16xbf16>
    %c0_69 = arith.constant 0 : index
    %c0_70 = arith.constant 0 : index
    %203 = vector.load %arg12[%c0_69, %c0_70] : memref<16x32xbf16, #tpu.memory_space<vmem>>, vector<16x32xbf16>
    %cst_71 = arith.constant dense<0.000000e+00> : vector<16x32xf32>
    %204 = tpu.matmul %202, %203, %cst_71 {dimension_numbers = #tpu.dot_dimension_numbers<[1], [0], [0], [1], [0, 0, 1, 1], [], []>} : vector<16x16xbf16>, vector<16x32xbf16>, vector<16x32xf32> -> vector<16x32xf32>
    %c0_72 = arith.constant 0 : index
    %c0_73 = arith.constant 0 : index
    %205 = vector.load %arg13[%c0_72, %c0_73] : memref<1x32xf32, #tpu.memory_space<vmem>>, vector<1x32xf32>
    %206 = vector.broadcast %205 : vector<1x32xf32> to vector<16x32xf32>
    %207 = arith.addf %204, %206 : vector<16x32xf32>
    %cst_74 = arith.constant 0.000000e+00 : f32
    %208 = vector.broadcast %cst_74 : f32 to vector<16x32xf32>
    %209 = arith.maximumf %207, %208 : vector<16x32xf32>
    %210 = arith.addf %95, %209 : vector<16x32xf32>
    %211 = arith.truncf %210 : vector<16x32xf32> to vector<16x32xbf16>
    %c0_75 = arith.constant 0 : index
    %c0_76 = arith.constant 0 : index
    %212 = vector.load %arg14[%c0_75, %c0_76] : memref<32x16xbf16, #tpu.memory_space<vmem>>, vector<32x16xbf16>
    %cst_77 = arith.constant dense<0.000000e+00> : vector<16x16xf32>
    %213 = tpu.matmul %211, %212, %cst_77 {dimension_numbers = #tpu.dot_dimension_numbers<[1], [0], [0], [1], [0, 0, 1, 1], [], []>} : vector<16x32xbf16>, vector<32x16xbf16>, vector<16x16xf32> -> vector<16x16xf32>
    %c0_78 = arith.constant 0 : index
    %c0_79 = arith.constant 0 : index
    %214 = vector.load %arg15[%c0_78, %c0_79] : memref<1x16xf32, #tpu.memory_space<vmem>>, vector<1x16xf32>
    %215 = vector.broadcast %214 : vector<1x16xf32> to vector<16x16xf32>
    %216 = arith.addf %213, %215 : vector<16x16xf32>
    %cst_80 = arith.constant 0.000000e+00 : f32
    %217 = vector.broadcast %cst_80 : f32 to vector<16x16xf32>
    %218 = arith.maximumf %216, %217 : vector<16x16xf32>
    %c0_81 = arith.constant 0 : index
    %c0_82 = arith.constant 0 : index
    %c0_83 = arith.constant 0 : index
    %219 = vector.load %arg16[%c0_81, %c0_82, %c0_83] : memref<9x1x16xf32, #tpu.memory_space<vmem>>, vector<9x1x16xf32>
    %c0_84 = arith.constant 0 : index
    %c0_85 = arith.constant 0 : index
    %220 = vector.load %arg17[%c0_84, %c0_85] : memref<1x16xf32, #tpu.memory_space<vmem>>, vector<1x16xf32>
    %cst_86 = arith.constant 0.000000e+00 : f32
    %221 = vector.broadcast %cst_86 : f32 to vector<16x16xf32>
    %222 = vector.broadcast %220 : vector<1x16xf32> to vector<16x16xf32>
    %223 = arith.addf %221, %222 : vector<16x16xf32>
    %cst_87 = arith.constant 0.000000e+00 : f32
    %224 = vector.broadcast %cst_87 : f32 to vector<5x16xf32>
    %225 = vector.extract_strided_slice %218 {offsets = [0, 0], sizes = [11, 16], strides = [1, 1]} : vector<16x16xf32> to vector<11x16xf32>
    %226 = tpu.concatenate %224, %225 in 0 : vector<5x16xf32>, vector<11x16xf32> -> vector<16x16xf32>
    %227 = vector.broadcast %0 : vector<16x1xf32> to vector<16x16xf32>
    %228 = arith.mulf %226, %227 : vector<16x16xf32>
    %229 = vector.extract_strided_slice %219 {offsets = [0, 0, 0], sizes = [1, 1, 16], strides = [1, 1, 1]} : vector<9x1x16xf32> to vector<1x1x16xf32>
    %230 = vector.shape_cast %229 : vector<1x1x16xf32> to vector<1x16xf32>
    %231 = vector.broadcast %230 : vector<1x16xf32> to vector<16x16xf32>
    %232 = arith.mulf %228, %231 : vector<16x16xf32>
    %233 = arith.addf %223, %232 : vector<16x16xf32>
    %cst_88 = arith.constant 0.000000e+00 : f32
    %234 = vector.broadcast %cst_88 : f32 to vector<4x16xf32>
    %235 = vector.extract_strided_slice %218 {offsets = [0, 0], sizes = [12, 16], strides = [1, 1]} : vector<16x16xf32> to vector<12x16xf32>
    %236 = tpu.concatenate %234, %235 in 0 : vector<4x16xf32>, vector<12x16xf32> -> vector<16x16xf32>
    %237 = vector.extract_strided_slice %219 {offsets = [1, 0, 0], sizes = [1, 1, 16], strides = [1, 1, 1]} : vector<9x1x16xf32> to vector<1x1x16xf32>
    %238 = vector.shape_cast %237 : vector<1x1x16xf32> to vector<1x16xf32>
    %239 = vector.broadcast %238 : vector<1x16xf32> to vector<16x16xf32>
    %240 = arith.mulf %236, %239 : vector<16x16xf32>
    %241 = arith.addf %233, %240 : vector<16x16xf32>
    %cst_89 = arith.constant 0.000000e+00 : f32
    %242 = vector.broadcast %cst_89 : f32 to vector<3x16xf32>
    %243 = vector.extract_strided_slice %218 {offsets = [0, 0], sizes = [13, 16], strides = [1, 1]} : vector<16x16xf32> to vector<13x16xf32>
    %244 = tpu.concatenate %242, %243 in 0 : vector<3x16xf32>, vector<13x16xf32> -> vector<16x16xf32>
    %245 = vector.broadcast %1 : vector<16x1xf32> to vector<16x16xf32>
    %246 = arith.mulf %244, %245 : vector<16x16xf32>
    %247 = vector.extract_strided_slice %219 {offsets = [2, 0, 0], sizes = [1, 1, 16], strides = [1, 1, 1]} : vector<9x1x16xf32> to vector<1x1x16xf32>
    %248 = vector.shape_cast %247 : vector<1x1x16xf32> to vector<1x16xf32>
    %249 = vector.broadcast %248 : vector<1x16xf32> to vector<16x16xf32>
    %250 = arith.mulf %246, %249 : vector<16x16xf32>
    %251 = arith.addf %241, %250 : vector<16x16xf32>
    %cst_90 = arith.constant 0.000000e+00 : f32
    %252 = vector.broadcast %cst_90 : f32 to vector<1x16xf32>
    %253 = vector.extract_strided_slice %218 {offsets = [0, 0], sizes = [15, 16], strides = [1, 1]} : vector<16x16xf32> to vector<15x16xf32>
    %254 = tpu.concatenate %252, %253 in 0 : vector<1x16xf32>, vector<15x16xf32> -> vector<16x16xf32>
    %255 = vector.broadcast %0 : vector<16x1xf32> to vector<16x16xf32>
    %256 = arith.mulf %254, %255 : vector<16x16xf32>
    %257 = vector.extract_strided_slice %219 {offsets = [3, 0, 0], sizes = [1, 1, 16], strides = [1, 1, 1]} : vector<9x1x16xf32> to vector<1x1x16xf32>
    %258 = vector.shape_cast %257 : vector<1x1x16xf32> to vector<1x16xf32>
    %259 = vector.broadcast %258 : vector<1x16xf32> to vector<16x16xf32>
    %260 = arith.mulf %256, %259 : vector<16x16xf32>
    %261 = arith.addf %251, %260 : vector<16x16xf32>
    %262 = vector.extract_strided_slice %219 {offsets = [4, 0, 0], sizes = [1, 1, 16], strides = [1, 1, 1]} : vector<9x1x16xf32> to vector<1x1x16xf32>
    %263 = vector.shape_cast %262 : vector<1x1x16xf32> to vector<1x16xf32>
    %264 = vector.broadcast %263 : vector<1x16xf32> to vector<16x16xf32>
    %265 = arith.mulf %218, %264 : vector<16x16xf32>
    %266 = arith.addf %261, %265 : vector<16x16xf32>
    %cst_91 = arith.constant 0.000000e+00 : f32
    %267 = vector.broadcast %cst_91 : f32 to vector<1x16xf32>
    %268 = vector.extract_strided_slice %218 {offsets = [1, 0], sizes = [15, 16], strides = [1, 1]} : vector<16x16xf32> to vector<15x16xf32>
    %269 = tpu.concatenate %268, %267 in 0 : vector<15x16xf32>, vector<1x16xf32> -> vector<16x16xf32>
    %270 = vector.broadcast %1 : vector<16x1xf32> to vector<16x16xf32>
    %271 = arith.mulf %269, %270 : vector<16x16xf32>
    %272 = vector.extract_strided_slice %219 {offsets = [5, 0, 0], sizes = [1, 1, 16], strides = [1, 1, 1]} : vector<9x1x16xf32> to vector<1x1x16xf32>
    %273 = vector.shape_cast %272 : vector<1x1x16xf32> to vector<1x16xf32>
    %274 = vector.broadcast %273 : vector<1x16xf32> to vector<16x16xf32>
    %275 = arith.mulf %271, %274 : vector<16x16xf32>
    %276 = arith.addf %266, %275 : vector<16x16xf32>
    %cst_92 = arith.constant 0.000000e+00 : f32
    %277 = vector.broadcast %cst_92 : f32 to vector<3x16xf32>
    %278 = vector.extract_strided_slice %218 {offsets = [3, 0], sizes = [13, 16], strides = [1, 1]} : vector<16x16xf32> to vector<13x16xf32>
    %279 = tpu.concatenate %278, %277 in 0 : vector<13x16xf32>, vector<3x16xf32> -> vector<16x16xf32>
    %280 = vector.broadcast %0 : vector<16x1xf32> to vector<16x16xf32>
    %281 = arith.mulf %279, %280 : vector<16x16xf32>
    %282 = vector.extract_strided_slice %219 {offsets = [6, 0, 0], sizes = [1, 1, 16], strides = [1, 1, 1]} : vector<9x1x16xf32> to vector<1x1x16xf32>
    %283 = vector.shape_cast %282 : vector<1x1x16xf32> to vector<1x16xf32>
    %284 = vector.broadcast %283 : vector<1x16xf32> to vector<16x16xf32>
    %285 = arith.mulf %281, %284 : vector<16x16xf32>
    %286 = arith.addf %276, %285 : vector<16x16xf32>
    %cst_93 = arith.constant 0.000000e+00 : f32
    %287 = vector.broadcast %cst_93 : f32 to vector<4x16xf32>
    %288 = vector.extract_strided_slice %218 {offsets = [4, 0], sizes = [12, 16], strides = [1, 1]} : vector<16x16xf32> to vector<12x16xf32>
    %289 = tpu.concatenate %288, %287 in 0 : vector<12x16xf32>, vector<4x16xf32> -> vector<16x16xf32>
    %290 = vector.extract_strided_slice %219 {offsets = [7, 0, 0], sizes = [1, 1, 16], strides = [1, 1, 1]} : vector<9x1x16xf32> to vector<1x1x16xf32>
    %291 = vector.shape_cast %290 : vector<1x1x16xf32> to vector<1x16xf32>
    %292 = vector.broadcast %291 : vector<1x16xf32> to vector<16x16xf32>
    %293 = arith.mulf %289, %292 : vector<16x16xf32>
    %294 = arith.addf %286, %293 : vector<16x16xf32>
    %cst_94 = arith.constant 0.000000e+00 : f32
    %295 = vector.broadcast %cst_94 : f32 to vector<5x16xf32>
    %296 = vector.extract_strided_slice %218 {offsets = [5, 0], sizes = [11, 16], strides = [1, 1]} : vector<16x16xf32> to vector<11x16xf32>
    %297 = tpu.concatenate %296, %295 in 0 : vector<11x16xf32>, vector<5x16xf32> -> vector<16x16xf32>
    %298 = vector.broadcast %1 : vector<16x1xf32> to vector<16x16xf32>
    %299 = arith.mulf %297, %298 : vector<16x16xf32>
    %300 = vector.extract_strided_slice %219 {offsets = [8, 0, 0], sizes = [1, 1, 16], strides = [1, 1, 1]} : vector<9x1x16xf32> to vector<1x1x16xf32>
    %301 = vector.shape_cast %300 : vector<1x1x16xf32> to vector<1x16xf32>
    %302 = vector.broadcast %301 : vector<1x16xf32> to vector<16x16xf32>
    %303 = arith.mulf %299, %302 : vector<16x16xf32>
    %304 = arith.addf %294, %303 : vector<16x16xf32>
    %305 = arith.truncf %304 : vector<16x16xf32> to vector<16x16xbf16>
    %c0_95 = arith.constant 0 : index
    %c0_96 = arith.constant 0 : index
    %306 = vector.load %arg18[%c0_95, %c0_96] : memref<16x32xbf16, #tpu.memory_space<vmem>>, vector<16x32xbf16>
    %cst_97 = arith.constant dense<0.000000e+00> : vector<16x32xf32>
    %307 = tpu.matmul %305, %306, %cst_97 {dimension_numbers = #tpu.dot_dimension_numbers<[1], [0], [0], [1], [0, 0, 1, 1], [], []>} : vector<16x16xbf16>, vector<16x32xbf16>, vector<16x32xf32> -> vector<16x32xf32>
    %c0_98 = arith.constant 0 : index
    %c0_99 = arith.constant 0 : index
    %308 = vector.load %arg19[%c0_98, %c0_99] : memref<1x32xf32, #tpu.memory_space<vmem>>, vector<1x32xf32>
    %309 = vector.broadcast %308 : vector<1x32xf32> to vector<16x32xf32>
    %310 = arith.addf %307, %309 : vector<16x32xf32>
    %cst_100 = arith.constant 0.000000e+00 : f32
    %311 = vector.broadcast %cst_100 : f32 to vector<16x32xf32>
    %312 = arith.maximumf %310, %311 : vector<16x32xf32>
    %c0_101 = arith.constant 0 : index
    %c0_102 = arith.constant 0 : index
    %313 = vector.load %arg20[%c0_101, %c0_102] : memref<1x32xf32, #tpu.memory_space<vmem>>, vector<1x32xf32>
    %314 = vector.broadcast %313 : vector<1x32xf32> to vector<16x32xf32>
    %315 = arith.mulf %210, %314 : vector<16x32xf32>
    %316 = arith.addf %315, %312 : vector<16x32xf32>
    %317 = arith.truncf %316 : vector<16x32xf32> to vector<16x32xbf16>
    %c0_103 = arith.constant 0 : index
    %c0_104 = arith.constant 0 : index
    %c0_105 = arith.constant 0 : index
    %318 = vector.load %arg21[%c0_103, %c0_104, %c0_105] : memref<1x16x32xbf16, #tpu.memory_space<vmem>>, vector<1x16x32xbf16>
    %319 = vector.shape_cast %318 : vector<1x16x32xbf16> to vector<16x32xbf16>
    %320 = vector.shape_cast %317 : vector<16x32xbf16> to vector<1x16x32xbf16>
    tpu.vector_store %arg21[%c0_103, %c0_104, %c0_105], %320 {strides = array<i32>} : memref<1x16x32xbf16, #tpu.memory_space<vmem>>, vector<1x16x32xbf16>,
    return
  }
  func.func @transform_0(%arg0: i32) -> (i32, i32, i32, i32) {
    %c0_i32 = arith.constant 0 : i32
    %c0_i32_0 = arith.constant 0 : i32
    %c0_i32_1 = arith.constant 0 : i32
    %c0_i32_2 = arith.constant 0 : i32
    return %arg0, %c0_i32, %c0_i32_0, %c0_i32_1 : i32, i32, i32, i32
  }
  func.func @transform_1(%arg0: i32) -> (i32, i32) {
    %c0_i32 = arith.constant 0 : i32
    %c0_i32_0 = arith.constant 0 : i32
    %c0_i32_1 = arith.constant 0 : i32
    return %c0_i32, %c0_i32_0 : i32, i32
  }
  func.func @transform_2(%arg0: i32) -> (i32, i32) {
    %c0_i32 = arith.constant 0 : i32
    %c0_i32_0 = arith.constant 0 : i32
    %c0_i32_1 = arith.constant 0 : i32
    return %c0_i32, %c0_i32_0 : i32, i32
  }
  func.func @transform_3(%arg0: i32) -> (i32, i32, i32) {
    %c0_i32 = arith.constant 0 : i32
    %c0_i32_0 = arith.constant 0 : i32
    %c0_i32_1 = arith.constant 0 : i32
    %c0_i32_2 = arith.constant 0 : i32
    return %c0_i32, %c0_i32_0, %c0_i32_1 : i32, i32, i32
  }
  func.func @transform_4(%arg0: i32) -> (i32, i32) {
    %c0_i32 = arith.constant 0 : i32
    %c0_i32_0 = arith.constant 0 : i32
    %c0_i32_1 = arith.constant 0 : i32
    return %c0_i32, %c0_i32_0 : i32, i32
  }
  func.func @transform_5(%arg0: i32) -> (i32, i32) {
    %c0_i32 = arith.constant 0 : i32
    %c0_i32_0 = arith.constant 0 : i32
    %c0_i32_1 = arith.constant 0 : i32
    return %c0_i32, %c0_i32_0 : i32, i32
  }
  func.func @transform_6(%arg0: i32) -> (i32, i32) {
    %c0_i32 = arith.constant 0 : i32
    %c0_i32_0 = arith.constant 0 : i32
    %c0_i32_1 = arith.constant 0 : i32
    return %c0_i32, %c0_i32_0 : i32, i32
  }
  func.func @transform_7(%arg0: i32) -> (i32, i32) {
    %c0_i32 = arith.constant 0 : i32
    %c0_i32_0 = arith.constant 0 : i32
    %c0_i32_1 = arith.constant 0 : i32
    return %c0_i32, %c0_i32_0 : i32, i32
  }
  func.func @transform_8(%arg0: i32) -> (i32, i32) {
    %c0_i32 = arith.constant 0 : i32
    %c0_i32_0 = arith.constant 0 : i32
    %c0_i32_1 = arith.constant 0 : i32
    return %c0_i32, %c0_i32_0 : i32, i32
  }
  func.func @transform_9(%arg0: i32) -> (i32, i32, i32) {
    %c0_i32 = arith.constant 0 : i32
    %c0_i32_0 = arith.constant 0 : i32
    %c0_i32_1 = arith.constant 0 : i32
    %c0_i32_2 = arith.constant 0 : i32
    return %c0_i32, %c0_i32_0, %c0_i32_1 : i32, i32, i32
  }
  func.func @transform_10(%arg0: i32) -> (i32, i32) {
    %c0_i32 = arith.constant 0 : i32
    %c0_i32_0 = arith.constant 0 : i32
    %c0_i32_1 = arith.constant 0 : i32
    return %c0_i32, %c0_i32_0 : i32, i32
  }
  func.func @transform_11(%arg0: i32) -> (i32, i32) {
    %c0_i32 = arith.constant 0 : i32
    %c0_i32_0 = arith.constant 0 : i32
    %c0_i32_1 = arith.constant 0 : i32
    return %c0_i32, %c0_i32_0 : i32, i32
  }
  func.func @transform_12(%arg0: i32) -> (i32, i32) {
    %c0_i32 = arith.constant 0 : i32
    %c0_i32_0 = arith.constant 0 : i32
    %c0_i32_1 = arith.constant 0 : i32
    return %c0_i32, %c0_i32_0 : i32, i32
  }
  func.func @transform_13(%arg0: i32) -> (i32, i32) {
    %c0_i32 = arith.constant 0 : i32
    %c0_i32_0 = arith.constant 0 : i32
    %c0_i32_1 = arith.constant 0 : i32
    return %c0_i32, %c0_i32_0 : i32, i32
  }
  func.func @transform_14(%arg0: i32) -> (i32, i32) {
    %c0_i32 = arith.constant 0 : i32
    %c0_i32_0 = arith.constant 0 : i32
    %c0_i32_1 = arith.constant 0 : i32
    return %c0_i32, %c0_i32_0 : i32, i32
  }
  func.func @transform_15(%arg0: i32) -> (i32, i32, i32) {
    %c0_i32 = arith.constant 0 : i32
    %c0_i32_0 = arith.constant 0 : i32
    %c0_i32_1 = arith.constant 0 : i32
    %c0_i32_2 = arith.constant 0 : i32
    return %c0_i32, %c0_i32_0, %c0_i32_1 : i32, i32, i32
  }
  func.func @transform_16(%arg0: i32) -> (i32, i32) {
    %c0_i32 = arith.constant 0 : i32
    %c0_i32_0 = arith.constant 0 : i32
    %c0_i32_1 = arith.constant 0 : i32
    return %c0_i32, %c0_i32_0 : i32, i32
  }
  func.func @transform_17(%arg0: i32) -> (i32, i32) {
    %c0_i32 = arith.constant 0 : i32
    %c0_i32_0 = arith.constant 0 : i32
    %c0_i32_1 = arith.constant 0 : i32
    return %c0_i32, %c0_i32_0 : i32, i32
  }
  func.func @transform_18(%arg0: i32) -> (i32, i32) {
    %c0_i32 = arith.constant 0 : i32
    %c0_i32_0 = arith.constant 0 : i32
    %c0_i32_1 = arith.constant 0 : i32
    return %c0_i32, %c0_i32_0 : i32, i32
  }
  func.func @transform_19(%arg0: i32) -> (i32, i32) {
    %c0_i32 = arith.constant 0 : i32
    %c0_i32_0 = arith.constant 0 : i32
    %c0_i32_1 = arith.constant 0 : i32
    return %c0_i32, %c0_i32_0 : i32, i32
  }
  func.func @transform_20(%arg0: i32) -> (i32, i32, i32) {
    %c0_i32 = arith.constant 0 : i32
    %c0_i32_0 = arith.constant 0 : i32
    %c0_i32_1 = arith.constant 0 : i32
    return %arg0, %c0_i32, %c0_i32_0 : i32, i32, i32
  }
}

module attributes {stable_mosaic.version = 11 : i64} {
  func.func @_stage_body(%arg0: i32, %arg1: memref<1x4x4x32xbf16, #tpu.memory_space<vmem>>, %arg2: memref<4x1xf32, #tpu.memory_space<vmem>>, %arg3: memref<4x1xf32, #tpu.memory_space<vmem>>, %arg4: memref<9x1x32xf32, #tpu.memory_space<vmem>>, %arg5: memref<1x32xf32, #tpu.memory_space<vmem>>, %arg6: memref<32x64xbf16, #tpu.memory_space<vmem>>, %arg7: memref<1x64xf32, #tpu.memory_space<vmem>>, %arg8: memref<32x32xbf16, #tpu.memory_space<vmem>>, %arg9: memref<1x32xf32, #tpu.memory_space<vmem>>, %arg10: memref<9x1x32xf32, #tpu.memory_space<vmem>>, %arg11: memref<1x32xf32, #tpu.memory_space<vmem>>, %arg12: memref<32x64xbf16, #tpu.memory_space<vmem>>, %arg13: memref<1x64xf32, #tpu.memory_space<vmem>>, %arg14: memref<64x32xbf16, #tpu.memory_space<vmem>>, %arg15: memref<1x32xf32, #tpu.memory_space<vmem>>, %arg16: memref<9x1x32xf32, #tpu.memory_space<vmem>>, %arg17: memref<1x32xf32, #tpu.memory_space<vmem>>, %arg18: memref<32x64xbf16, #tpu.memory_space<vmem>>, %arg19: memref<1x64xf32, #tpu.memory_space<vmem>>, %arg20: memref<1x64xf32, #tpu.memory_space<vmem>>, %arg21: memref<64x128xbf16, #tpu.memory_space<vmem>>, %arg22: memref<1x128xf32, #tpu.memory_space<vmem>>, %arg23: memref<128x10xbf16, #tpu.memory_space<vmem>>, %arg24: memref<1x10xf32, #tpu.memory_space<vmem>>, %arg25: memref<1x1x128xf32, #tpu.memory_space<vmem>>, %arg26: memref<1x1x10xf32, #tpu.memory_space<vmem>>) attributes {dimension_semantics = [#tpu.dimension_semantics<parallel>], iteration_bounds = array<i64: 2>, scalar_prefetch = 0 : i64, scratch_operands = 0 : i64, tpu.core_type = #tpu.core_type<tc>, window_params = [{transform_indices = @transform_0, window_bounds = array<i64: 1, 4, 4, 32>}, {pipeline_mode = #tpu.pipeline_mode<synchronous>, transform_indices = @transform_1, window_bounds = array<i64: 4, 1>}, {pipeline_mode = #tpu.pipeline_mode<synchronous>, transform_indices = @transform_2, window_bounds = array<i64: 4, 1>}, {pipeline_mode = #tpu.pipeline_mode<synchronous>, transform_indices = @transform_3, window_bounds = array<i64: 9, 1, 32>}, {pipeline_mode = #tpu.pipeline_mode<synchronous>, transform_indices = @transform_4, window_bounds = array<i64: 1, 32>}, {pipeline_mode = #tpu.pipeline_mode<synchronous>, transform_indices = @transform_5, window_bounds = array<i64: 32, 64>}, {pipeline_mode = #tpu.pipeline_mode<synchronous>, transform_indices = @transform_6, window_bounds = array<i64: 1, 64>}, {pipeline_mode = #tpu.pipeline_mode<synchronous>, transform_indices = @transform_7, window_bounds = array<i64: 32, 32>}, {pipeline_mode = #tpu.pipeline_mode<synchronous>, transform_indices = @transform_8, window_bounds = array<i64: 1, 32>}, {pipeline_mode = #tpu.pipeline_mode<synchronous>, transform_indices = @transform_9, window_bounds = array<i64: 9, 1, 32>}, {pipeline_mode = #tpu.pipeline_mode<synchronous>, transform_indices = @transform_10, window_bounds = array<i64: 1, 32>}, {pipeline_mode = #tpu.pipeline_mode<synchronous>, transform_indices = @transform_11, window_bounds = array<i64: 32, 64>}, {pipeline_mode = #tpu.pipeline_mode<synchronous>, transform_indices = @transform_12, window_bounds = array<i64: 1, 64>}, {pipeline_mode = #tpu.pipeline_mode<synchronous>, transform_indices = @transform_13, window_bounds = array<i64: 64, 32>}, {pipeline_mode = #tpu.pipeline_mode<synchronous>, transform_indices = @transform_14, window_bounds = array<i64: 1, 32>}, {pipeline_mode = #tpu.pipeline_mode<synchronous>, transform_indices = @transform_15, window_bounds = array<i64: 9, 1, 32>}, {pipeline_mode = #tpu.pipeline_mode<synchronous>, transform_indices = @transform_16, window_bounds = array<i64: 1, 32>}, {pipeline_mode = #tpu.pipeline_mode<synchronous>, transform_indices = @transform_17, window_bounds = array<i64: 32, 64>}, {pipeline_mode = #tpu.pipeline_mode<synchronous>, transform_indices = @transform_18, window_bounds = array<i64: 1, 64>}, {pipeline_mode = #tpu.pipeline_mode<synchronous>, transform_indices = @transform_19, window_bounds = array<i64: 1, 64>}, {pipeline_mode = #tpu.pipeline_mode<synchronous>, transform_indices = @transform_20, window_bounds = array<i64: 64, 128>}, {pipeline_mode = #tpu.pipeline_mode<synchronous>, transform_indices = @transform_21, window_bounds = array<i64: 1, 128>}, {pipeline_mode = #tpu.pipeline_mode<synchronous>, transform_indices = @transform_22, window_bounds = array<i64: 128, 10>}, {pipeline_mode = #tpu.pipeline_mode<synchronous>, transform_indices = @transform_23, window_bounds = array<i64: 1, 10>}, {transform_indices = @transform_24, window_bounds = array<i64: 1, 1, 128>}, {transform_indices = @transform_25, window_bounds = array<i64: 1, 1, 10>}]} {
    %c0 = arith.constant 0 : index
    %c0_0 = arith.constant 0 : index
    %0 = vector.load %arg2[%c0, %c0_0] : memref<4x1xf32, #tpu.memory_space<vmem>>, vector<4x1xf32>
    %c0_1 = arith.constant 0 : index
    %c0_2 = arith.constant 0 : index
    %1 = vector.load %arg3[%c0_1, %c0_2] : memref<4x1xf32, #tpu.memory_space<vmem>>, vector<4x1xf32>
    %c0_3 = arith.constant 0 : index
    %c0_4 = arith.constant 0 : index
    %c0_5 = arith.constant 0 : index
    %c0_6 = arith.constant 0 : index
    %2 = vector.load %arg1[%c0_3, %c0_4, %c0_5, %c0_6] : memref<1x4x4x32xbf16, #tpu.memory_space<vmem>>, vector<1x1x4x32xbf16>
    %3 = vector.shape_cast %2 : vector<1x1x4x32xbf16> to vector<4x32xbf16>
    %4 = arith.extf %3 : vector<4x32xbf16> to vector<4x32xf32>
    %c0_7 = arith.constant 0 : index
    %c1 = arith.constant 1 : index
    %c0_8 = arith.constant 0 : index
    %c0_9 = arith.constant 0 : index
    %5 = vector.load %arg1[%c0_7, %c1, %c0_8, %c0_9] : memref<1x4x4x32xbf16, #tpu.memory_space<vmem>>, vector<1x1x4x32xbf16>
    %6 = vector.shape_cast %5 : vector<1x1x4x32xbf16> to vector<4x32xbf16>
    %7 = arith.extf %6 : vector<4x32xbf16> to vector<4x32xf32>
    %c0_10 = arith.constant 0 : index
    %c2 = arith.constant 2 : index
    %c0_11 = arith.constant 0 : index
    %c0_12 = arith.constant 0 : index
    %8 = vector.load %arg1[%c0_10, %c2, %c0_11, %c0_12] : memref<1x4x4x32xbf16, #tpu.memory_space<vmem>>, vector<1x1x4x32xbf16>
    %9 = vector.shape_cast %8 : vector<1x1x4x32xbf16> to vector<4x32xbf16>
    %10 = arith.extf %9 : vector<4x32xbf16> to vector<4x32xf32>
    %c0_13 = arith.constant 0 : index
    %c3 = arith.constant 3 : index
    %c0_14 = arith.constant 0 : index
    %c0_15 = arith.constant 0 : index
    %11 = vector.load %arg1[%c0_13, %c3, %c0_14, %c0_15] : memref<1x4x4x32xbf16, #tpu.memory_space<vmem>>, vector<1x1x4x32xbf16>
    %12 = vector.shape_cast %11 : vector<1x1x4x32xbf16> to vector<4x32xbf16>
    %13 = arith.extf %12 : vector<4x32xbf16> to vector<4x32xf32>
    %c0_16 = arith.constant 0 : index
    %c0_17 = arith.constant 0 : index
    %c0_18 = arith.constant 0 : index
    %14 = vector.load %arg4[%c0_16, %c0_17, %c0_18] : memref<9x1x32xf32, #tpu.memory_space<vmem>>, vector<9x1x32xf32>
    %c0_19 = arith.constant 0 : index
    %c0_20 = arith.constant 0 : index
    %15 = vector.load %arg5[%c0_19, %c0_20] : memref<1x32xf32, #tpu.memory_space<vmem>>, vector<1x32xf32>
    %cst = arith.constant 0.000000e+00 : f32
    %16 = vector.broadcast %cst : f32 to vector<4x32xf32>
    %17 = vector.broadcast %15 : vector<1x32xf32> to vector<4x32xf32>
    %18 = arith.addf %16, %17 : vector<4x32xf32>
    %cst_21 = arith.constant 0.000000e+00 : f32
    %19 = vector.broadcast %cst_21 : f32 to vector<2x32xf32>
    %20 = vector.extract_strided_slice %13 {offsets = [0, 0], sizes = [2, 32], strides = [1, 1]} : vector<4x32xf32> to vector<2x32xf32>
    %21 = tpu.concatenate %19, %20 in 0 : vector<2x32xf32>, vector<2x32xf32> -> vector<4x32xf32>
    %cst_22 = arith.constant 0.000000e+00 : f32
    %22 = vector.broadcast %cst_22 : f32 to vector<1x32xf32>
    %23 = vector.extract_strided_slice %21 {offsets = [0, 0], sizes = [3, 32], strides = [1, 1]} : vector<4x32xf32> to vector<3x32xf32>
    %24 = tpu.concatenate %22, %23 in 0 : vector<1x32xf32>, vector<3x32xf32> -> vector<4x32xf32>
    %25 = vector.broadcast %0 : vector<4x1xf32> to vector<4x32xf32>
    %26 = arith.mulf %24, %25 : vector<4x32xf32>
    %27 = vector.extract_strided_slice %14 {offsets = [0, 0, 0], sizes = [1, 1, 32], strides = [1, 1, 1]} : vector<9x1x32xf32> to vector<1x1x32xf32>
    %28 = vector.shape_cast %27 : vector<1x1x32xf32> to vector<1x32xf32>
    %29 = vector.broadcast %28 : vector<1x32xf32> to vector<4x32xf32>
    %30 = arith.mulf %26, %29 : vector<4x32xf32>
    %31 = arith.addf %18, %30 : vector<4x32xf32>
    %cst_23 = arith.constant 0.000000e+00 : f32
    %32 = vector.broadcast %cst_23 : f32 to vector<2x32xf32>
    %33 = vector.extract_strided_slice %10 {offsets = [0, 0], sizes = [2, 32], strides = [1, 1]} : vector<4x32xf32> to vector<2x32xf32>
    %34 = tpu.concatenate %32, %33 in 0 : vector<2x32xf32>, vector<2x32xf32> -> vector<4x32xf32>
    %35 = vector.extract_strided_slice %14 {offsets = [1, 0, 0], sizes = [1, 1, 32], strides = [1, 1, 1]} : vector<9x1x32xf32> to vector<1x1x32xf32>
    %36 = vector.shape_cast %35 : vector<1x1x32xf32> to vector<1x32xf32>
    %37 = vector.broadcast %36 : vector<1x32xf32> to vector<4x32xf32>
    %38 = arith.mulf %34, %37 : vector<4x32xf32>
    %39 = arith.addf %31, %38 : vector<4x32xf32>
    %cst_24 = arith.constant 0.000000e+00 : f32
    %40 = vector.broadcast %cst_24 : f32 to vector<2x32xf32>
    %41 = vector.extract_strided_slice %13 {offsets = [0, 0], sizes = [2, 32], strides = [1, 1]} : vector<4x32xf32> to vector<2x32xf32>
    %42 = tpu.concatenate %40, %41 in 0 : vector<2x32xf32>, vector<2x32xf32> -> vector<4x32xf32>
    %43 = vector.extract_strided_slice %14 {offsets = [2, 0, 0], sizes = [1, 1, 32], strides = [1, 1, 1]} : vector<9x1x32xf32> to vector<1x1x32xf32>
    %44 = vector.shape_cast %43 : vector<1x1x32xf32> to vector<1x32xf32>
    %45 = vector.broadcast %44 : vector<1x32xf32> to vector<4x32xf32>
    %46 = arith.mulf %42, %45 : vector<4x32xf32>
    %47 = arith.addf %39, %46 : vector<4x32xf32>
    %cst_25 = arith.constant 0.000000e+00 : f32
    %48 = vector.broadcast %cst_25 : f32 to vector<1x32xf32>
    %49 = vector.extract_strided_slice %7 {offsets = [0, 0], sizes = [3, 32], strides = [1, 1]} : vector<4x32xf32> to vector<3x32xf32>
    %50 = tpu.concatenate %48, %49 in 0 : vector<1x32xf32>, vector<3x32xf32> -> vector<4x32xf32>
    %51 = vector.broadcast %0 : vector<4x1xf32> to vector<4x32xf32>
    %52 = arith.mulf %50, %51 : vector<4x32xf32>
    %53 = vector.extract_strided_slice %14 {offsets = [3, 0, 0], sizes = [1, 1, 32], strides = [1, 1, 1]} : vector<9x1x32xf32> to vector<1x1x32xf32>
    %54 = vector.shape_cast %53 : vector<1x1x32xf32> to vector<1x32xf32>
    %55 = vector.broadcast %54 : vector<1x32xf32> to vector<4x32xf32>
    %56 = arith.mulf %52, %55 : vector<4x32xf32>
    %57 = arith.addf %47, %56 : vector<4x32xf32>
    %58 = vector.extract_strided_slice %14 {offsets = [4, 0, 0], sizes = [1, 1, 32], strides = [1, 1, 1]} : vector<9x1x32xf32> to vector<1x1x32xf32>
    %59 = vector.shape_cast %58 : vector<1x1x32xf32> to vector<1x32xf32>
    %60 = vector.broadcast %59 : vector<1x32xf32> to vector<4x32xf32>
    %61 = arith.mulf %4, %60 : vector<4x32xf32>
    %62 = arith.addf %57, %61 : vector<4x32xf32>
    %63 = vector.extract_strided_slice %14 {offsets = [5, 0, 0], sizes = [1, 1, 32], strides = [1, 1, 1]} : vector<9x1x32xf32> to vector<1x1x32xf32>
    %64 = vector.shape_cast %63 : vector<1x1x32xf32> to vector<1x32xf32>
    %65 = vector.broadcast %64 : vector<1x32xf32> to vector<4x32xf32>
    %66 = arith.mulf %7, %65 : vector<4x32xf32>
    %67 = arith.addf %62, %66 : vector<4x32xf32>
    %cst_26 = arith.constant 0.000000e+00 : f32
    %68 = vector.broadcast %cst_26 : f32 to vector<1x32xf32>
    %69 = vector.extract_strided_slice %13 {offsets = [0, 0], sizes = [3, 32], strides = [1, 1]} : vector<4x32xf32> to vector<3x32xf32>
    %70 = tpu.concatenate %68, %69 in 0 : vector<1x32xf32>, vector<3x32xf32> -> vector<4x32xf32>
    %71 = vector.broadcast %0 : vector<4x1xf32> to vector<4x32xf32>
    %72 = arith.mulf %70, %71 : vector<4x32xf32>
    %73 = vector.extract_strided_slice %14 {offsets = [6, 0, 0], sizes = [1, 1, 32], strides = [1, 1, 1]} : vector<9x1x32xf32> to vector<1x1x32xf32>
    %74 = vector.shape_cast %73 : vector<1x1x32xf32> to vector<1x32xf32>
    %75 = vector.broadcast %74 : vector<1x32xf32> to vector<4x32xf32>
    %76 = arith.mulf %72, %75 : vector<4x32xf32>
    %77 = arith.addf %67, %76 : vector<4x32xf32>
    %78 = vector.extract_strided_slice %14 {offsets = [7, 0, 0], sizes = [1, 1, 32], strides = [1, 1, 1]} : vector<9x1x32xf32> to vector<1x1x32xf32>
    %79 = vector.shape_cast %78 : vector<1x1x32xf32> to vector<1x32xf32>
    %80 = vector.broadcast %79 : vector<1x32xf32> to vector<4x32xf32>
    %81 = arith.mulf %10, %80 : vector<4x32xf32>
    %82 = arith.addf %77, %81 : vector<4x32xf32>
    %83 = vector.extract_strided_slice %14 {offsets = [8, 0, 0], sizes = [1, 1, 32], strides = [1, 1, 1]} : vector<9x1x32xf32> to vector<1x1x32xf32>
    %84 = vector.shape_cast %83 : vector<1x1x32xf32> to vector<1x32xf32>
    %85 = vector.broadcast %84 : vector<1x32xf32> to vector<4x32xf32>
    %86 = arith.mulf %13, %85 : vector<4x32xf32>
    %87 = arith.addf %82, %86 : vector<4x32xf32>
    %88 = arith.truncf %87 : vector<4x32xf32> to vector<4x32xbf16>
    %c0_27 = arith.constant 0 : index
    %c0_28 = arith.constant 0 : index
    %89 = vector.load %arg6[%c0_27, %c0_28] : memref<32x64xbf16, #tpu.memory_space<vmem>>, vector<32x64xbf16>
    %cst_29 = arith.constant dense<0.000000e+00> : vector<4x64xf32>
    %90 = tpu.matmul %88, %89, %cst_29 {dimension_numbers = #tpu.dot_dimension_numbers<[1], [0], [0], [1], [0, 0, 1, 1], [], []>} : vector<4x32xbf16>, vector<32x64xbf16>, vector<4x64xf32> -> vector<4x64xf32>
    %c0_30 = arith.constant 0 : index
    %c0_31 = arith.constant 0 : index
    %91 = vector.load %arg7[%c0_30, %c0_31] : memref<1x64xf32, #tpu.memory_space<vmem>>, vector<1x64xf32>
    %92 = vector.broadcast %91 : vector<1x64xf32> to vector<4x64xf32>
    %93 = arith.addf %90, %92 : vector<4x64xf32>
    %cst_32 = arith.constant 0.000000e+00 : f32
    %94 = vector.broadcast %cst_32 : f32 to vector<4x64xf32>
    %95 = arith.maximumf %93, %94 : vector<4x64xf32>
    %96 = arith.truncf %4 : vector<4x32xf32> to vector<4x32xbf16>
    %c0_33 = arith.constant 0 : index
    %c0_34 = arith.constant 0 : index
    %97 = vector.load %arg8[%c0_33, %c0_34] : memref<32x32xbf16, #tpu.memory_space<vmem>>, vector<32x32xbf16>
    %cst_35 = arith.constant dense<0.000000e+00> : vector<4x32xf32>
    %98 = tpu.matmul %96, %97, %cst_35 {dimension_numbers = #tpu.dot_dimension_numbers<[1], [0], [0], [1], [0, 0, 1, 1], [], []>} : vector<4x32xbf16>, vector<32x32xbf16>, vector<4x32xf32> -> vector<4x32xf32>
    %c0_36 = arith.constant 0 : index
    %c0_37 = arith.constant 0 : index
    %99 = vector.load %arg9[%c0_36, %c0_37] : memref<1x32xf32, #tpu.memory_space<vmem>>, vector<1x32xf32>
    %100 = vector.broadcast %99 : vector<1x32xf32> to vector<4x32xf32>
    %101 = arith.addf %98, %100 : vector<4x32xf32>
    %cst_38 = arith.constant 0.000000e+00 : f32
    %102 = vector.broadcast %cst_38 : f32 to vector<4x32xf32>
    %103 = arith.maximumf %101, %102 : vector<4x32xf32>
    %104 = arith.truncf %7 : vector<4x32xf32> to vector<4x32xbf16>
    %c0_39 = arith.constant 0 : index
    %c0_40 = arith.constant 0 : index
    %105 = vector.load %arg8[%c0_39, %c0_40] : memref<32x32xbf16, #tpu.memory_space<vmem>>, vector<32x32xbf16>
    %cst_41 = arith.constant dense<0.000000e+00> : vector<4x32xf32>
    %106 = tpu.matmul %104, %105, %cst_41 {dimension_numbers = #tpu.dot_dimension_numbers<[1], [0], [0], [1], [0, 0, 1, 1], [], []>} : vector<4x32xbf16>, vector<32x32xbf16>, vector<4x32xf32> -> vector<4x32xf32>
    %c0_42 = arith.constant 0 : index
    %c0_43 = arith.constant 0 : index
    %107 = vector.load %arg9[%c0_42, %c0_43] : memref<1x32xf32, #tpu.memory_space<vmem>>, vector<1x32xf32>
    %108 = vector.broadcast %107 : vector<1x32xf32> to vector<4x32xf32>
    %109 = arith.addf %106, %108 : vector<4x32xf32>
    %cst_44 = arith.constant 0.000000e+00 : f32
    %110 = vector.broadcast %cst_44 : f32 to vector<4x32xf32>
    %111 = arith.maximumf %109, %110 : vector<4x32xf32>
    %112 = arith.truncf %10 : vector<4x32xf32> to vector<4x32xbf16>
    %c0_45 = arith.constant 0 : index
    %c0_46 = arith.constant 0 : index
    %113 = vector.load %arg8[%c0_45, %c0_46] : memref<32x32xbf16, #tpu.memory_space<vmem>>, vector<32x32xbf16>
    %cst_47 = arith.constant dense<0.000000e+00> : vector<4x32xf32>
    %114 = tpu.matmul %112, %113, %cst_47 {dimension_numbers = #tpu.dot_dimension_numbers<[1], [0], [0], [1], [0, 0, 1, 1], [], []>} : vector<4x32xbf16>, vector<32x32xbf16>, vector<4x32xf32> -> vector<4x32xf32>
    %c0_48 = arith.constant 0 : index
    %c0_49 = arith.constant 0 : index
    %115 = vector.load %arg9[%c0_48, %c0_49] : memref<1x32xf32, #tpu.memory_space<vmem>>, vector<1x32xf32>
    %116 = vector.broadcast %115 : vector<1x32xf32> to vector<4x32xf32>
    %117 = arith.addf %114, %116 : vector<4x32xf32>
    %cst_50 = arith.constant 0.000000e+00 : f32
    %118 = vector.broadcast %cst_50 : f32 to vector<4x32xf32>
    %119 = arith.maximumf %117, %118 : vector<4x32xf32>
    %120 = arith.truncf %13 : vector<4x32xf32> to vector<4x32xbf16>
    %c0_51 = arith.constant 0 : index
    %c0_52 = arith.constant 0 : index
    %121 = vector.load %arg8[%c0_51, %c0_52] : memref<32x32xbf16, #tpu.memory_space<vmem>>, vector<32x32xbf16>
    %cst_53 = arith.constant dense<0.000000e+00> : vector<4x32xf32>
    %122 = tpu.matmul %120, %121, %cst_53 {dimension_numbers = #tpu.dot_dimension_numbers<[1], [0], [0], [1], [0, 0, 1, 1], [], []>} : vector<4x32xbf16>, vector<32x32xbf16>, vector<4x32xf32> -> vector<4x32xf32>
    %c0_54 = arith.constant 0 : index
    %c0_55 = arith.constant 0 : index
    %123 = vector.load %arg9[%c0_54, %c0_55] : memref<1x32xf32, #tpu.memory_space<vmem>>, vector<1x32xf32>
    %124 = vector.broadcast %123 : vector<1x32xf32> to vector<4x32xf32>
    %125 = arith.addf %122, %124 : vector<4x32xf32>
    %cst_56 = arith.constant 0.000000e+00 : f32
    %126 = vector.broadcast %cst_56 : f32 to vector<4x32xf32>
    %127 = arith.maximumf %125, %126 : vector<4x32xf32>
    %c0_57 = arith.constant 0 : index
    %c0_58 = arith.constant 0 : index
    %c0_59 = arith.constant 0 : index
    %128 = vector.load %arg10[%c0_57, %c0_58, %c0_59] : memref<9x1x32xf32, #tpu.memory_space<vmem>>, vector<9x1x32xf32>
    %c0_60 = arith.constant 0 : index
    %c0_61 = arith.constant 0 : index
    %129 = vector.load %arg11[%c0_60, %c0_61] : memref<1x32xf32, #tpu.memory_space<vmem>>, vector<1x32xf32>
    %cst_62 = arith.constant 0.000000e+00 : f32
    %130 = vector.broadcast %cst_62 : f32 to vector<4x32xf32>
    %131 = vector.broadcast %129 : vector<1x32xf32> to vector<4x32xf32>
    %132 = arith.addf %130, %131 : vector<4x32xf32>
    %cst_63 = arith.constant 0.000000e+00 : f32
    %133 = vector.broadcast %cst_63 : f32 to vector<2x32xf32>
    %134 = vector.extract_strided_slice %127 {offsets = [0, 0], sizes = [2, 32], strides = [1, 1]} : vector<4x32xf32> to vector<2x32xf32>
    %135 = tpu.concatenate %133, %134 in 0 : vector<2x32xf32>, vector<2x32xf32> -> vector<4x32xf32>
    %cst_64 = arith.constant 0.000000e+00 : f32
    %136 = vector.broadcast %cst_64 : f32 to vector<1x32xf32>
    %137 = vector.extract_strided_slice %135 {offsets = [0, 0], sizes = [3, 32], strides = [1, 1]} : vector<4x32xf32> to vector<3x32xf32>
    %138 = tpu.concatenate %136, %137 in 0 : vector<1x32xf32>, vector<3x32xf32> -> vector<4x32xf32>
    %139 = vector.broadcast %0 : vector<4x1xf32> to vector<4x32xf32>
    %140 = arith.mulf %138, %139 : vector<4x32xf32>
    %141 = vector.extract_strided_slice %128 {offsets = [0, 0, 0], sizes = [1, 1, 32], strides = [1, 1, 1]} : vector<9x1x32xf32> to vector<1x1x32xf32>
    %142 = vector.shape_cast %141 : vector<1x1x32xf32> to vector<1x32xf32>
    %143 = vector.broadcast %142 : vector<1x32xf32> to vector<4x32xf32>
    %144 = arith.mulf %140, %143 : vector<4x32xf32>
    %145 = arith.addf %132, %144 : vector<4x32xf32>
    %cst_65 = arith.constant 0.000000e+00 : f32
    %146 = vector.broadcast %cst_65 : f32 to vector<2x32xf32>
    %147 = vector.extract_strided_slice %119 {offsets = [0, 0], sizes = [2, 32], strides = [1, 1]} : vector<4x32xf32> to vector<2x32xf32>
    %148 = tpu.concatenate %146, %147 in 0 : vector<2x32xf32>, vector<2x32xf32> -> vector<4x32xf32>
    %149 = vector.extract_strided_slice %128 {offsets = [1, 0, 0], sizes = [1, 1, 32], strides = [1, 1, 1]} : vector<9x1x32xf32> to vector<1x1x32xf32>
    %150 = vector.shape_cast %149 : vector<1x1x32xf32> to vector<1x32xf32>
    %151 = vector.broadcast %150 : vector<1x32xf32> to vector<4x32xf32>
    %152 = arith.mulf %148, %151 : vector<4x32xf32>
    %153 = arith.addf %145, %152 : vector<4x32xf32>
    %cst_66 = arith.constant 0.000000e+00 : f32
    %154 = vector.broadcast %cst_66 : f32 to vector<2x32xf32>
    %155 = vector.extract_strided_slice %127 {offsets = [0, 0], sizes = [2, 32], strides = [1, 1]} : vector<4x32xf32> to vector<2x32xf32>
    %156 = tpu.concatenate %154, %155 in 0 : vector<2x32xf32>, vector<2x32xf32> -> vector<4x32xf32>
    %157 = vector.extract_strided_slice %128 {offsets = [2, 0, 0], sizes = [1, 1, 32], strides = [1, 1, 1]} : vector<9x1x32xf32> to vector<1x1x32xf32>
    %158 = vector.shape_cast %157 : vector<1x1x32xf32> to vector<1x32xf32>
    %159 = vector.broadcast %158 : vector<1x32xf32> to vector<4x32xf32>
    %160 = arith.mulf %156, %159 : vector<4x32xf32>
    %161 = arith.addf %153, %160 : vector<4x32xf32>
    %cst_67 = arith.constant 0.000000e+00 : f32
    %162 = vector.broadcast %cst_67 : f32 to vector<1x32xf32>
    %163 = vector.extract_strided_slice %111 {offsets = [0, 0], sizes = [3, 32], strides = [1, 1]} : vector<4x32xf32> to vector<3x32xf32>
    %164 = tpu.concatenate %162, %163 in 0 : vector<1x32xf32>, vector<3x32xf32> -> vector<4x32xf32>
    %165 = vector.broadcast %0 : vector<4x1xf32> to vector<4x32xf32>
    %166 = arith.mulf %164, %165 : vector<4x32xf32>
    %167 = vector.extract_strided_slice %128 {offsets = [3, 0, 0], sizes = [1, 1, 32], strides = [1, 1, 1]} : vector<9x1x32xf32> to vector<1x1x32xf32>
    %168 = vector.shape_cast %167 : vector<1x1x32xf32> to vector<1x32xf32>
    %169 = vector.broadcast %168 : vector<1x32xf32> to vector<4x32xf32>
    %170 = arith.mulf %166, %169 : vector<4x32xf32>
    %171 = arith.addf %161, %170 : vector<4x32xf32>
    %172 = vector.extract_strided_slice %128 {offsets = [4, 0, 0], sizes = [1, 1, 32], strides = [1, 1, 1]} : vector<9x1x32xf32> to vector<1x1x32xf32>
    %173 = vector.shape_cast %172 : vector<1x1x32xf32> to vector<1x32xf32>
    %174 = vector.broadcast %173 : vector<1x32xf32> to vector<4x32xf32>
    %175 = arith.mulf %103, %174 : vector<4x32xf32>
    %176 = arith.addf %171, %175 : vector<4x32xf32>
    %177 = vector.extract_strided_slice %128 {offsets = [5, 0, 0], sizes = [1, 1, 32], strides = [1, 1, 1]} : vector<9x1x32xf32> to vector<1x1x32xf32>
    %178 = vector.shape_cast %177 : vector<1x1x32xf32> to vector<1x32xf32>
    %179 = vector.broadcast %178 : vector<1x32xf32> to vector<4x32xf32>
    %180 = arith.mulf %111, %179 : vector<4x32xf32>
    %181 = arith.addf %176, %180 : vector<4x32xf32>
    %cst_68 = arith.constant 0.000000e+00 : f32
    %182 = vector.broadcast %cst_68 : f32 to vector<1x32xf32>
    %183 = vector.extract_strided_slice %127 {offsets = [0, 0], sizes = [3, 32], strides = [1, 1]} : vector<4x32xf32> to vector<3x32xf32>
    %184 = tpu.concatenate %182, %183 in 0 : vector<1x32xf32>, vector<3x32xf32> -> vector<4x32xf32>
    %185 = vector.broadcast %0 : vector<4x1xf32> to vector<4x32xf32>
    %186 = arith.mulf %184, %185 : vector<4x32xf32>
    %187 = vector.extract_strided_slice %128 {offsets = [6, 0, 0], sizes = [1, 1, 32], strides = [1, 1, 1]} : vector<9x1x32xf32> to vector<1x1x32xf32>
    %188 = vector.shape_cast %187 : vector<1x1x32xf32> to vector<1x32xf32>
    %189 = vector.broadcast %188 : vector<1x32xf32> to vector<4x32xf32>
    %190 = arith.mulf %186, %189 : vector<4x32xf32>
    %191 = arith.addf %181, %190 : vector<4x32xf32>
    %192 = vector.extract_strided_slice %128 {offsets = [7, 0, 0], sizes = [1, 1, 32], strides = [1, 1, 1]} : vector<9x1x32xf32> to vector<1x1x32xf32>
    %193 = vector.shape_cast %192 : vector<1x1x32xf32> to vector<1x32xf32>
    %194 = vector.broadcast %193 : vector<1x32xf32> to vector<4x32xf32>
    %195 = arith.mulf %119, %194 : vector<4x32xf32>
    %196 = arith.addf %191, %195 : vector<4x32xf32>
    %197 = vector.extract_strided_slice %128 {offsets = [8, 0, 0], sizes = [1, 1, 32], strides = [1, 1, 1]} : vector<9x1x32xf32> to vector<1x1x32xf32>
    %198 = vector.shape_cast %197 : vector<1x1x32xf32> to vector<1x32xf32>
    %199 = vector.broadcast %198 : vector<1x32xf32> to vector<4x32xf32>
    %200 = arith.mulf %127, %199 : vector<4x32xf32>
    %201 = arith.addf %196, %200 : vector<4x32xf32>
    %202 = arith.truncf %201 : vector<4x32xf32> to vector<4x32xbf16>
    %c0_69 = arith.constant 0 : index
    %c0_70 = arith.constant 0 : index
    %203 = vector.load %arg12[%c0_69, %c0_70] : memref<32x64xbf16, #tpu.memory_space<vmem>>, vector<32x64xbf16>
    %cst_71 = arith.constant dense<0.000000e+00> : vector<4x64xf32>
    %204 = tpu.matmul %202, %203, %cst_71 {dimension_numbers = #tpu.dot_dimension_numbers<[1], [0], [0], [1], [0, 0, 1, 1], [], []>} : vector<4x32xbf16>, vector<32x64xbf16>, vector<4x64xf32> -> vector<4x64xf32>
    %c0_72 = arith.constant 0 : index
    %c0_73 = arith.constant 0 : index
    %205 = vector.load %arg13[%c0_72, %c0_73] : memref<1x64xf32, #tpu.memory_space<vmem>>, vector<1x64xf32>
    %206 = vector.broadcast %205 : vector<1x64xf32> to vector<4x64xf32>
    %207 = arith.addf %204, %206 : vector<4x64xf32>
    %cst_74 = arith.constant 0.000000e+00 : f32
    %208 = vector.broadcast %cst_74 : f32 to vector<4x64xf32>
    %209 = arith.maximumf %207, %208 : vector<4x64xf32>
    %210 = arith.addf %95, %209 : vector<4x64xf32>
    %211 = arith.truncf %210 : vector<4x64xf32> to vector<4x64xbf16>
    %c0_75 = arith.constant 0 : index
    %c0_76 = arith.constant 0 : index
    %212 = vector.load %arg14[%c0_75, %c0_76] : memref<64x32xbf16, #tpu.memory_space<vmem>>, vector<64x32xbf16>
    %cst_77 = arith.constant dense<0.000000e+00> : vector<4x32xf32>
    %213 = tpu.matmul %211, %212, %cst_77 {dimension_numbers = #tpu.dot_dimension_numbers<[1], [0], [0], [1], [0, 0, 1, 1], [], []>} : vector<4x64xbf16>, vector<64x32xbf16>, vector<4x32xf32> -> vector<4x32xf32>
    %c0_78 = arith.constant 0 : index
    %c0_79 = arith.constant 0 : index
    %214 = vector.load %arg15[%c0_78, %c0_79] : memref<1x32xf32, #tpu.memory_space<vmem>>, vector<1x32xf32>
    %215 = vector.broadcast %214 : vector<1x32xf32> to vector<4x32xf32>
    %216 = arith.addf %213, %215 : vector<4x32xf32>
    %cst_80 = arith.constant 0.000000e+00 : f32
    %217 = vector.broadcast %cst_80 : f32 to vector<4x32xf32>
    %218 = arith.maximumf %216, %217 : vector<4x32xf32>
    %c0_81 = arith.constant 0 : index
    %c0_82 = arith.constant 0 : index
    %c0_83 = arith.constant 0 : index
    %219 = vector.load %arg16[%c0_81, %c0_82, %c0_83] : memref<9x1x32xf32, #tpu.memory_space<vmem>>, vector<9x1x32xf32>
    %c0_84 = arith.constant 0 : index
    %c0_85 = arith.constant 0 : index
    %220 = vector.load %arg17[%c0_84, %c0_85] : memref<1x32xf32, #tpu.memory_space<vmem>>, vector<1x32xf32>
    %cst_86 = arith.constant 0.000000e+00 : f32
    %221 = vector.broadcast %cst_86 : f32 to vector<4x32xf32>
    %222 = vector.broadcast %220 : vector<1x32xf32> to vector<4x32xf32>
    %223 = arith.addf %221, %222 : vector<4x32xf32>
    %cst_87 = arith.constant 0.000000e+00 : f32
    %224 = vector.broadcast %cst_87 : f32 to vector<3x32xf32>
    %225 = vector.extract_strided_slice %218 {offsets = [0, 0], sizes = [1, 32], strides = [1, 1]} : vector<4x32xf32> to vector<1x32xf32>
    %226 = tpu.concatenate %224, %225 in 0 : vector<3x32xf32>, vector<1x32xf32> -> vector<4x32xf32>
    %227 = vector.broadcast %0 : vector<4x1xf32> to vector<4x32xf32>
    %228 = arith.mulf %226, %227 : vector<4x32xf32>
    %229 = vector.extract_strided_slice %219 {offsets = [0, 0, 0], sizes = [1, 1, 32], strides = [1, 1, 1]} : vector<9x1x32xf32> to vector<1x1x32xf32>
    %230 = vector.shape_cast %229 : vector<1x1x32xf32> to vector<1x32xf32>
    %231 = vector.broadcast %230 : vector<1x32xf32> to vector<4x32xf32>
    %232 = arith.mulf %228, %231 : vector<4x32xf32>
    %233 = arith.addf %223, %232 : vector<4x32xf32>
    %cst_88 = arith.constant 0.000000e+00 : f32
    %234 = vector.broadcast %cst_88 : f32 to vector<2x32xf32>
    %235 = vector.extract_strided_slice %218 {offsets = [0, 0], sizes = [2, 32], strides = [1, 1]} : vector<4x32xf32> to vector<2x32xf32>
    %236 = tpu.concatenate %234, %235 in 0 : vector<2x32xf32>, vector<2x32xf32> -> vector<4x32xf32>
    %237 = vector.extract_strided_slice %219 {offsets = [1, 0, 0], sizes = [1, 1, 32], strides = [1, 1, 1]} : vector<9x1x32xf32> to vector<1x1x32xf32>
    %238 = vector.shape_cast %237 : vector<1x1x32xf32> to vector<1x32xf32>
    %239 = vector.broadcast %238 : vector<1x32xf32> to vector<4x32xf32>
    %240 = arith.mulf %236, %239 : vector<4x32xf32>
    %241 = arith.addf %233, %240 : vector<4x32xf32>
    %cst_89 = arith.constant 0.000000e+00 : f32
    %242 = vector.broadcast %cst_89 : f32 to vector<1x32xf32>
    %243 = vector.extract_strided_slice %218 {offsets = [0, 0], sizes = [3, 32], strides = [1, 1]} : vector<4x32xf32> to vector<3x32xf32>
    %244 = tpu.concatenate %242, %243 in 0 : vector<1x32xf32>, vector<3x32xf32> -> vector<4x32xf32>
    %245 = vector.broadcast %1 : vector<4x1xf32> to vector<4x32xf32>
    %246 = arith.mulf %244, %245 : vector<4x32xf32>
    %247 = vector.extract_strided_slice %219 {offsets = [2, 0, 0], sizes = [1, 1, 32], strides = [1, 1, 1]} : vector<9x1x32xf32> to vector<1x1x32xf32>
    %248 = vector.shape_cast %247 : vector<1x1x32xf32> to vector<1x32xf32>
    %249 = vector.broadcast %248 : vector<1x32xf32> to vector<4x32xf32>
    %250 = arith.mulf %246, %249 : vector<4x32xf32>
    %251 = arith.addf %241, %250 : vector<4x32xf32>
    %cst_90 = arith.constant 0.000000e+00 : f32
    %252 = vector.broadcast %cst_90 : f32 to vector<1x32xf32>
    %253 = vector.extract_strided_slice %218 {offsets = [0, 0], sizes = [3, 32], strides = [1, 1]} : vector<4x32xf32> to vector<3x32xf32>
    %254 = tpu.concatenate %252, %253 in 0 : vector<1x32xf32>, vector<3x32xf32> -> vector<4x32xf32>
    %255 = vector.broadcast %0 : vector<4x1xf32> to vector<4x32xf32>
    %256 = arith.mulf %254, %255 : vector<4x32xf32>
    %257 = vector.extract_strided_slice %219 {offsets = [3, 0, 0], sizes = [1, 1, 32], strides = [1, 1, 1]} : vector<9x1x32xf32> to vector<1x1x32xf32>
    %258 = vector.shape_cast %257 : vector<1x1x32xf32> to vector<1x32xf32>
    %259 = vector.broadcast %258 : vector<1x32xf32> to vector<4x32xf32>
    %260 = arith.mulf %256, %259 : vector<4x32xf32>
    %261 = arith.addf %251, %260 : vector<4x32xf32>
    %262 = vector.extract_strided_slice %219 {offsets = [4, 0, 0], sizes = [1, 1, 32], strides = [1, 1, 1]} : vector<9x1x32xf32> to vector<1x1x32xf32>
    %263 = vector.shape_cast %262 : vector<1x1x32xf32> to vector<1x32xf32>
    %264 = vector.broadcast %263 : vector<1x32xf32> to vector<4x32xf32>
    %265 = arith.mulf %218, %264 : vector<4x32xf32>
    %266 = arith.addf %261, %265 : vector<4x32xf32>
    %cst_91 = arith.constant 0.000000e+00 : f32
    %267 = vector.broadcast %cst_91 : f32 to vector<1x32xf32>
    %268 = vector.extract_strided_slice %218 {offsets = [1, 0], sizes = [3, 32], strides = [1, 1]} : vector<4x32xf32> to vector<3x32xf32>
    %269 = tpu.concatenate %268, %267 in 0 : vector<3x32xf32>, vector<1x32xf32> -> vector<4x32xf32>
    %270 = vector.broadcast %1 : vector<4x1xf32> to vector<4x32xf32>
    %271 = arith.mulf %269, %270 : vector<4x32xf32>
    %272 = vector.extract_strided_slice %219 {offsets = [5, 0, 0], sizes = [1, 1, 32], strides = [1, 1, 1]} : vector<9x1x32xf32> to vector<1x1x32xf32>
    %273 = vector.shape_cast %272 : vector<1x1x32xf32> to vector<1x32xf32>
    %274 = vector.broadcast %273 : vector<1x32xf32> to vector<4x32xf32>
    %275 = arith.mulf %271, %274 : vector<4x32xf32>
    %276 = arith.addf %266, %275 : vector<4x32xf32>
    %cst_92 = arith.constant 0.000000e+00 : f32
    %277 = vector.broadcast %cst_92 : f32 to vector<1x32xf32>
    %278 = vector.extract_strided_slice %218 {offsets = [1, 0], sizes = [3, 32], strides = [1, 1]} : vector<4x32xf32> to vector<3x32xf32>
    %279 = tpu.concatenate %278, %277 in 0 : vector<3x32xf32>, vector<1x32xf32> -> vector<4x32xf32>
    %280 = vector.broadcast %0 : vector<4x1xf32> to vector<4x32xf32>
    %281 = arith.mulf %279, %280 : vector<4x32xf32>
    %282 = vector.extract_strided_slice %219 {offsets = [6, 0, 0], sizes = [1, 1, 32], strides = [1, 1, 1]} : vector<9x1x32xf32> to vector<1x1x32xf32>
    %283 = vector.shape_cast %282 : vector<1x1x32xf32> to vector<1x32xf32>
    %284 = vector.broadcast %283 : vector<1x32xf32> to vector<4x32xf32>
    %285 = arith.mulf %281, %284 : vector<4x32xf32>
    %286 = arith.addf %276, %285 : vector<4x32xf32>
    %cst_93 = arith.constant 0.000000e+00 : f32
    %287 = vector.broadcast %cst_93 : f32 to vector<2x32xf32>
    %288 = vector.extract_strided_slice %218 {offsets = [2, 0], sizes = [2, 32], strides = [1, 1]} : vector<4x32xf32> to vector<2x32xf32>
    %289 = tpu.concatenate %288, %287 in 0 : vector<2x32xf32>, vector<2x32xf32> -> vector<4x32xf32>
    %290 = vector.extract_strided_slice %219 {offsets = [7, 0, 0], sizes = [1, 1, 32], strides = [1, 1, 1]} : vector<9x1x32xf32> to vector<1x1x32xf32>
    %291 = vector.shape_cast %290 : vector<1x1x32xf32> to vector<1x32xf32>
    %292 = vector.broadcast %291 : vector<1x32xf32> to vector<4x32xf32>
    %293 = arith.mulf %289, %292 : vector<4x32xf32>
    %294 = arith.addf %286, %293 : vector<4x32xf32>
    %cst_94 = arith.constant 0.000000e+00 : f32
    %295 = vector.broadcast %cst_94 : f32 to vector<3x32xf32>
    %296 = vector.extract_strided_slice %218 {offsets = [3, 0], sizes = [1, 32], strides = [1, 1]} : vector<4x32xf32> to vector<1x32xf32>
    %297 = tpu.concatenate %296, %295 in 0 : vector<1x32xf32>, vector<3x32xf32> -> vector<4x32xf32>
    %298 = vector.broadcast %1 : vector<4x1xf32> to vector<4x32xf32>
    %299 = arith.mulf %297, %298 : vector<4x32xf32>
    %300 = vector.extract_strided_slice %219 {offsets = [8, 0, 0], sizes = [1, 1, 32], strides = [1, 1, 1]} : vector<9x1x32xf32> to vector<1x1x32xf32>
    %301 = vector.shape_cast %300 : vector<1x1x32xf32> to vector<1x32xf32>
    %302 = vector.broadcast %301 : vector<1x32xf32> to vector<4x32xf32>
    %303 = arith.mulf %299, %302 : vector<4x32xf32>
    %304 = arith.addf %294, %303 : vector<4x32xf32>
    %305 = arith.truncf %304 : vector<4x32xf32> to vector<4x32xbf16>
    %c0_95 = arith.constant 0 : index
    %c0_96 = arith.constant 0 : index
    %306 = vector.load %arg18[%c0_95, %c0_96] : memref<32x64xbf16, #tpu.memory_space<vmem>>, vector<32x64xbf16>
    %cst_97 = arith.constant dense<0.000000e+00> : vector<4x64xf32>
    %307 = tpu.matmul %305, %306, %cst_97 {dimension_numbers = #tpu.dot_dimension_numbers<[1], [0], [0], [1], [0, 0, 1, 1], [], []>} : vector<4x32xbf16>, vector<32x64xbf16>, vector<4x64xf32> -> vector<4x64xf32>
    %c0_98 = arith.constant 0 : index
    %c0_99 = arith.constant 0 : index
    %308 = vector.load %arg19[%c0_98, %c0_99] : memref<1x64xf32, #tpu.memory_space<vmem>>, vector<1x64xf32>
    %309 = vector.broadcast %308 : vector<1x64xf32> to vector<4x64xf32>
    %310 = arith.addf %307, %309 : vector<4x64xf32>
    %cst_100 = arith.constant 0.000000e+00 : f32
    %311 = vector.broadcast %cst_100 : f32 to vector<4x64xf32>
    %312 = arith.maximumf %310, %311 : vector<4x64xf32>
    %c0_101 = arith.constant 0 : index
    %c0_102 = arith.constant 0 : index
    %313 = vector.load %arg20[%c0_101, %c0_102] : memref<1x64xf32, #tpu.memory_space<vmem>>, vector<1x64xf32>
    %314 = vector.broadcast %313 : vector<1x64xf32> to vector<4x64xf32>
    %315 = arith.mulf %210, %314 : vector<4x64xf32>
    %316 = arith.addf %315, %312 : vector<4x64xf32>
    %317 = arith.truncf %316 : vector<4x64xf32> to vector<4x64xbf16>
    %c0_103 = arith.constant 0 : index
    %c0_104 = arith.constant 0 : index
    %318 = vector.load %arg21[%c0_103, %c0_104] : memref<64x128xbf16, #tpu.memory_space<vmem>>, vector<64x128xbf16>
    %cst_105 = arith.constant dense<0.000000e+00> : vector<4x128xf32>
    %319 = tpu.matmul %317, %318, %cst_105 {dimension_numbers = #tpu.dot_dimension_numbers<[1], [0], [0], [1], [0, 0, 1, 1], [], []>} : vector<4x64xbf16>, vector<64x128xbf16>, vector<4x128xf32> -> vector<4x128xf32>
    %c0_106 = arith.constant 0 : index
    %c0_107 = arith.constant 0 : index
    %320 = vector.load %arg22[%c0_106, %c0_107] : memref<1x128xf32, #tpu.memory_space<vmem>>, vector<1x128xf32>
    %321 = vector.broadcast %320 : vector<1x128xf32> to vector<4x128xf32>
    %322 = arith.addf %319, %321 : vector<4x128xf32>
    %cst_108 = arith.constant 0.000000e+00 : f32
    %323 = vector.broadcast %cst_108 : f32 to vector<4x128xf32>
    %324 = arith.maximumf %322, %323 : vector<4x128xf32>
    %cst_109 = arith.constant dense<0.000000e+00> : vector<128xf32>
    %325 = vector.multi_reduction <add>, %324, %cst_109 [0] : vector<4x128xf32> to vector<128xf32>
    %326 = vector.shape_cast %325 : vector<128xf32> to vector<1x128xf32>
    %cst_110 = arith.constant 2.500000e-01 : f32
    %327 = vector.broadcast %cst_110 : f32 to vector<1x128xf32>
    %328 = arith.mulf %326, %327 : vector<1x128xf32>
    %329 = arith.truncf %328 : vector<1x128xf32> to vector<1x128xbf16>
    %c0_111 = arith.constant 0 : index
    %c0_112 = arith.constant 0 : index
    %330 = vector.load %arg23[%c0_111, %c0_112] : memref<128x10xbf16, #tpu.memory_space<vmem>>, vector<128x10xbf16>
    %cst_113 = arith.constant dense<0.000000e+00> : vector<1x10xf32>
    %331 = tpu.matmul %329, %330, %cst_113 {dimension_numbers = #tpu.dot_dimension_numbers<[1], [0], [0], [1], [0, 0, 1, 1], [], []>} : vector<1x128xbf16>, vector<128x10xbf16>, vector<1x10xf32> -> vector<1x10xf32>
    %c0_114 = arith.constant 0 : index
    %c0_115 = arith.constant 0 : index
    %332 = vector.load %arg24[%c0_114, %c0_115] : memref<1x10xf32, #tpu.memory_space<vmem>>, vector<1x10xf32>
    %333 = arith.addf %331, %332 : vector<1x10xf32>
    %c0_116 = arith.constant 0 : index
    %c0_117 = arith.constant 0 : index
    %c0_118 = arith.constant 0 : index
    %334 = vector.load %arg25[%c0_116, %c0_117, %c0_118] : memref<1x1x128xf32, #tpu.memory_space<vmem>>, vector<1x1x128xf32>
    %335 = vector.shape_cast %334 : vector<1x1x128xf32> to vector<1x128xf32>
    %336 = vector.shape_cast %328 : vector<1x128xf32> to vector<1x1x128xf32>
    tpu.vector_store %arg25[%c0_116, %c0_117, %c0_118], %336 {strides = array<i32>} : memref<1x1x128xf32, #tpu.memory_space<vmem>>, vector<1x1x128xf32>,
    %c0_119 = arith.constant 0 : index
    %c0_120 = arith.constant 0 : index
    %c0_121 = arith.constant 0 : index
    %337 = vector.load %arg26[%c0_119, %c0_120, %c0_121] : memref<1x1x10xf32, #tpu.memory_space<vmem>>, vector<1x1x10xf32>
    %338 = vector.shape_cast %337 : vector<1x1x10xf32> to vector<1x10xf32>
    %339 = vector.shape_cast %333 : vector<1x10xf32> to vector<1x1x10xf32>
    tpu.vector_store %arg26[%c0_119, %c0_120, %c0_121], %339 {strides = array<i32>} : memref<1x1x10xf32, #tpu.memory_space<vmem>>, vector<1x1x10xf32>,
    return
  }
  func.func @transform_0(%arg0: i32) -> (i32, i32, i32, i32) {
    %c0_i32 = arith.constant 0 : i32
    %c0_i32_0 = arith.constant 0 : i32
    %c0_i32_1 = arith.constant 0 : i32
    %c0_i32_2 = arith.constant 0 : i32
    return %arg0, %c0_i32, %c0_i32_0, %c0_i32_1 : i32, i32, i32, i32
  }
  func.func @transform_1(%arg0: i32) -> (i32, i32) {
    %c0_i32 = arith.constant 0 : i32
    %c0_i32_0 = arith.constant 0 : i32
    %c0_i32_1 = arith.constant 0 : i32
    return %c0_i32, %c0_i32_0 : i32, i32
  }
  func.func @transform_2(%arg0: i32) -> (i32, i32) {
    %c0_i32 = arith.constant 0 : i32
    %c0_i32_0 = arith.constant 0 : i32
    %c0_i32_1 = arith.constant 0 : i32
    return %c0_i32, %c0_i32_0 : i32, i32
  }
  func.func @transform_3(%arg0: i32) -> (i32, i32, i32) {
    %c0_i32 = arith.constant 0 : i32
    %c0_i32_0 = arith.constant 0 : i32
    %c0_i32_1 = arith.constant 0 : i32
    %c0_i32_2 = arith.constant 0 : i32
    return %c0_i32, %c0_i32_0, %c0_i32_1 : i32, i32, i32
  }
  func.func @transform_4(%arg0: i32) -> (i32, i32) {
    %c0_i32 = arith.constant 0 : i32
    %c0_i32_0 = arith.constant 0 : i32
    %c0_i32_1 = arith.constant 0 : i32
    return %c0_i32, %c0_i32_0 : i32, i32
  }
  func.func @transform_5(%arg0: i32) -> (i32, i32) {
    %c0_i32 = arith.constant 0 : i32
    %c0_i32_0 = arith.constant 0 : i32
    %c0_i32_1 = arith.constant 0 : i32
    return %c0_i32, %c0_i32_0 : i32, i32
  }
  func.func @transform_6(%arg0: i32) -> (i32, i32) {
    %c0_i32 = arith.constant 0 : i32
    %c0_i32_0 = arith.constant 0 : i32
    %c0_i32_1 = arith.constant 0 : i32
    return %c0_i32, %c0_i32_0 : i32, i32
  }
  func.func @transform_7(%arg0: i32) -> (i32, i32) {
    %c0_i32 = arith.constant 0 : i32
    %c0_i32_0 = arith.constant 0 : i32
    %c0_i32_1 = arith.constant 0 : i32
    return %c0_i32, %c0_i32_0 : i32, i32
  }
  func.func @transform_8(%arg0: i32) -> (i32, i32) {
    %c0_i32 = arith.constant 0 : i32
    %c0_i32_0 = arith.constant 0 : i32
    %c0_i32_1 = arith.constant 0 : i32
    return %c0_i32, %c0_i32_0 : i32, i32
  }
  func.func @transform_9(%arg0: i32) -> (i32, i32, i32) {
    %c0_i32 = arith.constant 0 : i32
    %c0_i32_0 = arith.constant 0 : i32
    %c0_i32_1 = arith.constant 0 : i32
    %c0_i32_2 = arith.constant 0 : i32
    return %c0_i32, %c0_i32_0, %c0_i32_1 : i32, i32, i32
  }
  func.func @transform_10(%arg0: i32) -> (i32, i32) {
    %c0_i32 = arith.constant 0 : i32
    %c0_i32_0 = arith.constant 0 : i32
    %c0_i32_1 = arith.constant 0 : i32
    return %c0_i32, %c0_i32_0 : i32, i32
  }
  func.func @transform_11(%arg0: i32) -> (i32, i32) {
    %c0_i32 = arith.constant 0 : i32
    %c0_i32_0 = arith.constant 0 : i32
    %c0_i32_1 = arith.constant 0 : i32
    return %c0_i32, %c0_i32_0 : i32, i32
  }
  func.func @transform_12(%arg0: i32) -> (i32, i32) {
    %c0_i32 = arith.constant 0 : i32
    %c0_i32_0 = arith.constant 0 : i32
    %c0_i32_1 = arith.constant 0 : i32
    return %c0_i32, %c0_i32_0 : i32, i32
  }
  func.func @transform_13(%arg0: i32) -> (i32, i32) {
    %c0_i32 = arith.constant 0 : i32
    %c0_i32_0 = arith.constant 0 : i32
    %c0_i32_1 = arith.constant 0 : i32
    return %c0_i32, %c0_i32_0 : i32, i32
  }
  func.func @transform_14(%arg0: i32) -> (i32, i32) {
    %c0_i32 = arith.constant 0 : i32
    %c0_i32_0 = arith.constant 0 : i32
    %c0_i32_1 = arith.constant 0 : i32
    return %c0_i32, %c0_i32_0 : i32, i32
  }
  func.func @transform_15(%arg0: i32) -> (i32, i32, i32) {
    %c0_i32 = arith.constant 0 : i32
    %c0_i32_0 = arith.constant 0 : i32
    %c0_i32_1 = arith.constant 0 : i32
    %c0_i32_2 = arith.constant 0 : i32
    return %c0_i32, %c0_i32_0, %c0_i32_1 : i32, i32, i32
  }
  func.func @transform_16(%arg0: i32) -> (i32, i32) {
    %c0_i32 = arith.constant 0 : i32
    %c0_i32_0 = arith.constant 0 : i32
    %c0_i32_1 = arith.constant 0 : i32
    return %c0_i32, %c0_i32_0 : i32, i32
  }
  func.func @transform_17(%arg0: i32) -> (i32, i32) {
    %c0_i32 = arith.constant 0 : i32
    %c0_i32_0 = arith.constant 0 : i32
    %c0_i32_1 = arith.constant 0 : i32
    return %c0_i32, %c0_i32_0 : i32, i32
  }
  func.func @transform_18(%arg0: i32) -> (i32, i32) {
    %c0_i32 = arith.constant 0 : i32
    %c0_i32_0 = arith.constant 0 : i32
    %c0_i32_1 = arith.constant 0 : i32
    return %c0_i32, %c0_i32_0 : i32, i32
  }
  func.func @transform_19(%arg0: i32) -> (i32, i32) {
    %c0_i32 = arith.constant 0 : i32
    %c0_i32_0 = arith.constant 0 : i32
    %c0_i32_1 = arith.constant 0 : i32
    return %c0_i32, %c0_i32_0 : i32, i32
  }
  func.func @transform_20(%arg0: i32) -> (i32, i32) {
    %c0_i32 = arith.constant 0 : i32
    %c0_i32_0 = arith.constant 0 : i32
    %c0_i32_1 = arith.constant 0 : i32
    return %c0_i32, %c0_i32_0 : i32, i32
  }
  func.func @transform_21(%arg0: i32) -> (i32, i32) {
    %c0_i32 = arith.constant 0 : i32
    %c0_i32_0 = arith.constant 0 : i32
    %c0_i32_1 = arith.constant 0 : i32
    return %c0_i32, %c0_i32_0 : i32, i32
  }
  func.func @transform_22(%arg0: i32) -> (i32, i32) {
    %c0_i32 = arith.constant 0 : i32
    %c0_i32_0 = arith.constant 0 : i32
    %c0_i32_1 = arith.constant 0 : i32
    return %c0_i32, %c0_i32_0 : i32, i32
  }
  func.func @transform_23(%arg0: i32) -> (i32, i32) {
    %c0_i32 = arith.constant 0 : i32
    %c0_i32_0 = arith.constant 0 : i32
    %c0_i32_1 = arith.constant 0 : i32
    return %c0_i32, %c0_i32_0 : i32, i32
  }
  func.func @transform_24(%arg0: i32) -> (i32, i32, i32) {
    %c0_i32 = arith.constant 0 : i32
    %c0_i32_0 = arith.constant 0 : i32
    %c0_i32_1 = arith.constant 0 : i32
    return %arg0, %c0_i32, %c0_i32_0 : i32, i32, i32
  }
  func.func @transform_25(%arg0: i32) -> (i32, i32, i32) {
    %c0_i32 = arith.constant 0 : i32
    %c0_i32_0 = arith.constant 0 : i32
    %c0_i32_1 = arith.constant 0 : i32
    return %arg0, %c0_i32, %c0_i32_0 : i32, i32, i32
  }
}

</mosaic_0001>

<llo_original>
// kernel: _lambda_.4
$region0: #{_lambda_.4}
  #allocation0 [shape = 'u32[]', space=smem, size = 0x4, offset = 0x4, fixed_abs, tag = 'smem constant byte address 0x4 - core index']
  #allocation1 [shape = 'u32[72,128]{1,0:T(1,128)}', space=vmem, size = 0x9000, scoped, tag = 'internal scratch']
  %s0 = inlined_call_operand.vmem [shape: bf16[2,4,256,27], index: 0, kind: input, shape index: {}]
  %s1 = inlined_call_operand.vmem [shape: bf16[27,8], index: 1, kind: input, shape index: {}]
  %s2 = inlined_call_operand.vmem [shape: f32[1,8], index: 2, kind: input, shape index: {}]
  %s3 = inlined_call_operand.vmem [shape: f32[256,1], index: 3, kind: input, shape index: {}]
  %s4 = inlined_call_operand.vmem [shape: bf16[2,256,8], index: 4, kind: output, shape index: {}]
  %s5 = sld [smem:[#allocation0]]
  $region49: #{_lambda_.4} parent=0
    _
  %s7 = ssub.s32 1, %s5
  %s8 = scalar_select 0, %s7, %s5
  loop: start=0, step=1, limit=4
  $region2: #{_lambda_.4} parent=0 // loop_pre_header
    _
  $region3: #{_lambda_.4} parent=0 // loop_header
    %s10 = sphi 0, %s14
    %p11 = scmp.ge.s32.totalorder %s10, 4
    %s20 = sphi 0, %s22
    %s23 = sphi 0, %s20
    %s24 = sphi 0, %s23
    %s40 = sphi 0, %s24
    %s44 = sphi 0, %s44
    %s46 = sphi 0, %s44
    %s47 = sphi 0, %s46
    %s61 = sphi 0, %s47
    %s65 = sphi 0, %s65
    %s67 = sphi 0, %s65
    %s68 = sphi 0, %s67
    %s82 = sphi 0, %s68
    %s86 = sphi 0, %s86
    %s88 = sphi 0, %s86
    %s89 = sphi 0, %s88
    %s103 = sphi 0, %s89
    %s109 = sphi 0, %s111
    %s112 = sphi 0, %s109
    %s113 = sphi 0, %s112
    %s129 = sphi 0, %s113
  $region4: #{_lambda_.4} parent=0 // loop_header_branch
    %13 = sbr.rel (%p11) target = $region8
  $region5: #{_lambda_.4} parent=0 // loop_body
    %s15 = ssub.s32 %s10, 1
    %s16 = ssub.s32 %s10, 2
    %s17 = sadd.s32 %s10, 1
    %s18 = ssub.s32 %s10, %s17
    %p19 = scmp.eq.s32.totalorder %s18, 0
    %s21 = sadd.s32 %s20, 1
    %s22 = scalar_select %p19, %s20, %s21
    %p25 = pneg %p19
    %p26 = scmp.eq.s32.totalorder %s10, 1
    %p27 = por %p25, %p26
    %p28 = scmp.ne.s32.totalorder %s20, %s23
    %p29 = scmp.eq.s32.totalorder %s10, 0
    %p30 = por %p28, %p29
    %p31 = scmp.ne.s32.totalorder %s20, %s23
    %p32 = scmp.eq.s32.totalorder %s15, 1
    %p33 = por %p31, %p32
    %p34 = scmp.ne.s32.totalorder %s23, %s24
    %p35 = scmp.eq.s32.totalorder %s15, 0
    %p36 = por %p34, %p35
    %p37 = scmp.ne.s32.totalorder %s23, %s24
    %p38 = scmp.eq.s32.totalorder %s16, 1
    %p39 = por %p37, %p38
    %p41 = scmp.ne.s32.totalorder %s24, %s40
    %p42 = scmp.eq.s32.totalorder %s16, 0
    %p43 = por %p41, %p42
    %s45 = sadd.s32 %s44, 1
    %p48 = scmp.eq.s32.totalorder %s10, 1
    %p49 = scmp.ne.s32.totalorder %s44, %s46
    %p50 = scmp.eq.s32.totalorder %s10, 0
    %p51 = por %p49, %p50
    %p52 = scmp.ne.s32.totalorder %s44, %s46
    %p53 = scmp.eq.s32.totalorder %s15, 1
    %p54 = por %p52, %p53
    %p55 = scmp.ne.s32.totalorder %s46, %s47
    %p56 = scmp.eq.s32.totalorder %s15, 0
    %p57 = por %p55, %p56
    %p58 = scmp.ne.s32.totalorder %s46, %s47
    %p59 = scmp.eq.s32.totalorder %s16, 1
    %p60 = por %p58, %p59
    %p62 = scmp.ne.s32.totalorder %s47, %s61
    %p63 = scmp.eq.s32.totalorder %s16, 0
    %p64 = por %p62, %p63
    %s66 = sadd.s32 %s65, 1
    %p69 = scmp.eq.s32.totalorder %s10, 1
    %p70 = scmp.ne.s32.totalorder %s65, %s67
    %p71 = scmp.eq.s32.totalorder %s10, 0
    %p72 = por %p70, %p71
    %p73 = scmp.ne.s32.totalorder %s65, %s67
    %p74 = scmp.eq.s32.totalorder %s15, 1
    %p75 = por %p73, %p74
    %p76 = scmp.ne.s32.totalorder %s67, %s68
    %p77 = scmp.eq.s32.totalorder %s15, 0
    %p78 = por %p76, %p77
    %p79 = scmp.ne.s32.totalorder %s67, %s68
    %p80 = scmp.eq.s32.totalorder %s16, 1
    %p81 = por %p79, %p80
    %p83 = scmp.ne.s32.totalorder %s68, %s82
    %p84 = scmp.eq.s32.totalorder %s16, 0
    %p85 = por %p83, %p84
    %s87 = sadd.s32 %s86, 1
    %p90 = scmp.eq.s32.totalorder %s10, 1
    %p91 = scmp.ne.s32.totalorder %s86, %s88
    %p92 = scmp.eq.s32.totalorder %s10, 0
    %p93 = por %p91, %p92
    %p94 = scmp.ne.s32.totalorder %s86, %s88
    %p95 = scmp.eq.s32.totalorder %s15, 1
    %p96 = por %p94, %p95
    %p97 = scmp.ne.s32.totalorder %s88, %s89
    %p98 = scmp.eq.s32.totalorder %s15, 0
    %p99 = por %p97, %p98
    %p100 = scmp.ne.s32.totalorder %s88, %s89
    %p101 = scmp.eq.s32.totalorder %s16, 1
    %p102 = por %p100, %p101
    %p104 = scmp.ne.s32.totalorder %s89, %s103
    %p105 = scmp.eq.s32.totalorder %s16, 0
    %p106 = por %p104, %p105
    %s107 = ssub.s32 %s10, %s17
    %p108 = scmp.eq.s32.totalorder %s107, 0
    %s110 = sadd.s32 %s109, 1
    %s111 = scalar_select %p108, %s109, %s110
    %p114 = pneg %p108
    %p115 = scmp.eq.s32.totalorder %s10, 1
    %p116 = por %p114, %p115
    %p117 = scmp.ne.s32.totalorder %s109, %s112
    %p118 = scmp.eq.s32.totalorder %s10, 0
    %p119 = por %p117, %p118
    %p120 = scmp.ne.s32.totalorder %s109, %s112
    %p121 = scmp.eq.s32.totalorder %s15, 1
    %p122 = por %p120, %p121
    %p123 = scmp.ne.s32.totalorder %s112, %s113
    %p124 = scmp.eq.s32.totalorder %s15, 0
    %p125 = por %p123, %p124
    %p126 = scmp.ne.s32.totalorder %s112, %s113
    %p127 = scmp.eq.s32.totalorder %s16, 1
    %p128 = por %p126, %p127
    %p130 = scmp.ne.s32.totalorder %s113, %s129
    %p131 = scmp.eq.s32.totalorder %s16, 0
    %p132 = por %p130, %p131
    %p133 = scmp.le.s32.totalorder 1, %s10
    %p134 = scmp.lt.s32.totalorder %s10, 3
    %p135 = pnand %p133, %p134
    %p136 = pneg %p135
    // Predicated region
    $region9: #{_lambda_.4} parent=5 // pred_check
      _
    $region10: #{_lambda_.4} parent=5 // pred_check_branch
      %138 = sbr.rel (%p135) target = $region12
    $region11: #{_lambda_.4} parent=5 // pred_region
      %s139 = ssub.s32 %s10, 1
      // Predicated region
      $region13: #{_lambda_.4} parent=11 // pred_check
        %p140 = pneg %p57
      $region14: #{_lambda_.4} parent=11 // pred_check_branch
        %142 = sbr.rel (%p140) target = $region16
      $region15: #{_lambda_.4} parent=11 // pred_region
        _
      $region16: #{_lambda_.4} parent=11 // pred_fallthru
        _
      // Predicated region
      $region17: #{_lambda_.4} parent=11 // pred_check
        %p143 = pneg %p78
      $region18: #{_lambda_.4} parent=11 // pred_check_branch
        %145 = sbr.rel (%p143) target = $region20
      $region19: #{_lambda_.4} parent=11 // pred_region
        _
      $region20: #{_lambda_.4} parent=11 // pred_fallthru
        _
      // Predicated region
      $region21: #{_lambda_.4} parent=11 // pred_check
        %p146 = pneg %p99
      $region22: #{_lambda_.4} parent=11 // pred_check_branch
        %148 = sbr.rel (%p146) target = $region24
      $region23: #{_lambda_.4} parent=11 // pred_region
        _
      $region24: #{_lambda_.4} parent=11 // pred_fallthru
        _
    $region12: #{_lambda_.4} parent=5 // pred_fallthru
      _
    %p149 = scmp.lt.s32.totalorder %s10, 2
    // Predicated region
    $region25: #{_lambda_.4} parent=5 // pred_check
      %p150 = pneg %p149
    $region26: #{_lambda_.4} parent=5 // pred_check_branch
      %152 = sbr.rel (%p150) target = $region28
    $region27: #{_lambda_.4} parent=5 // pred_region
      // Predicated region
      $region29: #{_lambda_.4} parent=27 // pred_check
        %p153 = pneg %p30
      $region30: #{_lambda_.4} parent=27 // pred_check_branch
        %155 = sbr.rel (%p153) target = $region32
      $region31: #{_lambda_.4} parent=27 // pred_region
        %p156 = scmp.lt.s32.totalorder %s10, 1
        %s157 = scalar_select %p156, %s10, 1
        %s158 = smul.addr %s157, 128
        %s159 = smul.addr %s158, 4
        %s160 = scalar_lea.vmem %s0, %s159
      $region32: #{_lambda_.4} parent=27 // pred_fallthru
        _
    $region28: #{_lambda_.4} parent=5 // pred_fallthru
      _
    %p161 = scmp.le.s32.totalorder 1, %s10
    %p162 = scmp.lt.s32.totalorder %s10, 3
    %p163 = pnand %p161, %p162
    %p164 = pneg %p163
    // Predicated region
    $region33: #{_lambda_.4} parent=5 // pred_check
      _
    $region34: #{_lambda_.4} parent=5 // pred_check_branch
      %166 = sbr.rel (%p163) target = $region36
    $region35: #{_lambda_.4} parent=5 // pred_region
      %s167 = ssub.s32 %s10, 1
      %p168 = scmp.lt.s32.totalorder %s15, 1
      %s169 = scalar_select %p168, %s15, 1
      %s170 = smul.addr %s169, 128
      %s171 = smul.addr %s170, 4
      %s172 = scalar_lea.vmem %s0, %s171
      %p173 = pneg %p36
      %p174 = pneg %p33
      %p175 = pneg %p57
      %p176 = pneg %p54
      %p177 = pneg %p78
      %p178 = pneg %p75
      %p179 = pneg %p99
      %p180 = pneg %p96
      %p181 = pneg %p125
      %p182 = pneg %p122
      %p183 = scmp.lt.s32.totalorder %s15, 1
      %s184 = scalar_select %p183, %s15, 1
      %s185 = smul.addr %s184, 32
      %s186 = smul.addr %s185, 4
      %s187 = scalar_lea.vmem %s4, %s186
      %p188 = scmp.lt.s32.totalorder %s15, 1
      %s189 = scalar_select %p188, %s15, 1
      %s190 = smul.addr %s189, 128
      %s191 = smul.addr %s190, 4
      %s192 = scalar_lea.vmem %s0, %s191
      %p193 = scmp.lt.s32.totalorder %s15, 1
      %s194 = scalar_select %p193, %s15, 1
      %s195 = smul.addr %s194, 32
      %s196 = smul.addr %s195, 4
      %s197 = scalar_lea.vmem %s4, %s196
      %v199 = vld [vmem:[%s3] sm:$0xff]
      %v200 = vld [vmem:[%s3 + $0x8] sm:$0xff]
      %v201 = vld [vmem:[%s3 + $0x10] sm:$0xff]
      %v202 = vld [vmem:[%s3 + $0x18] sm:$0xff]
      %v203 = vld [vmem:[%s3 + $0x20] sm:$0xff]
      %v204 = vld [vmem:[%s3 + $0x28] sm:$0xff]
      %v205 = vld [vmem:[%s3 + $0x30] sm:$0xff]
      %v206 = vld [vmem:[%s3 + $0x38] sm:$0xff]
      %v207 = vld [vmem:[%s3 + $0x40] sm:$0xff]
      %v208 = vld [vmem:[%s3 + $0x48] sm:$0xff]
      %v209 = vld [vmem:[%s3 + $0x50] sm:$0xff]
      %v210 = vld [vmem:[%s3 + $0x58] sm:$0xff]
      %v211 = vld [vmem:[%s3 + $0x60] sm:$0xff]
      %v212 = vld [vmem:[%s3 + $0x68] sm:$0xff]
      %v213 = vld [vmem:[%s3 + $0x70] sm:$0xff]
      %v214 = vld [vmem:[%s3 + $0x78] sm:$0xff]
      %v215 = vld [vmem:[%s3 + $0x80] sm:$0xff]
      %v216 = vld [vmem:[%s3 + $0x88] sm:$0xff]
      %v217 = vld [vmem:[%s3 + $0x90] sm:$0xff]
      %v218 = vld [vmem:[%s3 + $0x98] sm:$0xff]
      %v219 = vld [vmem:[%s3 + $0xa0] sm:$0xff]
      %v220 = vld [vmem:[%s3 + $0xa8] sm:$0xff]
      %v221 = vld [vmem:[%s3 + $0xb0] sm:$0xff]
      %v222 = vld [vmem:[%s3 + $0xb8] sm:$0xff]
      %v223 = vld [vmem:[%s3 + $0xc0] sm:$0xff]
      %v224 = vld [vmem:[%s3 + $0xc8] sm:$0xff]
      %v225 = vld [vmem:[%s3 + $0xd0] sm:$0xff]
      %v226 = vld [vmem:[%s3 + $0xd8] sm:$0xff]
      %v227 = vld [vmem:[%s3 + $0xe0] sm:$0xff]
      %v228 = vld [vmem:[%s3 + $0xe8] sm:$0xff]
      %v229 = vld [vmem:[%s3 + $0xf0] sm:$0xff]
      %v230 = vld [vmem:[%s3 + $0xf8] sm:$0xff]
      %v231 = vld [vmem:[%s192] sm:$0xf]
      %v232 = vld [vmem:[%s192 + $0x4] sm:$0xf]
      %v233 = vld [vmem:[%s192 + $0x8] sm:$0xf]
      %v234 = vld [vmem:[%s192 + $0xc] sm:$0xf]
      %v235 = vld [vmem:[%s192 + $0x10] sm:$0xf]
      %v236 = vld [vmem:[%s192 + $0x14] sm:$0xf]
      %v237 = vld [vmem:[%s192 + $0x18] sm:$0xf]
      %v238 = vld [vmem:[%s192 + $0x1c] sm:$0xf]
      %v239 = vld [vmem:[%s192 + $0x20] sm:$0xf]
      %v240 = vld [vmem:[%s192 + $0x24] sm:$0xf]
      %v241 = vld [vmem:[%s192 + $0x28] sm:$0xf]
      %v242 = vld [vmem:[%s192 + $0x2c] sm:$0xf]
      %v243 = vld [vmem:[%s192 + $0x30] sm:$0xf]
      %v244 = vld [vmem:[%s192 + $0x34] sm:$0xf]
      %v245 = vld [vmem:[%s192 + $0x38] sm:$0xf]
      %v246 = vld [vmem:[%s192 + $0x3c] sm:$0xf]
      %v247 = vld [vmem:[%s192 + $0x40] sm:$0xf]
      %v248 = vld [vmem:[%s192 + $0x44] sm:$0xf]
      %v249 = vld [vmem:[%s192 + $0x48] sm:$0xf]
      %v250 = vld [vmem:[%s192 + $0x4c] sm:$0xf]
      %v251 = vld [vmem:[%s192 + $0x50] sm:$0xf]
      %v252 = vld [vmem:[%s192 + $0x54] sm:$0xf]
      %v253 = vld [vmem:[%s192 + $0x58] sm:$0xf]
      %v254 = vld [vmem:[%s192 + $0x5c] sm:$0xf]
      %v255 = vld [vmem:[%s192 + $0x60] sm:$0xf]
      %v256 = vld [vmem:[%s192 + $0x64] sm:$0xf]
      %v257 = vld [vmem:[%s192 + $0x68] sm:$0xf]
      %v258 = vld [vmem:[%s192 + $0x6c] sm:$0xf]
      %v259 = vld [vmem:[%s192 + $0x70] sm:$0xf]
      %v260 = vld [vmem:[%s192 + $0x74] sm:$0xf]
      %v261 = vld [vmem:[%s192 + $0x78] sm:$0xf]
      %v262 = vld [vmem:[%s192 + $0x7c] sm:$0xf]
      %v263 = vld [vmem:[%s1] sm:$0xf]
      %v264 = vld [vmem:[%s1 + $0x4] sm:$0xf]
      %v265 = vld [vmem:[%s1 + $0x8] sm:$0xf]
      %v266 = vld [vmem:[%s1 + $0xc] sm:$0x3]
      %v267 = vld [vmem:[%s2] sm:$0x1]
      %v269 = vperm.slane %v267, 0
      %v303 = vunpack.c.l.b16 %v231
      %v304 = vunpack.c.l.b16 %v232
      %v305 = vunpack.c.l.b16 %v233
      %v306 = vunpack.c.l.b16 %v234
      %v307 = vunpack.c.l.b16 %v235
      %v308 = vunpack.c.l.b16 %v236
      %v309 = vunpack.c.l.b16 %v237
      %v310 = vunpack.c.l.b16 %v238
      %v311 = vunpack.c.l.b16 %v239
      %v312 = vunpack.c.l.b16 %v240
      %v313 = vunpack.c.l.b16 %v241
      %v314 = vunpack.c.l.b16 %v242
      %v315 = vunpack.c.l.b16 %v243
      %v316 = vunpack.c.l.b16 %v244
      %v317 = vunpack.c.l.b16 %v245
      %v318 = vunpack.c.l.b16 %v246
      %v319 = vunpack.c.l.b16 %v247
      %v320 = vunpack.c.l.b16 %v248
      %v321 = vunpack.c.l.b16 %v249
      %v322 = vunpack.c.l.b16 %v250
      %v323 = vunpack.c.l.b16 %v251
      %v324 = vunpack.c.l.b16 %v252
      %v325 = vunpack.c.l.b16 %v253
      %v326 = vunpack.c.l.b16 %v254
      %v327 = vunpack.c.l.b16 %v255
      %v328 = vunpack.c.l.b16 %v256
      %v329 = vunpack.c.l.b16 %v257
      %v330 = vunpack.c.l.b16 %v258
      %v331 = vunpack.c.l.b16 %v259
      %v332 = vunpack.c.l.b16 %v260
      %v333 = vunpack.c.l.b16 %v261
      %v334 = vunpack.c.l.b16 %v262
      %v335 = vpack.c.b16 %v304, %v303
      %v336 = vpack.c.b16 %v306, %v305
      %v337 = vpack.c.b16 %v308, %v307
      %v338 = vpack.c.b16 %v310, %v309
      %v339 = vpack.c.b16 %v312, %v311
      %v340 = vpack.c.b16 %v314, %v313
      %v341 = vpack.c.b16 %v316, %v315
      %v342 = vpack.c.b16 %v318, %v317
      %v343 = vpack.c.b16 %v320, %v319
      %v344 = vpack.c.b16 %v322, %v321
      %v345 = vpack.c.b16 %v324, %v323
      %v346 = vpack.c.b16 %v326, %v325
      %v347 = vpack.c.b16 %v328, %v327
      %v348 = vpack.c.b16 %v330, %v329
      %v349 = vpack.c.b16 %v332, %v331
      %v350 = vpack.c.b16 %v334, %v333
      %v355 = vunpack.c.l.b16 %v263
      %v356 = vunpack.c.l.b16 %v264
      %v357 = vunpack.c.l.b16 %v265
      %v358 = vunpack.c.l.b16 %v266
      %v359 = vpack.c.b16 %v356, %v355
      %v360 = vpack.c.b16 %v358, %v357
      %vm362 = vcmask 220160
      %v364 = vsel %vm362, %v335, 0
      %v367 = vsel %vm362, %v336, 0
      %v370 = vsel %vm362, %v337, 0
      %v373 = vsel %vm362, %v338, 0
      %v376 = vsel %vm362, %v339, 0
      %v379 = vsel %vm362, %v340, 0
      %v382 = vsel %vm362, %v341, 0
      %v385 = vsel %vm362, %v342, 0
      %v388 = vsel %vm362, %v343, 0
      %v391 = vsel %vm362, %v344, 0
      %v394 = vsel %vm362, %v345, 0
      %v397 = vsel %vm362, %v346, 0
      %v400 = vsel %vm362, %v347, 0
      %v403 = vsel %vm362, %v348, 0
      %v406 = vsel %vm362, %v349, 0
      %v409 = vsel %vm362, %v350, 0
      %vm411 = vcmask 1044480
      %vm412 = vcmask 1045504
      %v413 = vsel %vm411, 4294967295, 65535
      %v414 = vsel %vm412, %v413, 0
      %v416 = vand.u32 %v360, %v414
      %418 = vmatpush.bf16.msra.mxu0 0
      %419 = vmatpush.bf16.msra.mxu0 0
      %420 = vmatpush.bf16.msra.mxu0 0
      %421 = vmatpush.bf16.msra.mxu0 0
      %422 = vmatpush.bf16.msra.mxu0 0
      %423 = vmatpush.bf16.msra.mxu0 0
      %424 = vmatpush.bf16.msra.mxu0 %v416
      %425 = vmatpush.bf16.msra.mxu0 %v359
      %426 = vmatmul.bf16.gmra.mxu0 %v364
      %v427 = vpop.f32.mrf.mxu0
      %v428 = vadd.f32 %v269, %v427
      %v429 = vpop.f32.mrf.mxu0
      %v430 = vadd.f32 %v269, %v429
      %431 = vmatmul.bf16.gmra.mxu0 %v367
      %v432 = vpop.f32.mrf.mxu0
      %v433 = vadd.f32 %v269, %v432
      %v434 = vpop.f32.mrf.mxu0
      %v435 = vadd.f32 %v269, %v434
      %436 = vmatmul.bf16.gmra.mxu0 %v370
      %v437 = vpop.f32.mrf.mxu0
      %v438 = vadd.f32 %v269, %v437
      %v439 = vpop.f32.mrf.mxu0
      %v440 = vadd.f32 %v269, %v439
      %441 = vmatmul.bf16.gmra.mxu0 %v373
      %v442 = vpop.f32.mrf.mxu0
      %v443 = vadd.f32 %v269, %v442
      %v444 = vpop.f32.mrf.mxu0
      %v445 = vadd.f32 %v269, %v444
      %446 = vmatmul.bf16.gmra.mxu0 %v376
      %v447 = vpop.f32.mrf.mxu0
      %v448 = vadd.f32 %v269, %v447
      %v449 = vpop.f32.mrf.mxu0
      %v450 = vadd.f32 %v269, %v449
      %451 = vmatmul.bf16.gmra.mxu0 %v379
      %v452 = vpop.f32.mrf.mxu0
      %v453 = vadd.f32 %v269, %v452
      %v454 = vpop.f32.mrf.mxu0
      %v455 = vadd.f32 %v269, %v454
      %456 = vmatmul.bf16.gmra.mxu0 %v382
      %v457 = vpop.f32.mrf.mxu0
      %v458 = vadd.f32 %v269, %v457
      %v459 = vpop.f32.mrf.mxu0
      %v460 = vadd.f32 %v269, %v459
      %461 = vmatmul.bf16.gmra.mxu0 %v385
      %v462 = vpop.f32.mrf.mxu0
      %v463 = vadd.f32 %v269, %v462
      %v464 = vpop.f32.mrf.mxu0
      %v465 = vadd.f32 %v269, %v464
      %466 = vmatmul.bf16.gmra.mxu0 %v388
      %v467 = vpop.f32.mrf.mxu0
      %v468 = vadd.f32 %v269, %v467
      %v469 = vpop.f32.mrf.mxu0
      %v470 = vadd.f32 %v269, %v469
      %471 = vmatmul.bf16.gmra.mxu0 %v391
      %v472 = vpop.f32.mrf.mxu0
      %v473 = vadd.f32 %v269, %v472
      %v474 = vpop.f32.mrf.mxu0
      %v475 = vadd.f32 %v269, %v474
      %476 = vmatmul.bf16.gmra.mxu0 %v394
      %v477 = vpop.f32.mrf.mxu0
      %v478 = vadd.f32 %v269, %v477
      %v479 = vpop.f32.mrf.mxu0
      %v480 = vadd.f32 %v269, %v479
      %481 = vmatmul.bf16.gmra.mxu0 %v397
      %v482 = vpop.f32.mrf.mxu0
      %v483 = vadd.f32 %v269, %v482
      %v484 = vpop.f32.mrf.mxu0
      %v485 = vadd.f32 %v269, %v484
      %486 = vmatmul.bf16.gmra.mxu0 %v400
      %v487 = vpop.f32.mrf.mxu0
      %v488 = vadd.f32 %v269, %v487
      %v489 = vpop.f32.mrf.mxu0
      %v490 = vadd.f32 %v269, %v489
      %491 = vmatmul.bf16.gmra.mxu0 %v403
      %v492 = vpop.f32.mrf.mxu0
      %v493 = vadd.f32 %v269, %v492
      %v494 = vpop.f32.mrf.mxu0
      %v495 = vadd.f32 %v269, %v494
      %496 = vmatmul.bf16.gmra.mxu0 %v406
      %v497 = vpop.f32.mrf.mxu0
      %v498 = vadd.f32 %v269, %v497
      %v499 = vpop.f32.mrf.mxu0
      %v500 = vadd.f32 %v269, %v499
      %501 = vmatmul.bf16.gmra.mxu0 %v409
      %v502 = vpop.f32.mrf.mxu0
      %v503 = vadd.f32 %v269, %v502
      %v504 = vpop.f32.mrf.mxu0
      %v505 = vadd.f32 %v269, %v504
      %506 = vdwg.mxu0
      %v507 = vmax.f32 %v428, 0.0
      %v508 = vmax.f32 %v430, 0.0
      %v509 = vmax.f32 %v433, 0.0
      %v510 = vmax.f32 %v435, 0.0
      %v511 = vmax.f32 %v438, 0.0
      %v512 = vmax.f32 %v440, 0.0
      %v513 = vmax.f32 %v443, 0.0
      %v514 = vmax.f32 %v445, 0.0
      %v515 = vmax.f32 %v448, 0.0
      %v516 = vmax.f32 %v450, 0.0
      %v517 = vmax.f32 %v453, 0.0
      %v518 = vmax.f32 %v455, 0.0
      %v519 = vmax.f32 %v458, 0.0
      %v520 = vmax.f32 %v460, 0.0
      %v521 = vmax.f32 %v463, 0.0
      %v522 = vmax.f32 %v465, 0.0
      %v523 = vmax.f32 %v468, 0.0
      %v524 = vmax.f32 %v470, 0.0
      %v525 = vmax.f32 %v473, 0.0
      %v526 = vmax.f32 %v475, 0.0
      %v527 = vmax.f32 %v478, 0.0
      %v528 = vmax.f32 %v480, 0.0
      %v529 = vmax.f32 %v483, 0.0
      %v530 = vmax.f32 %v485, 0.0
      %v531 = vmax.f32 %v488, 0.0
      %v532 = vmax.f32 %v490, 0.0
      %v533 = vmax.f32 %v493, 0.0
      %v534 = vmax.f32 %v495, 0.0
      %v535 = vmax.f32 %v498, 0.0
      %v536 = vmax.f32 %v500, 0.0
      %v537 = vmax.f32 %v503, 0.0
      %v538 = vmax.f32 %v505, 0.0
      %s539 = scalar_lea.vmem %s192, 128
      %v540 = vld [vmem:[%s539] sm:$0xf]
      %v541 = vld [vmem:[%s539 + $0x4] sm:$0xf]
      %v542 = vld [vmem:[%s539 + $0x8] sm:$0xf]
      %v543 = vld [vmem:[%s539 + $0xc] sm:$0xf]
      %v544 = vld [vmem:[%s539 + $0x10] sm:$0xf]
      %v545 = vld [vmem:[%s539 + $0x14] sm:$0xf]
      %v546 = vld [vmem:[%s539 + $0x18] sm:$0xf]
      %v547 = vld [vmem:[%s539 + $0x1c] sm:$0xf]
      %v548 = vld [vmem:[%s539 + $0x20] sm:$0xf]
      %v549 = vld [vmem:[%s539 + $0x24] sm:$0xf]
      %v550 = vld [vmem:[%s539 + $0x28] sm:$0xf]
      %v551 = vld [vmem:[%s539 + $0x2c] sm:$0xf]
      %v552 = vld [vmem:[%s539 + $0x30] sm:$0xf]
      %v553 = vld [vmem:[%s539 + $0x34] sm:$0xf]
      %v554 = vld [vmem:[%s539 + $0x38] sm:$0xf]
      %v555 = vld [vmem:[%s539 + $0x3c] sm:$0xf]
      %v556 = vld [vmem:[%s539 + $0x40] sm:$0xf]
      %v557 = vld [vmem:[%s539 + $0x44] sm:$0xf]
      %v558 = vld [vmem:[%s539 + $0x48] sm:$0xf]
      %v559 = vld [vmem:[%s539 + $0x4c] sm:$0xf]
      %v560 = vld [vmem:[%s539 + $0x50] sm:$0xf]
      %v561 = vld [vmem:[%s539 + $0x54] sm:$0xf]
      %v562 = vld [vmem:[%s539 + $0x58] sm:$0xf]
      %v563 = vld [vmem:[%s539 + $0x5c] sm:$0xf]
      %v564 = vld [vmem:[%s539 + $0x60] sm:$0xf]
      %v565 = vld [vmem:[%s539 + $0x64] sm:$0xf]
      %v566 = vld [vmem:[%s539 + $0x68] sm:$0xf]
      %v567 = vld [vmem:[%s539 + $0x6c] sm:$0xf]
      %v568 = vld [vmem:[%s539 + $0x70] sm:$0xf]
      %v569 = vld [vmem:[%s539 + $0x74] sm:$0xf]
      %v570 = vld [vmem:[%s539 + $0x78] sm:$0xf]
      %v571 = vld [vmem:[%s539 + $0x7c] sm:$0xf]
      %v604 = vunpack.c.l.b16 %v540
      %v605 = vunpack.c.l.b16 %v541
      %v606 = vunpack.c.l.b16 %v542
      %v607 = vunpack.c.l.b16 %v543
      %v608 = vunpack.c.l.b16 %v544
      %v609 = vunpack.c.l.b16 %v545
      %v610 = vunpack.c.l.b16 %v546
      %v611 = vunpack.c.l.b16 %v547
      %v612 = vunpack.c.l.b16 %v548
      %v613 = vunpack.c.l.b16 %v549
      %v614 = vunpack.c.l.b16 %v550
      %v615 = vunpack.c.l.b16 %v551
      %v616 = vunpack.c.l.b16 %v552
      %v617 = vunpack.c.l.b16 %v553
      %v618 = vunpack.c.l.b16 %v554
      %v619 = vunpack.c.l.b16 %v555
      %v620 = vunpack.c.l.b16 %v556
      %v621 = vunpack.c.l.b16 %v557
      %v622 = vunpack.c.l.b16 %v558
      %v623 = vunpack.c.l.b16 %v559
      %v624 = vunpack.c.l.b16 %v560
      %v625 = vunpack.c.l.b16 %v561
      %v626 = vunpack.c.l.b16 %v562
      %v627 = vunpack.c.l.b16 %v563
      %v628 = vunpack.c.l.b16 %v564
      %v629 = vunpack.c.l.b16 %v565
      %v630 = vunpack.c.l.b16 %v566
      %v631 = vunpack.c.l.b16 %v567
      %v632 = vunpack.c.l.b16 %v568
      %v633 = vunpack.c.l.b16 %v569
      %v634 = vunpack.c.l.b16 %v570
      %v635 = vunpack.c.l.b16 %v571
      %v636 = vpack.c.b16 %v605, %v604
      %v637 = vpack.c.b16 %v607, %v606
      %v638 = vpack.c.b16 %v609, %v608
      %v639 = vpack.c.b16 %v611, %v610
      %v640 = vpack.c.b16 %v613, %v612
      %v641 = vpack.c.b16 %v615, %v614
      %v642 = vpack.c.b16 %v617, %v616
      %v643 = vpack.c.b16 %v619, %v618
      %v644 = vpack.c.b16 %v621, %v620
      %v645 = vpack.c.b16 %v623, %v622
      %v646 = vpack.c.b16 %v625, %v624
      %v647 = vpack.c.b16 %v627, %v626
      %v648 = vpack.c.b16 %v629, %v628
      %v649 = vpack.c.b16 %v631, %v630
      %v650 = vpack.c.b16 %v633, %v632
      %v651 = vpack.c.b16 %v635, %v634
      %v653 = vsel %vm362, %v636, 0
      %v656 = vsel %vm362, %v637, 0
      %v659 = vsel %vm362, %v638, 0
      %v662 = vsel %vm362, %v639, 0
      %v665 = vsel %vm362, %v640, 0
      %v668 = vsel %vm362, %v641, 0
      %v671 = vsel %vm362, %v642, 0
      %v674 = vsel %vm362, %v643, 0
      %v677 = vsel %vm362, %v644, 0
      %v680 = vsel %vm362, %v645, 0
      %v683 = vsel %vm362, %v646, 0
      %v686 = vsel %vm362, %v647, 0
      %v689 = vsel %vm362, %v648, 0
      %v692 = vsel %vm362, %v649, 0
      %v695 = vsel %vm362, %v650, 0
      %v698 = vsel %vm362, %v651, 0
      %700 = vmatpush.bf16.msra.mxu0 0
      %701 = vmatpush.bf16.msra.mxu0 0
      %702 = vmatpush.bf16.msra.mxu0 0
      %703 = vmatpush.bf16.msra.mxu0 0
      %704 = vmatpush.bf16.msra.mxu0 0
      %705 = vmatpush.bf16.msra.mxu0 0
      %706 = vmatpush.bf16.msra.mxu0 %v416
      %707 = vmatpush.bf16.msra.mxu0 %v359
      %708 = vmatmul.bf16.gmra.mxu0 %v653
      %v709 = vpop.f32.mrf.mxu0
      %v710 = vadd.f32 %v269, %v709
      %v711 = vpop.f32.mrf.mxu0
      %v712 = vadd.f32 %v269, %v711
      %713 = vmatmul.bf16.gmra.mxu0 %v656
      %v714 = vpop.f32.mrf.mxu0
      %v715 = vadd.f32 %v269, %v714
      %v716 = vpop.f32.mrf.mxu0
      %v717 = vadd.f32 %v269, %v716
      %718 = vmatmul.bf16.gmra.mxu0 %v659
      %v719 = vpop.f32.mrf.mxu0
      %v720 = vadd.f32 %v269, %v719
      %v721 = vpop.f32.mrf.mxu0
      %v722 = vadd.f32 %v269, %v721
      %723 = vmatmul.bf16.gmra.mxu0 %v662
      %v724 = vpop.f32.mrf.mxu0
      %v725 = vadd.f32 %v269, %v724
      %v726 = vpop.f32.mrf.mxu0
      %v727 = vadd.f32 %v269, %v726
      %728 = vmatmul.bf16.gmra.mxu0 %v665
      %v729 = vpop.f32.mrf.mxu0
      %v730 = vadd.f32 %v269, %v729
      %v731 = vpop.f32.mrf.mxu0
      %v732 = vadd.f32 %v269, %v731
      %733 = vmatmul.bf16.gmra.mxu0 %v668
      %v734 = vpop.f32.mrf.mxu0
      %v735 = vadd.f32 %v269, %v734
      %v736 = vpop.f32.mrf.mxu0
      %v737 = vadd.f32 %v269, %v736
      %738 = vmatmul.bf16.gmra.mxu0 %v671
      %v739 = vpop.f32.mrf.mxu0
      %v740 = vadd.f32 %v269, %v739
      %v741 = vpop.f32.mrf.mxu0
      %v742 = vadd.f32 %v269, %v741
      %743 = vmatmul.bf16.gmra.mxu0 %v674
      %v744 = vpop.f32.mrf.mxu0
      %v745 = vadd.f32 %v269, %v744
      %v746 = vpop.f32.mrf.mxu0
      %v747 = vadd.f32 %v269, %v746
      %748 = vmatmul.bf16.gmra.mxu0 %v677
      %v749 = vpop.f32.mrf.mxu0
      %v750 = vadd.f32 %v269, %v749
      %v751 = vpop.f32.mrf.mxu0
      %v752 = vadd.f32 %v269, %v751
      %753 = vmatmul.bf16.gmra.mxu0 %v680
      %v754 = vpop.f32.mrf.mxu0
      %v755 = vadd.f32 %v269, %v754
      %v756 = vpop.f32.mrf.mxu0
      %v757 = vadd.f32 %v269, %v756
      %758 = vmatmul.bf16.gmra.mxu0 %v683
      %v759 = vpop.f32.mrf.mxu0
      %v760 = vadd.f32 %v269, %v759
      %v761 = vpop.f32.mrf.mxu0
      %v762 = vadd.f32 %v269, %v761
      %763 = vmatmul.bf16.gmra.mxu0 %v686
      %v764 = vpop.f32.mrf.mxu0
      %v765 = vadd.f32 %v269, %v764
      %v766 = vpop.f32.mrf.mxu0
      %v767 = vadd.f32 %v269, %v766
      %768 = vmatmul.bf16.gmra.mxu0 %v689
      %v769 = vpop.f32.mrf.mxu0
      %v770 = vadd.f32 %v269, %v769
      %v771 = vpop.f32.mrf.mxu0
      %v772 = vadd.f32 %v269, %v771
      %773 = vmatmul.bf16.gmra.mxu0 %v692
      %v774 = vpop.f32.mrf.mxu0
      %v775 = vadd.f32 %v269, %v774
      %v776 = vpop.f32.mrf.mxu0
      %v777 = vadd.f32 %v269, %v776
      %778 = vmatmul.bf16.gmra.mxu0 %v695
      %v779 = vpop.f32.mrf.mxu0
      %v780 = vadd.f32 %v269, %v779
      %v781 = vpop.f32.mrf.mxu0
      %v782 = vadd.f32 %v269, %v781
      %783 = vmatmul.bf16.gmra.mxu0 %v698
      %v784 = vpop.f32.mrf.mxu0
      %v785 = vadd.f32 %v269, %v784
      %v786 = vpop.f32.mrf.mxu0
      %v787 = vadd.f32 %v269, %v786
      %788 = vdwg.mxu0
      %v789 = vmax.f32 %v710, 0.0
      %v790 = vmax.f32 %v712, 0.0
      %v791 = vmax.f32 %v715, 0.0
      %v792 = vmax.f32 %v717, 0.0
      %v793 = vmax.f32 %v720, 0.0
      %v794 = vmax.f32 %v722, 0.0
      %v795 = vmax.f32 %v725, 0.0
      %v796 = vmax.f32 %v727, 0.0
      %v797 = vmax.f32 %v730, 0.0
      %v798 = vmax.f32 %v732, 0.0
      %v799 = vmax.f32 %v735, 0.0
      %v800 = vmax.f32 %v737, 0.0
      %v801 = vmax.f32 %v740, 0.0
      %v802 = vmax.f32 %v742, 0.0
      %v803 = vmax.f32 %v745, 0.0
      %v804 = vmax.f32 %v747, 0.0
      %v805 = vmax.f32 %v750, 0.0
      %v806 = vmax.f32 %v752, 0.0
      %v807 = vmax.f32 %v755, 0.0
      %v808 = vmax.f32 %v757, 0.0
      %v809 = vmax.f32 %v760, 0.0
      %v810 = vmax.f32 %v762, 0.0
      %v811 = vmax.f32 %v765, 0.0
      %v812 = vmax.f32 %v767, 0.0
      %v813 = vmax.f32 %v770, 0.0
      %v814 = vmax.f32 %v772, 0.0
      %v815 = vmax.f32 %v775, 0.0
      %v816 = vmax.f32 %v777, 0.0
      %v817 = vmax.f32 %v780, 0.0
      %v818 = vmax.f32 %v782, 0.0
      %v819 = vmax.f32 %v785, 0.0
      %v820 = vmax.f32 %v787, 0.0
      %s821 = scalar_lea.vmem %s192, 256
      %v822 = vld [vmem:[%s821] sm:$0xf]
      %v823 = vld [vmem:[%s821 + $0x4] sm:$0xf]
      %v824 = vld [vmem:[%s821 + $0x8] sm:$0xf]
      %v825 = vld [vmem:[%s821 + $0xc] sm:$0xf]
      %v826 = vld [vmem:[%s821 + $0x10] sm:$0xf]
      %v827 = vld [vmem:[%s821 + $0x14] sm:$0xf]
      %v828 = vld [vmem:[%s821 + $0x18] sm:$0xf]
      %v829 = vld [vmem:[%s821 + $0x1c] sm:$0xf]
      %v830 = vld [vmem:[%s821 + $0x20] sm:$0xf]
      %v831 = vld [vmem:[%s821 + $0x24] sm:$0xf]
      %v832 = vld [vmem:[%s821 + $0x28] sm:$0xf]
      %v833 = vld [vmem:[%s821 + $0x2c] sm:$0xf]
      %v834 = vld [vmem:[%s821 + $0x30] sm:$0xf]
      %v835 = vld [vmem:[%s821 + $0x34] sm:$0xf]
      %v836 = vld [vmem:[%s821 + $0x38] sm:$0xf]
      %v837 = vld [vmem:[%s821 + $0x3c] sm:$0xf]
      %v838 = vld [vmem:[%s821 + $0x40] sm:$0xf]
      %v839 = vld [vmem:[%s821 + $0x44] sm:$0xf]
      %v840 = vld [vmem:[%s821 + $0x48] sm:$0xf]
      %v841 = vld [vmem:[%s821 + $0x4c] sm:$0xf]
      %v842 = vld [vmem:[%s821 + $0x50] sm:$0xf]
      %v843 = vld [vmem:[%s821 + $0x54] sm:$0xf]
      %v844 = vld [vmem:[%s821 + $0x58] sm:$0xf]
      %v845 = vld [vmem:[%s821 + $0x5c] sm:$0xf]
      %v846 = vld [vmem:[%s821 + $0x60] sm:$0xf]
      %v847 = vld [vmem:[%s821 + $0x64] sm:$0xf]
      %v848 = vld [vmem:[%s821 + $0x68] sm:$0xf]
      %v849 = vld [vmem:[%s821 + $0x6c] sm:$0xf]
      %v850 = vld [vmem:[%s821 + $0x70] sm:$0xf]
      %v851 = vld [vmem:[%s821 + $0x74] sm:$0xf]
      %v852 = vld [vmem:[%s821 + $0x78] sm:$0xf]
      %v853 = vld [vmem:[%s821 + $0x7c] sm:$0xf]
      %v886 = vunpack.c.l.b16 %v822
      %v887 = vunpack.c.l.b16 %v823
      %v888 = vunpack.c.l.b16 %v824
      %v889 = vunpack.c.l.b16 %v825
      %v890 = vunpack.c.l.b16 %v826
      %v891 = vunpack.c.l.b16 %v827
      %v892 = vunpack.c.l.b16 %v828
      %v893 = vunpack.c.l.b16 %v829
      %v894 = vunpack.c.l.b16 %v830
      %v895 = vunpack.c.l.b16 %v831
      %v896 = vunpack.c.l.b16 %v832
      %v897 = vunpack.c.l.b16 %v833
      %v898 = vunpack.c.l.b16 %v834
      %v899 = vunpack.c.l.b16 %v835
      %v900 = vunpack.c.l.b16 %v836
      %v901 = vunpack.c.l.b16 %v837
      %v902 = vunpack.c.l.b16 %v838
      %v903 = vunpack.c.l.b16 %v839
      %v904 = vunpack.c.l.b16 %v840
      %v905 = vunpack.c.l.b16 %v841
      %v906 = vunpack.c.l.b16 %v842
      %v907 = vunpack.c.l.b16 %v843
      %v908 = vunpack.c.l.b16 %v844
      %v909 = vunpack.c.l.b16 %v845
      %v910 = vunpack.c.l.b16 %v846
      %v911 = vunpack.c.l.b16 %v847
      %v912 = vunpack.c.l.b16 %v848
      %v913 = vunpack.c.l.b16 %v849
      %v914 = vunpack.c.l.b16 %v850
      %v915 = vunpack.c.l.b16 %v851
      %v916 = vunpack.c.l.b16 %v852
      %v917 = vunpack.c.l.b16 %v853
      %v918 = vpack.c.b16 %v887, %v886
      %v919 = vpack.c.b16 %v889, %v888
      %v920 = vpack.c.b16 %v891, %v890
      %v921 = vpack.c.b16 %v893, %v892
      %v922 = vpack.c.b16 %v895, %v894
      %v923 = vpack.c.b16 %v897, %v896
      %v924 = vpack.c.b16 %v899, %v898
      %v925 = vpack.c.b16 %v901, %v900
      %v926 = vpack.c.b16 %v903, %v902
      %v927 = vpack.c.b16 %v905, %v904
      %v928 = vpack.c.b16 %v907, %v906
      %v929 = vpack.c.b16 %v909, %v908
      %v930 = vpack.c.b16 %v911, %v910
      %v931 = vpack.c.b16 %v913, %v912
      %v932 = vpack.c.b16 %v915, %v914
      %v933 = vpack.c.b16 %v917, %v916
      %v935 = vsel %vm362, %v918, 0
      %v938 = vsel %vm362, %v919, 0
      %v941 = vsel %vm362, %v920, 0
      %v944 = vsel %vm362, %v921, 0
      %v947 = vsel %vm362, %v922, 0
      %v950 = vsel %vm362, %v923, 0
      %v953 = vsel %vm362, %v924, 0
      %v956 = vsel %vm362, %v925, 0
      %v959 = vsel %vm362, %v926, 0
      %v962 = vsel %vm362, %v927, 0
      %v965 = vsel %vm362, %v928, 0
      %v968 = vsel %vm362, %v929, 0
      %v971 = vsel %vm362, %v930, 0
      %v974 = vsel %vm362, %v931, 0
      %v977 = vsel %vm362, %v932, 0
      %v980 = vsel %vm362, %v933, 0
      %982 = vmatpush.bf16.msra.mxu0 0
      %983 = vmatpush.bf16.msra.mxu0 0
      %984 = vmatpush.bf16.msra.mxu0 0
      %985 = vmatpush.bf16.msra.mxu0 0
      %986 = vmatpush.bf16.msra.mxu0 0
      %987 = vmatpush.bf16.msra.mxu0 0
      %988 = vmatpush.bf16.msra.mxu0 %v416
      %989 = vmatpush.bf16.msra.mxu0 %v359
      %990 = vmatmul.bf16.gmra.mxu0 %v935
      %v991 = vpop.f32.mrf.mxu0
      %v992 = vadd.f32 %v269, %v991
      %v993 = vpop.f32.mrf.mxu0
      %v994 = vadd.f32 %v269, %v993
      %995 = vmatmul.bf16.gmra.mxu0 %v938
      %v996 = vpop.f32.mrf.mxu0
      %v997 = vadd.f32 %v269, %v996
      %v998 = vpop.f32.mrf.mxu0
      %v999 = vadd.f32 %v269, %v998
      %1000 = vmatmul.bf16.gmra.mxu0 %v941
      %v1001 = vpop.f32.mrf.mxu0
      %v1002 = vadd.f32 %v269, %v1001
      %v1003 = vpop.f32.mrf.mxu0
      %v1004 = vadd.f32 %v269, %v1003
      %1005 = vmatmul.bf16.gmra.mxu0 %v944
      %v1006 = vpop.f32.mrf.mxu0
      %v1007 = vadd.f32 %v269, %v1006
      %v1008 = vpop.f32.mrf.mxu0
      %v1009 = vadd.f32 %v269, %v1008
      %1010 = vmatmul.bf16.gmra.mxu0 %v947
      %v1011 = vpop.f32.mrf.mxu0
      %v1012 = vadd.f32 %v269, %v1011
      %v1013 = vpop.f32.mrf.mxu0
      %v1014 = vadd.f32 %v269, %v1013
      %1015 = vmatmul.bf16.gmra.mxu0 %v950
      %v1016 = vpop.f32.mrf.mxu0
      %v1017 = vadd.f32 %v269, %v1016
      %v1018 = vpop.f32.mrf.mxu0
      %v1019 = vadd.f32 %v269, %v1018
      %1020 = vmatmul.bf16.gmra.mxu0 %v953
      %v1021 = vpop.f32.mrf.mxu0
      %v1022 = vadd.f32 %v269, %v1021
      %v1023 = vpop.f32.mrf.mxu0
      %v1024 = vadd.f32 %v269, %v1023
      %1025 = vmatmul.bf16.gmra.mxu0 %v956
      %v1026 = vpop.f32.mrf.mxu0
      %v1027 = vadd.f32 %v269, %v1026
      %v1028 = vpop.f32.mrf.mxu0
      %v1029 = vadd.f32 %v269, %v1028
      %1030 = vmatmul.bf16.gmra.mxu0 %v959
      %v1031 = vpop.f32.mrf.mxu0
      %v1032 = vadd.f32 %v269, %v1031
      %v1033 = vpop.f32.mrf.mxu0
      %v1034 = vadd.f32 %v269, %v1033
      %1035 = vmatmul.bf16.gmra.mxu0 %v962
      %v1036 = vpop.f32.mrf.mxu0
      %v1037 = vadd.f32 %v269, %v1036
      %v1038 = vpop.f32.mrf.mxu0
      %v1039 = vadd.f32 %v269, %v1038
      %1040 = vmatmul.bf16.gmra.mxu0 %v965
      %v1041 = vpop.f32.mrf.mxu0
      %v1042 = vadd.f32 %v269, %v1041
      %v1043 = vpop.f32.mrf.mxu0
      %v1044 = vadd.f32 %v269, %v1043
      %1045 = vmatmul.bf16.gmra.mxu0 %v968
      %v1046 = vpop.f32.mrf.mxu0
      %v1047 = vadd.f32 %v269, %v1046
      %v1048 = vpop.f32.mrf.mxu0
      %v1049 = vadd.f32 %v269, %v1048
      %1050 = vmatmul.bf16.gmra.mxu0 %v971
      %v1051 = vpop.f32.mrf.mxu0
      %v1052 = vadd.f32 %v269, %v1051
      %v1053 = vpop.f32.mrf.mxu0
      %v1054 = vadd.f32 %v269, %v1053
      %1055 = vmatmul.bf16.gmra.mxu0 %v974
      %v1056 = vpop.f32.mrf.mxu0
      %v1057 = vadd.f32 %v269, %v1056
      %v1058 = vpop.f32.mrf.mxu0
      %v1059 = vadd.f32 %v269, %v1058
      %1060 = vmatmul.bf16.gmra.mxu0 %v977
      %v1061 = vpop.f32.mrf.mxu0
      %v1062 = vadd.f32 %v269, %v1061
      %v1063 = vpop.f32.mrf.mxu0
      %v1064 = vadd.f32 %v269, %v1063
      %1065 = vmatmul.bf16.gmra.mxu0 %v980
      %v1066 = vpop.f32.mrf.mxu0
      %v1067 = vadd.f32 %v269, %v1066
      %v1068 = vpop.f32.mrf.mxu0
      %v1069 = vadd.f32 %v269, %v1068
      %1070 = vdwg.mxu0
      %v1071 = vmax.f32 %v992, 0.0
      %v1072 = vmax.f32 %v994, 0.0
      %v1073 = vmax.f32 %v997, 0.0
      %v1074 = vmax.f32 %v999, 0.0
      %v1075 = vmax.f32 %v1002, 0.0
      %v1076 = vmax.f32 %v1004, 0.0
      %v1077 = vmax.f32 %v1007, 0.0
      %v1078 = vmax.f32 %v1009, 0.0
      %v1079 = vmax.f32 %v1012, 0.0
      %v1080 = vmax.f32 %v1014, 0.0
      %v1081 = vmax.f32 %v1017, 0.0
      %v1082 = vmax.f32 %v1019, 0.0
      %v1083 = vmax.f32 %v1022, 0.0
      %v1084 = vmax.f32 %v1024, 0.0
      %v1085 = vmax.f32 %v1027, 0.0
      %v1086 = vmax.f32 %v1029, 0.0
      %v1087 = vmax.f32 %v1032, 0.0
      %v1088 = vmax.f32 %v1034, 0.0
      %v1089 = vmax.f32 %v1037, 0.0
      %v1090 = vmax.f32 %v1039, 0.0
      %v1091 = vmax.f32 %v1042, 0.0
      %v1092 = vmax.f32 %v1044, 0.0
      %v1093 = vmax.f32 %v1047, 0.0
      %v1094 = vmax.f32 %v1049, 0.0
      %v1095 = vmax.f32 %v1052, 0.0
      %v1096 = vmax.f32 %v1054, 0.0
      %v1097 = vmax.f32 %v1057, 0.0
      %v1098 = vmax.f32 %v1059, 0.0
      %v1099 = vmax.f32 %v1062, 0.0
      %v1100 = vmax.f32 %v1064, 0.0
      %v1101 = vmax.f32 %v1067, 0.0
      %v1102 = vmax.f32 %v1069, 0.0
      %s1103 = scalar_lea.vmem %s192, 384
      %v1104 = vld [vmem:[%s1103] sm:$0xf]
      %v1105 = vld [vmem:[%s1103 + $0x4] sm:$0xf]
      %v1106 = vld [vmem:[%s1103 + $0x8] sm:$0xf]
      %v1107 = vld [vmem:[%s1103 + $0xc] sm:$0xf]
      %v1108 = vld [vmem:[%s1103 + $0x10] sm:$0xf]
      %v1109 = vld [vmem:[%s1103 + $0x14] sm:$0xf]
      %v1110 = vld [vmem:[%s1103 + $0x18] sm:$0xf]
      %v1111 = vld [vmem:[%s1103 + $0x1c] sm:$0xf]
      %v1112 = vld [vmem:[%s1103 + $0x20] sm:$0xf]
      %v1113 = vld [vmem:[%s1103 + $0x24] sm:$0xf]
      %v1114 = vld [vmem:[%s1103 + $0x28] sm:$0xf]
      %v1115 = vld [vmem:[%s1103 + $0x2c] sm:$0xf]
      %v1116 = vld [vmem:[%s1103 + $0x30] sm:$0xf]
      %v1117 = vld [vmem:[%s1103 + $0x34] sm:$0xf]
      %v1118 = vld [vmem:[%s1103 + $0x38] sm:$0xf]
      %v1119 = vld [vmem:[%s1103 + $0x3c] sm:$0xf]
      %v1120 = vld [vmem:[%s1103 + $0x40] sm:$0xf]
      %v1121 = vld [vmem:[%s1103 + $0x44] sm:$0xf]
      %v1122 = vld [vmem:[%s1103 + $0x48] sm:$0xf]
      %v1123 = vld [vmem:[%s1103 + $0x4c] sm:$0xf]
      %v1124 = vld [vmem:[%s1103 + $0x50] sm:$0xf]
      %v1125 = vld [vmem:[%s1103 + $0x54] sm:$0xf]
      %v1126 = vld [vmem:[%s1103 + $0x58] sm:$0xf]
      %v1127 = vld [vmem:[%s1103 + $0x5c] sm:$0xf]
      %v1128 = vld [vmem:[%s1103 + $0x60] sm:$0xf]
      %v1129 = vld [vmem:[%s1103 + $0x64] sm:$0xf]
      %v1130 = vld [vmem:[%s1103 + $0x68] sm:$0xf]
      %v1131 = vld [vmem:[%s1103 + $0x6c] sm:$0xf]
      %v1132 = vld [vmem:[%s1103 + $0x70] sm:$0xf]
      %v1133 = vld [vmem:[%s1103 + $0x74] sm:$0xf]
      %v1134 = vld [vmem:[%s1103 + $0x78] sm:$0xf]
      %v1135 = vld [vmem:[%s1103 + $0x7c] sm:$0xf]
      %v1168 = vunpack.c.l.b16 %v1104
      %v1169 = vunpack.c.l.b16 %v1105
      %v1170 = vunpack.c.l.b16 %v1106
      %v1171 = vunpack.c.l.b16 %v1107
      %v1172 = vunpack.c.l.b16 %v1108
      %v1173 = vunpack.c.l.b16 %v1109
      %v1174 = vunpack.c.l.b16 %v1110
      %v1175 = vunpack.c.l.b16 %v1111
      %v1176 = vunpack.c.l.b16 %v1112
      %v1177 = vunpack.c.l.b16 %v1113
      %v1178 = vunpack.c.l.b16 %v1114
      %v1179 = vunpack.c.l.b16 %v1115
      %v1180 = vunpack.c.l.b16 %v1116
      %v1181 = vunpack.c.l.b16 %v1117
      %v1182 = vunpack.c.l.b16 %v1118
      %v1183 = vunpack.c.l.b16 %v1119
      %v1184 = vunpack.c.l.b16 %v1120
      %v1185 = vunpack.c.l.b16 %v1121
      %v1186 = vunpack.c.l.b16 %v1122
      %v1187 = vunpack.c.l.b16 %v1123
      %v1188 = vunpack.c.l.b16 %v1124
      %v1189 = vunpack.c.l.b16 %v1125
      %v1190 = vunpack.c.l.b16 %v1126
      %v1191 = vunpack.c.l.b16 %v1127
      %v1192 = vunpack.c.l.b16 %v1128
      %v1193 = vunpack.c.l.b16 %v1129
      %v1194 = vunpack.c.l.b16 %v1130
      %v1195 = vunpack.c.l.b16 %v1131
      %v1196 = vunpack.c.l.b16 %v1132
      %v1197 = vunpack.c.l.b16 %v1133
      %v1198 = vunpack.c.l.b16 %v1134
      %v1199 = vunpack.c.l.b16 %v1135
      %v1200 = vpack.c.b16 %v1169, %v1168
      %v1201 = vpack.c.b16 %v1171, %v1170
      %v1202 = vpack.c.b16 %v1173, %v1172
      %v1203 = vpack.c.b16 %v1175, %v1174
      %v1204 = vpack.c.b16 %v1177, %v1176
      %v1205 = vpack.c.b16 %v1179, %v1178
      %v1206 = vpack.c.b16 %v1181, %v1180
      %v1207 = vpack.c.b16 %v1183, %v1182
      %v1208 = vpack.c.b16 %v1185, %v1184
      %v1209 = vpack.c.b16 %v1187, %v1186
      %v1210 = vpack.c.b16 %v1189, %v1188
      %v1211 = vpack.c.b16 %v1191, %v1190
      %v1212 = vpack.c.b16 %v1193, %v1192
      %v1213 = vpack.c.b16 %v1195, %v1194
      %v1214 = vpack.c.b16 %v1197, %v1196
      %v1215 = vpack.c.b16 %v1199, %v1198
      %v1217 = vsel %vm362, %v1200, 0
      %v1220 = vsel %vm362, %v1201, 0
      %v1223 = vsel %vm362, %v1202, 0
      %v1226 = vsel %vm362, %v1203, 0
      %v1229 = vsel %vm362, %v1204, 0
      %v1232 = vsel %vm362, %v1205, 0
      %v1235 = vsel %vm362, %v1206, 0
      %v1238 = vsel %vm362, %v1207, 0
      %v1241 = vsel %vm362, %v1208, 0
      %v1244 = vsel %vm362, %v1209, 0
      %v1247 = vsel %vm362, %v1210, 0
      %v1250 = vsel %vm362, %v1211, 0
      %v1253 = vsel %vm362, %v1212, 0
      %v1256 = vsel %vm362, %v1213, 0
      %v1259 = vsel %vm362, %v1214, 0
      %v1262 = vsel %vm362, %v1215, 0
      %1264 = vmatpush.bf16.msra.mxu0 0
      %1265 = vmatpush.bf16.msra.mxu0 0
      %1266 = vmatpush.bf16.msra.mxu0 0
      %1267 = vmatpush.bf16.msra.mxu0 0
      %1268 = vmatpush.bf16.msra.mxu0 0
      %1269 = vmatpush.bf16.msra.mxu0 0
      %1270 = vmatpush.bf16.msra.mxu0 %v416
      %1271 = vmatpush.bf16.msra.mxu0 %v359
      %1272 = vmatmul.bf16.gmra.mxu0 %v1217
      %v1273 = vpop.f32.mrf.mxu0
      %v1274 = vadd.f32 %v269, %v1273
      %v1275 = vpop.f32.mrf.mxu0
      %v1276 = vadd.f32 %v269, %v1275
      %1277 = vmatmul.bf16.gmra.mxu0 %v1220
      %v1278 = vpop.f32.mrf.mxu0
      %v1279 = vadd.f32 %v269, %v1278
      %v1280 = vpop.f32.mrf.mxu0
      %v1281 = vadd.f32 %v269, %v1280
      %1282 = vmatmul.bf16.gmra.mxu0 %v1223
      %v1283 = vpop.f32.mrf.mxu0
      %v1284 = vadd.f32 %v269, %v1283
      %v1285 = vpop.f32.mrf.mxu0
      %v1286 = vadd.f32 %v269, %v1285
      %1287 = vmatmul.bf16.gmra.mxu0 %v1226
      %v1288 = vpop.f32.mrf.mxu0
      %v1289 = vadd.f32 %v269, %v1288
      %v1290 = vpop.f32.mrf.mxu0
      %v1291 = vadd.f32 %v269, %v1290
      %1292 = vmatmul.bf16.gmra.mxu0 %v1229
      %v1293 = vpop.f32.mrf.mxu0
      %v1294 = vadd.f32 %v269, %v1293
      %v1295 = vpop.f32.mrf.mxu0
      %v1296 = vadd.f32 %v269, %v1295
      %1297 = vmatmul.bf16.gmra.mxu0 %v1232
      %v1298 = vpop.f32.mrf.mxu0
      %v1299 = vadd.f32 %v269, %v1298
      %v1300 = vpop.f32.mrf.mxu0
      %v1301 = vadd.f32 %v269, %v1300
      %1302 = vmatmul.bf16.gmra.mxu0 %v1235
      %v1303 = vpop.f32.mrf.mxu0
      %v1304 = vadd.f32 %v269, %v1303
      %v1305 = vpop.f32.mrf.mxu0
      %v1306 = vadd.f32 %v269, %v1305
      %1307 = vmatmul.bf16.gmra.mxu0 %v1238
      %v1308 = vpop.f32.mrf.mxu0
      %v1309 = vadd.f32 %v269, %v1308
      %v1310 = vpop.f32.mrf.mxu0
      %v1311 = vadd.f32 %v269, %v1310
      %1312 = vmatmul.bf16.gmra.mxu0 %v1241
      %v1313 = vpop.f32.mrf.mxu0
      %v1314 = vadd.f32 %v269, %v1313
      %v1315 = vpop.f32.mrf.mxu0
      %v1316 = vadd.f32 %v269, %v1315
      %1317 = vmatmul.bf16.gmra.mxu0 %v1244
      %v1318 = vpop.f32.mrf.mxu0
      %v1319 = vadd.f32 %v269, %v1318
      %v1320 = vpop.f32.mrf.mxu0
      %v1321 = vadd.f32 %v269, %v1320
      %1322 = vmatmul.bf16.gmra.mxu0 %v1247
      %v1323 = vpop.f32.mrf.mxu0
      %v1324 = vadd.f32 %v269, %v1323
      %v1325 = vpop.f32.mrf.mxu0
      %v1326 = vadd.f32 %v269, %v1325
      %1327 = vmatmul.bf16.gmra.mxu0 %v1250
      %v1328 = vpop.f32.mrf.mxu0
      %v1329 = vadd.f32 %v269, %v1328
      %v1330 = vpop.f32.mrf.mxu0
      %v1331 = vadd.f32 %v269, %v1330
      %1332 = vmatmul.bf16.gmra.mxu0 %v1253
      %v1333 = vpop.f32.mrf.mxu0
      %v1334 = vadd.f32 %v269, %v1333
      %v1335 = vpop.f32.mrf.mxu0
      %v1336 = vadd.f32 %v269, %v1335
      %1337 = vmatmul.bf16.gmra.mxu0 %v1256
      %v1338 = vpop.f32.mrf.mxu0
      %v1339 = vadd.f32 %v269, %v1338
      %v1340 = vpop.f32.mrf.mxu0
      %v1341 = vadd.f32 %v269, %v1340
      %1342 = vmatmul.bf16.gmra.mxu0 %v1259
      %v1343 = vpop.f32.mrf.mxu0
      %v1344 = vadd.f32 %v269, %v1343
      %v1345 = vpop.f32.mrf.mxu0
      %v1346 = vadd.f32 %v269, %v1345
      %1347 = vmatmul.bf16.gmra.mxu0 %v1262
      %v1348 = vpop.f32.mrf.mxu0
      %v1349 = vadd.f32 %v269, %v1348
      %v1350 = vpop.f32.mrf.mxu0
      %v1351 = vadd.f32 %v269, %v1350
      %1352 = vdwg.mxu0
      %v1353 = vmax.f32 %v1274, 0.0
      %v1354 = vmax.f32 %v1276, 0.0
      %v1355 = vmax.f32 %v1279, 0.0
      %v1356 = vmax.f32 %v1281, 0.0
      %v1357 = vmax.f32 %v1284, 0.0
      %v1358 = vmax.f32 %v1286, 0.0
      %v1359 = vmax.f32 %v1289, 0.0
      %v1360 = vmax.f32 %v1291, 0.0
      %v1361 = vmax.f32 %v1294, 0.0
      %v1362 = vmax.f32 %v1296, 0.0
      %v1363 = vmax.f32 %v1299, 0.0
      %v1364 = vmax.f32 %v1301, 0.0
      %v1365 = vmax.f32 %v1304, 0.0
      %v1366 = vmax.f32 %v1306, 0.0
      %v1367 = vmax.f32 %v1309, 0.0
      %v1368 = vmax.f32 %v1311, 0.0
      %v1369 = vmax.f32 %v1314, 0.0
      %v1370 = vmax.f32 %v1316, 0.0
      %v1371 = vmax.f32 %v1319, 0.0
      %v1372 = vmax.f32 %v1321, 0.0
      %v1373 = vmax.f32 %v1324, 0.0
      %v1374 = vmax.f32 %v1326, 0.0
      %v1375 = vmax.f32 %v1329, 0.0
      %v1376 = vmax.f32 %v1331, 0.0
      %v1377 = vmax.f32 %v1334, 0.0
      %v1378 = vmax.f32 %v1336, 0.0
      %v1379 = vmax.f32 %v1339, 0.0
      %v1380 = vmax.f32 %v1341, 0.0
      %v1381 = vmax.f32 %v1344, 0.0
      %v1382 = vmax.f32 %v1346, 0.0
      %v1383 = vmax.f32 %v1349, 0.0
      %v1384 = vmax.f32 %v1351, 0.0
      %vm1416 = vcmask 1040384
      %v1417 = vrot.slane 0.0, 7
      %v1418 = vsel %vm1416, %v1417, %v1417
      %v1419 = vrot.slane %v1353, 7
      %v1420 = vsel %vm1416, %v1417, %v1419
      %v1421 = vrot.slane %v1354, 7
      %v1422 = vsel %vm1416, %v1419, %v1421
      %v1423 = vrot.slane %v1355, 7
      %v1424 = vsel %vm1416, %v1421, %v1423
      %v1425 = vrot.slane %v1356, 7
      %v1426 = vsel %vm1416, %v1423, %v1425
      %v1427 = vrot.slane %v1357, 7
      %v1428 = vsel %vm1416, %v1425, %v1427
      %v1429 = vrot.slane %v1358, 7
      %v1430 = vsel %vm1416, %v1427, %v1429
      %v1431 = vrot.slane %v1359, 7
      %v1432 = vsel %vm1416, %v1429, %v1431
      %v1433 = vrot.slane %v1360, 7
      %v1434 = vsel %vm1416, %v1431, %v1433
      %v1435 = vrot.slane %v1361, 7
      %v1436 = vsel %vm1416, %v1433, %v1435
      %v1437 = vrot.slane %v1362, 7
      %v1438 = vsel %vm1416, %v1435, %v1437
      %v1439 = vrot.slane %v1363, 7
      %v1440 = vsel %vm1416, %v1437, %v1439
      %v1441 = vrot.slane %v1364, 7
      %v1442 = vsel %vm1416, %v1439, %v1441
      %v1443 = vrot.slane %v1365, 7
      %v1444 = vsel %vm1416, %v1441, %v1443
      %v1445 = vrot.slane %v1366, 7
      %v1446 = vsel %vm1416, %v1443, %v1445
      %v1447 = vrot.slane %v1367, 7
      %v1448 = vsel %vm1416, %v1445, %v1447
      %v1449 = vrot.slane %v1368, 7
      %v1450 = vsel %vm1416, %v1447, %v1449
      %v1451 = vrot.slane %v1369, 7
      %v1452 = vsel %vm1416, %v1449, %v1451
      %v1453 = vrot.slane %v1370, 7
      %v1454 = vsel %vm1416, %v1451, %v1453
      %v1455 = vrot.slane %v1371, 7
      %v1456 = vsel %vm1416, %v1453, %v1455
      %v1457 = vrot.slane %v1372, 7
      %v1458 = vsel %vm1416, %v1455, %v1457
      %v1459 = vrot.slane %v1373, 7
      %v1460 = vsel %vm1416, %v1457, %v1459
      %v1461 = vrot.slane %v1374, 7
      %v1462 = vsel %vm1416, %v1459, %v1461
      %v1463 = vrot.slane %v1375, 7
      %v1464 = vsel %vm1416, %v1461, %v1463
      %v1465 = vrot.slane %v1376, 7
      %v1466 = vsel %vm1416, %v1463, %v1465
      %v1467 = vrot.slane %v1377, 7
      %v1468 = vsel %vm1416, %v1465, %v1467
      %v1469 = vrot.slane %v1378, 7
      %v1470 = vsel %vm1416, %v1467, %v1469
      %v1471 = vrot.slane %v1379, 7
      %v1472 = vsel %vm1416, %v1469, %v1471
      %v1473 = vrot.slane %v1380, 7
      %v1474 = vsel %vm1416, %v1471, %v1473
      %v1475 = vrot.slane %v1381, 7
      %v1476 = vsel %vm1416, %v1473, %v1475
      %v1477 = vrot.slane %v1382, 7
      %v1478 = vsel %vm1416, %v1475, %v1477
      %v1511 = vsel %vm1416, 0.0, %v1417
      %1513 = vset.pattern.permute.xlu0 0
      %1514 = vperm.xlu0 %1513, %v199
      %v1515 = vpop.permute.xlu0 %1514
      %1518 = vset.pattern.permute.xlu0 0
      %1519 = vperm.xlu0 %1518, %v200
      %v1520 = vpop.permute.xlu0 %1519
      %1523 = vset.pattern.permute.xlu0 0
      %1524 = vperm.xlu0 %1523, %v201
      %v1525 = vpop.permute.xlu0 %1524
      %1528 = vset.pattern.permute.xlu0 0
      %1529 = vperm.xlu0 %1528, %v202
      %v1530 = vpop.permute.xlu0 %1529
      %1533 = vset.pattern.permute.xlu0 0
      %1534 = vperm.xlu0 %1533, %v203
      %v1535 = vpop.permute.xlu0 %1534
      %1538 = vset.pattern.permute.xlu0 0
      %1539 = vperm.xlu0 %1538, %v204
      %v1540 = vpop.permute.xlu0 %1539
      %1543 = vset.pattern.permute.xlu0 0
      %1544 = vperm.xlu0 %1543, %v205
      %v1545 = vpop.permute.xlu0 %1544
      %1548 = vset.pattern.permute.xlu0 0
      %1549 = vperm.xlu0 %1548, %v206
      %v1550 = vpop.permute.xlu0 %1549
      %1553 = vset.pattern.permute.xlu0 0
      %1554 = vperm.xlu0 %1553, %v207
      %v1555 = vpop.permute.xlu0 %1554
      %1558 = vset.pattern.permute.xlu0 0
      %1559 = vperm.xlu0 %1558, %v208
      %v1560 = vpop.permute.xlu0 %1559
      %1563 = vset.pattern.permute.xlu0 0
      %1564 = vperm.xlu0 %1563, %v209
      %v1565 = vpop.permute.xlu0 %1564
      %1568 = vset.pattern.permute.xlu0 0
      %1569 = vperm.xlu0 %1568, %v210
      %v1570 = vpop.permute.xlu0 %1569
      %1573 = vset.pattern.permute.xlu0 0
      %1574 = vperm.xlu0 %1573, %v211
      %v1575 = vpop.permute.xlu0 %1574
      %1578 = vset.pattern.permute.xlu0 0
      %1579 = vperm.xlu0 %1578, %v212
      %v1580 = vpop.permute.xlu0 %1579
      %1583 = vset.pattern.permute.xlu0 0
      %1584 = vperm.xlu0 %1583, %v213
      %v1585 = vpop.permute.xlu0 %1584
      %1588 = vset.pattern.permute.xlu0 0
      %1589 = vperm.xlu0 %1588, %v214
      %v1590 = vpop.permute.xlu0 %1589
      %1593 = vset.pattern.permute.xlu0 0
      %1594 = vperm.xlu0 %1593, %v215
      %v1595 = vpop.permute.xlu0 %1594
      %1598 = vset.pattern.permute.xlu0 0
      %1599 = vperm.xlu0 %1598, %v216
      %v1600 = vpop.permute.xlu0 %1599
      %1603 = vset.pattern.permute.xlu0 0
      %1604 = vperm.xlu0 %1603, %v217
      %v1605 = vpop.permute.xlu0 %1604
      %1608 = vset.pattern.permute.xlu0 0
      %1609 = vperm.xlu0 %1608, %v218
      %v1610 = vpop.permute.xlu0 %1609
      %1613 = vset.pattern.permute.xlu0 0
      %1614 = vperm.xlu0 %1613, %v219
      %v1615 = vpop.permute.xlu0 %1614
      %1618 = vset.pattern.permute.xlu0 0
      %1619 = vperm.xlu0 %1618, %v220
      %v1620 = vpop.permute.xlu0 %1619
      %1623 = vset.pattern.permute.xlu0 0
      %1624 = vperm.xlu0 %1623, %v221
      %v1625 = vpop.permute.xlu0 %1624
      %1628 = vset.pattern.permute.xlu0 0
      %1629 = vperm.xlu0 %1628, %v222
      %v1630 = vpop.permute.xlu0 %1629
      %1633 = vset.pattern.permute.xlu0 0
      %1634 = vperm.xlu0 %1633, %v223
      %v1635 = vpop.permute.xlu0 %1634
      %1638 = vset.pattern.permute.xlu0 0
      %1639 = vperm.xlu0 %1638, %v224
      %v1640 = vpop.permute.xlu0 %1639
      %1643 = vset.pattern.permute.xlu0 0
      %1644 = vperm.xlu0 %1643, %v225
      %v1645 = vpop.permute.xlu0 %1644
      %1648 = vset.pattern.permute.xlu0 0
      %1649 = vperm.xlu0 %1648, %v226
      %v1650 = vpop.permute.xlu0 %1649
      %1653 = vset.pattern.permute.xlu0 0
      %1654 = vperm.xlu0 %1653, %v227
      %v1655 = vpop.permute.xlu0 %1654
      %1658 = vset.pattern.permute.xlu0 0
      %1659 = vperm.xlu0 %1658, %v228
      %v1660 = vpop.permute.xlu0 %1659
      %1663 = vset.pattern.permute.xlu0 0
      %1664 = vperm.xlu0 %1663, %v229
      %v1665 = vpop.permute.xlu0 %1664
      %1668 = vset.pattern.permute.xlu0 0
      %1669 = vperm.xlu0 %1668, %v230
      %v1670 = vpop.permute.xlu0 %1669
      %v1672 = vmul.f32 %v1511, %v1515
      %v1673 = vmul.f32 %v1418, %v1520
      %v1674 = vmul.f32 %v1420, %v1525
      %v1675 = vmul.f32 %v1422, %v1530
      %v1676 = vmul.f32 %v1424, %v1535
      %v1677 = vmul.f32 %v1426, %v1540
      %v1678 = vmul.f32 %v1428, %v1545
      %v1679 = vmul.f32 %v1430, %v1550
      %v1680 = vmul.f32 %v1432, %v1555
      %v1681 = vmul.f32 %v1434, %v1560
      %v1682 = vmul.f32 %v1436, %v1565
      %v1683 = vmul.f32 %v1438, %v1570
      %v1684 = vmul.f32 %v1440, %v1575
      %v1685 = vmul.f32 %v1442, %v1580
      %v1686 = vmul.f32 %v1444, %v1585
      %v1687 = vmul.f32 %v1446, %v1590
      %v1688 = vmul.f32 %v1448, %v1595
      %v1689 = vmul.f32 %v1450, %v1600
      %v1690 = vmul.f32 %v1452, %v1605
      %v1691 = vmul.f32 %v1454, %v1610
      %v1692 = vmul.f32 %v1456, %v1615
      %v1693 = vmul.f32 %v1458, %v1620
      %v1694 = vmul.f32 %v1460, %v1625
      %v1695 = vmul.f32 %v1462, %v1630
      %v1696 = vmul.f32 %v1464, %v1635
      %v1697 = vmul.f32 %v1466, %v1640
      %v1698 = vmul.f32 %v1468, %v1645
      %v1699 = vmul.f32 %v1470, %v1650
      %v1700 = vmul.f32 %v1472, %v1655
      %v1701 = vmul.f32 %v1474, %v1660
      %v1702 = vmul.f32 %v1476, %v1665
      %v1703 = vmul.f32 %v1478, %v1670
      %v1704 = vmax.f32 %v507, %v1672
      %v1705 = vmax.f32 %v508, %v1673
      %v1706 = vmax.f32 %v509, %v1674
      %v1707 = vmax.f32 %v510, %v1675
      %v1708 = vmax.f32 %v511, %v1676
      %v1709 = vmax.f32 %v512, %v1677
      %v1710 = vmax.f32 %v513, %v1678
      %v1711 = vmax.f32 %v514, %v1679
      %v1712 = vmax.f32 %v515, %v1680
      %v1713 = vmax.f32 %v516, %v1681
      %v1714 = vmax.f32 %v517, %v1682
      %v1715 = vmax.f32 %v518, %v1683
      %v1716 = vmax.f32 %v519, %v1684
      %v1717 = vmax.f32 %v520, %v1685
      %v1718 = vmax.f32 %v521, %v1686
      %v1719 = vmax.f32 %v522, %v1687
      %v1720 = vmax.f32 %v523, %v1688
      %v1721 = vmax.f32 %v524, %v1689
      %v1722 = vmax.f32 %v525, %v1690
      %v1723 = vmax.f32 %v526, %v1691
      %v1724 = vmax.f32 %v527, %v1692
      %v1725 = vmax.f32 %v528, %v1693
      %v1726 = vmax.f32 %v529, %v1694
      %v1727 = vmax.f32 %v530, %v1695
      %v1728 = vmax.f32 %v531, %v1696
      %v1729 = vmax.f32 %v532, %v1697
      %v1730 = vmax.f32 %v533, %v1698
      %v1731 = vmax.f32 %v534, %v1699
      %v1732 = vmax.f32 %v535, %v1700
      %v1733 = vmax.f32 %v536, %v1701
      %v1734 = vmax.f32 %v537, %v1702
      %v1735 = vmax.f32 %v538, %v1703
      %v1736 = vmax.f32 %v1704, 0.0
      %v1737 = vmax.f32 %v1705, 0.0
      %v1738 = vmax.f32 %v1706, %v1071
      %v1739 = vmax.f32 %v1707, %v1072
      %v1740 = vmax.f32 %v1708, %v1073
      %v1741 = vmax.f32 %v1709, %v1074
      %v1742 = vmax.f32 %v1710, %v1075
      %v1743 = vmax.f32 %v1711, %v1076
      %v1744 = vmax.f32 %v1712, %v1077
      %v1745 = vmax.f32 %v1713, %v1078
      %v1746 = vmax.f32 %v1714, %v1079
      %v1747 = vmax.f32 %v1715, %v1080
      %v1748 = vmax.f32 %v1716, %v1081
      %v1749 = vmax.f32 %v1717, %v1082
      %v1750 = vmax.f32 %v1718, %v1083
      %v1751 = vmax.f32 %v1719, %v1084
      %v1752 = vmax.f32 %v1720, %v1085
      %v1753 = vmax.f32 %v1721, %v1086
      %v1754 = vmax.f32 %v1722, %v1087
      %v1755 = vmax.f32 %v1723, %v1088
      %v1756 = vmax.f32 %v1724, %v1089
      %v1757 = vmax.f32 %v1725, %v1090
      %v1758 = vmax.f32 %v1726, %v1091
      %v1759 = vmax.f32 %v1727, %v1092
      %v1760 = vmax.f32 %v1728, %v1093
      %v1761 = vmax.f32 %v1729, %v1094
      %v1762 = vmax.f32 %v1730, %v1095
      %v1763 = vmax.f32 %v1731, %v1096
      %v1764 = vmax.f32 %v1732, %v1097
      %v1765 = vmax.f32 %v1733, %v1098
      %v1766 = vmax.f32 %v1734, %v1099
      %v1767 = vmax.f32 %v1735, %v1100
      %v1768 = vmax.f32 %v1736, 0.0
      %v1769 = vmax.f32 %v1737, 0.0
      %v1770 = vmax.f32 %v1738, %v1353
      %v1771 = vmax.f32 %v1739, %v1354
      %v1772 = vmax.f32 %v1740, %v1355
      %v1773 = vmax.f32 %v1741, %v1356
      %v1774 = vmax.f32 %v1742, %v1357
      %v1775 = vmax.f32 %v1743, %v1358
      %v1776 = vmax.f32 %v1744, %v1359
      %v1777 = vmax.f32 %v1745, %v1360
      %v1778 = vmax.f32 %v1746, %v1361
      %v1779 = vmax.f32 %v1747, %v1362
      %v1780 = vmax.f32 %v1748, %v1363
      %v1781 = vmax.f32 %v1749, %v1364
      %v1782 = vmax.f32 %v1750, %v1365
      %v1783 = vmax.f32 %v1751, %v1366
      %v1784 = vmax.f32 %v1752, %v1367
      %v1785 = vmax.f32 %v1753, %v1368
      %v1786 = vmax.f32 %v1754, %v1369
      %v1787 = vmax.f32 %v1755, %v1370
      %v1788 = vmax.f32 %v1756, %v1371
      %v1789 = vmax.f32 %v1757, %v1372
      %v1790 = vmax.f32 %v1758, %v1373
      %v1791 = vmax.f32 %v1759, %v1374
      %v1792 = vmax.f32 %v1760, %v1375
      %v1793 = vmax.f32 %v1761, %v1376
      %v1794 = vmax.f32 %v1762, %v1377
      %v1795 = vmax.f32 %v1763, %v1378
      %v1796 = vmax.f32 %v1764, %v1379
      %v1797 = vmax.f32 %v1765, %v1380
      %v1798 = vmax.f32 %v1766, %v1381
      %v1799 = vmax.f32 %v1767, %v1382
      %v1832 = vrot.slane %v789, 7
      %v1833 = vrot.slane %v790, 7
      %v1834 = vsel %vm1416, %v1832, %v1833
      %v1835 = vrot.slane %v791, 7
      %v1836 = vsel %vm1416, %v1833, %v1835
      %v1837 = vrot.slane %v792, 7
      %v1838 = vsel %vm1416, %v1835, %v1837
      %v1839 = vrot.slane %v793, 7
      %v1840 = vsel %vm1416, %v1837, %v1839
      %v1841 = vrot.slane %v794, 7
      %v1842 = vsel %vm1416, %v1839, %v1841
      %v1843 = vrot.slane %v795, 7
      %v1844 = vsel %vm1416, %v1841, %v1843
      %v1845 = vrot.slane %v796, 7
      %v1846 = vsel %vm1416, %v1843, %v1845
      %v1847 = vrot.slane %v797, 7
      %v1848 = vsel %vm1416, %v1845, %v1847
      %v1849 = vrot.slane %v798, 7
      %v1850 = vsel %vm1416, %v1847, %v1849
      %v1851 = vrot.slane %v799, 7
      %v1852 = vsel %vm1416, %v1849, %v1851
      %v1853 = vrot.slane %v800, 7
      %v1854 = vsel %vm1416, %v1851, %v1853
      %v1855 = vrot.slane %v801, 7
      %v1856 = vsel %vm1416, %v1853, %v1855
      %v1857 = vrot.slane %v802, 7
      %v1858 = vsel %vm1416, %v1855, %v1857
      %v1859 = vrot.slane %v803, 7
      %v1860 = vsel %vm1416, %v1857, %v1859
      %v1861 = vrot.slane %v804, 7
      %v1862 = vsel %vm1416, %v1859, %v1861
      %v1863 = vrot.slane %v805, 7
      %v1864 = vsel %vm1416, %v1861, %v1863
      %v1865 = vrot.slane %v806, 7
      %v1866 = vsel %vm1416, %v1863, %v1865
      %v1867 = vrot.slane %v807, 7
      %v1868 = vsel %vm1416, %v1865, %v1867
      %v1869 = vrot.slane %v808, 7
      %v1870 = vsel %vm1416, %v1867, %v1869
      %v1871 = vrot.slane %v809, 7
      %v1872 = vsel %vm1416, %v1869, %v1871
      %v1873 = vrot.slane %v810, 7
      %v1874 = vsel %vm1416, %v1871, %v1873
      %v1875 = vrot.slane %v811, 7
      %v1876 = vsel %vm1416, %v1873, %v1875
      %v1877 = vrot.slane %v812, 7
      %v1878 = vsel %vm1416, %v1875, %v1877
      %v1879 = vrot.slane %v813, 7
      %v1880 = vsel %vm1416, %v1877, %v1879
      %v1881 = vrot.slane %v814, 7
      %v1882 = vsel %vm1416, %v1879, %v1881
      %v1883 = vrot.slane %v815, 7
      %v1884 = vsel %vm1416, %v1881, %v1883
      %v1885 = vrot.slane %v816, 7
      %v1886 = vsel %vm1416, %v1883, %v1885
      %v1887 = vrot.slane %v817, 7
      %v1888 = vsel %vm1416, %v1885, %v1887
      %v1889 = vrot.slane %v818, 7
      %v1890 = vsel %vm1416, %v1887, %v1889
      %v1891 = vrot.slane %v819, 7
      %v1892 = vsel %vm1416, %v1889, %v1891
      %v1893 = vrot.slane %v820, 7
      %v1894 = vsel %vm1416, %v1891, %v1893
      %v1927 = vsel %vm1416, 0.0, %v1832
      %v1928 = vmul.f32 %v1927, %v1515
      %v1929 = vmul.f32 %v1834, %v1520
      %v1930 = vmul.f32 %v1836, %v1525
      %v1931 = vmul.f32 %v1838, %v1530
      %v1932 = vmul.f32 %v1840, %v1535
      %v1933 = vmul.f32 %v1842, %v1540
      %v1934 = vmul.f32 %v1844, %v1545
      %v1935 = vmul.f32 %v1846, %v1550
      %v1936 = vmul.f32 %v1848, %v1555
      %v1937 = vmul.f32 %v1850, %v1560
      %v1938 = vmul.f32 %v1852, %v1565
      %v1939 = vmul.f32 %v1854, %v1570
      %v1940 = vmul.f32 %v1856, %v1575
      %v1941 = vmul.f32 %v1858, %v1580
      %v1942 = vmul.f32 %v1860, %v1585
      %v1943 = vmul.f32 %v1862, %v1590
      %v1944 = vmul.f32 %v1864, %v1595
      %v1945 = vmul.f32 %v1866, %v1600
      %v1946 = vmul.f32 %v1868, %v1605
      %v1947 = vmul.f32 %v1870, %v1610
      %v1948 = vmul.f32 %v1872, %v1615
      %v1949 = vmul.f32 %v1874, %v1620
      %v1950 = vmul.f32 %v1876, %v1625
      %v1951 = vmul.f32 %v1878, %v1630
      %v1952 = vmul.f32 %v1880, %v1635
      %v1953 = vmul.f32 %v1882, %v1640
      %v1954 = vmul.f32 %v1884, %v1645
      %v1955 = vmul.f32 %v1886, %v1650
      %v1956 = vmul.f32 %v1888, %v1655
      %v1957 = vmul.f32 %v1890, %v1660
      %v1958 = vmul.f32 %v1892, %v1665
      %v1959 = vmul.f32 %v1894, %v1670
      %v1960 = vmax.f32 %v1768, %v1928
      %v1961 = vmax.f32 %v1769, %v1929
      %v1962 = vmax.f32 %v1770, %v1930
      %v1963 = vmax.f32 %v1771, %v1931
      %v1964 = vmax.f32 %v1772, %v1932
      %v1965 = vmax.f32 %v1773, %v1933
      %v1966 = vmax.f32 %v1774, %v1934
      %v1967 = vmax.f32 %v1775, %v1935
      %v1968 = vmax.f32 %v1776, %v1936
      %v1969 = vmax.f32 %v1777, %v1937
      %v1970 = vmax.f32 %v1778, %v1938
      %v1971 = vmax.f32 %v1779, %v1939
      %v1972 = vmax.f32 %v1780, %v1940
      %v1973 = vmax.f32 %v1781, %v1941
      %v1974 = vmax.f32 %v1782, %v1942
      %v1975 = vmax.f32 %v1783, %v1943
      %v1976 = vmax.f32 %v1784, %v1944
      %v1977 = vmax.f32 %v1785, %v1945
      %v1978 = vmax.f32 %v1786, %v1946
      %v1979 = vmax.f32 %v1787, %v1947
      %v1980 = vmax.f32 %v1788, %v1948
      %v1981 = vmax.f32 %v1789, %v1949
      %v1982 = vmax.f32 %v1790, %v1950
      %v1983 = vmax.f32 %v1791, %v1951
      %v1984 = vmax.f32 %v1792, %v1952
      %v1985 = vmax.f32 %v1793, %v1953
      %v1986 = vmax.f32 %v1794, %v1954
      %v1987 = vmax.f32 %v1795, %v1955
      %v1988 = vmax.f32 %v1796, %v1956
      %v1989 = vmax.f32 %v1797, %v1957
      %v1990 = vmax.f32 %v1798, %v1958
      %v1991 = vmax.f32 %v1799, %v1959
      %v1992 = vmax.f32 %v1960, %v789
      %v1993 = vmax.f32 %v1961, %v790
      %v1994 = vmax.f32 %v1962, %v791
      %v1995 = vmax.f32 %v1963, %v792
      %v1996 = vmax.f32 %v1964, %v793
      %v1997 = vmax.f32 %v1965, %v794
      %v1998 = vmax.f32 %v1966, %v795
      %v1999 = vmax.f32 %v1967, %v796
      %v2000 = vmax.f32 %v1968, %v797
      %v2001 = vmax.f32 %v1969, %v798
      %v2002 = vmax.f32 %v1970, %v799
      %v2003 = vmax.f32 %v1971, %v800
      %v2004 = vmax.f32 %v1972, %v801
      %v2005 = vmax.f32 %v1973, %v802
      %v2006 = vmax.f32 %v1974, %v803
      %v2007 = vmax.f32 %v1975, %v804
      %v2008 = vmax.f32 %v1976, %v805
      %v2009 = vmax.f32 %v1977, %v806
      %v2010 = vmax.f32 %v1978, %v807
      %v2011 = vmax.f32 %v1979, %v808
      %v2012 = vmax.f32 %v1980, %v809
      %v2013 = vmax.f32 %v1981, %v810
      %v2014 = vmax.f32 %v1982, %v811
      %v2015 = vmax.f32 %v1983, %v812
      %v2016 = vmax.f32 %v1984, %v813
      %v2017 = vmax.f32 %v1985, %v814
      %v2018 = vmax.f32 %v1986, %v815
      %v2019 = vmax.f32 %v1987, %v816
      %v2020 = vmax.f32 %v1988, %v817
      %v2021 = vmax.f32 %v1989, %v818
      %v2022 = vmax.f32 %v1990, %v819
      %v2023 = vmax.f32 %v1991, %v820
      %v2026 = vrot.slane %v1383, 7
      %v2027 = vsel %vm1416, %v1477, %v2026
      %v2028 = vrot.slane %v1384, 7
      %v2029 = vsel %vm1416, %v2026, %v2028
      %v2033 = vsel %vm1416, 0.0, %v1419
      %v2034 = vmul.f32 %v2033, %v1515
      %v2035 = vmul.f32 %v1422, %v1520
      %v2036 = vmul.f32 %v1424, %v1525
      %v2037 = vmul.f32 %v1426, %v1530
      %v2038 = vmul.f32 %v1428, %v1535
      %v2039 = vmul.f32 %v1430, %v1540
      %v2040 = vmul.f32 %v1432, %v1545
      %v2041 = vmul.f32 %v1434, %v1550
      %v2042 = vmul.f32 %v1436, %v1555
      %v2043 = vmul.f32 %v1438, %v1560
      %v2044 = vmul.f32 %v1440, %v1565
      %v2045 = vmul.f32 %v1442, %v1570
      %v2046 = vmul.f32 %v1444, %v1575
      %v2047 = vmul.f32 %v1446, %v1580
      %v2048 = vmul.f32 %v1448, %v1585
      %v2049 = vmul.f32 %v1450, %v1590
      %v2050 = vmul.f32 %v1452, %v1595
      %v2051 = vmul.f32 %v1454, %v1600
      %v2052 = vmul.f32 %v1456, %v1605
      %v2053 = vmul.f32 %v1458, %v1610
      %v2054 = vmul.f32 %v1460, %v1615
      %v2055 = vmul.f32 %v1462, %v1620
      %v2056 = vmul.f32 %v1464, %v1625
      %v2057 = vmul.f32 %v1466, %v1630
      %v2058 = vmul.f32 %v1468, %v1635
      %v2059 = vmul.f32 %v1470, %v1640
      %v2060 = vmul.f32 %v1472, %v1645
      %v2061 = vmul.f32 %v1474, %v1650
      %v2062 = vmul.f32 %v1476, %v1655
      %v2063 = vmul.f32 %v1478, %v1660
      %v2064 = vmul.f32 %v2027, %v1665
      %v2065 = vmul.f32 %v2029, %v1670
      %v2066 = vmax.f32 %v1992, %v2034
      %v2067 = vmax.f32 %v1993, %v2035
      %v2068 = vmax.f32 %v1994, %v2036
      %v2069 = vmax.f32 %v1995, %v2037
      %v2070 = vmax.f32 %v1996, %v2038
      %v2071 = vmax.f32 %v1997, %v2039
      %v2072 = vmax.f32 %v1998, %v2040
      %v2073 = vmax.f32 %v1999, %v2041
      %v2074 = vmax.f32 %v2000, %v2042
      %v2075 = vmax.f32 %v2001, %v2043
      %v2076 = vmax.f32 %v2002, %v2044
      %v2077 = vmax.f32 %v2003, %v2045
      %v2078 = vmax.f32 %v2004, %v2046
      %v2079 = vmax.f32 %v2005, %v2047
      %v2080 = vmax.f32 %v2006, %v2048
      %v2081 = vmax.f32 %v2007, %v2049
      %v2082 = vmax.f32 %v2008, %v2050
      %v2083 = vmax.f32 %v2009, %v2051
      %v2084 = vmax.f32 %v2010, %v2052
      %v2085 = vmax.f32 %v2011, %v2053
      %v2086 = vmax.f32 %v2012, %v2054
      %v2087 = vmax.f32 %v2013, %v2055
      %v2088 = vmax.f32 %v2014, %v2056
      %v2089 = vmax.f32 %v2015, %v2057
      %v2090 = vmax.f32 %v2016, %v2058
      %v2091 = vmax.f32 %v2017, %v2059
      %v2092 = vmax.f32 %v2018, %v2060
      %v2093 = vmax.f32 %v2019, %v2061
      %v2094 = vmax.f32 %v2020, %v2062
      %v2095 = vmax.f32 %v2021, %v2063
      %v2096 = vmax.f32 %v2022, %v2064
      %v2097 = vmax.f32 %v2023, %v2065
      %v2098 = vmax.f32 %v2066, %v1071
      %v2099 = vmax.f32 %v2067, %v1072
      %v2100 = vmax.f32 %v2068, %v1073
      %v2101 = vmax.f32 %v2069, %v1074
      %v2102 = vmax.f32 %v2070, %v1075
      %v2103 = vmax.f32 %v2071, %v1076
      %v2104 = vmax.f32 %v2072, %v1077
      %v2105 = vmax.f32 %v2073, %v1078
      %v2106 = vmax.f32 %v2074, %v1079
      %v2107 = vmax.f32 %v2075, %v1080
      %v2108 = vmax.f32 %v2076, %v1081
      %v2109 = vmax.f32 %v2077, %v1082
      %v2110 = vmax.f32 %v2078, %v1083
      %v2111 = vmax.f32 %v2079, %v1084
      %v2112 = vmax.f32 %v2080, %v1085
      %v2113 = vmax.f32 %v2081, %v1086
      %v2114 = vmax.f32 %v2082, %v1087
      %v2115 = vmax.f32 %v2083, %v1088
      %v2116 = vmax.f32 %v2084, %v1089
      %v2117 = vmax.f32 %v2085, %v1090
      %v2118 = vmax.f32 %v2086, %v1091
      %v2119 = vmax.f32 %v2087, %v1092
      %v2120 = vmax.f32 %v2088, %v1093
      %v2121 = vmax.f32 %v2089, %v1094
      %v2122 = vmax.f32 %v2090, %v1095
      %v2123 = vmax.f32 %v2091, %v1096
      %v2124 = vmax.f32 %v2092, %v1097
      %v2125 = vmax.f32 %v2093, %v1098
      %v2126 = vmax.f32 %v2094, %v1099
      %v2127 = vmax.f32 %v2095, %v1100
      %v2128 = vmax.f32 %v2096, %v1101
      %v2129 = vmax.f32 %v2097, %v1102
      %v2130 = vmax.f32 %v2098, %v1353
      %v2131 = vmax.f32 %v2099, %v1354
      %v2132 = vmax.f32 %v2100, %v1355
      %v2133 = vmax.f32 %v2101, %v1356
      %v2134 = vmax.f32 %v2102, %v1357
      %v2135 = vmax.f32 %v2103, %v1358
      %v2136 = vmax.f32 %v2104, %v1359
      %v2137 = vmax.f32 %v2105, %v1360
      %v2138 = vmax.f32 %v2106, %v1361
      %v2139 = vmax.f32 %v2107, %v1362
      %v2140 = vmax.f32 %v2108, %v1363
      %v2141 = vmax.f32 %v2109, %v1364
      %v2142 = vmax.f32 %v2110, %v1365
      %v2143 = vmax.f32 %v2111, %v1366
      %v2144 = vmax.f32 %v2112, %v1367
      %v2145 = vmax.f32 %v2113, %v1368
      %v2146 = vmax.f32 %v2114, %v1369
      %v2147 = vmax.f32 %v2115, %v1370
      %v2148 = vmax.f32 %v2116, %v1371
      %v2149 = vmax.f32 %v2117, %v1372
      %v2150 = vmax.f32 %v2118, %v1373
      %v2151 = vmax.f32 %v2119, %v1374
      %v2152 = vmax.f32 %v2120, %v1375
      %v2153 = vmax.f32 %v2121, %v1376
      %v2154 = vmax.f32 %v2122, %v1377
      %v2155 = vmax.f32 %v2123, %v1378
      %v2156 = vmax.f32 %v2124, %v1379
      %v2157 = vmax.f32 %v2125, %v1380
      %v2158 = vmax.f32 %v2126, %v1381
      %v2159 = vmax.f32 %v2127, %v1382
      %v2160 = vmax.f32 %v2128, %v1383
      %v2161 = vmax.f32 %v2129, %v1384
      %v2162 = vpack.c.bf16 %v2130, %v2130
      %v2163 = vpack.c.bf16 %v2131, %v2131
      %v2164 = vpack.c.bf16 %v2132, %v2132
      %v2165 = vpack.c.bf16 %v2133, %v2133
      %v2166 = vpack.c.bf16 %v2134, %v2134
      %v2167 = vpack.c.bf16 %v2135, %v2135
      %v2168 = vpack.c.bf16 %v2136, %v2136
      %v2169 = vpack.c.bf16 %v2137, %v2137
      %v2170 = vpack.c.bf16 %v2138, %v2138
      %v2171 = vpack.c.bf16 %v2139, %v2139
      %v2172 = vpack.c.bf16 %v2140, %v2140
      %v2173 = vpack.c.bf16 %v2141, %v2141
      %v2174 = vpack.c.bf16 %v2142, %v2142
      %v2175 = vpack.c.bf16 %v2143, %v2143
      %v2176 = vpack.c.bf16 %v2144, %v2144
      %v2177 = vpack.c.bf16 %v2145, %v2145
      %v2178 = vpack.c.bf16 %v2146, %v2146
      %v2179 = vpack.c.bf16 %v2147, %v2147
      %v2180 = vpack.c.bf16 %v2148, %v2148
      %v2181 = vpack.c.bf16 %v2149, %v2149
      %v2182 = vpack.c.bf16 %v2150, %v2150
      %v2183 = vpack.c.bf16 %v2151, %v2151
      %v2184 = vpack.c.bf16 %v2152, %v2152
      %v2185 = vpack.c.bf16 %v2153, %v2153
      %v2186 = vpack.c.bf16 %v2154, %v2154
      %v2187 = vpack.c.bf16 %v2155, %v2155
      %v2188 = vpack.c.bf16 %v2156, %v2156
      %v2189 = vpack.c.bf16 %v2157, %v2157
      %v2190 = vpack.c.bf16 %v2158, %v2158
      %v2191 = vpack.c.bf16 %v2159, %v2159
      %v2192 = vpack.c.bf16 %v2160, %v2160
      %v2193 = vpack.c.bf16 %v2161, %v2161
      %vm2194 = vcmask 60416
      %2195 = vst.msk [vmem:[%s197] sm:$0xf] %vm2194, %v2162
      %2196 = vst.msk [vmem:[%s197 + $0x4] sm:$0xf] %vm2194, %v2163
      %2197 = vst.msk [vmem:[%s197 + $0x8] sm:$0xf] %vm2194, %v2164
      %2198 = vst.msk [vmem:[%s197 + $0xc] sm:$0xf] %vm2194, %v2165
      %2199 = vst.msk [vmem:[%s197 + $0x10] sm:$0xf] %vm2194, %v2166
      %2200 = vst.msk [vmem:[%s197 + $0x14] sm:$0xf] %vm2194, %v2167
      %2201 = vst.msk [vmem:[%s197 + $0x18] sm:$0xf] %vm2194, %v2168
      %2202 = vst.msk [vmem:[%s197 + $0x1c] sm:$0xf] %vm2194, %v2169
      %2203 = vst.msk [vmem:[%s197 + $0x20] sm:$0xf] %vm2194, %v2170
      %2204 = vst.msk [vmem:[%s197 + $0x24] sm:$0xf] %vm2194, %v2171
      %2205 = vst.msk [vmem:[%s197 + $0x28] sm:$0xf] %vm2194, %v2172
      %2206 = vst.msk [vmem:[%s197 + $0x2c] sm:$0xf] %vm2194, %v2173
      %2207 = vst.msk [vmem:[%s197 + $0x30] sm:$0xf] %vm2194, %v2174
      %2208 = vst.msk [vmem:[%s197 + $0x34] sm:$0xf] %vm2194, %v2175
      %2209 = vst.msk [vmem:[%s197 + $0x38] sm:$0xf] %vm2194, %v2176
      %2210 = vst.msk [vmem:[%s197 + $0x3c] sm:$0xf] %vm2194, %v2177
      %2211 = vst.msk [vmem:[%s197 + $0x40] sm:$0xf] %vm2194, %v2178
      %2212 = vst.msk [vmem:[%s197 + $0x44] sm:$0xf] %vm2194, %v2179
      %2213 = vst.msk [vmem:[%s197 + $0x48] sm:$0xf] %vm2194, %v2180
      %2214 = vst.msk [vmem:[%s197 + $0x4c] sm:$0xf] %vm2194, %v2181
      %2215 = vst.msk [vmem:[%s197 + $0x50] sm:$0xf] %vm2194, %v2182
      %2216 = vst.msk [vmem:[%s197 + $0x54] sm:$0xf] %vm2194, %v2183
      %2217 = vst.msk [vmem:[%s197 + $0x58] sm:$0xf] %vm2194, %v2184
      %2218 = vst.msk [vmem:[%s197 + $0x5c] sm:$0xf] %vm2194, %v2185
      %2219 = vst.msk [vmem:[%s197 + $0x60] sm:$0xf] %vm2194, %v2186
      %2220 = vst.msk [vmem:[%s197 + $0x64] sm:$0xf] %vm2194, %v2187
      %2221 = vst.msk [vmem:[%s197 + $0x68] sm:$0xf] %vm2194, %v2188
      %2222 = vst.msk [vmem:[%s197 + $0x6c] sm:$0xf] %vm2194, %v2189
      %2223 = vst.msk [vmem:[%s197 + $0x70] sm:$0xf] %vm2194, %v2190
      %2224 = vst.msk [vmem:[%s197 + $0x74] sm:$0xf] %vm2194, %v2191
      %2225 = vst.msk [vmem:[%s197 + $0x78] sm:$0xf] %vm2194, %v2192
      %2226 = vst.msk [vmem:[%s197 + $0x7c] sm:$0xf] %vm2194, %v2193
      %p2227 = scmp.lt.s32.totalorder %s15, 1
      %s2228 = scalar_select %p2227, %s15, 1
      %s2229 = smul.addr %s2228, 32
      %s2230 = smul.addr %s2229, 4
      %s2231 = scalar_lea.vmem %s4, %s2230
      // Predicated region
      $region37: #{_lambda_.4} parent=35 // pred_check
        %p2232 = pneg %p122
      $region38: #{_lambda_.4} parent=35 // pred_check_branch
        %2234 = sbr.rel (%p2232) target = $region40
      $region39: #{_lambda_.4} parent=35 // pred_region
        _
      $region40: #{_lambda_.4} parent=35 // pred_fallthru
        _
    $region36: #{_lambda_.4} parent=5 // pred_fallthru
      _
    %p2235 = scmp.le.s32.totalorder 2, %s10
    // Predicated region
    $region41: #{_lambda_.4} parent=5 // pred_check
      %p2236 = pneg %p2235
    $region42: #{_lambda_.4} parent=5 // pred_check_branch
      %2238 = sbr.rel (%p2236) target = $region44
    $region43: #{_lambda_.4} parent=5 // pred_region
      %s2239 = ssub.s32 %s10, 2
      // Predicated region
      $region45: #{_lambda_.4} parent=43 // pred_check
        %p2240 = pneg %p128
      $region46: #{_lambda_.4} parent=43 // pred_check_branch
        %2242 = sbr.rel (%p2240) target = $region48
      $region47: #{_lambda_.4} parent=43 // pred_region
        %p2243 = scmp.lt.s32.totalorder %s16, 1
        %s2244 = scalar_select %p2243, %s16, 1
        %s2245 = smul.addr %s2244, 32
        %s2246 = smul.addr %s2245, 4
        %s2247 = scalar_lea.vmem %s4, %s2246
      $region48: #{_lambda_.4} parent=43 // pred_fallthru
        _
    $region44: #{_lambda_.4} parent=5 // pred_fallthru
      _
  $region6: #{_lambda_.4} parent=0 // loop_footer
    %s14 = sadd.s32 1, %s10
  $region7: #{_lambda_.4} parent=0 // loop_footer_branch
    %9 = sbr.rel target = $region3
  $region8: #{_lambda_.4} parent=0 // loop_exit
    _

// kernel: _lambda_.6
$region0: #{_lambda_.6}
  #allocation0 [shape = 'u32[]', space=smem, size = 0x4, offset = 0x4, fixed_abs, tag = 'smem constant byte address 0x4 - core index']
  #allocation1 [shape = 'u32[72,128]{1,0:T(1,128)}', space=vmem, size = 0x9000, scoped, tag = 'internal scratch']
  %s0 = inlined_call_operand.vmem [shape: bf16[2,4,16,16], index: 0, kind: input, shape index: {}]
  %s1 = inlined_call_operand.vmem [shape: f32[16,1], index: 1, kind: input, shape index: {}]
  %s2 = inlined_call_operand.vmem [shape: f32[16,1], index: 2, kind: input, shape index: {}]
  %s3 = inlined_call_operand.vmem [shape: f32[9,1,16], index: 3, kind: input, shape index: {}]
  %s4 = inlined_call_operand.vmem [shape: f32[1,16], index: 4, kind: input, shape index: {}]
  %s5 = inlined_call_operand.vmem [shape: bf16[16,32], index: 5, kind: input, shape index: {}]
  %s6 = inlined_call_operand.vmem [shape: f32[1,32], index: 6, kind: input, shape index: {}]
  %s7 = inlined_call_operand.vmem [shape: bf16[16,16], index: 7, kind: input, shape index: {}]
  %s8 = inlined_call_operand.hbm [shape: f32[1,16], index: 8, kind: input, shape index: {}]
  %s9 = inlined_call_operand.vmem [shape: f32[9,1,16], index: 9, kind: input, shape index: {}]
  %s10 = inlined_call_operand.hbm [shape: f32[1,16], index: 10, kind: input, shape index: {}]
  %s11 = inlined_call_operand.vmem [shape: bf16[16,32], index: 11, kind: input, shape index: {}]
  %s12 = inlined_call_operand.hbm [shape: f32[1,32], index: 12, kind: input, shape index: {}]
  %s13 = inlined_call_operand.vmem [shape: bf16[32,16], index: 13, kind: input, shape index: {}]
  %s14 = inlined_call_operand.hbm [shape: f32[1,16], index: 14, kind: input, shape index: {}]
  %s15 = inlined_call_operand.vmem [shape: f32[9,1,16], index: 15, kind: input, shape index: {}]
  %s16 = inlined_call_operand.hbm [shape: f32[1,16], index: 16, kind: input, shape index: {}]
  %s17 = inlined_call_operand.vmem [shape: bf16[16,32], index: 17, kind: input, shape index: {}]
  %s18 = inlined_call_operand.hbm [shape: f32[1,32], index: 18, kind: input, shape index: {}]
  %s19 = inlined_call_operand.hbm [shape: f32[1,32], index: 19, kind: input, shape index: {}]
  %s20 = inlined_call_operand.vmem [shape: bf16[2,16,32], index: 20, kind: output, shape index: {}]
  %s21 = sld [smem:[#allocation0]]
  $region141: #{_lambda_.6} parent=0
    _
  %s23 = ssub.s32 1, %s21
  %s24 = scalar_select 0, %s23, %s21
  $region1: #{_lambda_.6} parent=0
    #allocation2 [shape = 'u8[512]{0}', space=vmem, size = 0x400, scoped, tag = 'input window, operand 8, single buffered']
    #allocation3 [shape = 's32[2]{0}', space=sflag, size = 0x8, scoped, tag = 'scoped memory for _lambda_.6']
    #allocation4 [shape = 'u8[512]{0}', space=vmem, size = 0x400, scoped, tag = 'input window, operand 10, single buffered']
    #allocation5 [shape = 's32[1]{0}', space=sflag, size = 0x4, scoped, tag = 'scoped memory for _lambda_.6']
    #allocation6 [shape = 'u8[512]{0}', space=vmem, size = 0x400, scoped, tag = 'input window, operand 12, single buffered']
    #allocation7 [shape = 'u8[512]{0}', space=vmem, size = 0x400, scoped, tag = 'input window, operand 14, single buffered']
    #allocation8 [shape = 's32[1]{0}', space=sflag, size = 0x4, scoped, tag = 'scoped memory for _lambda_.6']
    #allocation9 [shape = 'u8[512]{0}', space=vmem, size = 0x400, scoped, tag = 'input window, operand 16, single buffered']
    #allocation10 [shape = 'u8[512]{0}', space=vmem, size = 0x400, scoped, tag = 'input window, operand 18, single buffered']
    #allocation11 [shape = 's32[1]{0}', space=sflag, size = 0x4, scoped, tag = 'scoped memory for _lambda_.6']
    #allocation12 [shape = 'u8[512]{0}', space=vmem, size = 0x400, scoped, tag = 'input window, operand 19, single buffered']
    %25 = vsyncpa [#allocation3], 0
    %26 = vsyncpa [#allocation5], 0
    %27 = vsyncpa [#allocation8], 0
    %28 = vsyncpa [#allocation11], 0
    loop: start=0, step=1, limit=4
    $region2: #{_lambda_.6} parent=1 // loop_pre_header
      _
    $region3: #{_lambda_.6} parent=1 // loop_header
      %s30 = sphi 0, %s34
      %p31 = scmp.ge.s32.totalorder %s30, 4
      %s40 = sphi 0, %s42
      %s43 = sphi 0, %s40
      %s44 = sphi 0, %s43
      %s60 = sphi 0, %s44
      %s64 = sphi 0, %s64
      %s66 = sphi 0, %s64
      %s67 = sphi 0, %s66
      %s81 = sphi 0, %s67
      %s85 = sphi 0, %s85
      %s87 = sphi 0, %s85
      %s88 = sphi 0, %s87
      %s102 = sphi 0, %s88
      %s106 = sphi 0, %s106
      %s108 = sphi 0, %s106
      %s109 = sphi 0, %s108
      %s123 = sphi 0, %s109
      %s127 = sphi 0, %s127
      %s129 = sphi 0, %s127
      %s130 = sphi 0, %s129
      %s144 = sphi 0, %s130
      %s148 = sphi 0, %s148
      %s150 = sphi 0, %s148
      %s151 = sphi 0, %s150
      %s165 = sphi 0, %s151
      %s169 = sphi 0, %s169
      %s171 = sphi 0, %s169
      %s172 = sphi 0, %s171
      %s186 = sphi 0, %s172
      %s190 = sphi 0, %s190
      %s192 = sphi 0, %s190
      %s193 = sphi 0, %s192
      %s207 = sphi 0, %s193
      %s211 = sphi 0, %s211
      %s213 = sphi 0, %s211
      %s214 = sphi 0, %s213
      %s228 = sphi 0, %s214
      %s232 = sphi 0, %s232
      %s234 = sphi 0, %s232
      %s235 = sphi 0, %s234
      %s249 = sphi 0, %s235
      %s253 = sphi 0, %s253
      %s255 = sphi 0, %s253
      %s256 = sphi 0, %s255
      %s270 = sphi 0, %s256
      %s274 = sphi 0, %s274
      %s276 = sphi 0, %s274
      %s277 = sphi 0, %s276
      %s291 = sphi 0, %s277
      %s295 = sphi 0, %s295
      %s297 = sphi 0, %s295
      %s298 = sphi 0, %s297
      %s312 = sphi 0, %s298
      %s316 = sphi 0, %s316
      %s318 = sphi 0, %s316
      %s319 = sphi 0, %s318
      %s333 = sphi 0, %s319
      %s337 = sphi 0, %s337
      %s339 = sphi 0, %s337
      %s340 = sphi 0, %s339
      %s354 = sphi 0, %s340
      %s358 = sphi 0, %s358
      %s360 = sphi 0, %s358
      %s361 = sphi 0, %s360
      %s375 = sphi 0, %s361
      %s379 = sphi 0, %s379
      %s381 = sphi 0, %s379
      %s382 = sphi 0, %s381
      %s396 = sphi 0, %s382
      %s400 = sphi 0, %s400
      %s402 = sphi 0, %s400
      %s403 = sphi 0, %s402
      %s417 = sphi 0, %s403
      %s421 = sphi 0, %s421
      %s423 = sphi 0, %s421
      %s424 = sphi 0, %s423
      %s438 = sphi 0, %s424
      %s442 = sphi 0, %s442
      %s444 = sphi 0, %s442
      %s445 = sphi 0, %s444
      %s459 = sphi 0, %s445
      %s465 = sphi 0, %s467
      %s468 = sphi 0, %s465
      %s469 = sphi 0, %s468
      %s485 = sphi 0, %s469
    $region4: #{_lambda_.6} parent=1 // loop_header_branch
      %33 = sbr.rel (%p31) target = $region8
    $region5: #{_lambda_.6} parent=1 // loop_body
      %s35 = ssub.s32 %s30, 1
      %s36 = ssub.s32 %s30, 2
      %s37 = sadd.s32 %s30, 1
      %s38 = ssub.s32 %s30, %s37
      %p39 = scmp.eq.s32.totalorder %s38, 0
      %s41 = sadd.s32 %s40, 1
      %s42 = scalar_select %p39, %s40, %s41
      %p45 = pneg %p39
      %p46 = scmp.eq.s32.totalorder %s30, 1
      %p47 = por %p45, %p46
      %p48 = scmp.ne.s32.totalorder %s40, %s43
      %p49 = scmp.eq.s32.totalorder %s30, 0
      %p50 = por %p48, %p49
      %p51 = scmp.ne.s32.totalorder %s40, %s43
      %p52 = scmp.eq.s32.totalorder %s35, 1
      %p53 = por %p51, %p52
      %p54 = scmp.ne.s32.totalorder %s43, %s44
      %p55 = scmp.eq.s32.totalorder %s35, 0
      %p56 = por %p54, %p55
      %p57 = scmp.ne.s32.totalorder %s43, %s44
      %p58 = scmp.eq.s32.totalorder %s36, 1
      %p59 = por %p57, %p58
      %p61 = scmp.ne.s32.totalorder %s44, %s60
      %p62 = scmp.eq.s32.totalorder %s36, 0
      %p63 = por %p61, %p62
      %s65 = sadd.s32 %s64, 1
      %p68 = scmp.eq.s32.totalorder %s30, 1
      %p69 = scmp.ne.s32.totalorder %s64, %s66
      %p70 = scmp.eq.s32.totalorder %s30, 0
      %p71 = por %p69, %p70
      %p72 = scmp.ne.s32.totalorder %s64, %s66
      %p73 = scmp.eq.s32.totalorder %s35, 1
      %p74 = por %p72, %p73
      %p75 = scmp.ne.s32.totalorder %s66, %s67
      %p76 = scmp.eq.s32.totalorder %s35, 0
      %p77 = por %p75, %p76
      %p78 = scmp.ne.s32.totalorder %s66, %s67
      %p79 = scmp.eq.s32.totalorder %s36, 1
      %p80 = por %p78, %p79
      %p82 = scmp.ne.s32.totalorder %s67, %s81
      %p83 = scmp.eq.s32.totalorder %s36, 0
      %p84 = por %p82, %p83
      %s86 = sadd.s32 %s85, 1
      %p89 = scmp.eq.s32.totalorder %s30, 1
      %p90 = scmp.ne.s32.totalorder %s85, %s87
      %p91 = scmp.eq.s32.totalorder %s30, 0
      %p92 = por %p90, %p91
      %p93 = scmp.ne.s32.totalorder %s85, %s87
      %p94 = scmp.eq.s32.totalorder %s35, 1
      %p95 = por %p93, %p94
      %p96 = scmp.ne.s32.totalorder %s87, %s88
      %p97 = scmp.eq.s32.totalorder %s35, 0
      %p98 = por %p96, %p97
      %p99 = scmp.ne.s32.totalorder %s87, %s88
      %p100 = scmp.eq.s32.totalorder %s36, 1
      %p101 = por %p99, %p100
      %p103 = scmp.ne.s32.totalorder %s88, %s102
      %p104 = scmp.eq.s32.totalorder %s36, 0
      %p105 = por %p103, %p104
      %s107 = sadd.s32 %s106, 1
      %p110 = scmp.eq.s32.totalorder %s30, 1
      %p111 = scmp.ne.s32.totalorder %s106, %s108
      %p112 = scmp.eq.s32.totalorder %s30, 0
      %p113 = por %p111, %p112
      %p114 = scmp.ne.s32.totalorder %s106, %s108
      %p115 = scmp.eq.s32.totalorder %s35, 1
      %p116 = por %p114, %p115
      %p117 = scmp.ne.s32.totalorder %s108, %s109
      %p118 = scmp.eq.s32.totalorder %s35, 0
      %p119 = por %p117, %p118
      %p120 = scmp.ne.s32.totalorder %s108, %s109
      %p121 = scmp.eq.s32.totalorder %s36, 1
      %p122 = por %p120, %p121
      %p124 = scmp.ne.s32.totalorder %s109, %s123
      %p125 = scmp.eq.s32.totalorder %s36, 0
      %p126 = por %p124, %p125
      %s128 = sadd.s32 %s127, 1
      %p131 = scmp.eq.s32.totalorder %s30, 1
      %p132 = scmp.ne.s32.totalorder %s127, %s129
      %p133 = scmp.eq.s32.totalorder %s30, 0
      %p134 = por %p132, %p133
      %p135 = scmp.ne.s32.totalorder %s127, %s129
      %p136 = scmp.eq.s32.totalorder %s35, 1
      %p137 = por %p135, %p136
      %p138 = scmp.ne.s32.totalorder %s129, %s130
      %p139 = scmp.eq.s32.totalorder %s35, 0
      %p140 = por %p138, %p139
      %p141 = scmp.ne.s32.totalorder %s129, %s130
      %p142 = scmp.eq.s32.totalorder %s36, 1
      %p143 = por %p141, %p142
      %p145 = scmp.ne.s32.totalorder %s130, %s144
      %p146 = scmp.eq.s32.totalorder %s36, 0
      %p147 = por %p145, %p146
      %s149 = sadd.s32 %s148, 1
      %p152 = scmp.eq.s32.totalorder %s30, 1
      %p153 = scmp.ne.s32.totalorder %s148, %s150
      %p154 = scmp.eq.s32.totalorder %s30, 0
      %p155 = por %p153, %p154
      %p156 = scmp.ne.s32.totalorder %s148, %s150
      %p157 = scmp.eq.s32.totalorder %s35, 1
      %p158 = por %p156, %p157
      %p159 = scmp.ne.s32.totalorder %s150, %s151
      %p160 = scmp.eq.s32.totalorder %s35, 0
      %p161 = por %p159, %p160
      %p162 = scmp.ne.s32.totalorder %s150, %s151
      %p163 = scmp.eq.s32.totalorder %s36, 1
      %p164 = por %p162, %p163
      %p166 = scmp.ne.s32.totalorder %s151, %s165
      %p167 = scmp.eq.s32.totalorder %s36, 0
      %p168 = por %p166, %p167
      %s170 = sadd.s32 %s169, 1
      %p173 = scmp.eq.s32.totalorder %s30, 1
      %p174 = scmp.ne.s32.totalorder %s169, %s171
      %p175 = scmp.eq.s32.totalorder %s30, 0
      %p176 = por %p174, %p175
      %p177 = scmp.ne.s32.totalorder %s169, %s171
      %p178 = scmp.eq.s32.totalorder %s35, 1
      %p179 = por %p177, %p178
      %p180 = scmp.ne.s32.totalorder %s171, %s172
      %p181 = scmp.eq.s32.totalorder %s35, 0
      %p182 = por %p180, %p181
      %p183 = scmp.ne.s32.totalorder %s171, %s172
      %p184 = scmp.eq.s32.totalorder %s36, 1
      %p185 = por %p183, %p184
      %p187 = scmp.ne.s32.totalorder %s172, %s186
      %p188 = scmp.eq.s32.totalorder %s36, 0
      %p189 = por %p187, %p188
      %s191 = sadd.s32 %s190, 1
      %p194 = scmp.eq.s32.totalorder %s30, 1
      %p195 = scmp.ne.s32.totalorder %s190, %s192
      %p196 = scmp.eq.s32.totalorder %s30, 0
      %p197 = por %p195, %p196
      %p198 = scmp.ne.s32.totalorder %s190, %s192
      %p199 = scmp.eq.s32.totalorder %s35, 1
      %p200 = por %p198, %p199
      %p201 = scmp.ne.s32.totalorder %s192, %s193
      %p202 = scmp.eq.s32.totalorder %s35, 0
      %p203 = por %p201, %p202
      %p204 = scmp.ne.s32.totalorder %s192, %s193
      %p205 = scmp.eq.s32.totalorder %s36, 1
      %p206 = por %p204, %p205
      %p208 = scmp.ne.s32.totalorder %s193, %s207
      %p209 = scmp.eq.s32.totalorder %s36, 0
      %p210 = por %p208, %p209
      %s212 = sadd.s32 %s211, 1
      %p215 = scmp.eq.s32.totalorder %s30, 1
      %p216 = scmp.ne.s32.totalorder %s211, %s213
      %p217 = scmp.eq.s32.totalorder %s30, 0
      %p218 = por %p216, %p217
      %p219 = scmp.ne.s32.totalorder %s211, %s213
      %p220 = scmp.eq.s32.totalorder %s35, 1
      %p221 = por %p219, %p220
      %p222 = scmp.ne.s32.totalorder %s213, %s214
      %p223 = scmp.eq.s32.totalorder %s35, 0
      %p224 = por %p222, %p223
      %p225 = scmp.ne.s32.totalorder %s213, %s214
      %p226 = scmp.eq.s32.totalorder %s36, 1
      %p227 = por %p225, %p226
      %p229 = scmp.ne.s32.totalorder %s214, %s228
      %p230 = scmp.eq.s32.totalorder %s36, 0
      %p231 = por %p229, %p230
      %s233 = sadd.s32 %s232, 1
      %p236 = scmp.eq.s32.totalorder %s30, 1
      %p237 = scmp.ne.s32.totalorder %s232, %s234
      %p238 = scmp.eq.s32.totalorder %s30, 0
      %p239 = por %p237, %p238
      %p240 = scmp.ne.s32.totalorder %s232, %s234
      %p241 = scmp.eq.s32.totalorder %s35, 1
      %p242 = por %p240, %p241
      %p243 = scmp.ne.s32.totalorder %s234, %s235
      %p244 = scmp.eq.s32.totalorder %s35, 0
      %p245 = por %p243, %p244
      %p246 = scmp.ne.s32.totalorder %s234, %s235
      %p247 = scmp.eq.s32.totalorder %s36, 1
      %p248 = por %p246, %p247
      %p250 = scmp.ne.s32.totalorder %s235, %s249
      %p251 = scmp.eq.s32.totalorder %s36, 0
      %p252 = por %p250, %p251
      %s254 = sadd.s32 %s253, 1
      %p257 = scmp.eq.s32.totalorder %s30, 1
      %p258 = scmp.ne.s32.totalorder %s253, %s255
      %p259 = scmp.eq.s32.totalorder %s30, 0
      %p260 = por %p258, %p259
      %p261 = scmp.ne.s32.totalorder %s253, %s255
      %p262 = scmp.eq.s32.totalorder %s35, 1
      %p263 = por %p261, %p262
      %p264 = scmp.ne.s32.totalorder %s255, %s256
      %p265 = scmp.eq.s32.totalorder %s35, 0
      %p266 = por %p264, %p265
      %p267 = scmp.ne.s32.totalorder %s255, %s256
      %p268 = scmp.eq.s32.totalorder %s36, 1
      %p269 = por %p267, %p268
      %p271 = scmp.ne.s32.totalorder %s256, %s270
      %p272 = scmp.eq.s32.totalorder %s36, 0
      %p273 = por %p271, %p272
      %s275 = sadd.s32 %s274, 1
      %p278 = scmp.eq.s32.totalorder %s30, 1
      %p279 = scmp.ne.s32.totalorder %s274, %s276
      %p280 = scmp.eq.s32.totalorder %s30, 0
      %p281 = por %p279, %p280
      %p282 = scmp.ne.s32.totalorder %s274, %s276
      %p283 = scmp.eq.s32.totalorder %s35, 1
      %p284 = por %p282, %p283
      %p285 = scmp.ne.s32.totalorder %s276, %s277
      %p286 = scmp.eq.s32.totalorder %s35, 0
      %p287 = por %p285, %p286
      %p288 = scmp.ne.s32.totalorder %s276, %s277
      %p289 = scmp.eq.s32.totalorder %s36, 1
      %p290 = por %p288, %p289
      %p292 = scmp.ne.s32.totalorder %s277, %s291
      %p293 = scmp.eq.s32.totalorder %s36, 0
      %p294 = por %p292, %p293
      %s296 = sadd.s32 %s295, 1
      %p299 = scmp.eq.s32.totalorder %s30, 1
      %p300 = scmp.ne.s32.totalorder %s295, %s297
      %p301 = scmp.eq.s32.totalorder %s30, 0
      %p302 = por %p300, %p301
      %p303 = scmp.ne.s32.totalorder %s295, %s297
      %p304 = scmp.eq.s32.totalorder %s35, 1
      %p305 = por %p303, %p304
      %p306 = scmp.ne.s32.totalorder %s297, %s298
      %p307 = scmp.eq.s32.totalorder %s35, 0
      %p308 = por %p306, %p307
      %p309 = scmp.ne.s32.totalorder %s297, %s298
      %p310 = scmp.eq.s32.totalorder %s36, 1
      %p311 = por %p309, %p310
      %p313 = scmp.ne.s32.totalorder %s298, %s312
      %p314 = scmp.eq.s32.totalorder %s36, 0
      %p315 = por %p313, %p314
      %s317 = sadd.s32 %s316, 1
      %p320 = scmp.eq.s32.totalorder %s30, 1
      %p321 = scmp.ne.s32.totalorder %s316, %s318
      %p322 = scmp.eq.s32.totalorder %s30, 0
      %p323 = por %p321, %p322
      %p324 = scmp.ne.s32.totalorder %s316, %s318
      %p325 = scmp.eq.s32.totalorder %s35, 1
      %p326 = por %p324, %p325
      %p327 = scmp.ne.s32.totalorder %s318, %s319
      %p328 = scmp.eq.s32.totalorder %s35, 0
      %p329 = por %p327, %p328
      %p330 = scmp.ne.s32.totalorder %s318, %s319
      %p331 = scmp.eq.s32.totalorder %s36, 1
      %p332 = por %p330, %p331
      %p334 = scmp.ne.s32.totalorder %s319, %s333
      %p335 = scmp.eq.s32.totalorder %s36, 0
      %p336 = por %p334, %p335
      %s338 = sadd.s32 %s337, 1
      %p341 = scmp.eq.s32.totalorder %s30, 1
      %p342 = scmp.ne.s32.totalorder %s337, %s339
      %p343 = scmp.eq.s32.totalorder %s30, 0
      %p344 = por %p342, %p343
      %p345 = scmp.ne.s32.totalorder %s337, %s339
      %p346 = scmp.eq.s32.totalorder %s35, 1
      %p347 = por %p345, %p346
      %p348 = scmp.ne.s32.totalorder %s339, %s340
      %p349 = scmp.eq.s32.totalorder %s35, 0
      %p350 = por %p348, %p349
      %p351 = scmp.ne.s32.totalorder %s339, %s340
      %p352 = scmp.eq.s32.totalorder %s36, 1
      %p353 = por %p351, %p352
      %p355 = scmp.ne.s32.totalorder %s340, %s354
      %p356 = scmp.eq.s32.totalorder %s36, 0
      %p357 = por %p355, %p356
      %s359 = sadd.s32 %s358, 1
      %p362 = scmp.eq.s32.totalorder %s30, 1
      %p363 = scmp.ne.s32.totalorder %s358, %s360
      %p364 = scmp.eq.s32.totalorder %s30, 0
      %p365 = por %p363, %p364
      %p366 = scmp.ne.s32.totalorder %s358, %s360
      %p367 = scmp.eq.s32.totalorder %s35, 1
      %p368 = por %p366, %p367
      %p369 = scmp.ne.s32.totalorder %s360, %s361
      %p370 = scmp.eq.s32.totalorder %s35, 0
      %p371 = por %p369, %p370
      %p372 = scmp.ne.s32.totalorder %s360, %s361
      %p373 = scmp.eq.s32.totalorder %s36, 1
      %p374 = por %p372, %p373
      %p376 = scmp.ne.s32.totalorder %s361, %s375
      %p377 = scmp.eq.s32.totalorder %s36, 0
      %p378 = por %p376, %p377
      %s380 = sadd.s32 %s379, 1
      %p383 = scmp.eq.s32.totalorder %s30, 1
      %p384 = scmp.ne.s32.totalorder %s379, %s381
      %p385 = scmp.eq.s32.totalorder %s30, 0
      %p386 = por %p384, %p385
      %p387 = scmp.ne.s32.totalorder %s379, %s381
      %p388 = scmp.eq.s32.totalorder %s35, 1
      %p389 = por %p387, %p388
      %p390 = scmp.ne.s32.totalorder %s381, %s382
      %p391 = scmp.eq.s32.totalorder %s35, 0
      %p392 = por %p390, %p391
      %p393 = scmp.ne.s32.totalorder %s381, %s382
      %p394 = scmp.eq.s32.totalorder %s36, 1
      %p395 = por %p393, %p394
      %p397 = scmp.ne.s32.totalorder %s382, %s396
      %p398 = scmp.eq.s32.totalorder %s36, 0
      %p399 = por %p397, %p398
      %s401 = sadd.s32 %s400, 1
      %p404 = scmp.eq.s32.totalorder %s30, 1
      %p405 = scmp.ne.s32.totalorder %s400, %s402
      %p406 = scmp.eq.s32.totalorder %s30, 0
      %p407 = por %p405, %p406
      %p408 = scmp.ne.s32.totalorder %s400, %s402
      %p409 = scmp.eq.s32.totalorder %s35, 1
      %p410 = por %p408, %p409
      %p411 = scmp.ne.s32.totalorder %s402, %s403
      %p412 = scmp.eq.s32.totalorder %s35, 0
      %p413 = por %p411, %p412
      %p414 = scmp.ne.s32.totalorder %s402, %s403
      %p415 = scmp.eq.s32.totalorder %s36, 1
      %p416 = por %p414, %p415
      %p418 = scmp.ne.s32.totalorder %s403, %s417
      %p419 = scmp.eq.s32.totalorder %s36, 0
      %p420 = por %p418, %p419
      %s422 = sadd.s32 %s421, 1
      %p425 = scmp.eq.s32.totalorder %s30, 1
      %p426 = scmp.ne.s32.totalorder %s421, %s423
      %p427 = scmp.eq.s32.totalorder %s30, 0
      %p428 = por %p426, %p427
      %p429 = scmp.ne.s32.totalorder %s421, %s423
      %p430 = scmp.eq.s32.totalorder %s35, 1
      %p431 = por %p429, %p430
      %p432 = scmp.ne.s32.totalorder %s423, %s424
      %p433 = scmp.eq.s32.totalorder %s35, 0
      %p434 = por %p432, %p433
      %p435 = scmp.ne.s32.totalorder %s423, %s424
      %p436 = scmp.eq.s32.totalorder %s36, 1
      %p437 = por %p435, %p436
      %p439 = scmp.ne.s32.totalorder %s424, %s438
      %p440 = scmp.eq.s32.totalorder %s36, 0
      %p441 = por %p439, %p440
      %s443 = sadd.s32 %s442, 1
      %p446 = scmp.eq.s32.totalorder %s30, 1
      %p447 = scmp.ne.s32.totalorder %s442, %s444
      %p448 = scmp.eq.s32.totalorder %s30, 0
      %p449 = por %p447, %p448
      %p450 = scmp.ne.s32.totalorder %s442, %s444
      %p451 = scmp.eq.s32.totalorder %s35, 1
      %p452 = por %p450, %p451
      %p453 = scmp.ne.s32.totalorder %s444, %s445
      %p454 = scmp.eq.s32.totalorder %s35, 0
      %p455 = por %p453, %p454
      %p456 = scmp.ne.s32.totalorder %s444, %s445
      %p457 = scmp.eq.s32.totalorder %s36, 1
      %p458 = por %p456, %p457
      %p460 = scmp.ne.s32.totalorder %s445, %s459
      %p461 = scmp.eq.s32.totalorder %s36, 0
      %p462 = por %p460, %p461
      %s463 = ssub.s32 %s30, %s37
      %p464 = scmp.eq.s32.totalorder %s463, 0
      %s466 = sadd.s32 %s465, 1
      %s467 = scalar_select %p464, %s465, %s466
      %p470 = pneg %p464
      %p471 = scmp.eq.s32.totalorder %s30, 1
      %p472 = por %p470, %p471
      %p473 = scmp.ne.s32.totalorder %s465, %s468
      %p474 = scmp.eq.s32.totalorder %s30, 0
      %p475 = por %p473, %p474
      %p476 = scmp.ne.s32.totalorder %s465, %s468
      %p477 = scmp.eq.s32.totalorder %s35, 1
      %p478 = por %p476, %p477
      %p479 = scmp.ne.s32.totalorder %s468, %s469
      %p480 = scmp.eq.s32.totalorder %s35, 0
      %p481 = por %p479, %p480
      %p482 = scmp.ne.s32.totalorder %s468, %s469
      %p483 = scmp.eq.s32.totalorder %s36, 1
      %p484 = por %p482, %p483
      %p486 = scmp.ne.s32.totalorder %s469, %s485
      %p487 = scmp.eq.s32.totalorder %s36, 0
      %p488 = por %p486, %p487
      %p489 = scmp.le.s32.totalorder 1, %s30
      %p490 = scmp.lt.s32.totalorder %s30, 3
      %p491 = pnand %p489, %p490
      %p492 = pneg %p491
      // Predicated region
      $region9: #{_lambda_.6} parent=5 // pred_check
        _
      $region10: #{_lambda_.6} parent=5 // pred_check_branch
        %494 = sbr.rel (%p491) target = $region12
      $region11: #{_lambda_.6} parent=5 // pred_region
        %s495 = ssub.s32 %s30, 1
        // Predicated region
        $region13: #{_lambda_.6} parent=11 // pred_check
          %p496 = pneg %p77
        $region14: #{_lambda_.6} parent=11 // pred_check_branch
          %498 = sbr.rel (%p496) target = $region16
        $region15: #{_lambda_.6} parent=11 // pred_region
          _
        $region16: #{_lambda_.6} parent=11 // pred_fallthru
          _
        // Predicated region
        $region17: #{_lambda_.6} parent=11 // pred_check
          %p499 = pneg %p98
        $region18: #{_lambda_.6} parent=11 // pred_check_branch
          %501 = sbr.rel (%p499) target = $region20
        $region19: #{_lambda_.6} parent=11 // pred_region
          _
        $region20: #{_lambda_.6} parent=11 // pred_fallthru
          _
        // Predicated region
        $region21: #{_lambda_.6} parent=11 // pred_check
          %p502 = pneg %p119
        $region22: #{_lambda_.6} parent=11 // pred_check_branch
          %504 = sbr.rel (%p502) target = $region24
        $region23: #{_lambda_.6} parent=11 // pred_region
          _
        $region24: #{_lambda_.6} parent=11 // pred_fallthru
          _
        // Predicated region
        $region25: #{_lambda_.6} parent=11 // pred_check
          %p505 = pneg %p140
        $region26: #{_lambda_.6} parent=11 // pred_check_branch
          %507 = sbr.rel (%p505) target = $region28
        $region27: #{_lambda_.6} parent=11 // pred_region
          _
        $region28: #{_lambda_.6} parent=11 // pred_fallthru
          _
        // Predicated region
        $region29: #{_lambda_.6} parent=11 // pred_check
          %p508 = pneg %p161
        $region30: #{_lambda_.6} parent=11 // pred_check_branch
          %510 = sbr.rel (%p508) target = $region32
        $region31: #{_lambda_.6} parent=11 // pred_region
          _
        $region32: #{_lambda_.6} parent=11 // pred_fallthru
          _
        // Predicated region
        $region33: #{_lambda_.6} parent=11 // pred_check
          %p511 = pneg %p182
        $region34: #{_lambda_.6} parent=11 // pred_check_branch
          %513 = sbr.rel (%p511) target = $region36
        $region35: #{_lambda_.6} parent=11 // pred_region
          _
        $region36: #{_lambda_.6} parent=11 // pred_fallthru
          _
        // Predicated region
        $region37: #{_lambda_.6} parent=11 // pred_check
          %p514 = pneg %p203
        $region38: #{_lambda_.6} parent=11 // pred_check_branch
          %516 = sbr.rel (%p514) target = $region40
        $region39: #{_lambda_.6} parent=11 // pred_region
          _
        $region40: #{_lambda_.6} parent=11 // pred_fallthru
          _
        // Predicated region
        $region41: #{_lambda_.6} parent=11 // pred_check
          %p517 = pneg %p224
        $region42: #{_lambda_.6} parent=11 // pred_check_branch
          %519 = sbr.rel (%p517) target = $region44
        $region43: #{_lambda_.6} parent=11 // pred_region
          %521 = vsyncadd [#allocation3], 0
          %s523 = sshll.u32 %s8, 4
          %s524 = int_to_ptr.hbm [resolvable:$true] %s523
          %s525 = sshll.u32 [#allocation2], 4
          %s526 = int_to_ptr.vmem [resolvable:$true] %s525
          %528 = dma.hbm_to_vmem [thread:$0]  %s524, 16, %s526, [#allocation3]
        $region44: #{_lambda_.6} parent=11 // pred_fallthru
          _
        // Predicated region
        $region45: #{_lambda_.6} parent=11 // pred_check
          %p529 = pneg %p245
        $region46: #{_lambda_.6} parent=11 // pred_check_branch
          %531 = sbr.rel (%p529) target = $region48
        $region47: #{_lambda_.6} parent=11 // pred_region
          _
        $region48: #{_lambda_.6} parent=11 // pred_fallthru
          _
        // Predicated region
        $region49: #{_lambda_.6} parent=11 // pred_check
          %p532 = pneg %p266
        $region50: #{_lambda_.6} parent=11 // pred_check_branch
          %534 = sbr.rel (%p532) target = $region52
        $region51: #{_lambda_.6} parent=11 // pred_region
          %536 = vsyncadd [#allocation5], 0
          %s538 = sshll.u32 %s10, 4
          %s539 = int_to_ptr.hbm [resolvable:$true] %s538
          %s540 = sshll.u32 [#allocation4], 4
          %s541 = int_to_ptr.vmem [resolvable:$true] %s540
          %543 = dma.hbm_to_vmem [thread:$0]  %s539, 16, %s541, [#allocation5]
        $region52: #{_lambda_.6} parent=11 // pred_fallthru
          _
        // Predicated region
        $region53: #{_lambda_.6} parent=11 // pred_check
          %p544 = pneg %p287
        $region54: #{_lambda_.6} parent=11 // pred_check_branch
          %546 = sbr.rel (%p544) target = $region56
        $region55: #{_lambda_.6} parent=11 // pred_region
          _
        $region56: #{_lambda_.6} parent=11 // pred_fallthru
          _
        // Predicated region
        $region57: #{_lambda_.6} parent=11 // pred_check
          %p547 = pneg %p308
        $region58: #{_lambda_.6} parent=11 // pred_check_branch
          %549 = sbr.rel (%p547) target = $region60
        $region59: #{_lambda_.6} parent=11 // pred_region
          %551 = vsyncadd [#allocation5], 0
          %s553 = sshll.u32 %s12, 4
          %s554 = int_to_ptr.hbm [resolvable:$true] %s553
          %s555 = sshll.u32 [#allocation6], 4
          %s556 = int_to_ptr.vmem [resolvable:$true] %s555
          %558 = dma.hbm_to_vmem [thread:$0]  %s554, 16, %s556, [#allocation5]
        $region60: #{_lambda_.6} parent=11 // pred_fallthru
          _
        // Predicated region
        $region61: #{_lambda_.6} parent=11 // pred_check
          %p559 = pneg %p329
        $region62: #{_lambda_.6} parent=11 // pred_check_branch
          %561 = sbr.rel (%p559) target = $region64
        $region63: #{_lambda_.6} parent=11 // pred_region
          _
        $region64: #{_lambda_.6} parent=11 // pred_fallthru
          _
        // Predicated region
        $region65: #{_lambda_.6} parent=11 // pred_check
          %p562 = pneg %p350
        $region66: #{_lambda_.6} parent=11 // pred_check_branch
          %564 = sbr.rel (%p562) target = $region68
        $region67: #{_lambda_.6} parent=11 // pred_region
          %566 = vsyncadd [#allocation8], 0
          %s568 = sshll.u32 %s14, 4
          %s569 = int_to_ptr.hbm [resolvable:$true] %s568
          %s570 = sshll.u32 [#allocation7], 4
          %s571 = int_to_ptr.vmem [resolvable:$true] %s570
          %573 = dma.hbm_to_vmem [thread:$0]  %s569, 16, %s571, [#allocation8]
        $region68: #{_lambda_.6} parent=11 // pred_fallthru
          _
        // Predicated region
        $region69: #{_lambda_.6} parent=11 // pred_check
          %p574 = pneg %p371
        $region70: #{_lambda_.6} parent=11 // pred_check_branch
          %576 = sbr.rel (%p574) target = $region72
        $region71: #{_lambda_.6} parent=11 // pred_region
          _
        $region72: #{_lambda_.6} parent=11 // pred_fallthru
          _
        // Predicated region
        $region73: #{_lambda_.6} parent=11 // pred_check
          %p577 = pneg %p392
        $region74: #{_lambda_.6} parent=11 // pred_check_branch
          %579 = sbr.rel (%p577) target = $region76
        $region75: #{_lambda_.6} parent=11 // pred_region
          %581 = vsyncadd [#allocation8], 0
          %s583 = sshll.u32 %s16, 4
          %s584 = int_to_ptr.hbm [resolvable:$true] %s583
          %s585 = sshll.u32 [#allocation9], 4
          %s586 = int_to_ptr.vmem [resolvable:$true] %s585
          %588 = dma.hbm_to_vmem [thread:$0]  %s584, 16, %s586, [#allocation8]
        $region76: #{_lambda_.6} parent=11 // pred_fallthru
          _
        // Predicated region
        $region77: #{_lambda_.6} parent=11 // pred_check
          %p589 = pneg %p413
        $region78: #{_lambda_.6} parent=11 // pred_check_branch
          %591 = sbr.rel (%p589) target = $region80
        $region79: #{_lambda_.6} parent=11 // pred_region
          _
        $region80: #{_lambda_.6} parent=11 // pred_fallthru
          _
        // Predicated region
        $region81: #{_lambda_.6} parent=11 // pred_check
          %p592 = pneg %p434
        $region82: #{_lambda_.6} parent=11 // pred_check_branch
          %594 = sbr.rel (%p592) target = $region84
        $region83: #{_lambda_.6} parent=11 // pred_region
          %596 = vsyncadd [#allocation11], 0
          %s598 = sshll.u32 %s18, 4
          %s599 = int_to_ptr.hbm [resolvable:$true] %s598
          %s600 = sshll.u32 [#allocation10], 4
          %s601 = int_to_ptr.vmem [resolvable:$true] %s600
          %603 = dma.hbm_to_vmem [thread:$0]  %s599, 16, %s601, [#allocation11]
        $region84: #{_lambda_.6} parent=11 // pred_fallthru
          _
        // Predicated region
        $region85: #{_lambda_.6} parent=11 // pred_check
          %p604 = pneg %p455
        $region86: #{_lambda_.6} parent=11 // pred_check_branch
          %606 = sbr.rel (%p604) target = $region88
        $region87: #{_lambda_.6} parent=11 // pred_region
          %608 = vsyncadd [#allocation11], 0
          %s610 = sshll.u32 %s19, 4
          %s611 = int_to_ptr.hbm [resolvable:$true] %s610
          %s612 = sshll.u32 [#allocation12], 4
          %s613 = int_to_ptr.vmem [resolvable:$true] %s612
          %615 = dma.hbm_to_vmem [thread:$0]  %s611, 16, %s613, [#allocation11]
        $region88: #{_lambda_.6} parent=11 // pred_fallthru
          _
      $region12: #{_lambda_.6} parent=5 // pred_fallthru
        _
      %p616 = scmp.lt.s32.totalorder %s30, 2
      // Predicated region
      $region89: #{_lambda_.6} parent=5 // pred_check
        %p617 = pneg %p616
      $region90: #{_lambda_.6} parent=5 // pred_check_branch
        %619 = sbr.rel (%p617) target = $region92
      $region91: #{_lambda_.6} parent=5 // pred_region
        // Predicated region
        $region93: #{_lambda_.6} parent=91 // pred_check
          %p620 = pneg %p50
        $region94: #{_lambda_.6} parent=91 // pred_check_branch
          %622 = sbr.rel (%p620) target = $region96
        $region95: #{_lambda_.6} parent=91 // pred_region
          %p623 = scmp.lt.s32.totalorder %s30, 1
          %s624 = scalar_select %p623, %s30, 1
          %s625 = smul.addr %s624, 8
          %s626 = smul.addr %s625, 4
          %s627 = scalar_lea.vmem %s0, %s626
        $region96: #{_lambda_.6} parent=91 // pred_fallthru
          _
      $region92: #{_lambda_.6} parent=5 // pred_fallthru
        _
      %p628 = scmp.le.s32.totalorder 1, %s30
      %p629 = scmp.lt.s32.totalorder %s30, 3
      %p630 = pnand %p628, %p629
      %p631 = pneg %p630
      // Predicated region
      $region97: #{_lambda_.6} parent=5 // pred_check
        _
      $region98: #{_lambda_.6} parent=5 // pred_check_branch
        %633 = sbr.rel (%p630) target = $region100
      $region99: #{_lambda_.6} parent=5 // pred_region
        %s634 = ssub.s32 %s30, 1
        // Predicated region
        $region101: #{_lambda_.6} parent=99 // pred_check
          %p635 = pneg %p224
        $region102: #{_lambda_.6} parent=99 // pred_check_branch
          %637 = sbr.rel (%p635) target = $region104
        $region103: #{_lambda_.6} parent=99 // pred_region
          %639 = dma.done [#allocation3], 16
        $region104: #{_lambda_.6} parent=99 // pred_fallthru
          _
        // Predicated region
        $region105: #{_lambda_.6} parent=99 // pred_check
          %p640 = pneg %p266
        $region106: #{_lambda_.6} parent=99 // pred_check_branch
          %642 = sbr.rel (%p640) target = $region108
        $region107: #{_lambda_.6} parent=99 // pred_region
          %644 = dma.done [#allocation5], 16
        $region108: #{_lambda_.6} parent=99 // pred_fallthru
          _
        // Predicated region
        $region109: #{_lambda_.6} parent=99 // pred_check
          %p645 = pneg %p308
        $region110: #{_lambda_.6} parent=99 // pred_check_branch
          %647 = sbr.rel (%p645) target = $region112
        $region111: #{_lambda_.6} parent=99 // pred_region
          %649 = dma.done [#allocation5], 16
        $region112: #{_lambda_.6} parent=99 // pred_fallthru
          _
        // Predicated region
        $region113: #{_lambda_.6} parent=99 // pred_check
          %p650 = pneg %p350
        $region114: #{_lambda_.6} parent=99 // pred_check_branch
          %652 = sbr.rel (%p650) target = $region116
        $region115: #{_lambda_.6} parent=99 // pred_region
          %654 = dma.done [#allocation8], 16
        $region116: #{_lambda_.6} parent=99 // pred_fallthru
          _
        // Predicated region
        $region117: #{_lambda_.6} parent=99 // pred_check
          %p655 = pneg %p392
        $region118: #{_lambda_.6} parent=99 // pred_check_branch
          %657 = sbr.rel (%p655) target = $region120
        $region119: #{_lambda_.6} parent=99 // pred_region
          %659 = dma.done [#allocation8], 16
        $region120: #{_lambda_.6} parent=99 // pred_fallthru
          _
        // Predicated region
        $region121: #{_lambda_.6} parent=99 // pred_check
          %p660 = pneg %p434
        $region122: #{_lambda_.6} parent=99 // pred_check_branch
          %662 = sbr.rel (%p660) target = $region124
        $region123: #{_lambda_.6} parent=99 // pred_region
          %664 = dma.done [#allocation11], 16
        $region124: #{_lambda_.6} parent=99 // pred_fallthru
          _
        // Predicated region
        $region125: #{_lambda_.6} parent=99 // pred_check
          %p665 = pneg %p455
        $region126: #{_lambda_.6} parent=99 // pred_check_branch
          %667 = sbr.rel (%p665) target = $region128
        $region127: #{_lambda_.6} parent=99 // pred_region
          %669 = dma.done [#allocation11], 16
        $region128: #{_lambda_.6} parent=99 // pred_fallthru
          _
        %p670 = scmp.lt.s32.totalorder %s35, 1
        %s671 = scalar_select %p670, %s35, 1
        %s672 = smul.addr %s671, 8
        %s673 = smul.addr %s672, 4
        %s674 = scalar_lea.vmem %s0, %s673
        %p675 = pneg %p56
        %p676 = pneg %p53
        %p677 = pneg %p77
        %p678 = pneg %p74
        %p679 = pneg %p98
        %p680 = pneg %p95
        %p681 = pneg %p119
        %p682 = pneg %p116
        %p683 = pneg %p140
        %p684 = pneg %p137
        %p685 = pneg %p161
        %p686 = pneg %p158
        %p687 = pneg %p182
        %p688 = pneg %p179
        %p689 = pneg %p203
        %p690 = pneg %p200
        %p691 = pneg %p224
        %p692 = pneg %p221
        %p693 = pneg %p245
        %p694 = pneg %p242
        %p695 = pneg %p266
        %p696 = pneg %p263
        %p697 = pneg %p287
        %p698 = pneg %p284
        %p699 = pneg %p308
        %p700 = pneg %p305
        %p701 = pneg %p329
        %p702 = pneg %p326
        %p703 = pneg %p350
        %p704 = pneg %p347
        %p705 = pneg %p371
        %p706 = pneg %p368
        %p707 = pneg %p392
        %p708 = pneg %p389
        %p709 = pneg %p413
        %p710 = pneg %p410
        %p711 = pneg %p434
        %p712 = pneg %p431
        %p713 = pneg %p455
        %p714 = pneg %p452
        %p715 = pneg %p481
        %p716 = pneg %p478
        %p717 = scmp.lt.s32.totalorder %s35, 1
        %s718 = scalar_select %p717, %s35, 1
        %s719 = smul.addr %s718, 2
        %s720 = smul.addr %s719, 4
        %s721 = scalar_lea.vmem %s20, %s720
        %p722 = scmp.lt.s32.totalorder %s35, 1
        %s723 = scalar_select %p722, %s35, 1
        %s724 = smul.addr %s723, 8
        %s725 = smul.addr %s724, 4
        %s726 = scalar_lea.vmem %s0, %s725
        %p727 = scmp.lt.s32.totalorder %s35, 1
        %s728 = scalar_select %p727, %s35, 1
        %s729 = smul.addr %s728, 2
        %s730 = smul.addr %s729, 4
        %s731 = scalar_lea.vmem %s20, %s730
        %v733 = vld [vmem:[%s1] sm:$0xff]
        %v734 = vld [vmem:[%s1 + $0x8] sm:$0xff]
        %v735 = vld [vmem:[%s2] sm:$0xff]
        %v736 = vld [vmem:[%s2 + $0x8] sm:$0xff]
        %v737 = vld [vmem:[%s726] sm:$0xf]
        %v738 = vld [vmem:[%s726 + $0x4] sm:$0xf]
        %v739 = vunpack.c.l.bf16 %v737
        %v740 = vunpack.c.l.bf16 %v738
        %s741 = scalar_lea.vmem %s726, 8
        %v742 = vld [vmem:[%s741] sm:$0xf]
        %v743 = vld [vmem:[%s741 + $0x4] sm:$0xf]
        %v744 = vunpack.c.l.bf16 %v742
        %v745 = vunpack.c.l.bf16 %v743
        %s746 = scalar_lea.vmem %s726, 16
        %v747 = vld [vmem:[%s746] sm:$0xf]
        %v748 = vld [vmem:[%s746 + $0x4] sm:$0xf]
        %v749 = vunpack.c.l.bf16 %v747
        %v750 = vunpack.c.l.bf16 %v748
        %s751 = scalar_lea.vmem %s726, 24
        %v752 = vld [vmem:[%s751] sm:$0xf]
        %v753 = vld [vmem:[%s751 + $0x4] sm:$0xf]
        %v754 = vunpack.c.l.bf16 %v752
        %v755 = vunpack.c.l.bf16 %v753
        %v756 = vld [vmem:[%s3] sm:$0x1]
        %v757 = vld [vmem:[%s3 + $0x1] sm:$0x1]
        %v758 = vld [vmem:[%s3 + $0x2] sm:$0x1]
        %v759 = vld [vmem:[%s3 + $0x3] sm:$0x1]
        %v760 = vld [vmem:[%s3 + $0x4] sm:$0x1]
        %v761 = vld [vmem:[%s3 + $0x5] sm:$0x1]
        %v762 = vld [vmem:[%s3 + $0x6] sm:$0x1]
        %v763 = vld [vmem:[%s3 + $0x7] sm:$0x1]
        %v764 = vld [vmem:[%s3 + $0x8] sm:$0x1]
        %v765 = vld [vmem:[%s4] sm:$0x1]
        %v767 = vperm.slane %v765, 0
        %v769 = vadd.f32 %v767, 0.0
        %vm772 = vcmask 1043456
        %v773 = vrot.slane %v754, 4
        %v774 = vrot.slane %v755, 4
        %v775 = vsel %vm772, %v773, %v774
        %v778 = vsel %vm772, 0.0, %v773
        %vm780 = vcmask 1040384
        %v781 = vrot.slane %v778, 7
        %v782 = vrot.slane %v775, 7
        %v783 = vsel %vm780, %v781, %v782
        %v786 = vsel %vm780, 0.0, %v781
        %788 = vset.pattern.permute.xlu0 0
        %789 = vperm.xlu0 %788, %v733
        %v790 = vpop.permute.xlu0 %789
        %793 = vset.pattern.permute.xlu0 0
        %794 = vperm.xlu0 %793, %v734
        %v795 = vpop.permute.xlu0 %794
        %v797 = vmul.f32 %v786, %v790
        %v798 = vmul.f32 %v783, %v795
        %v800 = vperm.slane %v756, 0
        %v802 = vmul.f32 %v797, %v800
        %v803 = vmul.f32 %v798, %v800
        %v804 = vadd.f32 %v769, %v802
        %v805 = vadd.f32 %v769, %v803
        %v808 = vrot.slane %v749, 4
        %v809 = vrot.slane %v750, 4
        %v810 = vsel %vm772, %v808, %v809
        %v813 = vsel %vm772, 0.0, %v808
        %v815 = vperm.slane %v757, 0
        %v817 = vmul.f32 %v813, %v815
        %v818 = vmul.f32 %v810, %v815
        %v819 = vadd.f32 %v804, %v817
        %v820 = vadd.f32 %v805, %v818
        %v822 = vperm.slane %v758, 0
        %v824 = vmul.f32 %v778, %v822
        %v825 = vmul.f32 %v775, %v822
        %v826 = vadd.f32 %v819, %v824
        %v827 = vadd.f32 %v820, %v825
        %v830 = vrot.slane %v744, 7
        %v831 = vrot.slane %v745, 7
        %v832 = vsel %vm780, %v830, %v831
        %v835 = vsel %vm780, 0.0, %v830
        %v836 = vmul.f32 %v835, %v790
        %v837 = vmul.f32 %v832, %v795
        %v839 = vperm.slane %v759, 0
        %v841 = vmul.f32 %v836, %v839
        %v842 = vmul.f32 %v837, %v839
        %v843 = vadd.f32 %v826, %v841
        %v844 = vadd.f32 %v827, %v842
        %v846 = vperm.slane %v760, 0
        %v848 = vmul.f32 %v739, %v846
        %v849 = vmul.f32 %v740, %v846
        %v850 = vadd.f32 %v843, %v848
        %v851 = vadd.f32 %v844, %v849
        %v853 = vperm.slane %v761, 0
        %v855 = vmul.f32 %v744, %v853
        %v856 = vmul.f32 %v745, %v853
        %v857 = vadd.f32 %v850, %v855
        %v858 = vadd.f32 %v851, %v856
        %v859 = vrot.slane %v754, 7
        %v860 = vrot.slane %v755, 7
        %v861 = vsel %vm780, %v859, %v860
        %v864 = vsel %vm780, 0.0, %v859
        %v865 = vmul.f32 %v864, %v790
        %v866 = vmul.f32 %v861, %v795
        %v868 = vperm.slane %v762, 0
        %v870 = vmul.f32 %v865, %v868
        %v871 = vmul.f32 %v866, %v868
        %v872 = vadd.f32 %v857, %v870
        %v873 = vadd.f32 %v858, %v871
        %v875 = vperm.slane %v763, 0
        %v877 = vmul.f32 %v749, %v875
        %v878 = vmul.f32 %v750, %v875
        %v879 = vadd.f32 %v872, %v877
        %v880 = vadd.f32 %v873, %v878
        %v882 = vperm.slane %v764, 0
        %v884 = vmul.f32 %v754, %v882
        %v885 = vmul.f32 %v755, %v882
        %v886 = vadd.f32 %v879, %v884
        %v887 = vadd.f32 %v880, %v885
        %v888 = vpack.c.bf16 %v887, %v886
        %v889 = vld [vmem:[%s5] sm:$0xf]
        %v890 = vld [vmem:[%s5 + $0x4] sm:$0xf]
        %v891 = vld [vmem:[%s6] sm:$0x1]
        %v893 = vperm.slane %v891, 0
        %v897 = vunpack.c.l.b16 %v889
        %v898 = vunpack.c.l.b16 %v890
        %v899 = vpack.c.b16 %v898, %v897
        %vm901 = vcmask 130048
        %v903 = vsel %vm901, %v888, 0
        %905 = vmatpush.bf16.msra.mxu0 0
        %906 = vmatpush.bf16.msra.mxu0 0
        %907 = vmatpush.bf16.msra.mxu0 0
        %908 = vmatpush.bf16.msra.mxu0 0
        %909 = vmatpush.bf16.msra.mxu0 0
        %910 = vmatpush.bf16.msra.mxu0 0
        %911 = vmatpush.bf16.msra.mxu0 0
        %912 = vmatpush.bf16.msra.mxu0 %v899
        %913 = vmatmul.bf16.gmra.mxu0 %v903
        %v914 = vpop.f32.mrf.mxu0
        %v915 = vadd.f32 %v893, %v914
        %v916 = vpop.f32.mrf.mxu0
        %v917 = vadd.f32 %v893, %v916
        %918 = vdwg.mxu0
        %v919 = vmax.f32 %v915, 0.0
        %v920 = vmax.f32 %v917, 0.0
        %v921 = vld [vmem:[%s7] sm:$0xf]
        %v922 = vld [vmem:[%s7 + $0x4] sm:$0xf]
        %v923 = vld [vmem:[#allocation2] sm:$0x1]
        %v925 = vperm.slane %v923, 0
        %v929 = vunpack.c.l.b16 %v737
        %v930 = vunpack.c.l.b16 %v738
        %v931 = vpack.c.b16 %v930, %v929
        %v934 = vunpack.c.l.b16 %v921
        %v935 = vunpack.c.l.b16 %v922
        %v936 = vpack.c.b16 %v935, %v934
        %v939 = vsel %vm901, %v931, 0
        %941 = vmatpush.bf16.msra.mxu0 0
        %942 = vmatpush.bf16.msra.mxu0 0
        %943 = vmatpush.bf16.msra.mxu0 0
        %944 = vmatpush.bf16.msra.mxu0 0
        %945 = vmatpush.bf16.msra.mxu0 0
        %946 = vmatpush.bf16.msra.mxu0 0
        %947 = vmatpush.bf16.msra.mxu0 0
        %948 = vmatpush.bf16.msra.mxu0 %v936
        %949 = vmatmul.bf16.gmra.mxu0 %v939
        %v950 = vpop.f32.mrf.mxu0
        %v951 = vadd.f32 %v925, %v950
        %v952 = vpop.f32.mrf.mxu0
        %v953 = vadd.f32 %v925, %v952
        %954 = vdwg.mxu0
        %v955 = vmax.f32 %v951, 0.0
        %v956 = vmax.f32 %v953, 0.0
        %v959 = vunpack.c.l.b16 %v742
        %v960 = vunpack.c.l.b16 %v743
        %v961 = vpack.c.b16 %v960, %v959
        %v963 = vsel %vm901, %v961, 0
        %965 = vmatpush.bf16.msra.mxu0 0
        %966 = vmatpush.bf16.msra.mxu0 0
        %967 = vmatpush.bf16.msra.mxu0 0
        %968 = vmatpush.bf16.msra.mxu0 0
        %969 = vmatpush.bf16.msra.mxu0 0
        %970 = vmatpush.bf16.msra.mxu0 0
        %971 = vmatpush.bf16.msra.mxu0 0
        %972 = vmatpush.bf16.msra.mxu0 %v936
        %973 = vmatmul.bf16.gmra.mxu0 %v963
        %v974 = vpop.f32.mrf.mxu0
        %v975 = vadd.f32 %v925, %v974
        %v976 = vpop.f32.mrf.mxu0
        %v977 = vadd.f32 %v925, %v976
        %978 = vdwg.mxu0
        %v979 = vmax.f32 %v975, 0.0
        %v980 = vmax.f32 %v977, 0.0
        %v983 = vunpack.c.l.b16 %v747
        %v984 = vunpack.c.l.b16 %v748
        %v985 = vpack.c.b16 %v984, %v983
        %v987 = vsel %vm901, %v985, 0
        %989 = vmatpush.bf16.msra.mxu0 0
        %990 = vmatpush.bf16.msra.mxu0 0
        %991 = vmatpush.bf16.msra.mxu0 0
        %992 = vmatpush.bf16.msra.mxu0 0
        %993 = vmatpush.bf16.msra.mxu0 0
        %994 = vmatpush.bf16.msra.mxu0 0
        %995 = vmatpush.bf16.msra.mxu0 0
        %996 = vmatpush.bf16.msra.mxu0 %v936
        %997 = vmatmul.bf16.gmra.mxu0 %v987
        %v998 = vpop.f32.mrf.mxu0
        %v999 = vadd.f32 %v925, %v998
        %v1000 = vpop.f32.mrf.mxu0
        %v1001 = vadd.f32 %v925, %v1000
        %1002 = vdwg.mxu0
        %v1003 = vmax.f32 %v999, 0.0
        %v1004 = vmax.f32 %v1001, 0.0
        %v1007 = vunpack.c.l.b16 %v752
        %v1008 = vunpack.c.l.b16 %v753
        %v1009 = vpack.c.b16 %v1008, %v1007
        %v1011 = vsel %vm901, %v1009, 0
        %1013 = vmatpush.bf16.msra.mxu0 0
        %1014 = vmatpush.bf16.msra.mxu0 0
        %1015 = vmatpush.bf16.msra.mxu0 0
        %1016 = vmatpush.bf16.msra.mxu0 0
        %1017 = vmatpush.bf16.msra.mxu0 0
        %1018 = vmatpush.bf16.msra.mxu0 0
        %1019 = vmatpush.bf16.msra.mxu0 0
        %1020 = vmatpush.bf16.msra.mxu0 %v936
        %1021 = vmatmul.bf16.gmra.mxu0 %v1011
        %v1022 = vpop.f32.mrf.mxu0
        %v1023 = vadd.f32 %v925, %v1022
        %v1024 = vpop.f32.mrf.mxu0
        %v1025 = vadd.f32 %v925, %v1024
        %1026 = vdwg.mxu0
        %v1027 = vmax.f32 %v1023, 0.0
        %v1028 = vmax.f32 %v1025, 0.0
        %v1029 = vld [vmem:[%s9] sm:$0x1]
        %v1030 = vld [vmem:[%s9 + $0x1] sm:$0x1]
        %v1031 = vld [vmem:[%s9 + $0x2] sm:$0x1]
        %v1032 = vld [vmem:[%s9 + $0x3] sm:$0x1]
        %v1033 = vld [vmem:[%s9 + $0x4] sm:$0x1]
        %v1034 = vld [vmem:[%s9 + $0x5] sm:$0x1]
        %v1035 = vld [vmem:[%s9 + $0x6] sm:$0x1]
        %v1036 = vld [vmem:[%s9 + $0x7] sm:$0x1]
        %v1037 = vld [vmem:[%s9 + $0x8] sm:$0x1]
        %v1038 = vld [vmem:[#allocation4] sm:$0x1]
        %v1040 = vperm.slane %v1038, 0
        %v1042 = vadd.f32 %v1040, 0.0
        %v1045 = vrot.slane %v1027, 4
        %v1046 = vrot.slane %v1028, 4
        %v1047 = vsel %vm772, %v1045, %v1046
        %v1050 = vsel %vm772, 0.0, %v1045
        %v1052 = vrot.slane %v1050, 7
        %v1053 = vrot.slane %v1047, 7
        %v1054 = vsel %vm780, %v1052, %v1053
        %v1057 = vsel %vm780, 0.0, %v1052
        %v1058 = vmul.f32 %v1057, %v790
        %v1059 = vmul.f32 %v1054, %v795
        %v1061 = vperm.slane %v1029, 0
        %v1063 = vmul.f32 %v1058, %v1061
        %v1064 = vmul.f32 %v1059, %v1061
        %v1065 = vadd.f32 %v1042, %v1063
        %v1066 = vadd.f32 %v1042, %v1064
        %v1069 = vrot.slane %v1003, 4
        %v1070 = vrot.slane %v1004, 4
        %v1071 = vsel %vm772, %v1069, %v1070
        %v1074 = vsel %vm772, 0.0, %v1069
        %v1076 = vperm.slane %v1030, 0
        %v1078 = vmul.f32 %v1074, %v1076
        %v1079 = vmul.f32 %v1071, %v1076
        %v1080 = vadd.f32 %v1065, %v1078
        %v1081 = vadd.f32 %v1066, %v1079
        %v1083 = vperm.slane %v1031, 0
        %v1085 = vmul.f32 %v1050, %v1083
        %v1086 = vmul.f32 %v1047, %v1083
        %v1087 = vadd.f32 %v1080, %v1085
        %v1088 = vadd.f32 %v1081, %v1086
        %v1091 = vrot.slane %v979, 7
        %v1092 = vrot.slane %v980, 7
        %v1093 = vsel %vm780, %v1091, %v1092
        %v1096 = vsel %vm780, 0.0, %v1091
        %v1097 = vmul.f32 %v1096, %v790
        %v1098 = vmul.f32 %v1093, %v795
        %v1100 = vperm.slane %v1032, 0
        %v1102 = vmul.f32 %v1097, %v1100
        %v1103 = vmul.f32 %v1098, %v1100
        %v1104 = vadd.f32 %v1087, %v1102
        %v1105 = vadd.f32 %v1088, %v1103
        %v1107 = vperm.slane %v1033, 0
        %v1109 = vmul.f32 %v955, %v1107
        %v1110 = vmul.f32 %v956, %v1107
        %v1111 = vadd.f32 %v1104, %v1109
        %v1112 = vadd.f32 %v1105, %v1110
        %v1114 = vperm.slane %v1034, 0
        %v1116 = vmul.f32 %v979, %v1114
        %v1117 = vmul.f32 %v980, %v1114
        %v1118 = vadd.f32 %v1111, %v1116
        %v1119 = vadd.f32 %v1112, %v1117
        %v1120 = vrot.slane %v1027, 7
        %v1121 = vrot.slane %v1028, 7
        %v1122 = vsel %vm780, %v1120, %v1121
        %v1125 = vsel %vm780, 0.0, %v1120
        %v1126 = vmul.f32 %v1125, %v790
        %v1127 = vmul.f32 %v1122, %v795
        %v1129 = vperm.slane %v1035, 0
        %v1131 = vmul.f32 %v1126, %v1129
        %v1132 = vmul.f32 %v1127, %v1129
        %v1133 = vadd.f32 %v1118, %v1131
        %v1134 = vadd.f32 %v1119, %v1132
        %v1136 = vperm.slane %v1036, 0
        %v1138 = vmul.f32 %v1003, %v1136
        %v1139 = vmul.f32 %v1004, %v1136
        %v1140 = vadd.f32 %v1133, %v1138
        %v1141 = vadd.f32 %v1134, %v1139
        %v1143 = vperm.slane %v1037, 0
        %v1145 = vmul.f32 %v1027, %v1143
        %v1146 = vmul.f32 %v1028, %v1143
        %v1147 = vadd.f32 %v1140, %v1145
        %v1148 = vadd.f32 %v1141, %v1146
        %v1149 = vpack.c.bf16 %v1148, %v1147
        %v1150 = vld [vmem:[%s11] sm:$0xf]
        %v1151 = vld [vmem:[%s11 + $0x4] sm:$0xf]
        %v1152 = vld [vmem:[#allocation6] sm:$0x1]
        %v1154 = vperm.slane %v1152, 0
        %v1158 = vunpack.c.l.b16 %v1150
        %v1159 = vunpack.c.l.b16 %v1151
        %v1160 = vpack.c.b16 %v1159, %v1158
        %v1163 = vsel %vm901, %v1149, 0
        %1165 = vmatpush.bf16.msra.mxu0 0
        %1166 = vmatpush.bf16.msra.mxu0 0
        %1167 = vmatpush.bf16.msra.mxu0 0
        %1168 = vmatpush.bf16.msra.mxu0 0
        %1169 = vmatpush.bf16.msra.mxu0 0
        %1170 = vmatpush.bf16.msra.mxu0 0
        %1171 = vmatpush.bf16.msra.mxu0 0
        %1172 = vmatpush.bf16.msra.mxu0 %v1160
        %1173 = vmatmul.bf16.gmra.mxu0 %v1163
        %v1174 = vpop.f32.mrf.mxu0
        %v1175 = vadd.f32 %v1154, %v1174
        %v1176 = vpop.f32.mrf.mxu0
        %v1177 = vadd.f32 %v1154, %v1176
        %1178 = vdwg.mxu0
        %v1179 = vmax.f32 %v1175, 0.0
        %v1180 = vmax.f32 %v1177, 0.0
        %v1181 = vadd.f32 %v919, %v1179
        %v1182 = vadd.f32 %v920, %v1180
        %v1183 = vpack.c.bf16 %v1182, %v1181
        %v1184 = vld [vmem:[%s13] sm:$0xf]
        %v1185 = vld [vmem:[%s13 + $0x4] sm:$0xf]
        %v1186 = vld [vmem:[%s13 + $0x8] sm:$0xf]
        %v1187 = vld [vmem:[%s13 + $0xc] sm:$0xf]
        %v1188 = vld [vmem:[#allocation7] sm:$0x1]
        %v1190 = vperm.slane %v1188, 0
        %v1196 = vunpack.c.l.b16 %v1184
        %v1197 = vunpack.c.l.b16 %v1185
        %v1198 = vunpack.c.l.b16 %v1186
        %v1199 = vunpack.c.l.b16 %v1187
        %v1200 = vpack.c.b16 %v1197, %v1196
        %v1201 = vpack.c.b16 %v1199, %v1198
        %vm1204 = vcmask 261120
        %v1206 = vsel %vm1204, %v1183, 0
        %1208 = vmatpush.bf16.msra.mxu0 0
        %1209 = vmatpush.bf16.msra.mxu0 0
        %1210 = vmatpush.bf16.msra.mxu0 0
        %1211 = vmatpush.bf16.msra.mxu0 0
        %1212 = vmatpush.bf16.msra.mxu0 0
        %1213 = vmatpush.bf16.msra.mxu0 0
        %1214 = vmatpush.bf16.msra.mxu0 %v1201
        %1215 = vmatpush.bf16.msra.mxu0 %v1200
        %1216 = vmatmul.bf16.gmra.mxu0 %v1206
        %v1217 = vpop.f32.mrf.mxu0
        %v1218 = vadd.f32 %v1190, %v1217
        %v1219 = vpop.f32.mrf.mxu0
        %v1220 = vadd.f32 %v1190, %v1219
        %1221 = vdwg.mxu0
        %v1222 = vmax.f32 %v1218, 0.0
        %v1223 = vmax.f32 %v1220, 0.0
        %v1224 = vld [vmem:[%s15] sm:$0x1]
        %v1225 = vld [vmem:[%s15 + $0x1] sm:$0x1]
        %v1226 = vld [vmem:[%s15 + $0x2] sm:$0x1]
        %v1227 = vld [vmem:[%s15 + $0x3] sm:$0x1]
        %v1228 = vld [vmem:[%s15 + $0x4] sm:$0x1]
        %v1229 = vld [vmem:[%s15 + $0x5] sm:$0x1]
        %v1230 = vld [vmem:[%s15 + $0x6] sm:$0x1]
        %v1231 = vld [vmem:[%s15 + $0x7] sm:$0x1]
        %v1232 = vld [vmem:[%s15 + $0x8] sm:$0x1]
        %v1233 = vld [vmem:[#allocation9] sm:$0x1]
        %v1235 = vperm.slane %v1233, 0
        %v1237 = vadd.f32 %v1235, 0.0
        %vm1240 = vcmask 1044480
        %v1241 = vrot.slane %v1222, 3
        %v1242 = vrot.slane %v1223, 3
        %v1243 = vsel %vm1240, %v1241, %v1242
        %v1246 = vsel %vm1240, 0.0, %v1241
        %v1247 = vmul.f32 %v1246, %v790
        %v1248 = vmul.f32 %v1243, %v795
        %v1250 = vperm.slane %v1224, 0
        %v1252 = vmul.f32 %v1247, %v1250
        %v1253 = vmul.f32 %v1248, %v1250
        %v1254 = vadd.f32 %v1237, %v1252
        %v1255 = vadd.f32 %v1237, %v1253
        %v1256 = vrot.slane %v1222, 4
        %v1257 = vrot.slane %v1223, 4
        %v1258 = vsel %vm772, %v1256, %v1257
        %v1261 = vsel %vm772, 0.0, %v1256
        %v1263 = vperm.slane %v1225, 0
        %v1265 = vmul.f32 %v1261, %v1263
        %v1266 = vmul.f32 %v1258, %v1263
        %v1267 = vadd.f32 %v1254, %v1265
        %v1268 = vadd.f32 %v1255, %v1266
        %vm1269 = vcmask 1042432
        %v1270 = vrot.slane %v1222, 5
        %v1271 = vrot.slane %v1223, 5
        %v1272 = vsel %vm1269, %v1270, %v1271
        %v1275 = vsel %vm1269, 0.0, %v1270
        %1277 = vset.pattern.permute.xlu0 0
        %1278 = vperm.xlu0 %1277, %v735
        %v1279 = vpop.permute.xlu0 %1278
        %1282 = vset.pattern.permute.xlu0 0
        %1283 = vperm.xlu0 %1282, %v736
        %v1284 = vpop.permute.xlu0 %1283
        %v1286 = vmul.f32 %v1275, %v1279
        %v1287 = vmul.f32 %v1272, %v1284
        %v1289 = vperm.slane %v1226, 0
        %v1291 = vmul.f32 %v1286, %v1289
        %v1292 = vmul.f32 %v1287, %v1289
        %v1293 = vadd.f32 %v1267, %v1291
        %v1294 = vadd.f32 %v1268, %v1292
        %v1295 = vrot.slane %v1222, 7
        %v1296 = vrot.slane %v1223, 7
        %v1297 = vsel %vm780, %v1295, %v1296
        %v1300 = vsel %vm780, 0.0, %v1295
        %v1301 = vmul.f32 %v1300, %v790
        %v1302 = vmul.f32 %v1297, %v795
        %v1304 = vperm.slane %v1227, 0
        %v1306 = vmul.f32 %v1301, %v1304
        %v1307 = vmul.f32 %v1302, %v1304
        %v1308 = vadd.f32 %v1293, %v1306
        %v1309 = vadd.f32 %v1294, %v1307
        %v1311 = vperm.slane %v1228, 0
        %v1313 = vmul.f32 %v1222, %v1311
        %v1314 = vmul.f32 %v1223, %v1311
        %v1315 = vadd.f32 %v1308, %v1313
        %v1316 = vadd.f32 %v1309, %v1314
        %vm1317 = vcmask 1046528
        %v1318 = vrot.slane %v1222, 1
        %v1319 = vrot.slane %v1223, 1
        %v1320 = vsel %vm1317, %v1318, %v1319
        %v1323 = vsel %vm1317, %v1319, 0.0
        %v1324 = vmul.f32 %v1320, %v1279
        %v1325 = vmul.f32 %v1323, %v1284
        %v1327 = vperm.slane %v1229, 0
        %v1329 = vmul.f32 %v1324, %v1327
        %v1330 = vmul.f32 %v1325, %v1327
        %v1331 = vadd.f32 %v1315, %v1329
        %v1332 = vadd.f32 %v1316, %v1330
        %v1334 = vsel %vm1240, %v1242, 0.0
        %v1335 = vmul.f32 %v1243, %v790
        %v1336 = vmul.f32 %v1334, %v795
        %v1338 = vperm.slane %v1230, 0
        %v1340 = vmul.f32 %v1335, %v1338
        %v1341 = vmul.f32 %v1336, %v1338
        %v1342 = vadd.f32 %v1331, %v1340
        %v1343 = vadd.f32 %v1332, %v1341
        %v1345 = vsel %vm772, %v1257, 0.0
        %v1347 = vperm.slane %v1231, 0
        %v1349 = vmul.f32 %v1258, %v1347
        %v1350 = vmul.f32 %v1345, %v1347
        %v1351 = vadd.f32 %v1342, %v1349
        %v1352 = vadd.f32 %v1343, %v1350
        %v1354 = vsel %vm1269, %v1271, 0.0
        %v1355 = vmul.f32 %v1272, %v1279
        %v1356 = vmul.f32 %v1354, %v1284
        %v1358 = vperm.slane %v1232, 0
        %v1360 = vmul.f32 %v1355, %v1358
        %v1361 = vmul.f32 %v1356, %v1358
        %v1362 = vadd.f32 %v1351, %v1360
        %v1363 = vadd.f32 %v1352, %v1361
        %v1364 = vpack.c.bf16 %v1363, %v1362
        %v1365 = vld [vmem:[%s17] sm:$0xf]
        %v1366 = vld [vmem:[%s17 + $0x4] sm:$0xf]
        %v1367 = vld [vmem:[#allocation10] sm:$0x1]
        %v1369 = vperm.slane %v1367, 0
        %v1373 = vunpack.c.l.b16 %v1365
        %v1374 = vunpack.c.l.b16 %v1366
        %v1375 = vpack.c.b16 %v1374, %v1373
        %v1378 = vsel %vm901, %v1364, 0
        %1380 = vmatpush.bf16.msra.mxu0 0
        %1381 = vmatpush.bf16.msra.mxu0 0
        %1382 = vmatpush.bf16.msra.mxu0 0
        %1383 = vmatpush.bf16.msra.mxu0 0
        %1384 = vmatpush.bf16.msra.mxu0 0
        %1385 = vmatpush.bf16.msra.mxu0 0
        %1386 = vmatpush.bf16.msra.mxu0 0
        %1387 = vmatpush.bf16.msra.mxu0 %v1375
        %1388 = vmatmul.bf16.gmra.mxu0 %v1378
        %v1389 = vpop.f32.mrf.mxu0
        %v1390 = vadd.f32 %v1369, %v1389
        %v1391 = vpop.f32.mrf.mxu0
        %v1392 = vadd.f32 %v1369, %v1391
        %1393 = vdwg.mxu0
        %v1394 = vmax.f32 %v1390, 0.0
        %v1395 = vmax.f32 %v1392, 0.0
        %v1396 = vld [vmem:[#allocation12] sm:$0x1]
        %v1398 = vperm.slane %v1396, 0
        %v1400 = vmul.f32 %v1181, %v1398
        %v1401 = vmul.f32 %v1182, %v1398
        %v1402 = vadd.f32 %v1400, %v1394
        %v1403 = vadd.f32 %v1401, %v1395
        %v1404 = vpack.c.bf16 %v1402, %v1402
        %v1405 = vpack.c.bf16 %v1403, %v1403
        %vm1406 = vcmask 257024
        %1407 = vst.msk [vmem:[%s731] sm:$0xf] %vm1406, %v1404
        %1408 = vst.msk [vmem:[%s731 + $0x4] sm:$0xf] %vm1406, %v1405
        %p1409 = scmp.lt.s32.totalorder %s35, 1
        %s1410 = scalar_select %p1409, %s35, 1
        %s1411 = smul.addr %s1410, 2
        %s1412 = smul.addr %s1411, 4
        %s1413 = scalar_lea.vmem %s20, %s1412
        // Predicated region
        $region129: #{_lambda_.6} parent=99 // pred_check
          %p1414 = pneg %p478
        $region130: #{_lambda_.6} parent=99 // pred_check_branch
          %1416 = sbr.rel (%p1414) target = $region132
        $region131: #{_lambda_.6} parent=99 // pred_region
          _
        $region132: #{_lambda_.6} parent=99 // pred_fallthru
          _
      $region100: #{_lambda_.6} parent=5 // pred_fallthru
        _
      %p1417 = scmp.le.s32.totalorder 2, %s30
      // Predicated region
      $region133: #{_lambda_.6} parent=5 // pred_check
        %p1418 = pneg %p1417
      $region134: #{_lambda_.6} parent=5 // pred_check_branch
        %1420 = sbr.rel (%p1418) target = $region136
      $region135: #{_lambda_.6} parent=5 // pred_region
        %s1421 = ssub.s32 %s30, 2
        // Predicated region
        $region137: #{_lambda_.6} parent=135 // pred_check
          %p1422 = pneg %p484
        $region138: #{_lambda_.6} parent=135 // pred_check_branch
          %1424 = sbr.rel (%p1422) target = $region140
        $region139: #{_lambda_.6} parent=135 // pred_region
          %p1425 = scmp.lt.s32.totalorder %s36, 1
          %s1426 = scalar_select %p1425, %s36, 1
          %s1427 = smul.addr %s1426, 2
          %s1428 = smul.addr %s1427, 4
          %s1429 = scalar_lea.vmem %s20, %s1428
        $region140: #{_lambda_.6} parent=135 // pred_fallthru
          _
      $region136: #{_lambda_.6} parent=5 // pred_fallthru
        _
    $region6: #{_lambda_.6} parent=1 // loop_footer
      %s34 = sadd.s32 1, %s30
    $region7: #{_lambda_.6} parent=1 // loop_footer_branch
      %29 = sbr.rel target = $region3
    $region8: #{_lambda_.6} parent=1 // loop_exit
      _
    %1430 = vsyncpa [#allocation3], 1
    %s1431 = scalar_lea.sflag [#allocation3], 1
    %1432 = vsyncpa %s1431, 1
    %1433 = vsyncpa [#allocation5], 1
    %1434 = vsyncpa [#allocation8], 1
    %1435 = vsyncpa [#allocation11], 1

// kernel: _lambda_.5
$region0: #{_lambda_.5}
  #allocation0 [shape = 'u32[]', space=smem, size = 0x4, offset = 0x4, fixed_abs, tag = 'smem constant byte address 0x4 - core index']
  #allocation1 [shape = 'u32[72,128]{1,0:T(1,128)}', space=vmem, size = 0x9000, scoped, tag = 'internal scratch']
  %s0 = inlined_call_operand.vmem [shape: bf16[2,4,64,8], index: 0, kind: input, shape index: {}]
  %s1 = inlined_call_operand.vmem [shape: f32[64,1], index: 1, kind: input, shape index: {}]
  %s2 = inlined_call_operand.vmem [shape: f32[64,1], index: 2, kind: input, shape index: {}]
  %s3 = inlined_call_operand.vmem [shape: f32[9,1,8], index: 3, kind: input, shape index: {}]
  %s4 = inlined_call_operand.hbm [shape: f32[1,8], index: 4, kind: input, shape index: {}]
  %s5 = inlined_call_operand.vmem [shape: bf16[8,16], index: 5, kind: input, shape index: {}]
  %s6 = inlined_call_operand.hbm [shape: f32[1,16], index: 6, kind: input, shape index: {}]
  %s7 = inlined_call_operand.vmem [shape: bf16[8,8], index: 7, kind: input, shape index: {}]
  %s8 = inlined_call_operand.vmem [shape: f32[1,8], index: 8, kind: input, shape index: {}]
  %s9 = inlined_call_operand.vmem [shape: f32[9,1,8], index: 9, kind: input, shape index: {}]
  %s10 = inlined_call_operand.vmem [shape: f32[1,8], index: 10, kind: input, shape index: {}]
  %s11 = inlined_call_operand.vmem [shape: bf16[8,16], index: 11, kind: input, shape index: {}]
  %s12 = inlined_call_operand.vmem [shape: f32[1,16], index: 12, kind: input, shape index: {}]
  %s13 = inlined_call_operand.vmem [shape: bf16[16,8], index: 13, kind: input, shape index: {}]
  %s14 = inlined_call_operand.vmem [shape: f32[1,8], index: 14, kind: input, shape index: {}]
  %s15 = inlined_call_operand.vmem [shape: f32[9,1,8], index: 15, kind: input, shape index: {}]
  %s16 = inlined_call_operand.vmem [shape: f32[1,8], index: 16, kind: input, shape index: {}]
  %s17 = inlined_call_operand.vmem [shape: bf16[8,16], index: 17, kind: input, shape index: {}]
  %s18 = inlined_call_operand.vmem [shape: f32[1,16], index: 18, kind: input, shape index: {}]
  %s19 = inlined_call_operand.vmem [shape: f32[1,16], index: 19, kind: input, shape index: {}]
  %s20 = inlined_call_operand.vmem [shape: bf16[2,64,16], index: 20, kind: output, shape index: {}]
  %s21 = sld [smem:[#allocation0]]
  $region121: #{_lambda_.5} parent=0
    _
  %s23 = ssub.s32 1, %s21
  %s24 = scalar_select 0, %s23, %s21
  $region1: #{_lambda_.5} parent=0
    #allocation2 [shape = 'u8[512]{0}', space=vmem, size = 0x400, scoped, tag = 'input window, operand 4, single buffered']
    #allocation3 [shape = 's32[2]{0}', space=sflag, size = 0x8, scoped, tag = 'scoped memory for _lambda_.5']
    #allocation4 [shape = 'u8[512]{0}', space=vmem, size = 0x400, scoped, tag = 'input window, operand 6, single buffered']
    #allocation5 [shape = 's32[1]{0}', space=sflag, size = 0x4, scoped, tag = 'scoped memory for _lambda_.5']
    %25 = vsyncpa [#allocation3], 0
    %26 = vsyncpa [#allocation5], 0
    loop: start=0, step=1, limit=4
    $region2: #{_lambda_.5} parent=1 // loop_pre_header
      _
    $region3: #{_lambda_.5} parent=1 // loop_header
      %s28 = sphi 0, %s32
      %p29 = scmp.ge.s32.totalorder %s28, 4
      %s38 = sphi 0, %s40
      %s41 = sphi 0, %s38
      %s42 = sphi 0, %s41
      %s58 = sphi 0, %s42
      %s62 = sphi 0, %s62
      %s64 = sphi 0, %s62
      %s65 = sphi 0, %s64
      %s79 = sphi 0, %s65
      %s83 = sphi 0, %s83
      %s85 = sphi 0, %s83
      %s86 = sphi 0, %s85
      %s100 = sphi 0, %s86
      %s104 = sphi 0, %s104
      %s106 = sphi 0, %s104
      %s107 = sphi 0, %s106
      %s121 = sphi 0, %s107
      %s125 = sphi 0, %s125
      %s127 = sphi 0, %s125
      %s128 = sphi 0, %s127
      %s142 = sphi 0, %s128
      %s146 = sphi 0, %s146
      %s148 = sphi 0, %s146
      %s149 = sphi 0, %s148
      %s163 = sphi 0, %s149
      %s167 = sphi 0, %s167
      %s169 = sphi 0, %s167
      %s170 = sphi 0, %s169
      %s184 = sphi 0, %s170
      %s188 = sphi 0, %s188
      %s190 = sphi 0, %s188
      %s191 = sphi 0, %s190
      %s205 = sphi 0, %s191
      %s209 = sphi 0, %s209
      %s211 = sphi 0, %s209
      %s212 = sphi 0, %s211
      %s226 = sphi 0, %s212
      %s230 = sphi 0, %s230
      %s232 = sphi 0, %s230
      %s233 = sphi 0, %s232
      %s247 = sphi 0, %s233
      %s251 = sphi 0, %s251
      %s253 = sphi 0, %s251
      %s254 = sphi 0, %s253
      %s268 = sphi 0, %s254
      %s272 = sphi 0, %s272
      %s274 = sphi 0, %s272
      %s275 = sphi 0, %s274
      %s289 = sphi 0, %s275
      %s293 = sphi 0, %s293
      %s295 = sphi 0, %s293
      %s296 = sphi 0, %s295
      %s310 = sphi 0, %s296
      %s314 = sphi 0, %s314
      %s316 = sphi 0, %s314
      %s317 = sphi 0, %s316
      %s331 = sphi 0, %s317
      %s335 = sphi 0, %s335
      %s337 = sphi 0, %s335
      %s338 = sphi 0, %s337
      %s352 = sphi 0, %s338
      %s356 = sphi 0, %s356
      %s358 = sphi 0, %s356
      %s359 = sphi 0, %s358
      %s373 = sphi 0, %s359
      %s377 = sphi 0, %s377
      %s379 = sphi 0, %s377
      %s380 = sphi 0, %s379
      %s394 = sphi 0, %s380
      %s398 = sphi 0, %s398
      %s400 = sphi 0, %s398
      %s401 = sphi 0, %s400
      %s415 = sphi 0, %s401
      %s419 = sphi 0, %s419
      %s421 = sphi 0, %s419
      %s422 = sphi 0, %s421
      %s436 = sphi 0, %s422
      %s440 = sphi 0, %s440
      %s442 = sphi 0, %s440
      %s443 = sphi 0, %s442
      %s457 = sphi 0, %s443
      %s463 = sphi 0, %s465
      %s466 = sphi 0, %s463
      %s467 = sphi 0, %s466
      %s483 = sphi 0, %s467
    $region4: #{_lambda_.5} parent=1 // loop_header_branch
      %31 = sbr.rel (%p29) target = $region8
    $region5: #{_lambda_.5} parent=1 // loop_body
      %s33 = ssub.s32 %s28, 1
      %s34 = ssub.s32 %s28, 2
      %s35 = sadd.s32 %s28, 1
      %s36 = ssub.s32 %s28, %s35
      %p37 = scmp.eq.s32.totalorder %s36, 0
      %s39 = sadd.s32 %s38, 1
      %s40 = scalar_select %p37, %s38, %s39
      %p43 = pneg %p37
      %p44 = scmp.eq.s32.totalorder %s28, 1
      %p45 = por %p43, %p44
      %p46 = scmp.ne.s32.totalorder %s38, %s41
      %p47 = scmp.eq.s32.totalorder %s28, 0
      %p48 = por %p46, %p47
      %p49 = scmp.ne.s32.totalorder %s38, %s41
      %p50 = scmp.eq.s32.totalorder %s33, 1
      %p51 = por %p49, %p50
      %p52 = scmp.ne.s32.totalorder %s41, %s42
      %p53 = scmp.eq.s32.totalorder %s33, 0
      %p54 = por %p52, %p53
      %p55 = scmp.ne.s32.totalorder %s41, %s42
      %p56 = scmp.eq.s32.totalorder %s34, 1
      %p57 = por %p55, %p56
      %p59 = scmp.ne.s32.totalorder %s42, %s58
      %p60 = scmp.eq.s32.totalorder %s34, 0
      %p61 = por %p59, %p60
      %s63 = sadd.s32 %s62, 1
      %p66 = scmp.eq.s32.totalorder %s28, 1
      %p67 = scmp.ne.s32.totalorder %s62, %s64
      %p68 = scmp.eq.s32.totalorder %s28, 0
      %p69 = por %p67, %p68
      %p70 = scmp.ne.s32.totalorder %s62, %s64
      %p71 = scmp.eq.s32.totalorder %s33, 1
      %p72 = por %p70, %p71
      %p73 = scmp.ne.s32.totalorder %s64, %s65
      %p74 = scmp.eq.s32.totalorder %s33, 0
      %p75 = por %p73, %p74
      %p76 = scmp.ne.s32.totalorder %s64, %s65
      %p77 = scmp.eq.s32.totalorder %s34, 1
      %p78 = por %p76, %p77
      %p80 = scmp.ne.s32.totalorder %s65, %s79
      %p81 = scmp.eq.s32.totalorder %s34, 0
      %p82 = por %p80, %p81
      %s84 = sadd.s32 %s83, 1
      %p87 = scmp.eq.s32.totalorder %s28, 1
      %p88 = scmp.ne.s32.totalorder %s83, %s85
      %p89 = scmp.eq.s32.totalorder %s28, 0
      %p90 = por %p88, %p89
      %p91 = scmp.ne.s32.totalorder %s83, %s85
      %p92 = scmp.eq.s32.totalorder %s33, 1
      %p93 = por %p91, %p92
      %p94 = scmp.ne.s32.totalorder %s85, %s86
      %p95 = scmp.eq.s32.totalorder %s33, 0
      %p96 = por %p94, %p95
      %p97 = scmp.ne.s32.totalorder %s85, %s86
      %p98 = scmp.eq.s32.totalorder %s34, 1
      %p99 = por %p97, %p98
      %p101 = scmp.ne.s32.totalorder %s86, %s100
      %p102 = scmp.eq.s32.totalorder %s34, 0
      %p103 = por %p101, %p102
      %s105 = sadd.s32 %s104, 1
      %p108 = scmp.eq.s32.totalorder %s28, 1
      %p109 = scmp.ne.s32.totalorder %s104, %s106
      %p110 = scmp.eq.s32.totalorder %s28, 0
      %p111 = por %p109, %p110
      %p112 = scmp.ne.s32.totalorder %s104, %s106
      %p113 = scmp.eq.s32.totalorder %s33, 1
      %p114 = por %p112, %p113
      %p115 = scmp.ne.s32.totalorder %s106, %s107
      %p116 = scmp.eq.s32.totalorder %s33, 0
      %p117 = por %p115, %p116
      %p118 = scmp.ne.s32.totalorder %s106, %s107
      %p119 = scmp.eq.s32.totalorder %s34, 1
      %p120 = por %p118, %p119
      %p122 = scmp.ne.s32.totalorder %s107, %s121
      %p123 = scmp.eq.s32.totalorder %s34, 0
      %p124 = por %p122, %p123
      %s126 = sadd.s32 %s125, 1
      %p129 = scmp.eq.s32.totalorder %s28, 1
      %p130 = scmp.ne.s32.totalorder %s125, %s127
      %p131 = scmp.eq.s32.totalorder %s28, 0
      %p132 = por %p130, %p131
      %p133 = scmp.ne.s32.totalorder %s125, %s127
      %p134 = scmp.eq.s32.totalorder %s33, 1
      %p135 = por %p133, %p134
      %p136 = scmp.ne.s32.totalorder %s127, %s128
      %p137 = scmp.eq.s32.totalorder %s33, 0
      %p138 = por %p136, %p137
      %p139 = scmp.ne.s32.totalorder %s127, %s128
      %p140 = scmp.eq.s32.totalorder %s34, 1
      %p141 = por %p139, %p140
      %p143 = scmp.ne.s32.totalorder %s128, %s142
      %p144 = scmp.eq.s32.totalorder %s34, 0
      %p145 = por %p143, %p144
      %s147 = sadd.s32 %s146, 1
      %p150 = scmp.eq.s32.totalorder %s28, 1
      %p151 = scmp.ne.s32.totalorder %s146, %s148
      %p152 = scmp.eq.s32.totalorder %s28, 0
      %p153 = por %p151, %p152
      %p154 = scmp.ne.s32.totalorder %s146, %s148
      %p155 = scmp.eq.s32.totalorder %s33, 1
      %p156 = por %p154, %p155
      %p157 = scmp.ne.s32.totalorder %s148, %s149
      %p158 = scmp.eq.s32.totalorder %s33, 0
      %p159 = por %p157, %p158
      %p160 = scmp.ne.s32.totalorder %s148, %s149
      %p161 = scmp.eq.s32.totalorder %s34, 1
      %p162 = por %p160, %p161
      %p164 = scmp.ne.s32.totalorder %s149, %s163
      %p165 = scmp.eq.s32.totalorder %s34, 0
      %p166 = por %p164, %p165
      %s168 = sadd.s32 %s167, 1
      %p171 = scmp.eq.s32.totalorder %s28, 1
      %p172 = scmp.ne.s32.totalorder %s167, %s169
      %p173 = scmp.eq.s32.totalorder %s28, 0
      %p174 = por %p172, %p173
      %p175 = scmp.ne.s32.totalorder %s167, %s169
      %p176 = scmp.eq.s32.totalorder %s33, 1
      %p177 = por %p175, %p176
      %p178 = scmp.ne.s32.totalorder %s169, %s170
      %p179 = scmp.eq.s32.totalorder %s33, 0
      %p180 = por %p178, %p179
      %p181 = scmp.ne.s32.totalorder %s169, %s170
      %p182 = scmp.eq.s32.totalorder %s34, 1
      %p183 = por %p181, %p182
      %p185 = scmp.ne.s32.totalorder %s170, %s184
      %p186 = scmp.eq.s32.totalorder %s34, 0
      %p187 = por %p185, %p186
      %s189 = sadd.s32 %s188, 1
      %p192 = scmp.eq.s32.totalorder %s28, 1
      %p193 = scmp.ne.s32.totalorder %s188, %s190
      %p194 = scmp.eq.s32.totalorder %s28, 0
      %p195 = por %p193, %p194
      %p196 = scmp.ne.s32.totalorder %s188, %s190
      %p197 = scmp.eq.s32.totalorder %s33, 1
      %p198 = por %p196, %p197
      %p199 = scmp.ne.s32.totalorder %s190, %s191
      %p200 = scmp.eq.s32.totalorder %s33, 0
      %p201 = por %p199, %p200
      %p202 = scmp.ne.s32.totalorder %s190, %s191
      %p203 = scmp.eq.s32.totalorder %s34, 1
      %p204 = por %p202, %p203
      %p206 = scmp.ne.s32.totalorder %s191, %s205
      %p207 = scmp.eq.s32.totalorder %s34, 0
      %p208 = por %p206, %p207
      %s210 = sadd.s32 %s209, 1
      %p213 = scmp.eq.s32.totalorder %s28, 1
      %p214 = scmp.ne.s32.totalorder %s209, %s211
      %p215 = scmp.eq.s32.totalorder %s28, 0
      %p216 = por %p214, %p215
      %p217 = scmp.ne.s32.totalorder %s209, %s211
      %p218 = scmp.eq.s32.totalorder %s33, 1
      %p219 = por %p217, %p218
      %p220 = scmp.ne.s32.totalorder %s211, %s212
      %p221 = scmp.eq.s32.totalorder %s33, 0
      %p222 = por %p220, %p221
      %p223 = scmp.ne.s32.totalorder %s211, %s212
      %p224 = scmp.eq.s32.totalorder %s34, 1
      %p225 = por %p223, %p224
      %p227 = scmp.ne.s32.totalorder %s212, %s226
      %p228 = scmp.eq.s32.totalorder %s34, 0
      %p229 = por %p227, %p228
      %s231 = sadd.s32 %s230, 1
      %p234 = scmp.eq.s32.totalorder %s28, 1
      %p235 = scmp.ne.s32.totalorder %s230, %s232
      %p236 = scmp.eq.s32.totalorder %s28, 0
      %p237 = por %p235, %p236
      %p238 = scmp.ne.s32.totalorder %s230, %s232
      %p239 = scmp.eq.s32.totalorder %s33, 1
      %p240 = por %p238, %p239
      %p241 = scmp.ne.s32.totalorder %s232, %s233
      %p242 = scmp.eq.s32.totalorder %s33, 0
      %p243 = por %p241, %p242
      %p244 = scmp.ne.s32.totalorder %s232, %s233
      %p245 = scmp.eq.s32.totalorder %s34, 1
      %p246 = por %p244, %p245
      %p248 = scmp.ne.s32.totalorder %s233, %s247
      %p249 = scmp.eq.s32.totalorder %s34, 0
      %p250 = por %p248, %p249
      %s252 = sadd.s32 %s251, 1
      %p255 = scmp.eq.s32.totalorder %s28, 1
      %p256 = scmp.ne.s32.totalorder %s251, %s253
      %p257 = scmp.eq.s32.totalorder %s28, 0
      %p258 = por %p256, %p257
      %p259 = scmp.ne.s32.totalorder %s251, %s253
      %p260 = scmp.eq.s32.totalorder %s33, 1
      %p261 = por %p259, %p260
      %p262 = scmp.ne.s32.totalorder %s253, %s254
      %p263 = scmp.eq.s32.totalorder %s33, 0
      %p264 = por %p262, %p263
      %p265 = scmp.ne.s32.totalorder %s253, %s254
      %p266 = scmp.eq.s32.totalorder %s34, 1
      %p267 = por %p265, %p266
      %p269 = scmp.ne.s32.totalorder %s254, %s268
      %p270 = scmp.eq.s32.totalorder %s34, 0
      %p271 = por %p269, %p270
      %s273 = sadd.s32 %s272, 1
      %p276 = scmp.eq.s32.totalorder %s28, 1
      %p277 = scmp.ne.s32.totalorder %s272, %s274
      %p278 = scmp.eq.s32.totalorder %s28, 0
      %p279 = por %p277, %p278
      %p280 = scmp.ne.s32.totalorder %s272, %s274
      %p281 = scmp.eq.s32.totalorder %s33, 1
      %p282 = por %p280, %p281
      %p283 = scmp.ne.s32.totalorder %s274, %s275
      %p284 = scmp.eq.s32.totalorder %s33, 0
      %p285 = por %p283, %p284
      %p286 = scmp.ne.s32.totalorder %s274, %s275
      %p287 = scmp.eq.s32.totalorder %s34, 1
      %p288 = por %p286, %p287
      %p290 = scmp.ne.s32.totalorder %s275, %s289
      %p291 = scmp.eq.s32.totalorder %s34, 0
      %p292 = por %p290, %p291
      %s294 = sadd.s32 %s293, 1
      %p297 = scmp.eq.s32.totalorder %s28, 1
      %p298 = scmp.ne.s32.totalorder %s293, %s295
      %p299 = scmp.eq.s32.totalorder %s28, 0
      %p300 = por %p298, %p299
      %p301 = scmp.ne.s32.totalorder %s293, %s295
      %p302 = scmp.eq.s32.totalorder %s33, 1
      %p303 = por %p301, %p302
      %p304 = scmp.ne.s32.totalorder %s295, %s296
      %p305 = scmp.eq.s32.totalorder %s33, 0
      %p306 = por %p304, %p305
      %p307 = scmp.ne.s32.totalorder %s295, %s296
      %p308 = scmp.eq.s32.totalorder %s34, 1
      %p309 = por %p307, %p308
      %p311 = scmp.ne.s32.totalorder %s296, %s310
      %p312 = scmp.eq.s32.totalorder %s34, 0
      %p313 = por %p311, %p312
      %s315 = sadd.s32 %s314, 1
      %p318 = scmp.eq.s32.totalorder %s28, 1
      %p319 = scmp.ne.s32.totalorder %s314, %s316
      %p320 = scmp.eq.s32.totalorder %s28, 0
      %p321 = por %p319, %p320
      %p322 = scmp.ne.s32.totalorder %s314, %s316
      %p323 = scmp.eq.s32.totalorder %s33, 1
      %p324 = por %p322, %p323
      %p325 = scmp.ne.s32.totalorder %s316, %s317
      %p326 = scmp.eq.s32.totalorder %s33, 0
      %p327 = por %p325, %p326
      %p328 = scmp.ne.s32.totalorder %s316, %s317
      %p329 = scmp.eq.s32.totalorder %s34, 1
      %p330 = por %p328, %p329
      %p332 = scmp.ne.s32.totalorder %s317, %s331
      %p333 = scmp.eq.s32.totalorder %s34, 0
      %p334 = por %p332, %p333
      %s336 = sadd.s32 %s335, 1
      %p339 = scmp.eq.s32.totalorder %s28, 1
      %p340 = scmp.ne.s32.totalorder %s335, %s337
      %p341 = scmp.eq.s32.totalorder %s28, 0
      %p342 = por %p340, %p341
      %p343 = scmp.ne.s32.totalorder %s335, %s337
      %p344 = scmp.eq.s32.totalorder %s33, 1
      %p345 = por %p343, %p344
      %p346 = scmp.ne.s32.totalorder %s337, %s338
      %p347 = scmp.eq.s32.totalorder %s33, 0
      %p348 = por %p346, %p347
      %p349 = scmp.ne.s32.totalorder %s337, %s338
      %p350 = scmp.eq.s32.totalorder %s34, 1
      %p351 = por %p349, %p350
      %p353 = scmp.ne.s32.totalorder %s338, %s352
      %p354 = scmp.eq.s32.totalorder %s34, 0
      %p355 = por %p353, %p354
      %s357 = sadd.s32 %s356, 1
      %p360 = scmp.eq.s32.totalorder %s28, 1
      %p361 = scmp.ne.s32.totalorder %s356, %s358
      %p362 = scmp.eq.s32.totalorder %s28, 0
      %p363 = por %p361, %p362
      %p364 = scmp.ne.s32.totalorder %s356, %s358
      %p365 = scmp.eq.s32.totalorder %s33, 1
      %p366 = por %p364, %p365
      %p367 = scmp.ne.s32.totalorder %s358, %s359
      %p368 = scmp.eq.s32.totalorder %s33, 0
      %p369 = por %p367, %p368
      %p370 = scmp.ne.s32.totalorder %s358, %s359
      %p371 = scmp.eq.s32.totalorder %s34, 1
      %p372 = por %p370, %p371
      %p374 = scmp.ne.s32.totalorder %s359, %s373
      %p375 = scmp.eq.s32.totalorder %s34, 0
      %p376 = por %p374, %p375
      %s378 = sadd.s32 %s377, 1
      %p381 = scmp.eq.s32.totalorder %s28, 1
      %p382 = scmp.ne.s32.totalorder %s377, %s379
      %p383 = scmp.eq.s32.totalorder %s28, 0
      %p384 = por %p382, %p383
      %p385 = scmp.ne.s32.totalorder %s377, %s379
      %p386 = scmp.eq.s32.totalorder %s33, 1
      %p387 = por %p385, %p386
      %p388 = scmp.ne.s32.totalorder %s379, %s380
      %p389 = scmp.eq.s32.totalorder %s33, 0
      %p390 = por %p388, %p389
      %p391 = scmp.ne.s32.totalorder %s379, %s380
      %p392 = scmp.eq.s32.totalorder %s34, 1
      %p393 = por %p391, %p392
      %p395 = scmp.ne.s32.totalorder %s380, %s394
      %p396 = scmp.eq.s32.totalorder %s34, 0
      %p397 = por %p395, %p396
      %s399 = sadd.s32 %s398, 1
      %p402 = scmp.eq.s32.totalorder %s28, 1
      %p403 = scmp.ne.s32.totalorder %s398, %s400
      %p404 = scmp.eq.s32.totalorder %s28, 0
      %p405 = por %p403, %p404
      %p406 = scmp.ne.s32.totalorder %s398, %s400
      %p407 = scmp.eq.s32.totalorder %s33, 1
      %p408 = por %p406, %p407
      %p409 = scmp.ne.s32.totalorder %s400, %s401
      %p410 = scmp.eq.s32.totalorder %s33, 0
      %p411 = por %p409, %p410
      %p412 = scmp.ne.s32.totalorder %s400, %s401
      %p413 = scmp.eq.s32.totalorder %s34, 1
      %p414 = por %p412, %p413
      %p416 = scmp.ne.s32.totalorder %s401, %s415
      %p417 = scmp.eq.s32.totalorder %s34, 0
      %p418 = por %p416, %p417
      %s420 = sadd.s32 %s419, 1
      %p423 = scmp.eq.s32.totalorder %s28, 1
      %p424 = scmp.ne.s32.totalorder %s419, %s421
      %p425 = scmp.eq.s32.totalorder %s28, 0
      %p426 = por %p424, %p425
      %p427 = scmp.ne.s32.totalorder %s419, %s421
      %p428 = scmp.eq.s32.totalorder %s33, 1
      %p429 = por %p427, %p428
      %p430 = scmp.ne.s32.totalorder %s421, %s422
      %p431 = scmp.eq.s32.totalorder %s33, 0
      %p432 = por %p430, %p431
      %p433 = scmp.ne.s32.totalorder %s421, %s422
      %p434 = scmp.eq.s32.totalorder %s34, 1
      %p435 = por %p433, %p434
      %p437 = scmp.ne.s32.totalorder %s422, %s436
      %p438 = scmp.eq.s32.totalorder %s34, 0
      %p439 = por %p437, %p438
      %s441 = sadd.s32 %s440, 1
      %p444 = scmp.eq.s32.totalorder %s28, 1
      %p445 = scmp.ne.s32.totalorder %s440, %s442
      %p446 = scmp.eq.s32.totalorder %s28, 0
      %p447 = por %p445, %p446
      %p448 = scmp.ne.s32.totalorder %s440, %s442
      %p449 = scmp.eq.s32.totalorder %s33, 1
      %p450 = por %p448, %p449
      %p451 = scmp.ne.s32.totalorder %s442, %s443
      %p452 = scmp.eq.s32.totalorder %s33, 0
      %p453 = por %p451, %p452
      %p454 = scmp.ne.s32.totalorder %s442, %s443
      %p455 = scmp.eq.s32.totalorder %s34, 1
      %p456 = por %p454, %p455
      %p458 = scmp.ne.s32.totalorder %s443, %s457
      %p459 = scmp.eq.s32.totalorder %s34, 0
      %p460 = por %p458, %p459
      %s461 = ssub.s32 %s28, %s35
      %p462 = scmp.eq.s32.totalorder %s461, 0
      %s464 = sadd.s32 %s463, 1
      %s465 = scalar_select %p462, %s463, %s464
      %p468 = pneg %p462
      %p469 = scmp.eq.s32.totalorder %s28, 1
      %p470 = por %p468, %p469
      %p471 = scmp.ne.s32.totalorder %s463, %s466
      %p472 = scmp.eq.s32.totalorder %s28, 0
      %p473 = por %p471, %p472
      %p474 = scmp.ne.s32.totalorder %s463, %s466
      %p475 = scmp.eq.s32.totalorder %s33, 1
      %p476 = por %p474, %p475
      %p477 = scmp.ne.s32.totalorder %s466, %s467
      %p478 = scmp.eq.s32.totalorder %s33, 0
      %p479 = por %p477, %p478
      %p480 = scmp.ne.s32.totalorder %s466, %s467
      %p481 = scmp.eq.s32.totalorder %s34, 1
      %p482 = por %p480, %p481
      %p484 = scmp.ne.s32.totalorder %s467, %s483
      %p485 = scmp.eq.s32.totalorder %s34, 0
      %p486 = por %p484, %p485
      %p487 = scmp.le.s32.totalorder 1, %s28
      %p488 = scmp.lt.s32.totalorder %s28, 3
      %p489 = pnand %p487, %p488
      %p490 = pneg %p489
      // Predicated region
      $region9: #{_lambda_.5} parent=5 // pred_check
        _
      $region10: #{_lambda_.5} parent=5 // pred_check_branch
        %492 = sbr.rel (%p489) target = $region12
      $region11: #{_lambda_.5} parent=5 // pred_region
        %s493 = ssub.s32 %s28, 1
        // Predicated region
        $region13: #{_lambda_.5} parent=11 // pred_check
          %p494 = pneg %p75
        $region14: #{_lambda_.5} parent=11 // pred_check_branch
          %496 = sbr.rel (%p494) target = $region16
        $region15: #{_lambda_.5} parent=11 // pred_region
          _
        $region16: #{_lambda_.5} parent=11 // pred_fallthru
          _
        // Predicated region
        $region17: #{_lambda_.5} parent=11 // pred_check
          %p497 = pneg %p96
        $region18: #{_lambda_.5} parent=11 // pred_check_branch
          %499 = sbr.rel (%p497) target = $region20
        $region19: #{_lambda_.5} parent=11 // pred_region
          _
        $region20: #{_lambda_.5} parent=11 // pred_fallthru
          _
        // Predicated region
        $region21: #{_lambda_.5} parent=11 // pred_check
          %p500 = pneg %p117
        $region22: #{_lambda_.5} parent=11 // pred_check_branch
          %502 = sbr.rel (%p500) target = $region24
        $region23: #{_lambda_.5} parent=11 // pred_region
          _
        $region24: #{_lambda_.5} parent=11 // pred_fallthru
          _
        // Predicated region
        $region25: #{_lambda_.5} parent=11 // pred_check
          %p503 = pneg %p138
        $region26: #{_lambda_.5} parent=11 // pred_check_branch
          %505 = sbr.rel (%p503) target = $region28
        $region27: #{_lambda_.5} parent=11 // pred_region
          %507 = vsyncadd [#allocation3], 0
          %s509 = sshll.u32 %s4, 4
          %s510 = int_to_ptr.hbm [resolvable:$true] %s509
          %s511 = sshll.u32 [#allocation2], 4
          %s512 = int_to_ptr.vmem [resolvable:$true] %s511
          %514 = dma.hbm_to_vmem [thread:$0]  %s510, 16, %s512, [#allocation3]
        $region28: #{_lambda_.5} parent=11 // pred_fallthru
          _
        // Predicated region
        $region29: #{_lambda_.5} parent=11 // pred_check
          %p515 = pneg %p159
        $region30: #{_lambda_.5} parent=11 // pred_check_branch
          %517 = sbr.rel (%p515) target = $region32
        $region31: #{_lambda_.5} parent=11 // pred_region
          _
        $region32: #{_lambda_.5} parent=11 // pred_fallthru
          _
        // Predicated region
        $region33: #{_lambda_.5} parent=11 // pred_check
          %p518 = pneg %p180
        $region34: #{_lambda_.5} parent=11 // pred_check_branch
          %520 = sbr.rel (%p518) target = $region36
        $region35: #{_lambda_.5} parent=11 // pred_region
          %522 = vsyncadd [#allocation5], 0
          %s524 = sshll.u32 %s6, 4
          %s525 = int_to_ptr.hbm [resolvable:$true] %s524
          %s526 = sshll.u32 [#allocation4], 4
          %s527 = int_to_ptr.vmem [resolvable:$true] %s526
          %529 = dma.hbm_to_vmem [thread:$0]  %s525, 16, %s527, [#allocation5]
        $region36: #{_lambda_.5} parent=11 // pred_fallthru
          _
        // Predicated region
        $region37: #{_lambda_.5} parent=11 // pred_check
          %p530 = pneg %p201
        $region38: #{_lambda_.5} parent=11 // pred_check_branch
          %532 = sbr.rel (%p530) target = $region40
        $region39: #{_lambda_.5} parent=11 // pred_region
          _
        $region40: #{_lambda_.5} parent=11 // pred_fallthru
          _
        // Predicated region
        $region41: #{_lambda_.5} parent=11 // pred_check
          %p533 = pneg %p222
        $region42: #{_lambda_.5} parent=11 // pred_check_branch
          %535 = sbr.rel (%p533) target = $region44
        $region43: #{_lambda_.5} parent=11 // pred_region
          _
        $region44: #{_lambda_.5} parent=11 // pred_fallthru
          _
        // Predicated region
        $region45: #{_lambda_.5} parent=11 // pred_check
          %p536 = pneg %p243
        $region46: #{_lambda_.5} parent=11 // pred_check_branch
          %538 = sbr.rel (%p536) target = $region48
        $region47: #{_lambda_.5} parent=11 // pred_region
          _
        $region48: #{_lambda_.5} parent=11 // pred_fallthru
          _
        // Predicated region
        $region49: #{_lambda_.5} parent=11 // pred_check
          %p539 = pneg %p264
        $region50: #{_lambda_.5} parent=11 // pred_check_branch
          %541 = sbr.rel (%p539) target = $region52
        $region51: #{_lambda_.5} parent=11 // pred_region
          _
        $region52: #{_lambda_.5} parent=11 // pred_fallthru
          _
        // Predicated region
        $region53: #{_lambda_.5} parent=11 // pred_check
          %p542 = pneg %p285
        $region54: #{_lambda_.5} parent=11 // pred_check_branch
          %544 = sbr.rel (%p542) target = $region56
        $region55: #{_lambda_.5} parent=11 // pred_region
          _
        $region56: #{_lambda_.5} parent=11 // pred_fallthru
          _
        // Predicated region
        $region57: #{_lambda_.5} parent=11 // pred_check
          %p545 = pneg %p306
        $region58: #{_lambda_.5} parent=11 // pred_check_branch
          %547 = sbr.rel (%p545) target = $region60
        $region59: #{_lambda_.5} parent=11 // pred_region
          _
        $region60: #{_lambda_.5} parent=11 // pred_fallthru
          _
        // Predicated region
        $region61: #{_lambda_.5} parent=11 // pred_check
          %p548 = pneg %p327
        $region62: #{_lambda_.5} parent=11 // pred_check_branch
          %550 = sbr.rel (%p548) target = $region64
        $region63: #{_lambda_.5} parent=11 // pred_region
          _
        $region64: #{_lambda_.5} parent=11 // pred_fallthru
          _
        // Predicated region
        $region65: #{_lambda_.5} parent=11 // pred_check
          %p551 = pneg %p348
        $region66: #{_lambda_.5} parent=11 // pred_check_branch
          %553 = sbr.rel (%p551) target = $region68
        $region67: #{_lambda_.5} parent=11 // pred_region
          _
        $region68: #{_lambda_.5} parent=11 // pred_fallthru
          _
        // Predicated region
        $region69: #{_lambda_.5} parent=11 // pred_check
          %p554 = pneg %p369
        $region70: #{_lambda_.5} parent=11 // pred_check_branch
          %556 = sbr.rel (%p554) target = $region72
        $region71: #{_lambda_.5} parent=11 // pred_region
          _
        $region72: #{_lambda_.5} parent=11 // pred_fallthru
          _
        // Predicated region
        $region73: #{_lambda_.5} parent=11 // pred_check
          %p557 = pneg %p390
        $region74: #{_lambda_.5} parent=11 // pred_check_branch
          %559 = sbr.rel (%p557) target = $region76
        $region75: #{_lambda_.5} parent=11 // pred_region
          _
        $region76: #{_lambda_.5} parent=11 // pred_fallthru
          _
        // Predicated region
        $region77: #{_lambda_.5} parent=11 // pred_check
          %p560 = pneg %p411
        $region78: #{_lambda_.5} parent=11 // pred_check_branch
          %562 = sbr.rel (%p560) target = $region80
        $region79: #{_lambda_.5} parent=11 // pred_region
          _
        $region80: #{_lambda_.5} parent=11 // pred_fallthru
          _
        // Predicated region
        $region81: #{_lambda_.5} parent=11 // pred_check
          %p563 = pneg %p432
        $region82: #{_lambda_.5} parent=11 // pred_check_branch
          %565 = sbr.rel (%p563) target = $region84
        $region83: #{_lambda_.5} parent=11 // pred_region
          _
        $region84: #{_lambda_.5} parent=11 // pred_fallthru
          _
        // Predicated region
        $region85: #{_lambda_.5} parent=11 // pred_check
          %p566 = pneg %p453
        $region86: #{_lambda_.5} parent=11 // pred_check_branch
          %568 = sbr.rel (%p566) target = $region88
        $region87: #{_lambda_.5} parent=11 // pred_region
          _
        $region88: #{_lambda_.5} parent=11 // pred_fallthru
          _
      $region12: #{_lambda_.5} parent=5 // pred_fallthru
        _
      %p569 = scmp.lt.s32.totalorder %s28, 2
      // Predicated region
      $region89: #{_lambda_.5} parent=5 // pred_check
        %p570 = pneg %p569
      $region90: #{_lambda_.5} parent=5 // pred_check_branch
        %572 = sbr.rel (%p570) target = $region92
      $region91: #{_lambda_.5} parent=5 // pred_region
        // Predicated region
        $region93: #{_lambda_.5} parent=91 // pred_check
          %p573 = pneg %p48
        $region94: #{_lambda_.5} parent=91 // pred_check_branch
          %575 = sbr.rel (%p573) target = $region96
        $region95: #{_lambda_.5} parent=91 // pred_region
          %p576 = scmp.lt.s32.totalorder %s28, 1
          %s577 = scalar_select %p576, %s28, 1
          %s578 = smul.addr %s577, 32
          %s579 = smul.addr %s578, 4
          %s580 = scalar_lea.vmem %s0, %s579
        $region96: #{_lambda_.5} parent=91 // pred_fallthru
          _
      $region92: #{_lambda_.5} parent=5 // pred_fallthru
        _
      %p581 = scmp.le.s32.totalorder 1, %s28
      %p582 = scmp.lt.s32.totalorder %s28, 3
      %p583 = pnand %p581, %p582
      %p584 = pneg %p583
      // Predicated region
      $region97: #{_lambda_.5} parent=5 // pred_check
        _
      $region98: #{_lambda_.5} parent=5 // pred_check_branch
        %586 = sbr.rel (%p583) target = $region100
      $region99: #{_lambda_.5} parent=5 // pred_region
        %s587 = ssub.s32 %s28, 1
        // Predicated region
        $region101: #{_lambda_.5} parent=99 // pred_check
          %p588 = pneg %p138
        $region102: #{_lambda_.5} parent=99 // pred_check_branch
          %590 = sbr.rel (%p588) target = $region104
        $region103: #{_lambda_.5} parent=99 // pred_region
          %592 = dma.done [#allocation3], 16
        $region104: #{_lambda_.5} parent=99 // pred_fallthru
          _
        // Predicated region
        $region105: #{_lambda_.5} parent=99 // pred_check
          %p593 = pneg %p180
        $region106: #{_lambda_.5} parent=99 // pred_check_branch
          %595 = sbr.rel (%p593) target = $region108
        $region107: #{_lambda_.5} parent=99 // pred_region
          %597 = dma.done [#allocation5], 16
        $region108: #{_lambda_.5} parent=99 // pred_fallthru
          _
        %p598 = scmp.lt.s32.totalorder %s33, 1
        %s599 = scalar_select %p598, %s33, 1
        %s600 = smul.addr %s599, 32
        %s601 = smul.addr %s600, 4
        %s602 = scalar_lea.vmem %s0, %s601
        %p603 = pneg %p54
        %p604 = pneg %p51
        %p605 = pneg %p75
        %p606 = pneg %p72
        %p607 = pneg %p96
        %p608 = pneg %p93
        %p609 = pneg %p117
        %p610 = pneg %p114
        %p611 = pneg %p138
        %p612 = pneg %p135
        %p613 = pneg %p159
        %p614 = pneg %p156
        %p615 = pneg %p180
        %p616 = pneg %p177
        %p617 = pneg %p201
        %p618 = pneg %p198
        %p619 = pneg %p222
        %p620 = pneg %p219
        %p621 = pneg %p243
        %p622 = pneg %p240
        %p623 = pneg %p264
        %p624 = pneg %p261
        %p625 = pneg %p285
        %p626 = pneg %p282
        %p627 = pneg %p306
        %p628 = pneg %p303
        %p629 = pneg %p327
        %p630 = pneg %p324
        %p631 = pneg %p348
        %p632 = pneg %p345
        %p633 = pneg %p369
        %p634 = pneg %p366
        %p635 = pneg %p390
        %p636 = pneg %p387
        %p637 = pneg %p411
        %p638 = pneg %p408
        %p639 = pneg %p432
        %p640 = pneg %p429
        %p641 = pneg %p453
        %p642 = pneg %p450
        %p643 = pneg %p479
        %p644 = pneg %p476
        %p645 = scmp.lt.s32.totalorder %s33, 1
        %s646 = scalar_select %p645, %s33, 1
        %s647 = smul.addr %s646, 8
        %s648 = smul.addr %s647, 4
        %s649 = scalar_lea.vmem %s20, %s648
        %p650 = scmp.lt.s32.totalorder %s33, 1
        %s651 = scalar_select %p650, %s33, 1
        %s652 = smul.addr %s651, 32
        %s653 = smul.addr %s652, 4
        %s654 = scalar_lea.vmem %s0, %s653
        %p655 = scmp.lt.s32.totalorder %s33, 1
        %s656 = scalar_select %p655, %s33, 1
        %s657 = smul.addr %s656, 8
        %s658 = smul.addr %s657, 4
        %s659 = scalar_lea.vmem %s20, %s658
        %v661 = vld [vmem:[%s1] sm:$0xff]
        %v662 = vld [vmem:[%s1 + $0x8] sm:$0xff]
        %v663 = vld [vmem:[%s1 + $0x10] sm:$0xff]
        %v664 = vld [vmem:[%s1 + $0x18] sm:$0xff]
        %v665 = vld [vmem:[%s1 + $0x20] sm:$0xff]
        %v666 = vld [vmem:[%s1 + $0x28] sm:$0xff]
        %v667 = vld [vmem:[%s1 + $0x30] sm:$0xff]
        %v668 = vld [vmem:[%s1 + $0x38] sm:$0xff]
        %v669 = vld [vmem:[%s2] sm:$0xff]
        %v670 = vld [vmem:[%s2 + $0x8] sm:$0xff]
        %v671 = vld [vmem:[%s2 + $0x10] sm:$0xff]
        %v672 = vld [vmem:[%s2 + $0x18] sm:$0xff]
        %v673 = vld [vmem:[%s2 + $0x20] sm:$0xff]
        %v674 = vld [vmem:[%s2 + $0x28] sm:$0xff]
        %v675 = vld [vmem:[%s2 + $0x30] sm:$0xff]
        %v676 = vld [vmem:[%s2 + $0x38] sm:$0xff]
        %v677 = vld [vmem:[%s654] sm:$0xf]
        %v678 = vld [vmem:[%s654 + $0x4] sm:$0xf]
        %v679 = vld [vmem:[%s654 + $0x8] sm:$0xf]
        %v680 = vld [vmem:[%s654 + $0xc] sm:$0xf]
        %v681 = vld [vmem:[%s654 + $0x10] sm:$0xf]
        %v682 = vld [vmem:[%s654 + $0x14] sm:$0xf]
        %v683 = vld [vmem:[%s654 + $0x18] sm:$0xf]
        %v684 = vld [vmem:[%s654 + $0x1c] sm:$0xf]
        %v685 = vunpack.c.l.bf16 %v677
        %v686 = vunpack.c.l.bf16 %v678
        %v687 = vunpack.c.l.bf16 %v679
        %v688 = vunpack.c.l.bf16 %v680
        %v689 = vunpack.c.l.bf16 %v681
        %v690 = vunpack.c.l.bf16 %v682
        %v691 = vunpack.c.l.bf16 %v683
        %v692 = vunpack.c.l.bf16 %v684
        %s693 = scalar_lea.vmem %s654, 32
        %v694 = vld [vmem:[%s693] sm:$0xf]
        %v695 = vld [vmem:[%s693 + $0x4] sm:$0xf]
        %v696 = vld [vmem:[%s693 + $0x8] sm:$0xf]
        %v697 = vld [vmem:[%s693 + $0xc] sm:$0xf]
        %v698 = vld [vmem:[%s693 + $0x10] sm:$0xf]
        %v699 = vld [vmem:[%s693 + $0x14] sm:$0xf]
        %v700 = vld [vmem:[%s693 + $0x18] sm:$0xf]
        %v701 = vld [vmem:[%s693 + $0x1c] sm:$0xf]
        %v702 = vunpack.c.l.bf16 %v694
        %v703 = vunpack.c.l.bf16 %v695
        %v704 = vunpack.c.l.bf16 %v696
        %v705 = vunpack.c.l.bf16 %v697
        %v706 = vunpack.c.l.bf16 %v698
        %v707 = vunpack.c.l.bf16 %v699
        %v708 = vunpack.c.l.bf16 %v700
        %v709 = vunpack.c.l.bf16 %v701
        %s710 = scalar_lea.vmem %s654, 64
        %v711 = vld [vmem:[%s710] sm:$0xf]
        %v712 = vld [vmem:[%s710 + $0x4] sm:$0xf]
        %v713 = vld [vmem:[%s710 + $0x8] sm:$0xf]
        %v714 = vld [vmem:[%s710 + $0xc] sm:$0xf]
        %v715 = vld [vmem:[%s710 + $0x10] sm:$0xf]
        %v716 = vld [vmem:[%s710 + $0x14] sm:$0xf]
        %v717 = vld [vmem:[%s710 + $0x18] sm:$0xf]
        %v718 = vld [vmem:[%s710 + $0x1c] sm:$0xf]
        %v719 = vunpack.c.l.bf16 %v711
        %v720 = vunpack.c.l.bf16 %v712
        %v721 = vunpack.c.l.bf16 %v713
        %v722 = vunpack.c.l.bf16 %v714
        %v723 = vunpack.c.l.bf16 %v715
        %v724 = vunpack.c.l.bf16 %v716
        %v725 = vunpack.c.l.bf16 %v717
        %v726 = vunpack.c.l.bf16 %v718
        %s727 = scalar_lea.vmem %s654, 96
        %v728 = vld [vmem:[%s727] sm:$0xf]
        %v729 = vld [vmem:[%s727 + $0x4] sm:$0xf]
        %v730 = vld [vmem:[%s727 + $0x8] sm:$0xf]
        %v731 = vld [vmem:[%s727 + $0xc] sm:$0xf]
        %v732 = vld [vmem:[%s727 + $0x10] sm:$0xf]
        %v733 = vld [vmem:[%s727 + $0x14] sm:$0xf]
        %v734 = vld [vmem:[%s727 + $0x18] sm:$0xf]
        %v735 = vld [vmem:[%s727 + $0x1c] sm:$0xf]
        %v736 = vunpack.c.l.bf16 %v728
        %v737 = vunpack.c.l.bf16 %v729
        %v738 = vunpack.c.l.bf16 %v730
        %v739 = vunpack.c.l.bf16 %v731
        %v740 = vunpack.c.l.bf16 %v732
        %v741 = vunpack.c.l.bf16 %v733
        %v742 = vunpack.c.l.bf16 %v734
        %v743 = vunpack.c.l.bf16 %v735
        %v744 = vld [vmem:[%s3] sm:$0x1]
        %v745 = vld [vmem:[%s3 + $0x1] sm:$0x1]
        %v746 = vld [vmem:[%s3 + $0x2] sm:$0x1]
        %v747 = vld [vmem:[%s3 + $0x3] sm:$0x1]
        %v748 = vld [vmem:[%s3 + $0x4] sm:$0x1]
        %v749 = vld [vmem:[%s3 + $0x5] sm:$0x1]
        %v750 = vld [vmem:[%s3 + $0x6] sm:$0x1]
        %v751 = vld [vmem:[%s3 + $0x7] sm:$0x1]
        %v752 = vld [vmem:[%s3 + $0x8] sm:$0x1]
        %v753 = vld [vmem:[#allocation2] sm:$0x1]
        %v755 = vperm.slane %v753, 0
        %v757 = vadd.f32 %v755, 0.0
        %vm766 = vcmask 1040384
        %v767 = vrot.slane 0.0, 7
        %v768 = vrot.slane %v736, 7
        %v769 = vsel %vm766, %v767, %v768
        %v770 = vrot.slane %v737, 7
        %v771 = vsel %vm766, %v768, %v770
        %v772 = vrot.slane %v738, 7
        %v773 = vsel %vm766, %v770, %v772
        %v774 = vrot.slane %v739, 7
        %v775 = vsel %vm766, %v772, %v774
        %v776 = vrot.slane %v740, 7
        %v777 = vsel %vm766, %v774, %v776
        %v778 = vrot.slane %v741, 7
        %v779 = vsel %vm766, %v776, %v778
        %v780 = vrot.slane %v742, 7
        %v781 = vsel %vm766, %v778, %v780
        %v790 = vsel %vm766, 0.0, %v767
        %792 = vset.pattern.permute.xlu0 0
        %793 = vperm.xlu0 %792, %v661
        %v794 = vpop.permute.xlu0 %793
        %797 = vset.pattern.permute.xlu0 0
        %798 = vperm.xlu0 %797, %v662
        %v799 = vpop.permute.xlu0 %798
        %802 = vset.pattern.permute.xlu0 0
        %803 = vperm.xlu0 %802, %v663
        %v804 = vpop.permute.xlu0 %803
        %807 = vset.pattern.permute.xlu0 0
        %808 = vperm.xlu0 %807, %v664
        %v809 = vpop.permute.xlu0 %808
        %812 = vset.pattern.permute.xlu0 0
        %813 = vperm.xlu0 %812, %v665
        %v814 = vpop.permute.xlu0 %813
        %817 = vset.pattern.permute.xlu0 0
        %818 = vperm.xlu0 %817, %v666
        %v819 = vpop.permute.xlu0 %818
        %822 = vset.pattern.permute.xlu0 0
        %823 = vperm.xlu0 %822, %v667
        %v824 = vpop.permute.xlu0 %823
        %827 = vset.pattern.permute.xlu0 0
        %828 = vperm.xlu0 %827, %v668
        %v829 = vpop.permute.xlu0 %828
        %v831 = vmul.f32 %v790, %v794
        %v832 = vmul.f32 %v769, %v799
        %v833 = vmul.f32 %v771, %v804
        %v834 = vmul.f32 %v773, %v809
        %v835 = vmul.f32 %v775, %v814
        %v836 = vmul.f32 %v777, %v819
        %v837 = vmul.f32 %v779, %v824
        %v838 = vmul.f32 %v781, %v829
        %v840 = vperm.slane %v744, 0
        %v842 = vmul.f32 %v831, %v840
        %v843 = vmul.f32 %v832, %v840
        %v844 = vmul.f32 %v833, %v840
        %v845 = vmul.f32 %v834, %v840
        %v846 = vmul.f32 %v835, %v840
        %v847 = vmul.f32 %v836, %v840
        %v848 = vmul.f32 %v837, %v840
        %v849 = vmul.f32 %v838, %v840
        %v850 = vadd.f32 %v757, %v842
        %v851 = vadd.f32 %v757, %v843
        %v852 = vadd.f32 %v757, %v844
        %v853 = vadd.f32 %v757, %v845
        %v854 = vadd.f32 %v757, %v846
        %v855 = vadd.f32 %v757, %v847
        %v856 = vadd.f32 %v757, %v848
        %v857 = vadd.f32 %v757, %v849
        %v859 = vperm.slane %v745, 0
        %v861 = vmul.f32 %v859, 0.0
        %v862 = vmul.f32 %v719, %v859
        %v863 = vmul.f32 %v720, %v859
        %v864 = vmul.f32 %v721, %v859
        %v865 = vmul.f32 %v722, %v859
        %v866 = vmul.f32 %v723, %v859
        %v867 = vmul.f32 %v724, %v859
        %v868 = vmul.f32 %v725, %v859
        %v869 = vadd.f32 %v850, %v861
        %v870 = vadd.f32 %v851, %v862
        %v871 = vadd.f32 %v852, %v863
        %v872 = vadd.f32 %v853, %v864
        %v873 = vadd.f32 %v854, %v865
        %v874 = vadd.f32 %v855, %v866
        %v875 = vadd.f32 %v856, %v867
        %v876 = vadd.f32 %v857, %v868
        %v878 = vperm.slane %v746, 0
        %v880 = vmul.f32 %v878, 0.0
        %v881 = vmul.f32 %v736, %v878
        %v882 = vmul.f32 %v737, %v878
        %v883 = vmul.f32 %v738, %v878
        %v884 = vmul.f32 %v739, %v878
        %v885 = vmul.f32 %v740, %v878
        %v886 = vmul.f32 %v741, %v878
        %v887 = vmul.f32 %v742, %v878
        %v888 = vadd.f32 %v869, %v880
        %v889 = vadd.f32 %v870, %v881
        %v890 = vadd.f32 %v871, %v882
        %v891 = vadd.f32 %v872, %v883
        %v892 = vadd.f32 %v873, %v884
        %v893 = vadd.f32 %v874, %v885
        %v894 = vadd.f32 %v875, %v886
        %v895 = vadd.f32 %v876, %v887
        %v904 = vrot.slane %v702, 7
        %v905 = vrot.slane %v703, 7
        %v906 = vsel %vm766, %v904, %v905
        %v907 = vrot.slane %v704, 7
        %v908 = vsel %vm766, %v905, %v907
        %v909 = vrot.slane %v705, 7
        %v910 = vsel %vm766, %v907, %v909
        %v911 = vrot.slane %v706, 7
        %v912 = vsel %vm766, %v909, %v911
        %v913 = vrot.slane %v707, 7
        %v914 = vsel %vm766, %v911, %v913
        %v915 = vrot.slane %v708, 7
        %v916 = vsel %vm766, %v913, %v915
        %v917 = vrot.slane %v709, 7
        %v918 = vsel %vm766, %v915, %v917
        %v927 = vsel %vm766, 0.0, %v904
        %v928 = vmul.f32 %v927, %v794
        %v929 = vmul.f32 %v906, %v799
        %v930 = vmul.f32 %v908, %v804
        %v931 = vmul.f32 %v910, %v809
        %v932 = vmul.f32 %v912, %v814
        %v933 = vmul.f32 %v914, %v819
        %v934 = vmul.f32 %v916, %v824
        %v935 = vmul.f32 %v918, %v829
        %v937 = vperm.slane %v747, 0
        %v939 = vmul.f32 %v928, %v937
        %v940 = vmul.f32 %v929, %v937
        %v941 = vmul.f32 %v930, %v937
        %v942 = vmul.f32 %v931, %v937
        %v943 = vmul.f32 %v932, %v937
        %v944 = vmul.f32 %v933, %v937
        %v945 = vmul.f32 %v934, %v937
        %v946 = vmul.f32 %v935, %v937
        %v947 = vadd.f32 %v888, %v939
        %v948 = vadd.f32 %v889, %v940
        %v949 = vadd.f32 %v890, %v941
        %v950 = vadd.f32 %v891, %v942
        %v951 = vadd.f32 %v892, %v943
        %v952 = vadd.f32 %v893, %v944
        %v953 = vadd.f32 %v894, %v945
        %v954 = vadd.f32 %v895, %v946
        %v956 = vperm.slane %v748, 0
        %v958 = vmul.f32 %v685, %v956
        %v959 = vmul.f32 %v686, %v956
        %v960 = vmul.f32 %v687, %v956
        %v961 = vmul.f32 %v688, %v956
        %v962 = vmul.f32 %v689, %v956
        %v963 = vmul.f32 %v690, %v956
        %v964 = vmul.f32 %v691, %v956
        %v965 = vmul.f32 %v692, %v956
        %v966 = vadd.f32 %v947, %v958
        %v967 = vadd.f32 %v948, %v959
        %v968 = vadd.f32 %v949, %v960
        %v969 = vadd.f32 %v950, %v961
        %v970 = vadd.f32 %v951, %v962
        %v971 = vadd.f32 %v952, %v963
        %v972 = vadd.f32 %v953, %v964
        %v973 = vadd.f32 %v954, %v965
        %v975 = vperm.slane %v749, 0
        %v977 = vmul.f32 %v702, %v975
        %v978 = vmul.f32 %v703, %v975
        %v979 = vmul.f32 %v704, %v975
        %v980 = vmul.f32 %v705, %v975
        %v981 = vmul.f32 %v706, %v975
        %v982 = vmul.f32 %v707, %v975
        %v983 = vmul.f32 %v708, %v975
        %v984 = vmul.f32 %v709, %v975
        %v985 = vadd.f32 %v966, %v977
        %v986 = vadd.f32 %v967, %v978
        %v987 = vadd.f32 %v968, %v979
        %v988 = vadd.f32 %v969, %v980
        %v989 = vadd.f32 %v970, %v981
        %v990 = vadd.f32 %v971, %v982
        %v991 = vadd.f32 %v972, %v983
        %v992 = vadd.f32 %v973, %v984
        %v994 = vrot.slane %v743, 7
        %v995 = vsel %vm766, %v780, %v994
        %v998 = vsel %vm766, 0.0, %v768
        %v999 = vmul.f32 %v998, %v794
        %v1000 = vmul.f32 %v771, %v799
        %v1001 = vmul.f32 %v773, %v804
        %v1002 = vmul.f32 %v775, %v809
        %v1003 = vmul.f32 %v777, %v814
        %v1004 = vmul.f32 %v779, %v819
        %v1005 = vmul.f32 %v781, %v824
        %v1006 = vmul.f32 %v995, %v829
        %v1008 = vperm.slane %v750, 0
        %v1010 = vmul.f32 %v999, %v1008
        %v1011 = vmul.f32 %v1000, %v1008
        %v1012 = vmul.f32 %v1001, %v1008
        %v1013 = vmul.f32 %v1002, %v1008
        %v1014 = vmul.f32 %v1003, %v1008
        %v1015 = vmul.f32 %v1004, %v1008
        %v1016 = vmul.f32 %v1005, %v1008
        %v1017 = vmul.f32 %v1006, %v1008
        %v1018 = vadd.f32 %v985, %v1010
        %v1019 = vadd.f32 %v986, %v1011
        %v1020 = vadd.f32 %v987, %v1012
        %v1021 = vadd.f32 %v988, %v1013
        %v1022 = vadd.f32 %v989, %v1014
        %v1023 = vadd.f32 %v990, %v1015
        %v1024 = vadd.f32 %v991, %v1016
        %v1025 = vadd.f32 %v992, %v1017
        %v1027 = vperm.slane %v751, 0
        %v1029 = vmul.f32 %v719, %v1027
        %v1030 = vmul.f32 %v720, %v1027
        %v1031 = vmul.f32 %v721, %v1027
        %v1032 = vmul.f32 %v722, %v1027
        %v1033 = vmul.f32 %v723, %v1027
        %v1034 = vmul.f32 %v724, %v1027
        %v1035 = vmul.f32 %v725, %v1027
        %v1036 = vmul.f32 %v726, %v1027
        %v1037 = vadd.f32 %v1018, %v1029
        %v1038 = vadd.f32 %v1019, %v1030
        %v1039 = vadd.f32 %v1020, %v1031
        %v1040 = vadd.f32 %v1021, %v1032
        %v1041 = vadd.f32 %v1022, %v1033
        %v1042 = vadd.f32 %v1023, %v1034
        %v1043 = vadd.f32 %v1024, %v1035
        %v1044 = vadd.f32 %v1025, %v1036
        %v1046 = vperm.slane %v752, 0
        %v1048 = vmul.f32 %v736, %v1046
        %v1049 = vmul.f32 %v737, %v1046
        %v1050 = vmul.f32 %v738, %v1046
        %v1051 = vmul.f32 %v739, %v1046
        %v1052 = vmul.f32 %v740, %v1046
        %v1053 = vmul.f32 %v741, %v1046
        %v1054 = vmul.f32 %v742, %v1046
        %v1055 = vmul.f32 %v743, %v1046
        %v1056 = vadd.f32 %v1037, %v1048
        %v1057 = vadd.f32 %v1038, %v1049
        %v1058 = vadd.f32 %v1039, %v1050
        %v1059 = vadd.f32 %v1040, %v1051
        %v1060 = vadd.f32 %v1041, %v1052
        %v1061 = vadd.f32 %v1042, %v1053
        %v1062 = vadd.f32 %v1043, %v1054
        %v1063 = vadd.f32 %v1044, %v1055
        %v1064 = vpack.c.bf16 %v1057, %v1056
        %v1065 = vpack.c.bf16 %v1059, %v1058
        %v1066 = vpack.c.bf16 %v1061, %v1060
        %v1067 = vpack.c.bf16 %v1063, %v1062
        %v1068 = vld [vmem:[%s5] sm:$0xf]
        %v1069 = vld [vmem:[#allocation4] sm:$0x1]
        %v1071 = vperm.slane %v1069, 0
        %vm1073 = vcmask 64512
        %v1075 = vsel %vm1073, %v1064, 0
        %v1078 = vsel %vm1073, %v1065, 0
        %v1081 = vsel %vm1073, %v1066, 0
        %v1084 = vsel %vm1073, %v1067, 0
        %vm1086 = vcmask 1043456
        %v1088 = vsel %vm1086, %v1068, 0
        %1090 = vmatpush.bf16.msra.mxu0 0
        %1091 = vmatpush.bf16.msra.mxu0 0
        %1092 = vmatpush.bf16.msra.mxu0 0
        %1093 = vmatpush.bf16.msra.mxu0 0
        %1094 = vmatpush.bf16.msra.mxu0 0
        %1095 = vmatpush.bf16.msra.mxu0 0
        %1096 = vmatpush.bf16.msra.mxu0 0
        %1097 = vmatpush.bf16.msra.mxu0 %v1088
        %1098 = vmatmul.bf16.gmra.mxu0 %v1075
        %v1099 = vpop.f32.mrf.mxu0
        %v1100 = vadd.f32 %v1071, %v1099
        %v1101 = vpop.f32.mrf.mxu0
        %v1102 = vadd.f32 %v1071, %v1101
        %1103 = vmatmul.bf16.gmra.mxu0 %v1078
        %v1104 = vpop.f32.mrf.mxu0
        %v1105 = vadd.f32 %v1071, %v1104
        %v1106 = vpop.f32.mrf.mxu0
        %v1107 = vadd.f32 %v1071, %v1106
        %1108 = vmatmul.bf16.gmra.mxu0 %v1081
        %v1109 = vpop.f32.mrf.mxu0
        %v1110 = vadd.f32 %v1071, %v1109
        %v1111 = vpop.f32.mrf.mxu0
        %v1112 = vadd.f32 %v1071, %v1111
        %1113 = vmatmul.bf16.gmra.mxu0 %v1084
        %v1114 = vpop.f32.mrf.mxu0
        %v1115 = vadd.f32 %v1071, %v1114
        %v1116 = vpop.f32.mrf.mxu0
        %v1117 = vadd.f32 %v1071, %v1116
        %1118 = vdwg.mxu0
        %v1119 = vmax.f32 %v1100, 0.0
        %v1120 = vmax.f32 %v1102, 0.0
        %v1121 = vmax.f32 %v1105, 0.0
        %v1122 = vmax.f32 %v1107, 0.0
        %v1123 = vmax.f32 %v1110, 0.0
        %v1124 = vmax.f32 %v1112, 0.0
        %v1125 = vmax.f32 %v1115, 0.0
        %v1126 = vmax.f32 %v1117, 0.0
        %v1127 = vld [vmem:[%s7] sm:$0xf]
        %v1128 = vld [vmem:[%s8] sm:$0x1]
        %v1130 = vperm.slane %v1128, 0
        %v1140 = vunpack.c.l.b16 %v677
        %v1141 = vunpack.c.l.b16 %v678
        %v1142 = vunpack.c.l.b16 %v679
        %v1143 = vunpack.c.l.b16 %v680
        %v1144 = vunpack.c.l.b16 %v681
        %v1145 = vunpack.c.l.b16 %v682
        %v1146 = vunpack.c.l.b16 %v683
        %v1147 = vunpack.c.l.b16 %v684
        %v1148 = vpack.c.b16 %v1141, %v1140
        %v1149 = vpack.c.b16 %v1143, %v1142
        %v1150 = vpack.c.b16 %v1145, %v1144
        %v1151 = vpack.c.b16 %v1147, %v1146
        %v1153 = vsel %vm1073, %v1148, 0
        %v1156 = vsel %vm1073, %v1149, 0
        %v1159 = vsel %vm1073, %v1150, 0
        %v1162 = vsel %vm1073, %v1151, 0
        %v1165 = vsel %vm1086, %v1127, 0
        %1167 = vmatpush.bf16.msra.mxu0 0
        %1168 = vmatpush.bf16.msra.mxu0 0
        %1169 = vmatpush.bf16.msra.mxu0 0
        %1170 = vmatpush.bf16.msra.mxu0 0
        %1171 = vmatpush.bf16.msra.mxu0 0
        %1172 = vmatpush.bf16.msra.mxu0 0
        %1173 = vmatpush.bf16.msra.mxu0 0
        %1174 = vmatpush.bf16.msra.mxu0 %v1165
        %1175 = vmatmul.bf16.gmra.mxu0 %v1153
        %v1176 = vpop.f32.mrf.mxu0
        %v1177 = vadd.f32 %v1130, %v1176
        %v1178 = vpop.f32.mrf.mxu0
        %v1179 = vadd.f32 %v1130, %v1178
        %1180 = vmatmul.bf16.gmra.mxu0 %v1156
        %v1181 = vpop.f32.mrf.mxu0
        %v1182 = vadd.f32 %v1130, %v1181
        %v1183 = vpop.f32.mrf.mxu0
        %v1184 = vadd.f32 %v1130, %v1183
        %1185 = vmatmul.bf16.gmra.mxu0 %v1159
        %v1186 = vpop.f32.mrf.mxu0
        %v1187 = vadd.f32 %v1130, %v1186
        %v1188 = vpop.f32.mrf.mxu0
        %v1189 = vadd.f32 %v1130, %v1188
        %1190 = vmatmul.bf16.gmra.mxu0 %v1162
        %v1191 = vpop.f32.mrf.mxu0
        %v1192 = vadd.f32 %v1130, %v1191
        %v1193 = vpop.f32.mrf.mxu0
        %v1194 = vadd.f32 %v1130, %v1193
        %1195 = vdwg.mxu0
        %v1196 = vmax.f32 %v1177, 0.0
        %v1197 = vmax.f32 %v1179, 0.0
        %v1198 = vmax.f32 %v1182, 0.0
        %v1199 = vmax.f32 %v1184, 0.0
        %v1200 = vmax.f32 %v1187, 0.0
        %v1201 = vmax.f32 %v1189, 0.0
        %v1202 = vmax.f32 %v1192, 0.0
        %v1203 = vmax.f32 %v1194, 0.0
        %v1212 = vunpack.c.l.b16 %v694
        %v1213 = vunpack.c.l.b16 %v695
        %v1214 = vunpack.c.l.b16 %v696
        %v1215 = vunpack.c.l.b16 %v697
        %v1216 = vunpack.c.l.b16 %v698
        %v1217 = vunpack.c.l.b16 %v699
        %v1218 = vunpack.c.l.b16 %v700
        %v1219 = vunpack.c.l.b16 %v701
        %v1220 = vpack.c.b16 %v1213, %v1212
        %v1221 = vpack.c.b16 %v1215, %v1214
        %v1222 = vpack.c.b16 %v1217, %v1216
        %v1223 = vpack.c.b16 %v1219, %v1218
        %v1225 = vsel %vm1073, %v1220, 0
        %v1228 = vsel %vm1073, %v1221, 0
        %v1231 = vsel %vm1073, %v1222, 0
        %v1234 = vsel %vm1073, %v1223, 0
        %1236 = vmatpush.bf16.msra.mxu0 0
        %1237 = vmatpush.bf16.msra.mxu0 0
        %1238 = vmatpush.bf16.msra.mxu0 0
        %1239 = vmatpush.bf16.msra.mxu0 0
        %1240 = vmatpush.bf16.msra.mxu0 0
        %1241 = vmatpush.bf16.msra.mxu0 0
        %1242 = vmatpush.bf16.msra.mxu0 0
        %1243 = vmatpush.bf16.msra.mxu0 %v1165
        %1244 = vmatmul.bf16.gmra.mxu0 %v1225
        %v1245 = vpop.f32.mrf.mxu0
        %v1246 = vadd.f32 %v1130, %v1245
        %v1247 = vpop.f32.mrf.mxu0
        %v1248 = vadd.f32 %v1130, %v1247
        %1249 = vmatmul.bf16.gmra.mxu0 %v1228
        %v1250 = vpop.f32.mrf.mxu0
        %v1251 = vadd.f32 %v1130, %v1250
        %v1252 = vpop.f32.mrf.mxu0
        %v1253 = vadd.f32 %v1130, %v1252
        %1254 = vmatmul.bf16.gmra.mxu0 %v1231
        %v1255 = vpop.f32.mrf.mxu0
        %v1256 = vadd.f32 %v1130, %v1255
        %v1257 = vpop.f32.mrf.mxu0
        %v1258 = vadd.f32 %v1130, %v1257
        %1259 = vmatmul.bf16.gmra.mxu0 %v1234
        %v1260 = vpop.f32.mrf.mxu0
        %v1261 = vadd.f32 %v1130, %v1260
        %v1262 = vpop.f32.mrf.mxu0
        %v1263 = vadd.f32 %v1130, %v1262
        %1264 = vdwg.mxu0
        %v1265 = vmax.f32 %v1246, 0.0
        %v1266 = vmax.f32 %v1248, 0.0
        %v1267 = vmax.f32 %v1251, 0.0
        %v1268 = vmax.f32 %v1253, 0.0
        %v1269 = vmax.f32 %v1256, 0.0
        %v1270 = vmax.f32 %v1258, 0.0
        %v1271 = vmax.f32 %v1261, 0.0
        %v1272 = vmax.f32 %v1263, 0.0
        %v1281 = vunpack.c.l.b16 %v711
        %v1282 = vunpack.c.l.b16 %v712
        %v1283 = vunpack.c.l.b16 %v713
        %v1284 = vunpack.c.l.b16 %v714
        %v1285 = vunpack.c.l.b16 %v715
        %v1286 = vunpack.c.l.b16 %v716
        %v1287 = vunpack.c.l.b16 %v717
        %v1288 = vunpack.c.l.b16 %v718
        %v1289 = vpack.c.b16 %v1282, %v1281
        %v1290 = vpack.c.b16 %v1284, %v1283
        %v1291 = vpack.c.b16 %v1286, %v1285
        %v1292 = vpack.c.b16 %v1288, %v1287
        %v1294 = vsel %vm1073, %v1289, 0
        %v1297 = vsel %vm1073, %v1290, 0
        %v1300 = vsel %vm1073, %v1291, 0
        %v1303 = vsel %vm1073, %v1292, 0
        %1305 = vmatpush.bf16.msra.mxu0 0
        %1306 = vmatpush.bf16.msra.mxu0 0
        %1307 = vmatpush.bf16.msra.mxu0 0
        %1308 = vmatpush.bf16.msra.mxu0 0
        %1309 = vmatpush.bf16.msra.mxu0 0
        %1310 = vmatpush.bf16.msra.mxu0 0
        %1311 = vmatpush.bf16.msra.mxu0 0
        %1312 = vmatpush.bf16.msra.mxu0 %v1165
        %1313 = vmatmul.bf16.gmra.mxu0 %v1294
        %v1314 = vpop.f32.mrf.mxu0
        %v1315 = vadd.f32 %v1130, %v1314
        %v1316 = vpop.f32.mrf.mxu0
        %v1317 = vadd.f32 %v1130, %v1316
        %1318 = vmatmul.bf16.gmra.mxu0 %v1297
        %v1319 = vpop.f32.mrf.mxu0
        %v1320 = vadd.f32 %v1130, %v1319
        %v1321 = vpop.f32.mrf.mxu0
        %v1322 = vadd.f32 %v1130, %v1321
        %1323 = vmatmul.bf16.gmra.mxu0 %v1300
        %v1324 = vpop.f32.mrf.mxu0
        %v1325 = vadd.f32 %v1130, %v1324
        %v1326 = vpop.f32.mrf.mxu0
        %v1327 = vadd.f32 %v1130, %v1326
        %1328 = vmatmul.bf16.gmra.mxu0 %v1303
        %v1329 = vpop.f32.mrf.mxu0
        %v1330 = vadd.f32 %v1130, %v1329
        %v1331 = vpop.f32.mrf.mxu0
        %v1332 = vadd.f32 %v1130, %v1331
        %1333 = vdwg.mxu0
        %v1334 = vmax.f32 %v1315, 0.0
        %v1335 = vmax.f32 %v1317, 0.0
        %v1336 = vmax.f32 %v1320, 0.0
        %v1337 = vmax.f32 %v1322, 0.0
        %v1338 = vmax.f32 %v1325, 0.0
        %v1339 = vmax.f32 %v1327, 0.0
        %v1340 = vmax.f32 %v1330, 0.0
        %v1341 = vmax.f32 %v1332, 0.0
        %v1350 = vunpack.c.l.b16 %v728
        %v1351 = vunpack.c.l.b16 %v729
        %v1352 = vunpack.c.l.b16 %v730
        %v1353 = vunpack.c.l.b16 %v731
        %v1354 = vunpack.c.l.b16 %v732
        %v1355 = vunpack.c.l.b16 %v733
        %v1356 = vunpack.c.l.b16 %v734
        %v1357 = vunpack.c.l.b16 %v735
        %v1358 = vpack.c.b16 %v1351, %v1350
        %v1359 = vpack.c.b16 %v1353, %v1352
        %v1360 = vpack.c.b16 %v1355, %v1354
        %v1361 = vpack.c.b16 %v1357, %v1356
        %v1363 = vsel %vm1073, %v1358, 0
        %v1366 = vsel %vm1073, %v1359, 0
        %v1369 = vsel %vm1073, %v1360, 0
        %v1372 = vsel %vm1073, %v1361, 0
        %1374 = vmatpush.bf16.msra.mxu0 0
        %1375 = vmatpush.bf16.msra.mxu0 0
        %1376 = vmatpush.bf16.msra.mxu0 0
        %1377 = vmatpush.bf16.msra.mxu0 0
        %1378 = vmatpush.bf16.msra.mxu0 0
        %1379 = vmatpush.bf16.msra.mxu0 0
        %1380 = vmatpush.bf16.msra.mxu0 0
        %1381 = vmatpush.bf16.msra.mxu0 %v1165
        %1382 = vmatmul.bf16.gmra.mxu0 %v1363
        %v1383 = vpop.f32.mrf.mxu0
        %v1384 = vadd.f32 %v1130, %v1383
        %v1385 = vpop.f32.mrf.mxu0
        %v1386 = vadd.f32 %v1130, %v1385
        %1387 = vmatmul.bf16.gmra.mxu0 %v1366
        %v1388 = vpop.f32.mrf.mxu0
        %v1389 = vadd.f32 %v1130, %v1388
        %v1390 = vpop.f32.mrf.mxu0
        %v1391 = vadd.f32 %v1130, %v1390
        %1392 = vmatmul.bf16.gmra.mxu0 %v1369
        %v1393 = vpop.f32.mrf.mxu0
        %v1394 = vadd.f32 %v1130, %v1393
        %v1395 = vpop.f32.mrf.mxu0
        %v1396 = vadd.f32 %v1130, %v1395
        %1397 = vmatmul.bf16.gmra.mxu0 %v1372
        %v1398 = vpop.f32.mrf.mxu0
        %v1399 = vadd.f32 %v1130, %v1398
        %v1400 = vpop.f32.mrf.mxu0
        %v1401 = vadd.f32 %v1130, %v1400
        %1402 = vdwg.mxu0
        %v1403 = vmax.f32 %v1384, 0.0
        %v1404 = vmax.f32 %v1386, 0.0
        %v1405 = vmax.f32 %v1389, 0.0
        %v1406 = vmax.f32 %v1391, 0.0
        %v1407 = vmax.f32 %v1394, 0.0
        %v1408 = vmax.f32 %v1396, 0.0
        %v1409 = vmax.f32 %v1399, 0.0
        %v1410 = vmax.f32 %v1401, 0.0
        %v1411 = vld [vmem:[%s9] sm:$0x1]
        %v1412 = vld [vmem:[%s9 + $0x1] sm:$0x1]
        %v1413 = vld [vmem:[%s9 + $0x2] sm:$0x1]
        %v1414 = vld [vmem:[%s9 + $0x3] sm:$0x1]
        %v1415 = vld [vmem:[%s9 + $0x4] sm:$0x1]
        %v1416 = vld [vmem:[%s9 + $0x5] sm:$0x1]
        %v1417 = vld [vmem:[%s9 + $0x6] sm:$0x1]
        %v1418 = vld [vmem:[%s9 + $0x7] sm:$0x1]
        %v1419 = vld [vmem:[%s9 + $0x8] sm:$0x1]
        %v1420 = vld [vmem:[%s10] sm:$0x1]
        %v1422 = vperm.slane %v1420, 0
        %v1424 = vadd.f32 %v1422, 0.0
        %v1432 = vrot.slane %v1403, 7
        %v1433 = vsel %vm766, %v767, %v1432
        %v1434 = vrot.slane %v1404, 7
        %v1435 = vsel %vm766, %v1432, %v1434
        %v1436 = vrot.slane %v1405, 7
        %v1437 = vsel %vm766, %v1434, %v1436
        %v1438 = vrot.slane %v1406, 7
        %v1439 = vsel %vm766, %v1436, %v1438
        %v1440 = vrot.slane %v1407, 7
        %v1441 = vsel %vm766, %v1438, %v1440
        %v1442 = vrot.slane %v1408, 7
        %v1443 = vsel %vm766, %v1440, %v1442
        %v1444 = vrot.slane %v1409, 7
        %v1445 = vsel %vm766, %v1442, %v1444
        %v1453 = vmul.f32 %v1433, %v799
        %v1454 = vmul.f32 %v1435, %v804
        %v1455 = vmul.f32 %v1437, %v809
        %v1456 = vmul.f32 %v1439, %v814
        %v1457 = vmul.f32 %v1441, %v819
        %v1458 = vmul.f32 %v1443, %v824
        %v1459 = vmul.f32 %v1445, %v829
        %v1461 = vperm.slane %v1411, 0
        %v1463 = vmul.f32 %v831, %v1461
        %v1464 = vmul.f32 %v1453, %v1461
        %v1465 = vmul.f32 %v1454, %v1461
        %v1466 = vmul.f32 %v1455, %v1461
        %v1467 = vmul.f32 %v1456, %v1461
        %v1468 = vmul.f32 %v1457, %v1461
        %v1469 = vmul.f32 %v1458, %v1461
        %v1470 = vmul.f32 %v1459, %v1461
        %v1471 = vadd.f32 %v1424, %v1463
        %v1472 = vadd.f32 %v1424, %v1464
        %v1473 = vadd.f32 %v1424, %v1465
        %v1474 = vadd.f32 %v1424, %v1466
        %v1475 = vadd.f32 %v1424, %v1467
        %v1476 = vadd.f32 %v1424, %v1468
        %v1477 = vadd.f32 %v1424, %v1469
        %v1478 = vadd.f32 %v1424, %v1470
        %v1480 = vperm.slane %v1412, 0
        %v1482 = vmul.f32 %v1480, 0.0
        %v1483 = vmul.f32 %v1334, %v1480
        %v1484 = vmul.f32 %v1335, %v1480
        %v1485 = vmul.f32 %v1336, %v1480
        %v1486 = vmul.f32 %v1337, %v1480
        %v1487 = vmul.f32 %v1338, %v1480
        %v1488 = vmul.f32 %v1339, %v1480
        %v1489 = vmul.f32 %v1340, %v1480
        %v1490 = vadd.f32 %v1471, %v1482
        %v1491 = vadd.f32 %v1472, %v1483
        %v1492 = vadd.f32 %v1473, %v1484
        %v1493 = vadd.f32 %v1474, %v1485
        %v1494 = vadd.f32 %v1475, %v1486
        %v1495 = vadd.f32 %v1476, %v1487
        %v1496 = vadd.f32 %v1477, %v1488
        %v1497 = vadd.f32 %v1478, %v1489
        %v1499 = vperm.slane %v1413, 0
        %v1501 = vmul.f32 %v1499, 0.0
        %v1502 = vmul.f32 %v1403, %v1499
        %v1503 = vmul.f32 %v1404, %v1499
        %v1504 = vmul.f32 %v1405, %v1499
        %v1505 = vmul.f32 %v1406, %v1499
        %v1506 = vmul.f32 %v1407, %v1499
        %v1507 = vmul.f32 %v1408, %v1499
        %v1508 = vmul.f32 %v1409, %v1499
        %v1509 = vadd.f32 %v1490, %v1501
        %v1510 = vadd.f32 %v1491, %v1502
        %v1511 = vadd.f32 %v1492, %v1503
        %v1512 = vadd.f32 %v1493, %v1504
        %v1513 = vadd.f32 %v1494, %v1505
        %v1514 = vadd.f32 %v1495, %v1506
        %v1515 = vadd.f32 %v1496, %v1507
        %v1516 = vadd.f32 %v1497, %v1508
        %v1525 = vrot.slane %v1265, 7
        %v1526 = vrot.slane %v1266, 7
        %v1527 = vsel %vm766, %v1525, %v1526
        %v1528 = vrot.slane %v1267, 7
        %v1529 = vsel %vm766, %v1526, %v1528
        %v1530 = vrot.slane %v1268, 7
        %v1531 = vsel %vm766, %v1528, %v1530
        %v1532 = vrot.slane %v1269, 7
        %v1533 = vsel %vm766, %v1530, %v1532
        %v1534 = vrot.slane %v1270, 7
        %v1535 = vsel %vm766, %v1532, %v1534
        %v1536 = vrot.slane %v1271, 7
        %v1537 = vsel %vm766, %v1534, %v1536
        %v1538 = vrot.slane %v1272, 7
        %v1539 = vsel %vm766, %v1536, %v1538
        %v1548 = vsel %vm766, 0.0, %v1525
        %v1549 = vmul.f32 %v1548, %v794
        %v1550 = vmul.f32 %v1527, %v799
        %v1551 = vmul.f32 %v1529, %v804
        %v1552 = vmul.f32 %v1531, %v809
        %v1553 = vmul.f32 %v1533, %v814
        %v1554 = vmul.f32 %v1535, %v819
        %v1555 = vmul.f32 %v1537, %v824
        %v1556 = vmul.f32 %v1539, %v829
        %v1558 = vperm.slane %v1414, 0
        %v1560 = vmul.f32 %v1549, %v1558
        %v1561 = vmul.f32 %v1550, %v1558
        %v1562 = vmul.f32 %v1551, %v1558
        %v1563 = vmul.f32 %v1552, %v1558
        %v1564 = vmul.f32 %v1553, %v1558
        %v1565 = vmul.f32 %v1554, %v1558
        %v1566 = vmul.f32 %v1555, %v1558
        %v1567 = vmul.f32 %v1556, %v1558
        %v1568 = vadd.f32 %v1509, %v1560
        %v1569 = vadd.f32 %v1510, %v1561
        %v1570 = vadd.f32 %v1511, %v1562
        %v1571 = vadd.f32 %v1512, %v1563
        %v1572 = vadd.f32 %v1513, %v1564
        %v1573 = vadd.f32 %v1514, %v1565
        %v1574 = vadd.f32 %v1515, %v1566
        %v1575 = vadd.f32 %v1516, %v1567
        %v1577 = vperm.slane %v1415, 0
        %v1579 = vmul.f32 %v1196, %v1577
        %v1580 = vmul.f32 %v1197, %v1577
        %v1581 = vmul.f32 %v1198, %v1577
        %v1582 = vmul.f32 %v1199, %v1577
        %v1583 = vmul.f32 %v1200, %v1577
        %v1584 = vmul.f32 %v1201, %v1577
        %v1585 = vmul.f32 %v1202, %v1577
        %v1586 = vmul.f32 %v1203, %v1577
        %v1587 = vadd.f32 %v1568, %v1579
        %v1588 = vadd.f32 %v1569, %v1580
        %v1589 = vadd.f32 %v1570, %v1581
        %v1590 = vadd.f32 %v1571, %v1582
        %v1591 = vadd.f32 %v1572, %v1583
        %v1592 = vadd.f32 %v1573, %v1584
        %v1593 = vadd.f32 %v1574, %v1585
        %v1594 = vadd.f32 %v1575, %v1586
        %v1596 = vperm.slane %v1416, 0
        %v1598 = vmul.f32 %v1265, %v1596
        %v1599 = vmul.f32 %v1266, %v1596
        %v1600 = vmul.f32 %v1267, %v1596
        %v1601 = vmul.f32 %v1268, %v1596
        %v1602 = vmul.f32 %v1269, %v1596
        %v1603 = vmul.f32 %v1270, %v1596
        %v1604 = vmul.f32 %v1271, %v1596
        %v1605 = vmul.f32 %v1272, %v1596
        %v1606 = vadd.f32 %v1587, %v1598
        %v1607 = vadd.f32 %v1588, %v1599
        %v1608 = vadd.f32 %v1589, %v1600
        %v1609 = vadd.f32 %v1590, %v1601
        %v1610 = vadd.f32 %v1591, %v1602
        %v1611 = vadd.f32 %v1592, %v1603
        %v1612 = vadd.f32 %v1593, %v1604
        %v1613 = vadd.f32 %v1594, %v1605
        %v1615 = vrot.slane %v1410, 7
        %v1616 = vsel %vm766, %v1444, %v1615
        %v1619 = vsel %vm766, 0.0, %v1432
        %v1620 = vmul.f32 %v1619, %v794
        %v1621 = vmul.f32 %v1435, %v799
        %v1622 = vmul.f32 %v1437, %v804
        %v1623 = vmul.f32 %v1439, %v809
        %v1624 = vmul.f32 %v1441, %v814
        %v1625 = vmul.f32 %v1443, %v819
        %v1626 = vmul.f32 %v1445, %v824
        %v1627 = vmul.f32 %v1616, %v829
        %v1629 = vperm.slane %v1417, 0
        %v1631 = vmul.f32 %v1620, %v1629
        %v1632 = vmul.f32 %v1621, %v1629
        %v1633 = vmul.f32 %v1622, %v1629
        %v1634 = vmul.f32 %v1623, %v1629
        %v1635 = vmul.f32 %v1624, %v1629
        %v1636 = vmul.f32 %v1625, %v1629
        %v1637 = vmul.f32 %v1626, %v1629
        %v1638 = vmul.f32 %v1627, %v1629
        %v1639 = vadd.f32 %v1606, %v1631
        %v1640 = vadd.f32 %v1607, %v1632
        %v1641 = vadd.f32 %v1608, %v1633
        %v1642 = vadd.f32 %v1609, %v1634
        %v1643 = vadd.f32 %v1610, %v1635
        %v1644 = vadd.f32 %v1611, %v1636
        %v1645 = vadd.f32 %v1612, %v1637
        %v1646 = vadd.f32 %v1613, %v1638
        %v1648 = vperm.slane %v1418, 0
        %v1650 = vmul.f32 %v1334, %v1648
        %v1651 = vmul.f32 %v1335, %v1648
        %v1652 = vmul.f32 %v1336, %v1648
        %v1653 = vmul.f32 %v1337, %v1648
        %v1654 = vmul.f32 %v1338, %v1648
        %v1655 = vmul.f32 %v1339, %v1648
        %v1656 = vmul.f32 %v1340, %v1648
        %v1657 = vmul.f32 %v1341, %v1648
        %v1658 = vadd.f32 %v1639, %v1650
        %v1659 = vadd.f32 %v1640, %v1651
        %v1660 = vadd.f32 %v1641, %v1652
        %v1661 = vadd.f32 %v1642, %v1653
        %v1662 = vadd.f32 %v1643, %v1654
        %v1663 = vadd.f32 %v1644, %v1655
        %v1664 = vadd.f32 %v1645, %v1656
        %v1665 = vadd.f32 %v1646, %v1657
        %v1667 = vperm.slane %v1419, 0
        %v1669 = vmul.f32 %v1403, %v1667
        %v1670 = vmul.f32 %v1404, %v1667
        %v1671 = vmul.f32 %v1405, %v1667
        %v1672 = vmul.f32 %v1406, %v1667
        %v1673 = vmul.f32 %v1407, %v1667
        %v1674 = vmul.f32 %v1408, %v1667
        %v1675 = vmul.f32 %v1409, %v1667
        %v1676 = vmul.f32 %v1410, %v1667
        %v1677 = vadd.f32 %v1658, %v1669
        %v1678 = vadd.f32 %v1659, %v1670
        %v1679 = vadd.f32 %v1660, %v1671
        %v1680 = vadd.f32 %v1661, %v1672
        %v1681 = vadd.f32 %v1662, %v1673
        %v1682 = vadd.f32 %v1663, %v1674
        %v1683 = vadd.f32 %v1664, %v1675
        %v1684 = vadd.f32 %v1665, %v1676
        %v1685 = vpack.c.bf16 %v1678, %v1677
        %v1686 = vpack.c.bf16 %v1680, %v1679
        %v1687 = vpack.c.bf16 %v1682, %v1681
        %v1688 = vpack.c.bf16 %v1684, %v1683
        %v1689 = vld [vmem:[%s11] sm:$0xf]
        %v1690 = vld [vmem:[%s12] sm:$0x1]
        %v1692 = vperm.slane %v1690, 0
        %v1695 = vsel %vm1073, %v1685, 0
        %v1698 = vsel %vm1073, %v1686, 0
        %v1701 = vsel %vm1073, %v1687, 0
        %v1704 = vsel %vm1073, %v1688, 0
        %v1707 = vsel %vm1086, %v1689, 0
        %1709 = vmatpush.bf16.msra.mxu0 0
        %1710 = vmatpush.bf16.msra.mxu0 0
        %1711 = vmatpush.bf16.msra.mxu0 0
        %1712 = vmatpush.bf16.msra.mxu0 0
        %1713 = vmatpush.bf16.msra.mxu0 0
        %1714 = vmatpush.bf16.msra.mxu0 0
        %1715 = vmatpush.bf16.msra.mxu0 0
        %1716 = vmatpush.bf16.msra.mxu0 %v1707
        %1717 = vmatmul.bf16.gmra.mxu0 %v1695
        %v1718 = vpop.f32.mrf.mxu0
        %v1719 = vadd.f32 %v1692, %v1718
        %v1720 = vpop.f32.mrf.mxu0
        %v1721 = vadd.f32 %v1692, %v1720
        %1722 = vmatmul.bf16.gmra.mxu0 %v1698
        %v1723 = vpop.f32.mrf.mxu0
        %v1724 = vadd.f32 %v1692, %v1723
        %v1725 = vpop.f32.mrf.mxu0
        %v1726 = vadd.f32 %v1692, %v1725
        %1727 = vmatmul.bf16.gmra.mxu0 %v1701
        %v1728 = vpop.f32.mrf.mxu0
        %v1729 = vadd.f32 %v1692, %v1728
        %v1730 = vpop.f32.mrf.mxu0
        %v1731 = vadd.f32 %v1692, %v1730
        %1732 = vmatmul.bf16.gmra.mxu0 %v1704
        %v1733 = vpop.f32.mrf.mxu0
        %v1734 = vadd.f32 %v1692, %v1733
        %v1735 = vpop.f32.mrf.mxu0
        %v1736 = vadd.f32 %v1692, %v1735
        %1737 = vdwg.mxu0
        %v1738 = vmax.f32 %v1719, 0.0
        %v1739 = vmax.f32 %v1721, 0.0
        %v1740 = vmax.f32 %v1724, 0.0
        %v1741 = vmax.f32 %v1726, 0.0
        %v1742 = vmax.f32 %v1729, 0.0
        %v1743 = vmax.f32 %v1731, 0.0
        %v1744 = vmax.f32 %v1734, 0.0
        %v1745 = vmax.f32 %v1736, 0.0
        %v1746 = vadd.f32 %v1119, %v1738
        %v1747 = vadd.f32 %v1120, %v1739
        %v1748 = vadd.f32 %v1121, %v1740
        %v1749 = vadd.f32 %v1122, %v1741
        %v1750 = vadd.f32 %v1123, %v1742
        %v1751 = vadd.f32 %v1124, %v1743
        %v1752 = vadd.f32 %v1125, %v1744
        %v1753 = vadd.f32 %v1126, %v1745
        %v1754 = vpack.c.bf16 %v1747, %v1746
        %v1755 = vpack.c.bf16 %v1749, %v1748
        %v1756 = vpack.c.bf16 %v1751, %v1750
        %v1757 = vpack.c.bf16 %v1753, %v1752
        %v1758 = vld [vmem:[%s13] sm:$0xf]
        %v1759 = vld [vmem:[%s13 + $0x4] sm:$0xf]
        %v1760 = vld [vmem:[%s14] sm:$0x1]
        %v1762 = vperm.slane %v1760, 0
        %v1766 = vunpack.c.l.b16 %v1758
        %v1767 = vunpack.c.l.b16 %v1759
        %v1768 = vpack.c.b16 %v1767, %v1766
        %vm1770 = vcmask 130048
        %v1772 = vsel %vm1770, %v1754, 0
        %v1775 = vsel %vm1770, %v1755, 0
        %v1778 = vsel %vm1770, %v1756, 0
        %v1781 = vsel %vm1770, %v1757, 0
        %1783 = vmatpush.bf16.msra.mxu0 0
        %1784 = vmatpush.bf16.msra.mxu0 0
        %1785 = vmatpush.bf16.msra.mxu0 0
        %1786 = vmatpush.bf16.msra.mxu0 0
        %1787 = vmatpush.bf16.msra.mxu0 0
        %1788 = vmatpush.bf16.msra.mxu0 0
        %1789 = vmatpush.bf16.msra.mxu0 0
        %1790 = vmatpush.bf16.msra.mxu0 %v1768
        %1791 = vmatmul.bf16.gmra.mxu0 %v1772
        %v1792 = vpop.f32.mrf.mxu0
        %v1793 = vadd.f32 %v1762, %v1792
        %v1794 = vpop.f32.mrf.mxu0
        %v1795 = vadd.f32 %v1762, %v1794
        %1796 = vmatmul.bf16.gmra.mxu0 %v1775
        %v1797 = vpop.f32.mrf.mxu0
        %v1798 = vadd.f32 %v1762, %v1797
        %v1799 = vpop.f32.mrf.mxu0
        %v1800 = vadd.f32 %v1762, %v1799
        %1801 = vmatmul.bf16.gmra.mxu0 %v1778
        %v1802 = vpop.f32.mrf.mxu0
        %v1803 = vadd.f32 %v1762, %v1802
        %v1804 = vpop.f32.mrf.mxu0
        %v1805 = vadd.f32 %v1762, %v1804
        %1806 = vmatmul.bf16.gmra.mxu0 %v1781
        %v1807 = vpop.f32.mrf.mxu0
        %v1808 = vadd.f32 %v1762, %v1807
        %v1809 = vpop.f32.mrf.mxu0
        %v1810 = vadd.f32 %v1762, %v1809
        %1811 = vdwg.mxu0
        %v1812 = vmax.f32 %v1793, 0.0
        %v1813 = vmax.f32 %v1795, 0.0
        %v1814 = vmax.f32 %v1798, 0.0
        %v1815 = vmax.f32 %v1800, 0.0
        %v1816 = vmax.f32 %v1803, 0.0
        %v1817 = vmax.f32 %v1805, 0.0
        %v1818 = vmax.f32 %v1808, 0.0
        %v1819 = vmax.f32 %v1810, 0.0
        %v1820 = vld [vmem:[%s15] sm:$0x1]
        %v1821 = vld [vmem:[%s15 + $0x1] sm:$0x1]
        %v1822 = vld [vmem:[%s15 + $0x2] sm:$0x1]
        %v1823 = vld [vmem:[%s15 + $0x3] sm:$0x1]
        %v1824 = vld [vmem:[%s15 + $0x4] sm:$0x1]
        %v1825 = vld [vmem:[%s15 + $0x5] sm:$0x1]
        %v1826 = vld [vmem:[%s15 + $0x6] sm:$0x1]
        %v1827 = vld [vmem:[%s15 + $0x7] sm:$0x1]
        %v1828 = vld [vmem:[%s15 + $0x8] sm:$0x1]
        %v1829 = vld [vmem:[%s16] sm:$0x1]
        %v1831 = vperm.slane %v1829, 0
        %v1833 = vadd.f32 %v1831, 0.0
        %v1841 = vrot.slane %v1812, 7
        %v1842 = vrot.slane %v1813, 7
        %v1843 = vsel %vm766, %v1841, %v1842
        %v1844 = vrot.slane %v1814, 7
        %v1845 = vsel %vm766, %v1842, %v1844
        %v1846 = vrot.slane %v1815, 7
        %v1847 = vsel %vm766, %v1844, %v1846
        %v1848 = vrot.slane %v1816, 7
        %v1849 = vsel %vm766, %v1846, %v1848
        %v1850 = vrot.slane %v1817, 7
        %v1851 = vsel %vm766, %v1848, %v1850
        %v1852 = vrot.slane %v1818, 7
        %v1853 = vsel %vm766, %v1850, %v1852
        %v1861 = vsel %vm766, 0.0, %v1841
        %v1862 = vmul.f32 %v794, 0.0
        %v1863 = vmul.f32 %v1861, %v799
        %v1864 = vmul.f32 %v1843, %v804
        %v1865 = vmul.f32 %v1845, %v809
        %v1866 = vmul.f32 %v1847, %v814
        %v1867 = vmul.f32 %v1849, %v819
        %v1868 = vmul.f32 %v1851, %v824
        %v1869 = vmul.f32 %v1853, %v829
        %v1871 = vperm.slane %v1820, 0
        %v1873 = vmul.f32 %v1862, %v1871
        %v1874 = vmul.f32 %v1863, %v1871
        %v1875 = vmul.f32 %v1864, %v1871
        %v1876 = vmul.f32 %v1865, %v1871
        %v1877 = vmul.f32 %v1866, %v1871
        %v1878 = vmul.f32 %v1867, %v1871
        %v1879 = vmul.f32 %v1868, %v1871
        %v1880 = vmul.f32 %v1869, %v1871
        %v1881 = vadd.f32 %v1833, %v1873
        %v1882 = vadd.f32 %v1833, %v1874
        %v1883 = vadd.f32 %v1833, %v1875
        %v1884 = vadd.f32 %v1833, %v1876
        %v1885 = vadd.f32 %v1833, %v1877
        %v1886 = vadd.f32 %v1833, %v1878
        %v1887 = vadd.f32 %v1833, %v1879
        %v1888 = vadd.f32 %v1833, %v1880
        %v1890 = vperm.slane %v1821, 0
        %v1892 = vmul.f32 %v1890, 0.0
        %v1893 = vmul.f32 %v1812, %v1890
        %v1894 = vmul.f32 %v1813, %v1890
        %v1895 = vmul.f32 %v1814, %v1890
        %v1896 = vmul.f32 %v1815, %v1890
        %v1897 = vmul.f32 %v1816, %v1890
        %v1898 = vmul.f32 %v1817, %v1890
        %v1899 = vmul.f32 %v1818, %v1890
        %v1900 = vadd.f32 %v1881, %v1892
        %v1901 = vadd.f32 %v1882, %v1893
        %v1902 = vadd.f32 %v1883, %v1894
        %v1903 = vadd.f32 %v1884, %v1895
        %v1904 = vadd.f32 %v1885, %v1896
        %v1905 = vadd.f32 %v1886, %v1897
        %v1906 = vadd.f32 %v1887, %v1898
        %v1907 = vadd.f32 %v1888, %v1899
        %vm1909 = vcmask 1046528
        %v1910 = vrot.slane %v1812, 1
        %v1911 = vrot.slane %v1813, 1
        %v1912 = vsel %vm1909, %v1910, %v1911
        %v1913 = vrot.slane %v1814, 1
        %v1914 = vsel %vm1909, %v1911, %v1913
        %v1915 = vrot.slane %v1815, 1
        %v1916 = vsel %vm1909, %v1913, %v1915
        %v1917 = vrot.slane %v1816, 1
        %v1918 = vsel %vm1909, %v1915, %v1917
        %v1919 = vrot.slane %v1817, 1
        %v1920 = vsel %vm1909, %v1917, %v1919
        %v1921 = vrot.slane %v1818, 1
        %v1922 = vsel %vm1909, %v1919, %v1921
        %v1923 = vrot.slane %v1819, 1
        %v1924 = vsel %vm1909, %v1921, %v1923
        %v1933 = vsel %vm1909, 0.0, %v1910
        %1935 = vset.pattern.permute.xlu0 0
        %1936 = vperm.xlu0 %1935, %v669
        %v1937 = vpop.permute.xlu0 %1936
        %1940 = vset.pattern.permute.xlu0 0
        %1941 = vperm.xlu0 %1940, %v670
        %v1942 = vpop.permute.xlu0 %1941
        %1945 = vset.pattern.permute.xlu0 0
        %1946 = vperm.xlu0 %1945, %v671
        %v1947 = vpop.permute.xlu0 %1946
        %1950 = vset.pattern.permute.xlu0 0
        %1951 = vperm.xlu0 %1950, %v672
        %v1952 = vpop.permute.xlu0 %1951
        %1955 = vset.pattern.permute.xlu0 0
        %1956 = vperm.xlu0 %1955, %v673
        %v1957 = vpop.permute.xlu0 %1956
        %1960 = vset.pattern.permute.xlu0 0
        %1961 = vperm.xlu0 %1960, %v674
        %v1962 = vpop.permute.xlu0 %1961
        %1965 = vset.pattern.permute.xlu0 0
        %1966 = vperm.xlu0 %1965, %v675
        %v1967 = vpop.permute.xlu0 %1966
        %1970 = vset.pattern.permute.xlu0 0
        %1971 = vperm.xlu0 %1970, %v676
        %v1972 = vpop.permute.xlu0 %1971
        %v1974 = vmul.f32 %v1933, %v1937
        %v1975 = vmul.f32 %v1912, %v1942
        %v1976 = vmul.f32 %v1914, %v1947
        %v1977 = vmul.f32 %v1916, %v1952
        %v1978 = vmul.f32 %v1918, %v1957
        %v1979 = vmul.f32 %v1920, %v1962
        %v1980 = vmul.f32 %v1922, %v1967
        %v1981 = vmul.f32 %v1924, %v1972
        %v1983 = vperm.slane %v1822, 0
        %v1985 = vmul.f32 %v1974, %v1983
        %v1986 = vmul.f32 %v1975, %v1983
        %v1987 = vmul.f32 %v1976, %v1983
        %v1988 = vmul.f32 %v1977, %v1983
        %v1989 = vmul.f32 %v1978, %v1983
        %v1990 = vmul.f32 %v1979, %v1983
        %v1991 = vmul.f32 %v1980, %v1983
        %v1992 = vmul.f32 %v1981, %v1983
        %v1993 = vadd.f32 %v1900, %v1985
        %v1994 = vadd.f32 %v1901, %v1986
        %v1995 = vadd.f32 %v1902, %v1987
        %v1996 = vadd.f32 %v1903, %v1988
        %v1997 = vadd.f32 %v1904, %v1989
        %v1998 = vadd.f32 %v1905, %v1990
        %v1999 = vadd.f32 %v1906, %v1991
        %v2000 = vadd.f32 %v1907, %v1992
        %v2001 = vrot.slane %v1819, 7
        %v2002 = vsel %vm766, %v1852, %v2001
        %v2004 = vmul.f32 %v1861, %v794
        %v2005 = vmul.f32 %v1843, %v799
        %v2006 = vmul.f32 %v1845, %v804
        %v2007 = vmul.f32 %v1847, %v809
        %v2008 = vmul.f32 %v1849, %v814
        %v2009 = vmul.f32 %v1851, %v819
        %v2010 = vmul.f32 %v1853, %v824
        %v2011 = vmul.f32 %v2002, %v829
        %v2013 = vperm.slane %v1823, 0
        %v2015 = vmul.f32 %v2004, %v2013
        %v2016 = vmul.f32 %v2005, %v2013
        %v2017 = vmul.f32 %v2006, %v2013
        %v2018 = vmul.f32 %v2007, %v2013
        %v2019 = vmul.f32 %v2008, %v2013
        %v2020 = vmul.f32 %v2009, %v2013
        %v2021 = vmul.f32 %v2010, %v2013
        %v2022 = vmul.f32 %v2011, %v2013
        %v2023 = vadd.f32 %v1993, %v2015
        %v2024 = vadd.f32 %v1994, %v2016
        %v2025 = vadd.f32 %v1995, %v2017
        %v2026 = vadd.f32 %v1996, %v2018
        %v2027 = vadd.f32 %v1997, %v2019
        %v2028 = vadd.f32 %v1998, %v2020
        %v2029 = vadd.f32 %v1999, %v2021
        %v2030 = vadd.f32 %v2000, %v2022
        %v2032 = vperm.slane %v1824, 0
        %v2034 = vmul.f32 %v1812, %v2032
        %v2035 = vmul.f32 %v1813, %v2032
        %v2036 = vmul.f32 %v1814, %v2032
        %v2037 = vmul.f32 %v1815, %v2032
        %v2038 = vmul.f32 %v1816, %v2032
        %v2039 = vmul.f32 %v1817, %v2032
        %v2040 = vmul.f32 %v1818, %v2032
        %v2041 = vmul.f32 %v1819, %v2032
        %v2042 = vadd.f32 %v2023, %v2034
        %v2043 = vadd.f32 %v2024, %v2035
        %v2044 = vadd.f32 %v2025, %v2036
        %v2045 = vadd.f32 %v2026, %v2037
        %v2046 = vadd.f32 %v2027, %v2038
        %v2047 = vadd.f32 %v2028, %v2039
        %v2048 = vadd.f32 %v2029, %v2040
        %v2049 = vadd.f32 %v2030, %v2041
        %v2051 = vsel %vm1909, %v1923, 0.0
        %v2052 = vmul.f32 %v1912, %v1937
        %v2053 = vmul.f32 %v1914, %v1942
        %v2054 = vmul.f32 %v1916, %v1947
        %v2055 = vmul.f32 %v1918, %v1952
        %v2056 = vmul.f32 %v1920, %v1957
        %v2057 = vmul.f32 %v1922, %v1962
        %v2058 = vmul.f32 %v1924, %v1967
        %v2059 = vmul.f32 %v2051, %v1972
        %v2061 = vperm.slane %v1825, 0
        %v2063 = vmul.f32 %v2052, %v2061
        %v2064 = vmul.f32 %v2053, %v2061
        %v2065 = vmul.f32 %v2054, %v2061
        %v2066 = vmul.f32 %v2055, %v2061
        %v2067 = vmul.f32 %v2056, %v2061
        %v2068 = vmul.f32 %v2057, %v2061
        %v2069 = vmul.f32 %v2058, %v2061
        %v2070 = vmul.f32 %v2059, %v2061
        %v2071 = vadd.f32 %v2042, %v2063
        %v2072 = vadd.f32 %v2043, %v2064
        %v2073 = vadd.f32 %v2044, %v2065
        %v2074 = vadd.f32 %v2045, %v2066
        %v2075 = vadd.f32 %v2046, %v2067
        %v2076 = vadd.f32 %v2047, %v2068
        %v2077 = vadd.f32 %v2048, %v2069
        %v2078 = vadd.f32 %v2049, %v2070
        %v2080 = vsel %vm766, %v2001, 0.0
        %v2081 = vmul.f32 %v1843, %v794
        %v2082 = vmul.f32 %v1845, %v799
        %v2083 = vmul.f32 %v1847, %v804
        %v2084 = vmul.f32 %v1849, %v809
        %v2085 = vmul.f32 %v1851, %v814
        %v2086 = vmul.f32 %v1853, %v819
        %v2087 = vmul.f32 %v2002, %v824
        %v2088 = vmul.f32 %v2080, %v829
        %v2090 = vperm.slane %v1826, 0
        %v2092 = vmul.f32 %v2081, %v2090
        %v2093 = vmul.f32 %v2082, %v2090
        %v2094 = vmul.f32 %v2083, %v2090
        %v2095 = vmul.f32 %v2084, %v2090
        %v2096 = vmul.f32 %v2085, %v2090
        %v2097 = vmul.f32 %v2086, %v2090
        %v2098 = vmul.f32 %v2087, %v2090
        %v2099 = vmul.f32 %v2088, %v2090
        %v2100 = vadd.f32 %v2071, %v2092
        %v2101 = vadd.f32 %v2072, %v2093
        %v2102 = vadd.f32 %v2073, %v2094
        %v2103 = vadd.f32 %v2074, %v2095
        %v2104 = vadd.f32 %v2075, %v2096
        %v2105 = vadd.f32 %v2076, %v2097
        %v2106 = vadd.f32 %v2077, %v2098
        %v2107 = vadd.f32 %v2078, %v2099
        %v2109 = vperm.slane %v1827, 0
        %v2111 = vmul.f32 %v1813, %v2109
        %v2112 = vmul.f32 %v1814, %v2109
        %v2113 = vmul.f32 %v1815, %v2109
        %v2114 = vmul.f32 %v1816, %v2109
        %v2115 = vmul.f32 %v1817, %v2109
        %v2116 = vmul.f32 %v1818, %v2109
        %v2117 = vmul.f32 %v1819, %v2109
        %v2118 = vmul.f32 %v2109, 0.0
        %v2119 = vadd.f32 %v2100, %v2111
        %v2120 = vadd.f32 %v2101, %v2112
        %v2121 = vadd.f32 %v2102, %v2113
        %v2122 = vadd.f32 %v2103, %v2114
        %v2123 = vadd.f32 %v2104, %v2115
        %v2124 = vadd.f32 %v2105, %v2116
        %v2125 = vadd.f32 %v2106, %v2117
        %v2126 = vadd.f32 %v2107, %v2118
        %v2127 = vmul.f32 %v1914, %v1937
        %v2128 = vmul.f32 %v1916, %v1942
        %v2129 = vmul.f32 %v1918, %v1947
        %v2130 = vmul.f32 %v1920, %v1952
        %v2131 = vmul.f32 %v1922, %v1957
        %v2132 = vmul.f32 %v1924, %v1962
        %v2133 = vmul.f32 %v2051, %v1967
        %v2134 = vmul.f32 %v1972, 0.0
        %v2136 = vperm.slane %v1828, 0
        %v2138 = vmul.f32 %v2127, %v2136
        %v2139 = vmul.f32 %v2128, %v2136
        %v2140 = vmul.f32 %v2129, %v2136
        %v2141 = vmul.f32 %v2130, %v2136
        %v2142 = vmul.f32 %v2131, %v2136
        %v2143 = vmul.f32 %v2132, %v2136
        %v2144 = vmul.f32 %v2133, %v2136
        %v2145 = vmul.f32 %v2134, %v2136
        %v2146 = vadd.f32 %v2119, %v2138
        %v2147 = vadd.f32 %v2120, %v2139
        %v2148 = vadd.f32 %v2121, %v2140
        %v2149 = vadd.f32 %v2122, %v2141
        %v2150 = vadd.f32 %v2123, %v2142
        %v2151 = vadd.f32 %v2124, %v2143
        %v2152 = vadd.f32 %v2125, %v2144
        %v2153 = vadd.f32 %v2126, %v2145
        %v2154 = vpack.c.bf16 %v2147, %v2146
        %v2155 = vpack.c.bf16 %v2149, %v2148
        %v2156 = vpack.c.bf16 %v2151, %v2150
        %v2157 = vpack.c.bf16 %v2153, %v2152
        %v2158 = vld [vmem:[%s17] sm:$0xf]
        %v2159 = vld [vmem:[%s18] sm:$0x1]
        %v2161 = vperm.slane %v2159, 0
        %v2164 = vsel %vm1073, %v2154, 0
        %v2167 = vsel %vm1073, %v2155, 0
        %v2170 = vsel %vm1073, %v2156, 0
        %v2173 = vsel %vm1073, %v2157, 0
        %v2176 = vsel %vm1086, %v2158, 0
        %2178 = vmatpush.bf16.msra.mxu0 0
        %2179 = vmatpush.bf16.msra.mxu0 0
        %2180 = vmatpush.bf16.msra.mxu0 0
        %2181 = vmatpush.bf16.msra.mxu0 0
        %2182 = vmatpush.bf16.msra.mxu0 0
        %2183 = vmatpush.bf16.msra.mxu0 0
        %2184 = vmatpush.bf16.msra.mxu0 0
        %2185 = vmatpush.bf16.msra.mxu0 %v2176
        %2186 = vmatmul.bf16.gmra.mxu0 %v2164
        %v2187 = vpop.f32.mrf.mxu0
        %v2188 = vadd.f32 %v2161, %v2187
        %v2189 = vpop.f32.mrf.mxu0
        %v2190 = vadd.f32 %v2161, %v2189
        %2191 = vmatmul.bf16.gmra.mxu0 %v2167
        %v2192 = vpop.f32.mrf.mxu0
        %v2193 = vadd.f32 %v2161, %v2192
        %v2194 = vpop.f32.mrf.mxu0
        %v2195 = vadd.f32 %v2161, %v2194
        %2196 = vmatmul.bf16.gmra.mxu0 %v2170
        %v2197 = vpop.f32.mrf.mxu0
        %v2198 = vadd.f32 %v2161, %v2197
        %v2199 = vpop.f32.mrf.mxu0
        %v2200 = vadd.f32 %v2161, %v2199
        %2201 = vmatmul.bf16.gmra.mxu0 %v2173
        %v2202 = vpop.f32.mrf.mxu0
        %v2203 = vadd.f32 %v2161, %v2202
        %v2204 = vpop.f32.mrf.mxu0
        %v2205 = vadd.f32 %v2161, %v2204
        %2206 = vdwg.mxu0
        %v2207 = vmax.f32 %v2188, 0.0
        %v2208 = vmax.f32 %v2190, 0.0
        %v2209 = vmax.f32 %v2193, 0.0
        %v2210 = vmax.f32 %v2195, 0.0
        %v2211 = vmax.f32 %v2198, 0.0
        %v2212 = vmax.f32 %v2200, 0.0
        %v2213 = vmax.f32 %v2203, 0.0
        %v2214 = vmax.f32 %v2205, 0.0
        %v2215 = vld [vmem:[%s19] sm:$0x1]
        %v2217 = vperm.slane %v2215, 0
        %v2219 = vmul.f32 %v1746, %v2217
        %v2220 = vmul.f32 %v1747, %v2217
        %v2221 = vmul.f32 %v1748, %v2217
        %v2222 = vmul.f32 %v1749, %v2217
        %v2223 = vmul.f32 %v1750, %v2217
        %v2224 = vmul.f32 %v1751, %v2217
        %v2225 = vmul.f32 %v1752, %v2217
        %v2226 = vmul.f32 %v1753, %v2217
        %v2227 = vadd.f32 %v2219, %v2207
        %v2228 = vadd.f32 %v2220, %v2208
        %v2229 = vadd.f32 %v2221, %v2209
        %v2230 = vadd.f32 %v2222, %v2210
        %v2231 = vadd.f32 %v2223, %v2211
        %v2232 = vadd.f32 %v2224, %v2212
        %v2233 = vadd.f32 %v2225, %v2213
        %v2234 = vadd.f32 %v2226, %v2214
        %v2235 = vpack.c.bf16 %v2227, %v2227
        %v2236 = vpack.c.bf16 %v2228, %v2228
        %v2237 = vpack.c.bf16 %v2229, %v2229
        %v2238 = vpack.c.bf16 %v2230, %v2230
        %v2239 = vpack.c.bf16 %v2231, %v2231
        %v2240 = vpack.c.bf16 %v2232, %v2232
        %v2241 = vpack.c.bf16 %v2233, %v2233
        %v2242 = vpack.c.bf16 %v2234, %v2234
        %vm2243 = vcmask 125952
        %2244 = vst.msk [vmem:[%s659] sm:$0xf] %vm2243, %v2235
        %2245 = vst.msk [vmem:[%s659 + $0x4] sm:$0xf] %vm2243, %v2236
        %2246 = vst.msk [vmem:[%s659 + $0x8] sm:$0xf] %vm2243, %v2237
        %2247 = vst.msk [vmem:[%s659 + $0xc] sm:$0xf] %vm2243, %v2238
        %2248 = vst.msk [vmem:[%s659 + $0x10] sm:$0xf] %vm2243, %v2239
        %2249 = vst.msk [vmem:[%s659 + $0x14] sm:$0xf] %vm2243, %v2240
        %2250 = vst.msk [vmem:[%s659 + $0x18] sm:$0xf] %vm2243, %v2241
        %2251 = vst.msk [vmem:[%s659 + $0x1c] sm:$0xf] %vm2243, %v2242
        %p2252 = scmp.lt.s32.totalorder %s33, 1
        %s2253 = scalar_select %p2252, %s33, 1
        %s2254 = smul.addr %s2253, 8
        %s2255 = smul.addr %s2254, 4
        %s2256 = scalar_lea.vmem %s20, %s2255
        // Predicated region
        $region109: #{_lambda_.5} parent=99 // pred_check
          %p2257 = pneg %p476
        $region110: #{_lambda_.5} parent=99 // pred_check_branch
          %2259 = sbr.rel (%p2257) target = $region112
        $region111: #{_lambda_.5} parent=99 // pred_region
          _
        $region112: #{_lambda_.5} parent=99 // pred_fallthru
          _
      $region100: #{_lambda_.5} parent=5 // pred_fallthru
        _
      %p2260 = scmp.le.s32.totalorder 2, %s28
      // Predicated region
      $region113: #{_lambda_.5} parent=5 // pred_check
        %p2261 = pneg %p2260
      $region114: #{_lambda_.5} parent=5 // pred_check_branch
        %2263 = sbr.rel (%p2261) target = $region116
      $region115: #{_lambda_.5} parent=5 // pred_region
        %s2264 = ssub.s32 %s28, 2
        // Predicated region
        $region117: #{_lambda_.5} parent=115 // pred_check
          %p2265 = pneg %p482
        $region118: #{_lambda_.5} parent=115 // pred_check_branch
          %2267 = sbr.rel (%p2265) target = $region120
        $region119: #{_lambda_.5} parent=115 // pred_region
          %p2268 = scmp.lt.s32.totalorder %s34, 1
          %s2269 = scalar_select %p2268, %s34, 1
          %s2270 = smul.addr %s2269, 8
          %s2271 = smul.addr %s2270, 4
          %s2272 = scalar_lea.vmem %s20, %s2271
        $region120: #{_lambda_.5} parent=115 // pred_fallthru
          _
      $region116: #{_lambda_.5} parent=5 // pred_fallthru
        _
    $region6: #{_lambda_.5} parent=1 // loop_footer
      %s32 = sadd.s32 1, %s28
    $region7: #{_lambda_.5} parent=1 // loop_footer_branch
      %27 = sbr.rel target = $region3
    $region8: #{_lambda_.5} parent=1 // loop_exit
      _
    %2273 = vsyncpa [#allocation3], 1
    %s2274 = scalar_lea.sflag [#allocation3], 1
    %2275 = vsyncpa %s2274, 1
    %2276 = vsyncpa [#allocation5], 1

// kernel: _lambda_.7
$region0: #{_lambda_.7}
  #allocation0 [shape = 'u32[]', space=smem, size = 0x4, offset = 0x4, fixed_abs, tag = 'smem constant byte address 0x4 - core index']
  #allocation1 [shape = 'u32[72,128]{1,0:T(1,128)}', space=vmem, size = 0x9000, scoped, tag = 'internal scratch']
  %s0 = inlined_call_operand.vmem [shape: bf16[2,4,4,32], index: 0, kind: input, shape index: {}]
  %s1 = inlined_call_operand.vmem [shape: f32[4,1], index: 1, kind: input, shape index: {}]
  %s2 = inlined_call_operand.vmem [shape: f32[4,1], index: 2, kind: input, shape index: {}]
  %s3 = inlined_call_operand.vmem [shape: f32[9,1,32], index: 3, kind: input, shape index: {}]
  %s4 = inlined_call_operand.hbm [shape: f32[1,32], index: 4, kind: input, shape index: {}]
  %s5 = inlined_call_operand.vmem [shape: bf16[32,64], index: 5, kind: input, shape index: {}]
  %s6 = inlined_call_operand.hbm [shape: f32[1,64], index: 6, kind: input, shape index: {}]
  %s7 = inlined_call_operand.vmem [shape: bf16[32,32], index: 7, kind: input, shape index: {}]
  %s8 = inlined_call_operand.hbm [shape: f32[1,32], index: 8, kind: input, shape index: {}]
  %s9 = inlined_call_operand.vmem [shape: f32[9,1,32], index: 9, kind: input, shape index: {}]
  %s10 = inlined_call_operand.vmem [shape: f32[1,32], index: 10, kind: input, shape index: {}]
  %s11 = inlined_call_operand.vmem [shape: bf16[32,64], index: 11, kind: input, shape index: {}]
  %s12 = inlined_call_operand.vmem [shape: f32[1,64], index: 12, kind: input, shape index: {}]
  %s13 = inlined_call_operand.vmem [shape: bf16[64,32], index: 13, kind: input, shape index: {}]
  %s14 = inlined_call_operand.vmem [shape: f32[1,32], index: 14, kind: input, shape index: {}]
  %s15 = inlined_call_operand.vmem [shape: f32[9,1,32], index: 15, kind: input, shape index: {}]
  %s16 = inlined_call_operand.vmem [shape: f32[1,32], index: 16, kind: input, shape index: {}]
  %s17 = inlined_call_operand.vmem [shape: bf16[32,64], index: 17, kind: input, shape index: {}]
  %s18 = inlined_call_operand.vmem [shape: f32[1,64], index: 18, kind: input, shape index: {}]
  %s19 = inlined_call_operand.vmem [shape: f32[1,64], index: 19, kind: input, shape index: {}]
  %s20 = inlined_call_operand.vmem [shape: bf16[64,128], index: 20, kind: input, shape index: {}]
  %s21 = inlined_call_operand.vmem [shape: f32[1,128], index: 21, kind: input, shape index: {}]
  %s22 = inlined_call_operand.vmem [shape: bf16[128,10], index: 22, kind: input, shape index: {}]
  %s23 = inlined_call_operand.vmem [shape: f32[1,10], index: 23, kind: input, shape index: {}]
  %s24 = inlined_call_operand.hbm [shape: f32[2,1,128], index: 24, kind: output, shape index: {0}]
  %s25 = inlined_call_operand.hbm [shape: f32[2,1,10], index: 25, kind: output, shape index: {1}]
  %26 = xla_tuple %s24, %s25
  %s27 = sld [smem:[#allocation0]]
  $region149: #{_lambda_.7} parent=0
    _
  %s29 = ssub.s32 1, %s27
  %s30 = scalar_select 0, %s29, %s27
  $region1: #{_lambda_.7} parent=0
    #allocation2 [shape = 'u8[512]{0}', space=vmem, size = 0x400, scoped, tag = 'input window, operand 4, single buffered']
    #allocation3 [shape = 's32[2]{0}', space=sflag, size = 0x8, scoped, tag = 'scoped memory for _lambda_.7']
    #allocation4 [shape = 's32[2]{0}', space=sflag, size = 0x8, scoped, tag = 'scoped memory for _lambda_.7']
    #allocation5 [shape = 'u8[512]{0}', space=vmem, size = 0x400, scoped, tag = 'input window, operand 6, single buffered']
    #allocation6 [shape = 's32[1]{0}', space=sflag, size = 0x4, scoped, tag = 'scoped memory for _lambda_.7']
    #allocation7 [shape = 'u8[512]{0}', space=vmem, size = 0x400, scoped, tag = 'input window, operand 8, single buffered']
    #allocation8 [shape = 'u8[1024]{0}', space=vmem, size = 0x400, scoped, tag = 'output window, operand 0']
    #allocation9 [shape = 'u8[1024]{0}', space=vmem, size = 0x400, scoped, tag = 'output window, operand 1']
    #allocation10 [shape = 's32[2]{0}', space=sflag, size = 0x8, scoped, tag = 'scoped memory for _lambda_.7']
    %31 = vsyncpa [#allocation3], 0
    %32 = vsyncpa [#allocation6], 0
    %33 = vsyncpa [#allocation4], 0
    %s34 = scalar_lea.sflag [#allocation4], 1
    %35 = vsyncpa %s34, 0
    %36 = vsyncpa [#allocation10], 0
    %s37 = scalar_lea.sflag [#allocation10], 1
    %38 = vsyncpa %s37, 0
    loop: start=0, step=1, limit=4
    $region2: #{_lambda_.7} parent=1 // loop_pre_header
      _
    $region3: #{_lambda_.7} parent=1 // loop_header
      %s40 = sphi 0, %s44
      %p41 = scmp.ge.s32.totalorder %s40, 4
      %s50 = sphi 0, %s52
      %s53 = sphi 0, %s50
      %s54 = sphi 0, %s53
      %s70 = sphi 0, %s54
      %s74 = sphi 0, %s74
      %s76 = sphi 0, %s74
      %s77 = sphi 0, %s76
      %s91 = sphi 0, %s77
      %s95 = sphi 0, %s95
      %s97 = sphi 0, %s95
      %s98 = sphi 0, %s97
      %s112 = sphi 0, %s98
      %s116 = sphi 0, %s116
      %s118 = sphi 0, %s116
      %s119 = sphi 0, %s118
      %s133 = sphi 0, %s119
      %s137 = sphi 0, %s137
      %s139 = sphi 0, %s137
      %s140 = sphi 0, %s139
      %s154 = sphi 0, %s140
      %s158 = sphi 0, %s158
      %s160 = sphi 0, %s158
      %s161 = sphi 0, %s160
      %s175 = sphi 0, %s161
      %s179 = sphi 0, %s179
      %s181 = sphi 0, %s179
      %s182 = sphi 0, %s181
      %s196 = sphi 0, %s182
      %s200 = sphi 0, %s200
      %s202 = sphi 0, %s200
      %s203 = sphi 0, %s202
      %s217 = sphi 0, %s203
      %s221 = sphi 0, %s221
      %s223 = sphi 0, %s221
      %s224 = sphi 0, %s223
      %s238 = sphi 0, %s224
      %s242 = sphi 0, %s242
      %s244 = sphi 0, %s242
      %s245 = sphi 0, %s244
      %s259 = sphi 0, %s245
      %s263 = sphi 0, %s263
      %s265 = sphi 0, %s263
      %s266 = sphi 0, %s265
      %s280 = sphi 0, %s266
      %s284 = sphi 0, %s284
      %s286 = sphi 0, %s284
      %s287 = sphi 0, %s286
      %s301 = sphi 0, %s287
      %s305 = sphi 0, %s305
      %s307 = sphi 0, %s305
      %s308 = sphi 0, %s307
      %s322 = sphi 0, %s308
      %s326 = sphi 0, %s326
      %s328 = sphi 0, %s326
      %s329 = sphi 0, %s328
      %s343 = sphi 0, %s329
      %s347 = sphi 0, %s347
      %s349 = sphi 0, %s347
      %s350 = sphi 0, %s349
      %s364 = sphi 0, %s350
      %s368 = sphi 0, %s368
      %s370 = sphi 0, %s368
      %s371 = sphi 0, %s370
      %s385 = sphi 0, %s371
      %s389 = sphi 0, %s389
      %s391 = sphi 0, %s389
      %s392 = sphi 0, %s391
      %s406 = sphi 0, %s392
      %s410 = sphi 0, %s410
      %s412 = sphi 0, %s410
      %s413 = sphi 0, %s412
      %s427 = sphi 0, %s413
      %s431 = sphi 0, %s431
      %s433 = sphi 0, %s431
      %s434 = sphi 0, %s433
      %s448 = sphi 0, %s434
      %s452 = sphi 0, %s452
      %s454 = sphi 0, %s452
      %s455 = sphi 0, %s454
      %s469 = sphi 0, %s455
      %s473 = sphi 0, %s473
      %s475 = sphi 0, %s473
      %s476 = sphi 0, %s475
      %s490 = sphi 0, %s476
      %s494 = sphi 0, %s494
      %s496 = sphi 0, %s494
      %s497 = sphi 0, %s496
      %s511 = sphi 0, %s497
      %s515 = sphi 0, %s515
      %s517 = sphi 0, %s515
      %s518 = sphi 0, %s517
      %s532 = sphi 0, %s518
      %s536 = sphi 0, %s536
      %s538 = sphi 0, %s536
      %s539 = sphi 0, %s538
      %s553 = sphi 0, %s539
      %s559 = sphi 0, %s561
      %s562 = sphi 0, %s559
      %s563 = sphi 0, %s562
      %s579 = sphi 0, %s563
      %s585 = sphi 0, %s587
      %s588 = sphi 0, %s585
      %s589 = sphi 0, %s588
      %s605 = sphi 0, %s589
    $region4: #{_lambda_.7} parent=1 // loop_header_branch
      %43 = sbr.rel (%p41) target = $region8
    $region5: #{_lambda_.7} parent=1 // loop_body
      %s45 = ssub.s32 %s40, 1
      %s46 = ssub.s32 %s40, 2
      %s47 = sadd.s32 %s40, 1
      %s48 = ssub.s32 %s40, %s47
      %p49 = scmp.eq.s32.totalorder %s48, 0
      %s51 = sadd.s32 %s50, 1
      %s52 = scalar_select %p49, %s50, %s51
      %p55 = pneg %p49
      %p56 = scmp.eq.s32.totalorder %s40, 1
      %p57 = por %p55, %p56
      %p58 = scmp.ne.s32.totalorder %s50, %s53
      %p59 = scmp.eq.s32.totalorder %s40, 0
      %p60 = por %p58, %p59
      %p61 = scmp.ne.s32.totalorder %s50, %s53
      %p62 = scmp.eq.s32.totalorder %s45, 1
      %p63 = por %p61, %p62
      %p64 = scmp.ne.s32.totalorder %s53, %s54
      %p65 = scmp.eq.s32.totalorder %s45, 0
      %p66 = por %p64, %p65
      %p67 = scmp.ne.s32.totalorder %s53, %s54
      %p68 = scmp.eq.s32.totalorder %s46, 1
      %p69 = por %p67, %p68
      %p71 = scmp.ne.s32.totalorder %s54, %s70
      %p72 = scmp.eq.s32.totalorder %s46, 0
      %p73 = por %p71, %p72
      %s75 = sadd.s32 %s74, 1
      %p78 = scmp.eq.s32.totalorder %s40, 1
      %p79 = scmp.ne.s32.totalorder %s74, %s76
      %p80 = scmp.eq.s32.totalorder %s40, 0
      %p81 = por %p79, %p80
      %p82 = scmp.ne.s32.totalorder %s74, %s76
      %p83 = scmp.eq.s32.totalorder %s45, 1
      %p84 = por %p82, %p83
      %p85 = scmp.ne.s32.totalorder %s76, %s77
      %p86 = scmp.eq.s32.totalorder %s45, 0
      %p87 = por %p85, %p86
      %p88 = scmp.ne.s32.totalorder %s76, %s77
      %p89 = scmp.eq.s32.totalorder %s46, 1
      %p90 = por %p88, %p89
      %p92 = scmp.ne.s32.totalorder %s77, %s91
      %p93 = scmp.eq.s32.totalorder %s46, 0
      %p94 = por %p92, %p93
      %s96 = sadd.s32 %s95, 1
      %p99 = scmp.eq.s32.totalorder %s40, 1
      %p100 = scmp.ne.s32.totalorder %s95, %s97
      %p101 = scmp.eq.s32.totalorder %s40, 0
      %p102 = por %p100, %p101
      %p103 = scmp.ne.s32.totalorder %s95, %s97
      %p104 = scmp.eq.s32.totalorder %s45, 1
      %p105 = por %p103, %p104
      %p106 = scmp.ne.s32.totalorder %s97, %s98
      %p107 = scmp.eq.s32.totalorder %s45, 0
      %p108 = por %p106, %p107
      %p109 = scmp.ne.s32.totalorder %s97, %s98
      %p110 = scmp.eq.s32.totalorder %s46, 1
      %p111 = por %p109, %p110
      %p113 = scmp.ne.s32.totalorder %s98, %s112
      %p114 = scmp.eq.s32.totalorder %s46, 0
      %p115 = por %p113, %p114
      %s117 = sadd.s32 %s116, 1
      %p120 = scmp.eq.s32.totalorder %s40, 1
      %p121 = scmp.ne.s32.totalorder %s116, %s118
      %p122 = scmp.eq.s32.totalorder %s40, 0
      %p123 = por %p121, %p122
      %p124 = scmp.ne.s32.totalorder %s116, %s118
      %p125 = scmp.eq.s32.totalorder %s45, 1
      %p126 = por %p124, %p125
      %p127 = scmp.ne.s32.totalorder %s118, %s119
      %p128 = scmp.eq.s32.totalorder %s45, 0
      %p129 = por %p127, %p128
      %p130 = scmp.ne.s32.totalorder %s118, %s119
      %p131 = scmp.eq.s32.totalorder %s46, 1
      %p132 = por %p130, %p131
      %p134 = scmp.ne.s32.totalorder %s119, %s133
      %p135 = scmp.eq.s32.totalorder %s46, 0
      %p136 = por %p134, %p135
      %s138 = sadd.s32 %s137, 1
      %p141 = scmp.eq.s32.totalorder %s40, 1
      %p142 = scmp.ne.s32.totalorder %s137, %s139
      %p143 = scmp.eq.s32.totalorder %s40, 0
      %p144 = por %p142, %p143
      %p145 = scmp.ne.s32.totalorder %s137, %s139
      %p146 = scmp.eq.s32.totalorder %s45, 1
      %p147 = por %p145, %p146
      %p148 = scmp.ne.s32.totalorder %s139, %s140
      %p149 = scmp.eq.s32.totalorder %s45, 0
      %p150 = por %p148, %p149
      %p151 = scmp.ne.s32.totalorder %s139, %s140
      %p152 = scmp.eq.s32.totalorder %s46, 1
      %p153 = por %p151, %p152
      %p155 = scmp.ne.s32.totalorder %s140, %s154
      %p156 = scmp.eq.s32.totalorder %s46, 0
      %p157 = por %p155, %p156
      %s159 = sadd.s32 %s158, 1
      %p162 = scmp.eq.s32.totalorder %s40, 1
      %p163 = scmp.ne.s32.totalorder %s158, %s160
      %p164 = scmp.eq.s32.totalorder %s40, 0
      %p165 = por %p163, %p164
      %p166 = scmp.ne.s32.totalorder %s158, %s160
      %p167 = scmp.eq.s32.totalorder %s45, 1
      %p168 = por %p166, %p167
      %p169 = scmp.ne.s32.totalorder %s160, %s161
      %p170 = scmp.eq.s32.totalorder %s45, 0
      %p171 = por %p169, %p170
      %p172 = scmp.ne.s32.totalorder %s160, %s161
      %p173 = scmp.eq.s32.totalorder %s46, 1
      %p174 = por %p172, %p173
      %p176 = scmp.ne.s32.totalorder %s161, %s175
      %p177 = scmp.eq.s32.totalorder %s46, 0
      %p178 = por %p176, %p177
      %s180 = sadd.s32 %s179, 1
      %p183 = scmp.eq.s32.totalorder %s40, 1
      %p184 = scmp.ne.s32.totalorder %s179, %s181
      %p185 = scmp.eq.s32.totalorder %s40, 0
      %p186 = por %p184, %p185
      %p187 = scmp.ne.s32.totalorder %s179, %s181
      %p188 = scmp.eq.s32.totalorder %s45, 1
      %p189 = por %p187, %p188
      %p190 = scmp.ne.s32.totalorder %s181, %s182
      %p191 = scmp.eq.s32.totalorder %s45, 0
      %p192 = por %p190, %p191
      %p193 = scmp.ne.s32.totalorder %s181, %s182
      %p194 = scmp.eq.s32.totalorder %s46, 1
      %p195 = por %p193, %p194
      %p197 = scmp.ne.s32.totalorder %s182, %s196
      %p198 = scmp.eq.s32.totalorder %s46, 0
      %p199 = por %p197, %p198
      %s201 = sadd.s32 %s200, 1
      %p204 = scmp.eq.s32.totalorder %s40, 1
      %p205 = scmp.ne.s32.totalorder %s200, %s202
      %p206 = scmp.eq.s32.totalorder %s40, 0
      %p207 = por %p205, %p206
      %p208 = scmp.ne.s32.totalorder %s200, %s202
      %p209 = scmp.eq.s32.totalorder %s45, 1
      %p210 = por %p208, %p209
      %p211 = scmp.ne.s32.totalorder %s202, %s203
      %p212 = scmp.eq.s32.totalorder %s45, 0
      %p213 = por %p211, %p212
      %p214 = scmp.ne.s32.totalorder %s202, %s203
      %p215 = scmp.eq.s32.totalorder %s46, 1
      %p216 = por %p214, %p215
      %p218 = scmp.ne.s32.totalorder %s203, %s217
      %p219 = scmp.eq.s32.totalorder %s46, 0
      %p220 = por %p218, %p219
      %s222 = sadd.s32 %s221, 1
      %p225 = scmp.eq.s32.totalorder %s40, 1
      %p226 = scmp.ne.s32.totalorder %s221, %s223
      %p227 = scmp.eq.s32.totalorder %s40, 0
      %p228 = por %p226, %p227
      %p229 = scmp.ne.s32.totalorder %s221, %s223
      %p230 = scmp.eq.s32.totalorder %s45, 1
      %p231 = por %p229, %p230
      %p232 = scmp.ne.s32.totalorder %s223, %s224
      %p233 = scmp.eq.s32.totalorder %s45, 0
      %p234 = por %p232, %p233
      %p235 = scmp.ne.s32.totalorder %s223, %s224
      %p236 = scmp.eq.s32.totalorder %s46, 1
      %p237 = por %p235, %p236
      %p239 = scmp.ne.s32.totalorder %s224, %s238
      %p240 = scmp.eq.s32.totalorder %s46, 0
      %p241 = por %p239, %p240
      %s243 = sadd.s32 %s242, 1
      %p246 = scmp.eq.s32.totalorder %s40, 1
      %p247 = scmp.ne.s32.totalorder %s242, %s244
      %p248 = scmp.eq.s32.totalorder %s40, 0
      %p249 = por %p247, %p248
      %p250 = scmp.ne.s32.totalorder %s242, %s244
      %p251 = scmp.eq.s32.totalorder %s45, 1
      %p252 = por %p250, %p251
      %p253 = scmp.ne.s32.totalorder %s244, %s245
      %p254 = scmp.eq.s32.totalorder %s45, 0
      %p255 = por %p253, %p254
      %p256 = scmp.ne.s32.totalorder %s244, %s245
      %p257 = scmp.eq.s32.totalorder %s46, 1
      %p258 = por %p256, %p257
      %p260 = scmp.ne.s32.totalorder %s245, %s259
      %p261 = scmp.eq.s32.totalorder %s46, 0
      %p262 = por %p260, %p261
      %s264 = sadd.s32 %s263, 1
      %p267 = scmp.eq.s32.totalorder %s40, 1
      %p268 = scmp.ne.s32.totalorder %s263, %s265
      %p269 = scmp.eq.s32.totalorder %s40, 0
      %p270 = por %p268, %p269
      %p271 = scmp.ne.s32.totalorder %s263, %s265
      %p272 = scmp.eq.s32.totalorder %s45, 1
      %p273 = por %p271, %p272
      %p274 = scmp.ne.s32.totalorder %s265, %s266
      %p275 = scmp.eq.s32.totalorder %s45, 0
      %p276 = por %p274, %p275
      %p277 = scmp.ne.s32.totalorder %s265, %s266
      %p278 = scmp.eq.s32.totalorder %s46, 1
      %p279 = por %p277, %p278
      %p281 = scmp.ne.s32.totalorder %s266, %s280
      %p282 = scmp.eq.s32.totalorder %s46, 0
      %p283 = por %p281, %p282
      %s285 = sadd.s32 %s284, 1
      %p288 = scmp.eq.s32.totalorder %s40, 1
      %p289 = scmp.ne.s32.totalorder %s284, %s286
      %p290 = scmp.eq.s32.totalorder %s40, 0
      %p291 = por %p289, %p290
      %p292 = scmp.ne.s32.totalorder %s284, %s286
      %p293 = scmp.eq.s32.totalorder %s45, 1
      %p294 = por %p292, %p293
      %p295 = scmp.ne.s32.totalorder %s286, %s287
      %p296 = scmp.eq.s32.totalorder %s45, 0
      %p297 = por %p295, %p296
      %p298 = scmp.ne.s32.totalorder %s286, %s287
      %p299 = scmp.eq.s32.totalorder %s46, 1
      %p300 = por %p298, %p299
      %p302 = scmp.ne.s32.totalorder %s287, %s301
      %p303 = scmp.eq.s32.totalorder %s46, 0
      %p304 = por %p302, %p303
      %s306 = sadd.s32 %s305, 1
      %p309 = scmp.eq.s32.totalorder %s40, 1
      %p310 = scmp.ne.s32.totalorder %s305, %s307
      %p311 = scmp.eq.s32.totalorder %s40, 0
      %p312 = por %p310, %p311
      %p313 = scmp.ne.s32.totalorder %s305, %s307
      %p314 = scmp.eq.s32.totalorder %s45, 1
      %p315 = por %p313, %p314
      %p316 = scmp.ne.s32.totalorder %s307, %s308
      %p317 = scmp.eq.s32.totalorder %s45, 0
      %p318 = por %p316, %p317
      %p319 = scmp.ne.s32.totalorder %s307, %s308
      %p320 = scmp.eq.s32.totalorder %s46, 1
      %p321 = por %p319, %p320
      %p323 = scmp.ne.s32.totalorder %s308, %s322
      %p324 = scmp.eq.s32.totalorder %s46, 0
      %p325 = por %p323, %p324
      %s327 = sadd.s32 %s326, 1
      %p330 = scmp.eq.s32.totalorder %s40, 1
      %p331 = scmp.ne.s32.totalorder %s326, %s328
      %p332 = scmp.eq.s32.totalorder %s40, 0
      %p333 = por %p331, %p332
      %p334 = scmp.ne.s32.totalorder %s326, %s328
      %p335 = scmp.eq.s32.totalorder %s45, 1
      %p336 = por %p334, %p335
      %p337 = scmp.ne.s32.totalorder %s328, %s329
      %p338 = scmp.eq.s32.totalorder %s45, 0
      %p339 = por %p337, %p338
      %p340 = scmp.ne.s32.totalorder %s328, %s329
      %p341 = scmp.eq.s32.totalorder %s46, 1
      %p342 = por %p340, %p341
      %p344 = scmp.ne.s32.totalorder %s329, %s343
      %p345 = scmp.eq.s32.totalorder %s46, 0
      %p346 = por %p344, %p345
      %s348 = sadd.s32 %s347, 1
      %p351 = scmp.eq.s32.totalorder %s40, 1
      %p352 = scmp.ne.s32.totalorder %s347, %s349
      %p353 = scmp.eq.s32.totalorder %s40, 0
      %p354 = por %p352, %p353
      %p355 = scmp.ne.s32.totalorder %s347, %s349
      %p356 = scmp.eq.s32.totalorder %s45, 1
      %p357 = por %p355, %p356
      %p358 = scmp.ne.s32.totalorder %s349, %s350
      %p359 = scmp.eq.s32.totalorder %s45, 0
      %p360 = por %p358, %p359
      %p361 = scmp.ne.s32.totalorder %s349, %s350
      %p362 = scmp.eq.s32.totalorder %s46, 1
      %p363 = por %p361, %p362
      %p365 = scmp.ne.s32.totalorder %s350, %s364
      %p366 = scmp.eq.s32.totalorder %s46, 0
      %p367 = por %p365, %p366
      %s369 = sadd.s32 %s368, 1
      %p372 = scmp.eq.s32.totalorder %s40, 1
      %p373 = scmp.ne.s32.totalorder %s368, %s370
      %p374 = scmp.eq.s32.totalorder %s40, 0
      %p375 = por %p373, %p374
      %p376 = scmp.ne.s32.totalorder %s368, %s370
      %p377 = scmp.eq.s32.totalorder %s45, 1
      %p378 = por %p376, %p377
      %p379 = scmp.ne.s32.totalorder %s370, %s371
      %p380 = scmp.eq.s32.totalorder %s45, 0
      %p381 = por %p379, %p380
      %p382 = scmp.ne.s32.totalorder %s370, %s371
      %p383 = scmp.eq.s32.totalorder %s46, 1
      %p384 = por %p382, %p383
      %p386 = scmp.ne.s32.totalorder %s371, %s385
      %p387 = scmp.eq.s32.totalorder %s46, 0
      %p388 = por %p386, %p387
      %s390 = sadd.s32 %s389, 1
      %p393 = scmp.eq.s32.totalorder %s40, 1
      %p394 = scmp.ne.s32.totalorder %s389, %s391
      %p395 = scmp.eq.s32.totalorder %s40, 0
      %p396 = por %p394, %p395
      %p397 = scmp.ne.s32.totalorder %s389, %s391
      %p398 = scmp.eq.s32.totalorder %s45, 1
      %p399 = por %p397, %p398
      %p400 = scmp.ne.s32.totalorder %s391, %s392
      %p401 = scmp.eq.s32.totalorder %s45, 0
      %p402 = por %p400, %p401
      %p403 = scmp.ne.s32.totalorder %s391, %s392
      %p404 = scmp.eq.s32.totalorder %s46, 1
      %p405 = por %p403, %p404
      %p407 = scmp.ne.s32.totalorder %s392, %s406
      %p408 = scmp.eq.s32.totalorder %s46, 0
      %p409 = por %p407, %p408
      %s411 = sadd.s32 %s410, 1
      %p414 = scmp.eq.s32.totalorder %s40, 1
      %p415 = scmp.ne.s32.totalorder %s410, %s412
      %p416 = scmp.eq.s32.totalorder %s40, 0
      %p417 = por %p415, %p416
      %p418 = scmp.ne.s32.totalorder %s410, %s412
      %p419 = scmp.eq.s32.totalorder %s45, 1
      %p420 = por %p418, %p419
      %p421 = scmp.ne.s32.totalorder %s412, %s413
      %p422 = scmp.eq.s32.totalorder %s45, 0
      %p423 = por %p421, %p422
      %p424 = scmp.ne.s32.totalorder %s412, %s413
      %p425 = scmp.eq.s32.totalorder %s46, 1
      %p426 = por %p424, %p425
      %p428 = scmp.ne.s32.totalorder %s413, %s427
      %p429 = scmp.eq.s32.totalorder %s46, 0
      %p430 = por %p428, %p429
      %s432 = sadd.s32 %s431, 1
      %p435 = scmp.eq.s32.totalorder %s40, 1
      %p436 = scmp.ne.s32.totalorder %s431, %s433
      %p437 = scmp.eq.s32.totalorder %s40, 0
      %p438 = por %p436, %p437
      %p439 = scmp.ne.s32.totalorder %s431, %s433
      %p440 = scmp.eq.s32.totalorder %s45, 1
      %p441 = por %p439, %p440
      %p442 = scmp.ne.s32.totalorder %s433, %s434
      %p443 = scmp.eq.s32.totalorder %s45, 0
      %p444 = por %p442, %p443
      %p445 = scmp.ne.s32.totalorder %s433, %s434
      %p446 = scmp.eq.s32.totalorder %s46, 1
      %p447 = por %p445, %p446
      %p449 = scmp.ne.s32.totalorder %s434, %s448
      %p450 = scmp.eq.s32.totalorder %s46, 0
      %p451 = por %p449, %p450
      %s453 = sadd.s32 %s452, 1
      %p456 = scmp.eq.s32.totalorder %s40, 1
      %p457 = scmp.ne.s32.totalorder %s452, %s454
      %p458 = scmp.eq.s32.totalorder %s40, 0
      %p459 = por %p457, %p458
      %p460 = scmp.ne.s32.totalorder %s452, %s454
      %p461 = scmp.eq.s32.totalorder %s45, 1
      %p462 = por %p460, %p461
      %p463 = scmp.ne.s32.totalorder %s454, %s455
      %p464 = scmp.eq.s32.totalorder %s45, 0
      %p465 = por %p463, %p464
      %p466 = scmp.ne.s32.totalorder %s454, %s455
      %p467 = scmp.eq.s32.totalorder %s46, 1
      %p468 = por %p466, %p467
      %p470 = scmp.ne.s32.totalorder %s455, %s469
      %p471 = scmp.eq.s32.totalorder %s46, 0
      %p472 = por %p470, %p471
      %s474 = sadd.s32 %s473, 1
      %p477 = scmp.eq.s32.totalorder %s40, 1
      %p478 = scmp.ne.s32.totalorder %s473, %s475
      %p479 = scmp.eq.s32.totalorder %s40, 0
      %p480 = por %p478, %p479
      %p481 = scmp.ne.s32.totalorder %s473, %s475
      %p482 = scmp.eq.s32.totalorder %s45, 1
      %p483 = por %p481, %p482
      %p484 = scmp.ne.s32.totalorder %s475, %s476
      %p485 = scmp.eq.s32.totalorder %s45, 0
      %p486 = por %p484, %p485
      %p487 = scmp.ne.s32.totalorder %s475, %s476
      %p488 = scmp.eq.s32.totalorder %s46, 1
      %p489 = por %p487, %p488
      %p491 = scmp.ne.s32.totalorder %s476, %s490
      %p492 = scmp.eq.s32.totalorder %s46, 0
      %p493 = por %p491, %p492
      %s495 = sadd.s32 %s494, 1
      %p498 = scmp.eq.s32.totalorder %s40, 1
      %p499 = scmp.ne.s32.totalorder %s494, %s496
      %p500 = scmp.eq.s32.totalorder %s40, 0
      %p501 = por %p499, %p500
      %p502 = scmp.ne.s32.totalorder %s494, %s496
      %p503 = scmp.eq.s32.totalorder %s45, 1
      %p504 = por %p502, %p503
      %p505 = scmp.ne.s32.totalorder %s496, %s497
      %p506 = scmp.eq.s32.totalorder %s45, 0
      %p507 = por %p505, %p506
      %p508 = scmp.ne.s32.totalorder %s496, %s497
      %p509 = scmp.eq.s32.totalorder %s46, 1
      %p510 = por %p508, %p509
      %p512 = scmp.ne.s32.totalorder %s497, %s511
      %p513 = scmp.eq.s32.totalorder %s46, 0
      %p514 = por %p512, %p513
      %s516 = sadd.s32 %s515, 1
      %p519 = scmp.eq.s32.totalorder %s40, 1
      %p520 = scmp.ne.s32.totalorder %s515, %s517
      %p521 = scmp.eq.s32.totalorder %s40, 0
      %p522 = por %p520, %p521
      %p523 = scmp.ne.s32.totalorder %s515, %s517
      %p524 = scmp.eq.s32.totalorder %s45, 1
      %p525 = por %p523, %p524
      %p526 = scmp.ne.s32.totalorder %s517, %s518
      %p527 = scmp.eq.s32.totalorder %s45, 0
      %p528 = por %p526, %p527
      %p529 = scmp.ne.s32.totalorder %s517, %s518
      %p530 = scmp.eq.s32.totalorder %s46, 1
      %p531 = por %p529, %p530
      %p533 = scmp.ne.s32.totalorder %s518, %s532
      %p534 = scmp.eq.s32.totalorder %s46, 0
      %p535 = por %p533, %p534
      %s537 = sadd.s32 %s536, 1
      %p540 = scmp.eq.s32.totalorder %s40, 1
      %p541 = scmp.ne.s32.totalorder %s536, %s538
      %p542 = scmp.eq.s32.totalorder %s40, 0
      %p543 = por %p541, %p542
      %p544 = scmp.ne.s32.totalorder %s536, %s538
      %p545 = scmp.eq.s32.totalorder %s45, 1
      %p546 = por %p544, %p545
      %p547 = scmp.ne.s32.totalorder %s538, %s539
      %p548 = scmp.eq.s32.totalorder %s45, 0
      %p549 = por %p547, %p548
      %p550 = scmp.ne.s32.totalorder %s538, %s539
      %p551 = scmp.eq.s32.totalorder %s46, 1
      %p552 = por %p550, %p551
      %p554 = scmp.ne.s32.totalorder %s539, %s553
      %p555 = scmp.eq.s32.totalorder %s46, 0
      %p556 = por %p554, %p555
      %s557 = ssub.s32 %s40, %s47
      %p558 = scmp.eq.s32.totalorder %s557, 0
      %s560 = sadd.s32 %s559, 1
      %s561 = scalar_select %p558, %s559, %s560
      %p564 = pneg %p558
      %p565 = scmp.eq.s32.totalorder %s40, 1
      %p566 = por %p564, %p565
      %p567 = scmp.ne.s32.totalorder %s559, %s562
      %p568 = scmp.eq.s32.totalorder %s40, 0
      %p569 = por %p567, %p568
      %p570 = scmp.ne.s32.totalorder %s559, %s562
      %p571 = scmp.eq.s32.totalorder %s45, 1
      %p572 = por %p570, %p571
      %p573 = scmp.ne.s32.totalorder %s562, %s563
      %p574 = scmp.eq.s32.totalorder %s45, 0
      %p575 = por %p573, %p574
      %p576 = scmp.ne.s32.totalorder %s562, %s563
      %p577 = scmp.eq.s32.totalorder %s46, 1
      %p578 = por %p576, %p577
      %p580 = scmp.ne.s32.totalorder %s563, %s579
      %p581 = scmp.eq.s32.totalorder %s46, 0
      %p582 = por %p580, %p581
      %s583 = ssub.s32 %s40, %s47
      %p584 = scmp.eq.s32.totalorder %s583, 0
      %s586 = sadd.s32 %s585, 1
      %s587 = scalar_select %p584, %s585, %s586
      %p590 = pneg %p584
      %p591 = scmp.eq.s32.totalorder %s40, 1
      %p592 = por %p590, %p591
      %p593 = scmp.ne.s32.totalorder %s585, %s588
      %p594 = scmp.eq.s32.totalorder %s40, 0
      %p595 = por %p593, %p594
      %p596 = scmp.ne.s32.totalorder %s585, %s588
      %p597 = scmp.eq.s32.totalorder %s45, 1
      %p598 = por %p596, %p597
      %p599 = scmp.ne.s32.totalorder %s588, %s589
      %p600 = scmp.eq.s32.totalorder %s45, 0
      %p601 = por %p599, %p600
      %p602 = scmp.ne.s32.totalorder %s588, %s589
      %p603 = scmp.eq.s32.totalorder %s46, 1
      %p604 = por %p602, %p603
      %p606 = scmp.ne.s32.totalorder %s589, %s605
      %p607 = scmp.eq.s32.totalorder %s46, 0
      %p608 = por %p606, %p607
      %p609 = scmp.le.s32.totalorder 1, %s40
      %p610 = scmp.lt.s32.totalorder %s40, 3
      %p611 = pnand %p609, %p610
      %p612 = pneg %p611
      // Predicated region
      $region9: #{_lambda_.7} parent=5 // pred_check
        _
      $region10: #{_lambda_.7} parent=5 // pred_check_branch
        %614 = sbr.rel (%p611) target = $region12
      $region11: #{_lambda_.7} parent=5 // pred_region
        %s615 = ssub.s32 %s40, 1
        // Predicated region
        $region13: #{_lambda_.7} parent=11 // pred_check
          %p616 = pneg %p87
        $region14: #{_lambda_.7} parent=11 // pred_check_branch
          %618 = sbr.rel (%p616) target = $region16
        $region15: #{_lambda_.7} parent=11 // pred_region
          _
        $region16: #{_lambda_.7} parent=11 // pred_fallthru
          _
        // Predicated region
        $region17: #{_lambda_.7} parent=11 // pred_check
          %p619 = pneg %p108
        $region18: #{_lambda_.7} parent=11 // pred_check_branch
          %621 = sbr.rel (%p619) target = $region20
        $region19: #{_lambda_.7} parent=11 // pred_region
          _
        $region20: #{_lambda_.7} parent=11 // pred_fallthru
          _
        // Predicated region
        $region21: #{_lambda_.7} parent=11 // pred_check
          %p622 = pneg %p129
        $region22: #{_lambda_.7} parent=11 // pred_check_branch
          %624 = sbr.rel (%p622) target = $region24
        $region23: #{_lambda_.7} parent=11 // pred_region
          _
        $region24: #{_lambda_.7} parent=11 // pred_fallthru
          _
        // Predicated region
        $region25: #{_lambda_.7} parent=11 // pred_check
          %p625 = pneg %p150
        $region26: #{_lambda_.7} parent=11 // pred_check_branch
          %627 = sbr.rel (%p625) target = $region28
        $region27: #{_lambda_.7} parent=11 // pred_region
          %629 = vsyncadd [#allocation3], 0
          %s631 = sshll.u32 %s4, 4
          %s632 = int_to_ptr.hbm [resolvable:$true] %s631
          %s633 = sshll.u32 [#allocation2], 4
          %s634 = int_to_ptr.vmem [resolvable:$true] %s633
          %636 = dma.hbm_to_vmem [thread:$0]  %s632, 16, %s634, [#allocation3]
        $region28: #{_lambda_.7} parent=11 // pred_fallthru
          _
        // Predicated region
        $region29: #{_lambda_.7} parent=11 // pred_check
          %p637 = pneg %p171
        $region30: #{_lambda_.7} parent=11 // pred_check_branch
          %639 = sbr.rel (%p637) target = $region32
        $region31: #{_lambda_.7} parent=11 // pred_region
          _
        $region32: #{_lambda_.7} parent=11 // pred_fallthru
          _
        // Predicated region
        $region33: #{_lambda_.7} parent=11 // pred_check
          %p640 = pneg %p192
        $region34: #{_lambda_.7} parent=11 // pred_check_branch
          %642 = sbr.rel (%p640) target = $region36
        $region35: #{_lambda_.7} parent=11 // pred_region
          %644 = vsyncadd [#allocation6], 0
          %s646 = sshll.u32 %s6, 4
          %s647 = int_to_ptr.hbm [resolvable:$true] %s646
          %s648 = sshll.u32 [#allocation5], 4
          %s649 = int_to_ptr.vmem [resolvable:$true] %s648
          %651 = dma.hbm_to_vmem [thread:$0]  %s647, 16, %s649, [#allocation6]
        $region36: #{_lambda_.7} parent=11 // pred_fallthru
          _
        // Predicated region
        $region37: #{_lambda_.7} parent=11 // pred_check
          %p652 = pneg %p213
        $region38: #{_lambda_.7} parent=11 // pred_check_branch
          %654 = sbr.rel (%p652) target = $region40
        $region39: #{_lambda_.7} parent=11 // pred_region
          _
        $region40: #{_lambda_.7} parent=11 // pred_fallthru
          _
        // Predicated region
        $region41: #{_lambda_.7} parent=11 // pred_check
          %p655 = pneg %p234
        $region42: #{_lambda_.7} parent=11 // pred_check_branch
          %657 = sbr.rel (%p655) target = $region44
        $region43: #{_lambda_.7} parent=11 // pred_region
          %659 = vsyncadd [#allocation6], 0
          %s661 = sshll.u32 %s8, 4
          %s662 = int_to_ptr.hbm [resolvable:$true] %s661
          %s663 = sshll.u32 [#allocation7], 4
          %s664 = int_to_ptr.vmem [resolvable:$true] %s663
          %666 = dma.hbm_to_vmem [thread:$0]  %s662, 16, %s664, [#allocation6]
        $region44: #{_lambda_.7} parent=11 // pred_fallthru
          _
        // Predicated region
        $region45: #{_lambda_.7} parent=11 // pred_check
          %p667 = pneg %p255
        $region46: #{_lambda_.7} parent=11 // pred_check_branch
          %669 = sbr.rel (%p667) target = $region48
        $region47: #{_lambda_.7} parent=11 // pred_region
          _
        $region48: #{_lambda_.7} parent=11 // pred_fallthru
          _
        // Predicated region
        $region49: #{_lambda_.7} parent=11 // pred_check
          %p670 = pneg %p276
        $region50: #{_lambda_.7} parent=11 // pred_check_branch
          %672 = sbr.rel (%p670) target = $region52
        $region51: #{_lambda_.7} parent=11 // pred_region
          _
        $region52: #{_lambda_.7} parent=11 // pred_fallthru
          _
        // Predicated region
        $region53: #{_lambda_.7} parent=11 // pred_check
          %p673 = pneg %p297
        $region54: #{_lambda_.7} parent=11 // pred_check_branch
          %675 = sbr.rel (%p673) target = $region56
        $region55: #{_lambda_.7} parent=11 // pred_region
          _
        $region56: #{_lambda_.7} parent=11 // pred_fallthru
          _
        // Predicated region
        $region57: #{_lambda_.7} parent=11 // pred_check
          %p676 = pneg %p318
        $region58: #{_lambda_.7} parent=11 // pred_check_branch
          %678 = sbr.rel (%p676) target = $region60
        $region59: #{_lambda_.7} parent=11 // pred_region
          _
        $region60: #{_lambda_.7} parent=11 // pred_fallthru
          _
        // Predicated region
        $region61: #{_lambda_.7} parent=11 // pred_check
          %p679 = pneg %p339
        $region62: #{_lambda_.7} parent=11 // pred_check_branch
          %681 = sbr.rel (%p679) target = $region64
        $region63: #{_lambda_.7} parent=11 // pred_region
          _
        $region64: #{_lambda_.7} parent=11 // pred_fallthru
          _
        // Predicated region
        $region65: #{_lambda_.7} parent=11 // pred_check
          %p682 = pneg %p360
        $region66: #{_lambda_.7} parent=11 // pred_check_branch
          %684 = sbr.rel (%p682) target = $region68
        $region67: #{_lambda_.7} parent=11 // pred_region
          _
        $region68: #{_lambda_.7} parent=11 // pred_fallthru
          _
        // Predicated region
        $region69: #{_lambda_.7} parent=11 // pred_check
          %p685 = pneg %p381
        $region70: #{_lambda_.7} parent=11 // pred_check_branch
          %687 = sbr.rel (%p685) target = $region72
        $region71: #{_lambda_.7} parent=11 // pred_region
          _
        $region72: #{_lambda_.7} parent=11 // pred_fallthru
          _
        // Predicated region
        $region73: #{_lambda_.7} parent=11 // pred_check
          %p688 = pneg %p402
        $region74: #{_lambda_.7} parent=11 // pred_check_branch
          %690 = sbr.rel (%p688) target = $region76
        $region75: #{_lambda_.7} parent=11 // pred_region
          _
        $region76: #{_lambda_.7} parent=11 // pred_fallthru
          _
        // Predicated region
        $region77: #{_lambda_.7} parent=11 // pred_check
          %p691 = pneg %p423
        $region78: #{_lambda_.7} parent=11 // pred_check_branch
          %693 = sbr.rel (%p691) target = $region80
        $region79: #{_lambda_.7} parent=11 // pred_region
          _
        $region80: #{_lambda_.7} parent=11 // pred_fallthru
          _
        // Predicated region
        $region81: #{_lambda_.7} parent=11 // pred_check
          %p694 = pneg %p444
        $region82: #{_lambda_.7} parent=11 // pred_check_branch
          %696 = sbr.rel (%p694) target = $region84
        $region83: #{_lambda_.7} parent=11 // pred_region
          _
        $region84: #{_lambda_.7} parent=11 // pred_fallthru
          _
        // Predicated region
        $region85: #{_lambda_.7} parent=11 // pred_check
          %p697 = pneg %p465
        $region86: #{_lambda_.7} parent=11 // pred_check_branch
          %699 = sbr.rel (%p697) target = $region88
        $region87: #{_lambda_.7} parent=11 // pred_region
          _
        $region88: #{_lambda_.7} parent=11 // pred_fallthru
          _
        // Predicated region
        $region89: #{_lambda_.7} parent=11 // pred_check
          %p700 = pneg %p486
        $region90: #{_lambda_.7} parent=11 // pred_check_branch
          %702 = sbr.rel (%p700) target = $region92
        $region91: #{_lambda_.7} parent=11 // pred_region
          _
        $region92: #{_lambda_.7} parent=11 // pred_fallthru
          _
        // Predicated region
        $region93: #{_lambda_.7} parent=11 // pred_check
          %p703 = pneg %p507
        $region94: #{_lambda_.7} parent=11 // pred_check_branch
          %705 = sbr.rel (%p703) target = $region96
        $region95: #{_lambda_.7} parent=11 // pred_region
          _
        $region96: #{_lambda_.7} parent=11 // pred_fallthru
          _
        // Predicated region
        $region97: #{_lambda_.7} parent=11 // pred_check
          %p706 = pneg %p528
        $region98: #{_lambda_.7} parent=11 // pred_check_branch
          %708 = sbr.rel (%p706) target = $region100
        $region99: #{_lambda_.7} parent=11 // pred_region
          _
        $region100: #{_lambda_.7} parent=11 // pred_fallthru
          _
        // Predicated region
        $region101: #{_lambda_.7} parent=11 // pred_check
          %p709 = pneg %p549
        $region102: #{_lambda_.7} parent=11 // pred_check_branch
          %711 = sbr.rel (%p709) target = $region104
        $region103: #{_lambda_.7} parent=11 // pred_region
          _
        $region104: #{_lambda_.7} parent=11 // pred_fallthru
          _
      $region12: #{_lambda_.7} parent=5 // pred_fallthru
        _
      %p712 = scmp.lt.s32.totalorder %s40, 2
      // Predicated region
      $region105: #{_lambda_.7} parent=5 // pred_check
        %p713 = pneg %p712
      $region106: #{_lambda_.7} parent=5 // pred_check_branch
        %715 = sbr.rel (%p713) target = $region108
      $region107: #{_lambda_.7} parent=5 // pred_region
        // Predicated region
        $region109: #{_lambda_.7} parent=107 // pred_check
          %p716 = pneg %p60
        $region110: #{_lambda_.7} parent=107 // pred_check_branch
          %718 = sbr.rel (%p716) target = $region112
        $region111: #{_lambda_.7} parent=107 // pred_region
          %p719 = scmp.lt.s32.totalorder %s40, 1
          %s720 = scalar_select %p719, %s40, 1
          %s721 = smul.addr %s720, 4
          %s722 = smul.addr %s721, 2
          %s723 = scalar_lea.vmem %s0, %s722
        $region112: #{_lambda_.7} parent=107 // pred_fallthru
          _
      $region108: #{_lambda_.7} parent=5 // pred_fallthru
        _
      %p724 = scmp.le.s32.totalorder 1, %s40
      %p725 = scmp.lt.s32.totalorder %s40, 3
      %p726 = pnand %p724, %p725
      %p727 = pneg %p726
      // Predicated region
      $region113: #{_lambda_.7} parent=5 // pred_check
        _
      $region114: #{_lambda_.7} parent=5 // pred_check_branch
        %729 = sbr.rel (%p726) target = $region116
      $region115: #{_lambda_.7} parent=5 // pred_region
        %s730 = ssub.s32 %s40, 1
        // Predicated region
        $region117: #{_lambda_.7} parent=115 // pred_check
          %p731 = pneg %p150
        $region118: #{_lambda_.7} parent=115 // pred_check_branch
          %733 = sbr.rel (%p731) target = $region120
        $region119: #{_lambda_.7} parent=115 // pred_region
          %735 = dma.done [#allocation3], 16
        $region120: #{_lambda_.7} parent=115 // pred_fallthru
          _
        // Predicated region
        $region121: #{_lambda_.7} parent=115 // pred_check
          %p736 = pneg %p192
        $region122: #{_lambda_.7} parent=115 // pred_check_branch
          %738 = sbr.rel (%p736) target = $region124
        $region123: #{_lambda_.7} parent=115 // pred_region
          %740 = dma.done [#allocation6], 16
        $region124: #{_lambda_.7} parent=115 // pred_fallthru
          _
        // Predicated region
        $region125: #{_lambda_.7} parent=115 // pred_check
          %p741 = pneg %p234
        $region126: #{_lambda_.7} parent=115 // pred_check_branch
          %743 = sbr.rel (%p741) target = $region128
        $region127: #{_lambda_.7} parent=115 // pred_region
          %745 = dma.done [#allocation6], 16
        $region128: #{_lambda_.7} parent=115 // pred_fallthru
          _
        %p746 = scmp.lt.s32.totalorder %s45, 1
        %s747 = scalar_select %p746, %s45, 1
        %s748 = smul.addr %s747, 4
        %s749 = smul.addr %s748, 2
        %s750 = scalar_lea.vmem %s0, %s749
        %p751 = pneg %p66
        %p752 = pneg %p63
        %p753 = pneg %p87
        %p754 = pneg %p84
        %p755 = pneg %p108
        %p756 = pneg %p105
        %p757 = pneg %p129
        %p758 = pneg %p126
        %p759 = pneg %p150
        %p760 = pneg %p147
        %p761 = pneg %p171
        %p762 = pneg %p168
        %p763 = pneg %p192
        %p764 = pneg %p189
        %p765 = pneg %p213
        %p766 = pneg %p210
        %p767 = pneg %p234
        %p768 = pneg %p231
        %p769 = pneg %p255
        %p770 = pneg %p252
        %p771 = pneg %p276
        %p772 = pneg %p273
        %p773 = pneg %p297
        %p774 = pneg %p294
        %p775 = pneg %p318
        %p776 = pneg %p315
        %p777 = pneg %p339
        %p778 = pneg %p336
        %p779 = pneg %p360
        %p780 = pneg %p357
        %p781 = pneg %p381
        %p782 = pneg %p378
        %p783 = pneg %p402
        %p784 = pneg %p399
        %p785 = pneg %p423
        %p786 = pneg %p420
        %p787 = pneg %p444
        %p788 = pneg %p441
        %p789 = pneg %p465
        %p790 = pneg %p462
        %p791 = pneg %p486
        %p792 = pneg %p483
        %p793 = pneg %p507
        %p794 = pneg %p504
        %p795 = pneg %p528
        %p796 = pneg %p525
        %p797 = pneg %p549
        %p798 = pneg %p546
        %p799 = pneg %p575
        %p800 = pneg %p572
        %s801 = sand.u32 %s562, 1
        %s802 = scalar_lea.sflag [#allocation4], %s801
        %s803 = sand.u32 %s562, 1
        %s804 = scalar_lea.vmem [#allocation8], %s803
        %p805 = pneg %p601
        %p806 = pneg %p598
        %s807 = sand.u32 %s588, 1
        %s808 = scalar_lea.sflag [#allocation10], %s807
        %s809 = sand.u32 %s588, 1
        %s810 = scalar_lea.vmem [#allocation9], %s809
        %p811 = scmp.lt.s32.totalorder %s45, 1
        %s812 = scalar_select %p811, %s45, 1
        %s813 = smul.addr %s812, 4
        %s814 = smul.addr %s813, 2
        %s815 = scalar_lea.vmem %s0, %s814
        %v817 = vld [vmem:[%s1] sm:$0xf]
        %v818 = vld [vmem:[%s2] sm:$0xf]
        %v819 = vld [vmem:[%s815] sm:$0x3]
        %v820 = vunpack.c.l.bf16 %v819
        %s821 = scalar_lea.vmem %s815, 2
        %v822 = vld [vmem:[%s821] sm:$0x3]
        %v823 = vunpack.c.l.bf16 %v822
        %s824 = scalar_lea.vmem %s815, 4
        %v825 = vld [vmem:[%s824] sm:$0x3]
        %v826 = vunpack.c.l.bf16 %v825
        %s827 = scalar_lea.vmem %s815, 6
        %v828 = vld [vmem:[%s827] sm:$0x3]
        %v829 = vunpack.c.l.bf16 %v828
        %v830 = vld [vmem:[%s3] sm:$0x1]
        %v831 = vld [vmem:[%s3 + $0x1] sm:$0x1]
        %v832 = vld [vmem:[%s3 + $0x2] sm:$0x1]
        %v833 = vld [vmem:[%s3 + $0x3] sm:$0x1]
        %v834 = vld [vmem:[%s3 + $0x4] sm:$0x1]
        %v835 = vld [vmem:[%s3 + $0x5] sm:$0x1]
        %v836 = vld [vmem:[%s3 + $0x6] sm:$0x1]
        %v837 = vld [vmem:[%s3 + $0x7] sm:$0x1]
        %v838 = vld [vmem:[%s3 + $0x8] sm:$0x1]
        %v839 = vld [vmem:[#allocation2] sm:$0x1]
        %v841 = vperm.slane %v839, 0
        %v843 = vadd.f32 %v841, 0.0
        %845 = vst [vmem:[#allocation1] ss:$2 sm:$0xff] %v829
        %v846 = vld.sshfl [vmem:[#allocation1] sm:$0xff pattern:$0x75316420]
        %v847 = vrot.slane %v846, 6
        %vm849 = vcmask 1041408
        %v850 = vsel %vm849, 0.0, %v847
        %v852 = vrot.slane %v850, 7
        %vm854 = vcmask 1040384
        %v855 = vsel %vm854, 0.0, %v852
        %857 = vset.pattern.permute.xlu0 0
        %858 = vperm.xlu0 %857, %v817
        %v859 = vpop.permute.xlu0 %858
        %v861 = vmul.f32 %v855, %v859
        %v863 = vperm.slane %v830, 0
        %v865 = vmul.f32 %v861, %v863
        %v866 = vadd.f32 %v843, %v865
        %868 = vst [vmem:[#allocation1] ss:$2 sm:$0xff] %v826
        %v869 = vld.sshfl [vmem:[#allocation1] sm:$0xff pattern:$0x75316420]
        %v870 = vrot.slane %v869, 6
        %v872 = vsel %vm849, 0.0, %v870
        %v874 = vperm.slane %v831, 0
        %v876 = vmul.f32 %v872, %v874
        %v877 = vadd.f32 %v866, %v876
        %v879 = vperm.slane %v832, 0
        %v881 = vmul.f32 %v850, %v879
        %v882 = vadd.f32 %v877, %v881
        %884 = vst [vmem:[#allocation1] ss:$2 sm:$0xff] %v823
        %v885 = vld.sshfl [vmem:[#allocation1] sm:$0xff pattern:$0x75316420]
        %v886 = vrot.slane %v885, 7
        %v888 = vsel %vm854, 0.0, %v886
        %v889 = vmul.f32 %v888, %v859
        %v891 = vperm.slane %v833, 0
        %v893 = vmul.f32 %v889, %v891
        %v894 = vadd.f32 %v882, %v893
        %v896 = vperm.slane %v834, 0
        %v898 = vmul.f32 %v820, %v896
        %v899 = vadd.f32 %v894, %v898
        %v901 = vperm.slane %v835, 0
        %v903 = vmul.f32 %v823, %v901
        %v904 = vadd.f32 %v899, %v903
        %905 = vst [vmem:[#allocation1] ss:$2 sm:$0xff] %v829
        %v906 = vld.sshfl [vmem:[#allocation1] sm:$0xff pattern:$0x75316420]
        %v907 = vrot.slane %v906, 7
        %v909 = vsel %vm854, 0.0, %v907
        %v910 = vmul.f32 %v909, %v859
        %v912 = vperm.slane %v836, 0
        %v914 = vmul.f32 %v910, %v912
        %v915 = vadd.f32 %v904, %v914
        %v917 = vperm.slane %v837, 0
        %v919 = vmul.f32 %v826, %v917
        %v920 = vadd.f32 %v915, %v919
        %v922 = vperm.slane %v838, 0
        %v924 = vmul.f32 %v829, %v922
        %v925 = vadd.f32 %v920, %v924
        %v926 = vpack.c.bf16 %v925, %v925
        %v927 = vld [vmem:[%s5] sm:$0xf]
        %v928 = vld [vmem:[%s5 + $0x4] sm:$0xf]
        %v929 = vld [vmem:[%s5 + $0x8] sm:$0xf]
        %v930 = vld [vmem:[%s5 + $0xc] sm:$0xf]
        %v931 = vld [vmem:[#allocation5] sm:$0x1]
        %v933 = vperm.slane %v931, 0
        %v939 = vunpack.c.l.b16 %v927
        %v940 = vunpack.c.l.b16 %v928
        %v941 = vunpack.c.l.b16 %v929
        %v942 = vunpack.c.l.b16 %v930
        %v943 = vpack.c.b16 %v940, %v939
        %v944 = vpack.c.b16 %v942, %v941
        %vm947 = vcmask 261120
        %v949 = vsel %vm947, %v926, 0
        %951 = vmatpush.bf16.msra.mxu0 0
        %952 = vmatpush.bf16.msra.mxu0 0
        %953 = vmatpush.bf16.msra.mxu0 0
        %954 = vmatpush.bf16.msra.mxu0 0
        %955 = vmatpush.bf16.msra.mxu0 0
        %956 = vmatpush.bf16.msra.mxu0 0
        %957 = vmatpush.bf16.msra.mxu0 %v944
        %958 = vmatpush.bf16.msra.mxu0 %v943
        %959 = vmatmul.bf16.gmra.mxu0 %v949
        %v960 = vpop.f32.mrf.mxu0
        %v961 = vadd.f32 %v933, %v960
        %v962 = vpop.f32.mrf.mxu0
        %963 = vdwg.mxu0
        %v964 = vmax.f32 %v961, 0.0
        %v965 = vld [vmem:[%s7] sm:$0xf]
        %v966 = vld [vmem:[%s7 + $0x4] sm:$0xf]
        %v967 = vld [vmem:[%s7 + $0x8] sm:$0xf]
        %v968 = vld [vmem:[%s7 + $0xc] sm:$0xf]
        %v969 = vld [vmem:[#allocation7] sm:$0x1]
        %v971 = vperm.slane %v969, 0
        %v977 = vunpack.c.l.b16 %v965
        %v978 = vunpack.c.l.b16 %v966
        %v979 = vunpack.c.l.b16 %v967
        %v980 = vunpack.c.l.b16 %v968
        %v981 = vpack.c.b16 %v978, %v977
        %v982 = vpack.c.b16 %v980, %v979
        %v986 = vsel %vm947, %v819, 0
        %988 = vmatpush.bf16.msra.mxu0 0
        %989 = vmatpush.bf16.msra.mxu0 0
        %990 = vmatpush.bf16.msra.mxu0 0
        %991 = vmatpush.bf16.msra.mxu0 0
        %992 = vmatpush.bf16.msra.mxu0 0
        %993 = vmatpush.bf16.msra.mxu0 0
        %994 = vmatpush.bf16.msra.mxu0 %v982
        %995 = vmatpush.bf16.msra.mxu0 %v981
        %996 = vmatmul.bf16.gmra.mxu0 %v986
        %v997 = vpop.f32.mrf.mxu0
        %v998 = vadd.f32 %v971, %v997
        %v999 = vpop.f32.mrf.mxu0
        %1000 = vdwg.mxu0
        %v1001 = vmax.f32 %v998, 0.0
        %v1003 = vsel %vm947, %v822, 0
        %1005 = vmatpush.bf16.msra.mxu0 0
        %1006 = vmatpush.bf16.msra.mxu0 0
        %1007 = vmatpush.bf16.msra.mxu0 0
        %1008 = vmatpush.bf16.msra.mxu0 0
        %1009 = vmatpush.bf16.msra.mxu0 0
        %1010 = vmatpush.bf16.msra.mxu0 0
        %1011 = vmatpush.bf16.msra.mxu0 %v982
        %1012 = vmatpush.bf16.msra.mxu0 %v981
        %1013 = vmatmul.bf16.gmra.mxu0 %v1003
        %v1014 = vpop.f32.mrf.mxu0
        %v1015 = vadd.f32 %v971, %v1014
        %v1016 = vpop.f32.mrf.mxu0
        %1017 = vdwg.mxu0
        %v1018 = vmax.f32 %v1015, 0.0
        %v1020 = vsel %vm947, %v825, 0
        %1022 = vmatpush.bf16.msra.mxu0 0
        %1023 = vmatpush.bf16.msra.mxu0 0
        %1024 = vmatpush.bf16.msra.mxu0 0
        %1025 = vmatpush.bf16.msra.mxu0 0
        %1026 = vmatpush.bf16.msra.mxu0 0
        %1027 = vmatpush.bf16.msra.mxu0 0
        %1028 = vmatpush.bf16.msra.mxu0 %v982
        %1029 = vmatpush.bf16.msra.mxu0 %v981
        %1030 = vmatmul.bf16.gmra.mxu0 %v1020
        %v1031 = vpop.f32.mrf.mxu0
        %v1032 = vadd.f32 %v971, %v1031
        %v1033 = vpop.f32.mrf.mxu0
        %1034 = vdwg.mxu0
        %v1035 = vmax.f32 %v1032, 0.0
        %v1037 = vsel %vm947, %v828, 0
        %1039 = vmatpush.bf16.msra.mxu0 0
        %1040 = vmatpush.bf16.msra.mxu0 0
        %1041 = vmatpush.bf16.msra.mxu0 0
        %1042 = vmatpush.bf16.msra.mxu0 0
        %1043 = vmatpush.bf16.msra.mxu0 0
        %1044 = vmatpush.bf16.msra.mxu0 0
        %1045 = vmatpush.bf16.msra.mxu0 %v982
        %1046 = vmatpush.bf16.msra.mxu0 %v981
        %1047 = vmatmul.bf16.gmra.mxu0 %v1037
        %v1048 = vpop.f32.mrf.mxu0
        %v1049 = vadd.f32 %v971, %v1048
        %v1050 = vpop.f32.mrf.mxu0
        %1051 = vdwg.mxu0
        %v1052 = vmax.f32 %v1049, 0.0
        %v1053 = vld [vmem:[%s9] sm:$0x1]
        %v1054 = vld [vmem:[%s9 + $0x1] sm:$0x1]
        %v1055 = vld [vmem:[%s9 + $0x2] sm:$0x1]
        %v1056 = vld [vmem:[%s9 + $0x3] sm:$0x1]
        %v1057 = vld [vmem:[%s9 + $0x4] sm:$0x1]
        %v1058 = vld [vmem:[%s9 + $0x5] sm:$0x1]
        %v1059 = vld [vmem:[%s9 + $0x6] sm:$0x1]
        %v1060 = vld [vmem:[%s9 + $0x7] sm:$0x1]
        %v1061 = vld [vmem:[%s9 + $0x8] sm:$0x1]
        %v1062 = vld [vmem:[%s10] sm:$0x1]
        %v1064 = vperm.slane %v1062, 0
        %v1066 = vadd.f32 %v1064, 0.0
        %v1068 = vrot.slane %v1052, 6
        %v1070 = vsel %vm849, 0.0, %v1068
        %v1072 = vrot.slane %v1070, 7
        %v1074 = vsel %vm854, 0.0, %v1072
        %v1075 = vmul.f32 %v1074, %v859
        %v1077 = vperm.slane %v1053, 0
        %v1079 = vmul.f32 %v1075, %v1077
        %v1080 = vadd.f32 %v1066, %v1079
        %v1082 = vrot.slane %v1035, 6
        %v1084 = vsel %vm849, 0.0, %v1082
        %v1086 = vperm.slane %v1054, 0
        %v1088 = vmul.f32 %v1084, %v1086
        %v1089 = vadd.f32 %v1080, %v1088
        %v1091 = vperm.slane %v1055, 0
        %v1093 = vmul.f32 %v1070, %v1091
        %v1094 = vadd.f32 %v1089, %v1093
        %v1096 = vrot.slane %v1018, 7
        %v1098 = vsel %vm854, 0.0, %v1096
        %v1099 = vmul.f32 %v1098, %v859
        %v1101 = vperm.slane %v1056, 0
        %v1103 = vmul.f32 %v1099, %v1101
        %v1104 = vadd.f32 %v1094, %v1103
        %v1106 = vperm.slane %v1057, 0
        %v1108 = vmul.f32 %v1001, %v1106
        %v1109 = vadd.f32 %v1104, %v1108
        %v1111 = vperm.slane %v1058, 0
        %v1113 = vmul.f32 %v1018, %v1111
        %v1114 = vadd.f32 %v1109, %v1113
        %v1115 = vrot.slane %v1052, 7
        %v1117 = vsel %vm854, 0.0, %v1115
        %v1118 = vmul.f32 %v1117, %v859
        %v1120 = vperm.slane %v1059, 0
        %v1122 = vmul.f32 %v1118, %v1120
        %v1123 = vadd.f32 %v1114, %v1122
        %v1125 = vperm.slane %v1060, 0
        %v1127 = vmul.f32 %v1035, %v1125
        %v1128 = vadd.f32 %v1123, %v1127
        %v1130 = vperm.slane %v1061, 0
        %v1132 = vmul.f32 %v1052, %v1130
        %v1133 = vadd.f32 %v1128, %v1132
        %v1134 = vpack.c.bf16 %v1133, %v1133
        %v1135 = vld [vmem:[%s11] sm:$0xf]
        %v1136 = vld [vmem:[%s11 + $0x4] sm:$0xf]
        %v1137 = vld [vmem:[%s11 + $0x8] sm:$0xf]
        %v1138 = vld [vmem:[%s11 + $0xc] sm:$0xf]
        %v1139 = vld [vmem:[%s12] sm:$0x1]
        %v1141 = vperm.slane %v1139, 0
        %v1147 = vunpack.c.l.b16 %v1135
        %v1148 = vunpack.c.l.b16 %v1136
        %v1149 = vunpack.c.l.b16 %v1137
        %v1150 = vunpack.c.l.b16 %v1138
        %v1151 = vpack.c.b16 %v1148, %v1147
        %v1152 = vpack.c.b16 %v1150, %v1149
        %v1156 = vsel %vm947, %v1134, 0
        %1158 = vmatpush.bf16.msra.mxu0 0
        %1159 = vmatpush.bf16.msra.mxu0 0
        %1160 = vmatpush.bf16.msra.mxu0 0
        %1161 = vmatpush.bf16.msra.mxu0 0
        %1162 = vmatpush.bf16.msra.mxu0 0
        %1163 = vmatpush.bf16.msra.mxu0 0
        %1164 = vmatpush.bf16.msra.mxu0 %v1152
        %1165 = vmatpush.bf16.msra.mxu0 %v1151
        %1166 = vmatmul.bf16.gmra.mxu0 %v1156
        %v1167 = vpop.f32.mrf.mxu0
        %v1168 = vadd.f32 %v1141, %v1167
        %v1169 = vpop.f32.mrf.mxu0
        %1170 = vdwg.mxu0
        %v1171 = vmax.f32 %v1168, 0.0
        %v1172 = vadd.f32 %v964, %v1171
        %v1173 = vpack.c.bf16 %v1172, %v1172
        %v1174 = vld [vmem:[%s13] sm:$0xf]
        %v1175 = vld [vmem:[%s13 + $0x4] sm:$0xf]
        %v1176 = vld [vmem:[%s13 + $0x8] sm:$0xf]
        %v1177 = vld [vmem:[%s13 + $0xc] sm:$0xf]
        %v1178 = vld [vmem:[%s13 + $0x10] sm:$0xf]
        %v1179 = vld [vmem:[%s13 + $0x14] sm:$0xf]
        %v1180 = vld [vmem:[%s13 + $0x18] sm:$0xf]
        %v1181 = vld [vmem:[%s13 + $0x1c] sm:$0xf]
        %v1182 = vld [vmem:[%s14] sm:$0x1]
        %v1184 = vperm.slane %v1182, 0
        %v1194 = vunpack.c.l.b16 %v1174
        %v1195 = vunpack.c.l.b16 %v1175
        %v1196 = vunpack.c.l.b16 %v1176
        %v1197 = vunpack.c.l.b16 %v1177
        %v1198 = vunpack.c.l.b16 %v1178
        %v1199 = vunpack.c.l.b16 %v1179
        %v1200 = vunpack.c.l.b16 %v1180
        %v1201 = vunpack.c.l.b16 %v1181
        %v1202 = vpack.c.b16 %v1195, %v1194
        %v1203 = vpack.c.b16 %v1197, %v1196
        %v1204 = vpack.c.b16 %v1199, %v1198
        %v1205 = vpack.c.b16 %v1201, %v1200
        %vm1210 = vcmask 523264
        %v1212 = vsel %vm1210, %v1173, 0
        %1214 = vmatpush.bf16.msra.mxu0 0
        %1215 = vmatpush.bf16.msra.mxu0 0
        %1216 = vmatpush.bf16.msra.mxu0 0
        %1217 = vmatpush.bf16.msra.mxu0 0
        %1218 = vmatpush.bf16.msra.mxu0 %v1205
        %1219 = vmatpush.bf16.msra.mxu0 %v1204
        %1220 = vmatpush.bf16.msra.mxu0 %v1203
        %1221 = vmatpush.bf16.msra.mxu0 %v1202
        %1222 = vmatmul.bf16.gmra.mxu0 %v1212
        %v1223 = vpop.f32.mrf.mxu0
        %v1224 = vadd.f32 %v1184, %v1223
        %v1225 = vpop.f32.mrf.mxu0
        %1226 = vdwg.mxu0
        %v1227 = vmax.f32 %v1224, 0.0
        %v1228 = vld [vmem:[%s15] sm:$0x1]
        %v1229 = vld [vmem:[%s15 + $0x1] sm:$0x1]
        %v1230 = vld [vmem:[%s15 + $0x2] sm:$0x1]
        %v1231 = vld [vmem:[%s15 + $0x3] sm:$0x1]
        %v1232 = vld [vmem:[%s15 + $0x4] sm:$0x1]
        %v1233 = vld [vmem:[%s15 + $0x5] sm:$0x1]
        %v1234 = vld [vmem:[%s15 + $0x6] sm:$0x1]
        %v1235 = vld [vmem:[%s15 + $0x7] sm:$0x1]
        %v1236 = vld [vmem:[%s15 + $0x8] sm:$0x1]
        %v1237 = vld [vmem:[%s16] sm:$0x1]
        %v1239 = vperm.slane %v1237, 0
        %v1241 = vadd.f32 %v1239, 0.0
        %v1243 = vrot.slane %v1227, 5
        %vm1245 = vcmask 1042432
        %v1246 = vsel %vm1245, 0.0, %v1243
        %v1247 = vmul.f32 %v1246, %v859
        %v1249 = vperm.slane %v1228, 0
        %v1251 = vmul.f32 %v1247, %v1249
        %v1252 = vadd.f32 %v1241, %v1251
        %v1253 = vrot.slane %v1227, 6
        %v1255 = vsel %vm849, 0.0, %v1253
        %v1257 = vperm.slane %v1229, 0
        %v1259 = vmul.f32 %v1255, %v1257
        %v1260 = vadd.f32 %v1252, %v1259
        %v1261 = vrot.slane %v1227, 7
        %v1263 = vsel %vm854, 0.0, %v1261
        %1265 = vset.pattern.permute.xlu0 0
        %1266 = vperm.xlu0 %1265, %v818
        %v1267 = vpop.permute.xlu0 %1266
        %v1269 = vmul.f32 %v1263, %v1267
        %v1271 = vperm.slane %v1230, 0
        %v1273 = vmul.f32 %v1269, %v1271
        %v1274 = vadd.f32 %v1260, %v1273
        %v1275 = vmul.f32 %v1263, %v859
        %v1277 = vperm.slane %v1231, 0
        %v1279 = vmul.f32 %v1275, %v1277
        %v1280 = vadd.f32 %v1274, %v1279
        %v1282 = vperm.slane %v1232, 0
        %v1284 = vmul.f32 %v1227, %v1282
        %v1285 = vadd.f32 %v1280, %v1284
        %v1286 = vrot.slane %v1227, 1
        %v1288 = vsel %vm1245, %v1286, 0.0
        %v1289 = vmul.f32 %v1288, %v1267
        %v1291 = vperm.slane %v1233, 0
        %v1293 = vmul.f32 %v1289, %v1291
        %v1294 = vadd.f32 %v1285, %v1293
        %v1295 = vmul.f32 %v1288, %v859
        %v1297 = vperm.slane %v1234, 0
        %v1299 = vmul.f32 %v1295, %v1297
        %v1300 = vadd.f32 %v1294, %v1299
        %v1301 = vrot.slane %v1227, 2
        %v1303 = vsel %vm849, %v1301, 0.0
        %v1305 = vperm.slane %v1235, 0
        %v1307 = vmul.f32 %v1303, %v1305
        %v1308 = vadd.f32 %v1300, %v1307
        %v1309 = vrot.slane %v1227, 3
        %v1311 = vsel %vm854, %v1309, 0.0
        %v1312 = vmul.f32 %v1311, %v1267
        %v1314 = vperm.slane %v1236, 0
        %v1316 = vmul.f32 %v1312, %v1314
        %v1317 = vadd.f32 %v1308, %v1316
        %v1318 = vpack.c.bf16 %v1317, %v1317
        %v1319 = vld [vmem:[%s17] sm:$0xf]
        %v1320 = vld [vmem:[%s17 + $0x4] sm:$0xf]
        %v1321 = vld [vmem:[%s17 + $0x8] sm:$0xf]
        %v1322 = vld [vmem:[%s17 + $0xc] sm:$0xf]
        %v1323 = vld [vmem:[%s18] sm:$0x1]
        %v1325 = vperm.slane %v1323, 0
        %v1331 = vunpack.c.l.b16 %v1319
        %v1332 = vunpack.c.l.b16 %v1320
        %v1333 = vunpack.c.l.b16 %v1321
        %v1334 = vunpack.c.l.b16 %v1322
        %v1335 = vpack.c.b16 %v1332, %v1331
        %v1336 = vpack.c.b16 %v1334, %v1333
        %v1340 = vsel %vm947, %v1318, 0
        %1342 = vmatpush.bf16.msra.mxu0 0
        %1343 = vmatpush.bf16.msra.mxu0 0
        %1344 = vmatpush.bf16.msra.mxu0 0
        %1345 = vmatpush.bf16.msra.mxu0 0
        %1346 = vmatpush.bf16.msra.mxu0 0
        %1347 = vmatpush.bf16.msra.mxu0 0
        %1348 = vmatpush.bf16.msra.mxu0 %v1336
        %1349 = vmatpush.bf16.msra.mxu0 %v1335
        %1350 = vmatmul.bf16.gmra.mxu0 %v1340
        %v1351 = vpop.f32.mrf.mxu0
        %v1352 = vadd.f32 %v1325, %v1351
        %v1353 = vpop.f32.mrf.mxu0
        %1354 = vdwg.mxu0
        %v1355 = vmax.f32 %v1352, 0.0
        %v1356 = vld [vmem:[%s19] sm:$0x1]
        %v1358 = vperm.slane %v1356, 0
        %v1360 = vmul.f32 %v1172, %v1358
        %v1361 = vadd.f32 %v1360, %v1355
        %v1362 = vpack.c.bf16 %v1361, %v1361
        %v1363 = vld [vmem:[%s20] sm:$0xf]
        %v1364 = vld [vmem:[%s20 + $0x4] sm:$0xf]
        %v1365 = vld [vmem:[%s20 + $0x8] sm:$0xf]
        %v1366 = vld [vmem:[%s20 + $0xc] sm:$0xf]
        %v1367 = vld [vmem:[%s20 + $0x10] sm:$0xf]
        %v1368 = vld [vmem:[%s20 + $0x14] sm:$0xf]
        %v1369 = vld [vmem:[%s20 + $0x18] sm:$0xf]
        %v1370 = vld [vmem:[%s20 + $0x1c] sm:$0xf]
        %v1371 = vld [vmem:[%s21] sm:$0x1]
        %v1373 = vperm.slane %v1371, 0
        %v1383 = vunpack.c.l.b16 %v1363
        %v1384 = vunpack.c.l.b16 %v1364
        %v1385 = vunpack.c.l.b16 %v1365
        %v1386 = vunpack.c.l.b16 %v1366
        %v1387 = vunpack.c.l.b16 %v1367
        %v1388 = vunpack.c.l.b16 %v1368
        %v1389 = vunpack.c.l.b16 %v1369
        %v1390 = vunpack.c.l.b16 %v1370
        %v1391 = vpack.c.b16 %v1384, %v1383
        %v1392 = vpack.c.b16 %v1386, %v1385
        %v1393 = vpack.c.b16 %v1388, %v1387
        %v1394 = vpack.c.b16 %v1390, %v1389
        %v1400 = vsel %vm1210, %v1362, 0
        %1402 = vmatpush.bf16.msra.mxu0 0
        %1403 = vmatpush.bf16.msra.mxu0 0
        %1404 = vmatpush.bf16.msra.mxu0 0
        %1405 = vmatpush.bf16.msra.mxu0 0
        %1406 = vmatpush.bf16.msra.mxu0 %v1394
        %1407 = vmatpush.bf16.msra.mxu0 %v1393
        %1408 = vmatpush.bf16.msra.mxu0 %v1392
        %1409 = vmatpush.bf16.msra.mxu0 %v1391
        %1410 = vmatmul.bf16.gmra.mxu0 %v1400
        %v1411 = vpop.f32.mrf.mxu0
        %v1412 = vadd.f32 %v1373, %v1411
        %v1413 = vpop.f32.mrf.mxu0
        %1414 = vdwg.mxu0
        %v1415 = vmax.f32 %v1412, 0.0
        %vm1416 = vcmask 1043456
        %v1417 = vsel %vm1416, %v1415, 0.0
        %v1418 = vrot.slane %v1417, 4
        %v1419 = vadd.f32 %v1417, %v1418
        %v1420 = vrot.slane %v1419, 2
        %v1421 = vadd.f32 %v1419, %v1420
        %v1422 = vrot.slane %v1421, 1
        %v1423 = vadd.f32 %v1421, %v1422
        %v1424 = vmul.f32 %v1423, 0.25
        %v1425 = vpack.c.bf16 %v1424, %v1424
        %v1426 = vld [vmem:[%s22] sm:$0xf]
        %v1427 = vld [vmem:[%s22 + $0x4] sm:$0xf]
        %v1428 = vld [vmem:[%s22 + $0x8] sm:$0xf]
        %v1429 = vld [vmem:[%s22 + $0xc] sm:$0xf]
        %v1430 = vld [vmem:[%s22 + $0x10] sm:$0xf]
        %v1431 = vld [vmem:[%s22 + $0x14] sm:$0xf]
        %v1432 = vld [vmem:[%s22 + $0x18] sm:$0xf]
        %v1433 = vld [vmem:[%s22 + $0x1c] sm:$0xf]
        %v1434 = vld [vmem:[%s22 + $0x20] sm:$0xf]
        %v1435 = vld [vmem:[%s22 + $0x24] sm:$0xf]
        %v1436 = vld [vmem:[%s22 + $0x28] sm:$0xf]
        %v1437 = vld [vmem:[%s22 + $0x2c] sm:$0xf]
        %v1438 = vld [vmem:[%s22 + $0x30] sm:$0xf]
        %v1439 = vld [vmem:[%s22 + $0x34] sm:$0xf]
        %v1440 = vld [vmem:[%s22 + $0x38] sm:$0xf]
        %v1441 = vld [vmem:[%s22 + $0x3c] sm:$0xf]
        %v1442 = vld [vmem:[%s23] sm:$0x1]
        %v1459 = vunpack.c.l.b16 %v1426
        %v1460 = vunpack.c.l.b16 %v1427
        %v1461 = vunpack.c.l.b16 %v1428
        %v1462 = vunpack.c.l.b16 %v1429
        %v1463 = vunpack.c.l.b16 %v1430
        %v1464 = vunpack.c.l.b16 %v1431
        %v1465 = vunpack.c.l.b16 %v1432
        %v1466 = vunpack.c.l.b16 %v1433
        %v1467 = vunpack.c.l.b16 %v1434
        %v1468 = vunpack.c.l.b16 %v1435
        %v1469 = vunpack.c.l.b16 %v1436
        %v1470 = vunpack.c.l.b16 %v1437
        %v1471 = vunpack.c.l.b16 %v1438
        %v1472 = vunpack.c.l.b16 %v1439
        %v1473 = vunpack.c.l.b16 %v1440
        %v1474 = vunpack.c.l.b16 %v1441
        %v1475 = vpack.c.b16 %v1460, %v1459
        %v1476 = vpack.c.b16 %v1462, %v1461
        %v1477 = vpack.c.b16 %v1464, %v1463
        %v1478 = vpack.c.b16 %v1466, %v1465
        %v1479 = vpack.c.b16 %v1468, %v1467
        %v1480 = vpack.c.b16 %v1470, %v1469
        %v1481 = vpack.c.b16 %v1472, %v1471
        %v1482 = vpack.c.b16 %v1474, %v1473
        %1491 = vmatpush.bf16.msra.mxu0 %v1482
        %1492 = vmatpush.bf16.msra.mxu0 %v1481
        %1493 = vmatpush.bf16.msra.mxu0 %v1480
        %1494 = vmatpush.bf16.msra.mxu0 %v1479
        %1495 = vmatpush.bf16.msra.mxu0 %v1478
        %1496 = vmatpush.bf16.msra.mxu0 %v1477
        %1497 = vmatpush.bf16.msra.mxu0 %v1476
        %1498 = vmatpush.bf16.msra.mxu0 %v1475
        %1499 = vmatmul.bf16.gmra.mxu0 %v1425
        %v1500 = vpop.f32.mrf.mxu0
        %v1501 = vadd.f32 %v1442, %v1500
        %v1502 = vpop.f32.mrf.mxu0
        %1503 = vdwg.mxu0
        %1504 = vst [vmem:[%s804] sm:$0x1] %v1424
        %vm1505 = vcmask 73728
        %1506 = vst.msk [vmem:[%s810] sm:$0x1] %vm1505, %v1501
        %s1507 = sand.u32 %s562, 1
        %s1508 = scalar_lea.sflag [#allocation4], %s1507
        %s1509 = sand.u32 %s562, 1
        %s1510 = scalar_lea.vmem [#allocation8], %s1509
        %s1511 = sand.u32 %s588, 1
        %s1512 = scalar_lea.sflag [#allocation10], %s1511
        %s1513 = sand.u32 %s588, 1
        %s1514 = scalar_lea.vmem [#allocation9], %s1513
        // Predicated region
        $region129: #{_lambda_.7} parent=115 // pred_check
          %p1515 = pneg %p572
        $region130: #{_lambda_.7} parent=115 // pred_check_branch
          %1517 = sbr.rel (%p1515) target = $region132
        $region131: #{_lambda_.7} parent=115 // pred_region
          %1519 = vsyncadd %s1508, 0
          %s1520 = scalar_lea.hbm %s24, %s45
          %s1522 = sshll.u32 %s1510, 4
          %s1523 = int_to_ptr.vmem [resolvable:$true] %s1522
          %s1524 = sshll.u32 %s1520, 4
          %s1525 = int_to_ptr.hbm [resolvable:$true] %s1524
          %1527 = dma.vmem_to_hbm [thread:$0]  %s1523, 16, %s1525, %s1508
        $region132: #{_lambda_.7} parent=115 // pred_fallthru
          _
        // Predicated region
        $region133: #{_lambda_.7} parent=115 // pred_check
          %p1528 = pneg %p598
        $region134: #{_lambda_.7} parent=115 // pred_check_branch
          %1530 = sbr.rel (%p1528) target = $region136
        $region135: #{_lambda_.7} parent=115 // pred_region
          %1532 = vsyncadd %s1512, 0
          %s1533 = scalar_lea.hbm %s25, %s45
          %s1535 = sshll.u32 %s1514, 4
          %s1536 = int_to_ptr.vmem [resolvable:$true] %s1535
          %s1537 = sshll.u32 %s1533, 4
          %s1538 = int_to_ptr.hbm [resolvable:$true] %s1537
          %1540 = dma.vmem_to_hbm [thread:$0]  %s1536, 16, %s1538, %s1512
        $region136: #{_lambda_.7} parent=115 // pred_fallthru
          _
      $region116: #{_lambda_.7} parent=5 // pred_fallthru
        _
      %p1541 = scmp.le.s32.totalorder 2, %s40
      // Predicated region
      $region137: #{_lambda_.7} parent=5 // pred_check
        %p1542 = pneg %p1541
      $region138: #{_lambda_.7} parent=5 // pred_check_branch
        %1544 = sbr.rel (%p1542) target = $region140
      $region139: #{_lambda_.7} parent=5 // pred_region
        %s1545 = ssub.s32 %s40, 2
        // Predicated region
        $region141: #{_lambda_.7} parent=139 // pred_check
          %p1546 = pneg %p578
        $region142: #{_lambda_.7} parent=139 // pred_check_branch
          %1548 = sbr.rel (%p1546) target = $region144
        $region143: #{_lambda_.7} parent=139 // pred_region
          %s1549 = sand.u32 %s563, 1
          %s1550 = scalar_lea.sflag [#allocation4], %s1549
          %s1551 = sand.u32 %s563, 1
          %s1552 = scalar_lea.vmem [#allocation8], %s1551
          %1554 = dma.done %s1550, 16
        $region144: #{_lambda_.7} parent=139 // pred_fallthru
          _
        // Predicated region
        $region145: #{_lambda_.7} parent=139 // pred_check
          %p1555 = pneg %p604
        $region146: #{_lambda_.7} parent=139 // pred_check_branch
          %1557 = sbr.rel (%p1555) target = $region148
        $region147: #{_lambda_.7} parent=139 // pred_region
          %s1558 = sand.u32 %s589, 1
          %s1559 = scalar_lea.sflag [#allocation10], %s1558
          %s1560 = sand.u32 %s589, 1
          %s1561 = scalar_lea.vmem [#allocation9], %s1560
          %1563 = dma.done %s1559, 16
        $region148: #{_lambda_.7} parent=139 // pred_fallthru
          _
      $region140: #{_lambda_.7} parent=5 // pred_fallthru
        _
    $region6: #{_lambda_.7} parent=1 // loop_footer
      %s44 = sadd.s32 1, %s40
    $region7: #{_lambda_.7} parent=1 // loop_footer_branch
      %39 = sbr.rel target = $region3
    $region8: #{_lambda_.7} parent=1 // loop_exit
      _
    %1564 = vsyncpa [#allocation3], 1
    %s1565 = scalar_lea.sflag [#allocation3], 1
    %1566 = vsyncpa %s1565, 1
    %1567 = vsyncpa [#allocation6], 1
    %1568 = vsyncpa [#allocation4], 1
    %s1569 = scalar_lea.sflag [#allocation4], 1
    %1570 = vsyncpa %s1569, 1
    %1571 = vsyncpa [#allocation10], 1
    %s1572 = scalar_lea.sflag [#allocation10], 1
    %1573 = vsyncpa %s1572, 1

</llo_original>
